<compile_context>
chip_gen: v5e
topology: v5e:2x2
jax: 0.10.0
libtpu: 0.0.40
codegen_flags: <defaults>
</compile_context>

<pallas_src>
import numpy as np
import jax
import jax.numpy as jnp
from jax import lax
from jax.experimental import pallas as pl
from jax.experimental.pallas import tpu as pltpu


# ----------------------------------------------------------------------------
# Pallas kernel factory (T, Bp, Hp are static trace-time constants)
# ----------------------------------------------------------------------------
def _make_encoder_kernel(T, Bp, Hp):
    G = 4 * Hp  # gate width per direction

    def kernel(emb_ref, len_ref, wihf_ref, wihb_ref, bf_ref, bb_ref,
               whhf_ref, whhb_ref, wof_ref, wob_ref, whf_ref, whb_ref,
               wcf_ref, wcb_ref,
               out_ref, hh_ref, hc_ref,
               xgf_scr, xgb_scr, hsf_scr, hsb_scr):
        # ---- hoisted input projections (bf16 MXU, f32 accumulate) ----------
        # (T*Bp, Hp) @ (Hp, 4Hp) + bias, once per direction, fills the
        # per-step input-gate scratches before the recurrence.
        emb = emb_ref[...]                                    # bf16
        xgf_scr[...] = (jnp.dot(emb, wihf_ref[...],
                                preferred_element_type=jnp.float32)
                        + bf_ref[...])
        xgb_scr[...] = (jnp.dot(emb, wihb_ref[...],
                                preferred_element_type=jnp.float32)
                        + bb_ref[...])

        lens = len_ref[...]                                   # (Bp, 1) int32

        def cell(gates, c):
            # gate order i, f, g, o (PyTorch); slices are 128-lane aligned.
            i = jax.nn.sigmoid(gates[:, 0:Hp])
            f = jax.nn.sigmoid(gates[:, Hp:2 * Hp])
            g = jnp.tanh(gates[:, 2 * Hp:3 * Hp])
            o = jax.nn.sigmoid(gates[:, 3 * Hp:4 * Hp])
            c_new = f * c + i * g
            h_new = o * jnp.tanh(c_new)
            return h_new, c_new

        zeros = jnp.zeros((Bp, Hp), jnp.float32)

        # ---- single loop: fwd time `it` and bwd time `T-1-it` interleaved --
        # Only the masked hidden states are stored per step; all output
        # projections happen after the loop.
        def body(it, carry):
            h_f, c_f, h_b, c_b = carry
            tf = it
            tb = T - 1 - it
            rf = pl.multiple_of(tf * Bp, Bp)
            rb = pl.multiple_of(tb * Bp, Bp)
            m_f = (lens > tf).astype(jnp.float32)             # (Bp,1), 0/1
            m_b = (lens > tb).astype(jnp.float32)

            # forward direction, time tf
            g_f = xgf_scr[pl.ds(rf, Bp), :] + jnp.dot(
                h_f.astype(jnp.bfloat16), whhf_ref[...],
                preferred_element_type=jnp.float32)
            hf_new, cf_new = cell(g_f, c_f)
            hsf_scr[pl.ds(rf, Bp), :] = m_f * hf_new          # masked hidden
            h_f = h_f + m_f * (hf_new - h_f)                  # freeze past end
            c_f = c_f + m_f * (cf_new - c_f)

            # backward direction, time tb (independent of the fwd step above)
            g_b = xgb_scr[pl.ds(rb, Bp), :] + jnp.dot(
                h_b.astype(jnp.bfloat16), whhb_ref[...],
                preferred_element_type=jnp.float32)
            hb_new, cb_new = cell(g_b, c_b)
            hsb_scr[pl.ds(rb, Bp), :] = m_b * hb_new
            h_b = h_b + m_b * (hb_new - h_b)
            c_b = c_b + m_b * (cb_new - c_b)
            return (h_f, c_f, h_b, c_b)

        h_f, c_f, h_b, c_b = lax.fori_loop(
            0, T, body, (zeros, zeros, zeros, zeros), unroll=True)

        # ---- hoisted W_o projection: one pair of lane-dense big matmuls ----
        out_ref[...] = (
            jnp.dot(hsf_scr[...].astype(jnp.bfloat16), wof_ref[...],
                    preferred_element_type=jnp.float32)
            + jnp.dot(hsb_scr[...].astype(jnp.bfloat16), wob_ref[...],
                      preferred_element_type=jnp.float32))

        # ---- final hidden / cell projections (split halves, no concat) -----
        hh_ref[...] = (
            jnp.dot(h_f.astype(jnp.bfloat16), whf_ref[...],
                    preferred_element_type=jnp.float32)
            + jnp.dot(h_b.astype(jnp.bfloat16), whb_ref[...],
                      preferred_element_type=jnp.float32))
        hc_ref[...] = (
            jnp.dot(c_f.astype(jnp.bfloat16), wcf_ref[...],
                    preferred_element_type=jnp.float32)
            + jnp.dot(c_b.astype(jnp.bfloat16), wcb_ref[...],
                      preferred_element_type=jnp.float32))

    return kernel


# ----------------------------------------------------------------------------
# Wrapper: embedding gather + lane/sublane padding + weight prep + pallas_call
# ----------------------------------------------------------------------------
def encoder_forward(input_ids, input_length, params):
    """input_ids: (B, T) int32, input_length: (B,) int32."""
    B, T = input_ids.shape
    H = params["emb"].shape[1]
    Hp = ((H + 127) // 128) * 128          # lane-dense hidden dim
    Bp = ((B + 7) // 8) * 8                # full sublane occupancy

    # embedding lookup (glue) -> time-major, padded, flattened (T*Bp, Hp)
    emb = params["emb"][input_ids].astype(jnp.float32)      # (B, T, H)
    emb = jnp.transpose(emb, (1, 0, 2))                     # (T, B, H)
    emb = jnp.pad(emb, ((0, 0), (0, Bp - B), (0, Hp - H)))
    emb2d = emb.reshape(T * Bp, Hp).astype(jnp.bfloat16)

    # lengths -> (Bp, 1) int32 (padded batch rows get length 0 == always masked)
    lens = jnp.pad(input_length.astype(jnp.int32), (0, Bp - B))[:, None]

    def pad_gate_w(w):   # (4H, Hin) -> (Hp, 4Hp) bf16: per-gate padded + T
        w = w.reshape(4, H, w.shape[1])
        w = jnp.pad(w, ((0, 0), (0, Hp - H), (0, Hp - w.shape[2])))
        return jnp.transpose(w, (2, 0, 1)).reshape(Hp, 4 * Hp).astype(jnp.bfloat16)

    def pad_gate_b(b):   # (4H,) -> (1, 4Hp) f32: per-gate padded
        return jnp.pad(b.reshape(4, H), ((0, 0), (0, Hp - H))).reshape(1, 4 * Hp)

    def pad_sq(w):       # (H, H) -> (Hp, Hp) bf16
        return jnp.pad(w, ((0, Hp - w.shape[0]),
                           (0, Hp - w.shape[1]))).astype(jnp.bfloat16)

    wih_f = pad_gate_w(params["w_ih_f"])
    wih_b = pad_gate_w(params["w_ih_b"])
    b_f = pad_gate_b(params["b_ih_f"] + params["b_hh_f"])    # (1, 4Hp) f32
    b_b = pad_gate_b(params["b_ih_b"] + params["b_hh_b"])
    whh_f = pad_gate_w(params["w_hh_f"])
    whh_b = pad_gate_w(params["w_hh_b"])
    # split 2H->H projections into fwd/bwd halves (no lane-axis concats)
    wo_f = pad_sq(params["W_o"][:, :H].T); wo_b = pad_sq(params["W_o"][:, H:].T)
    wh_f = pad_sq(params["W_h"][:, :H].T); wh_b = pad_sq(params["W_h"][:, H:].T)
    wc_f = pad_sq(params["W_c"][:, :H].T); wc_b = pad_sq(params["W_c"][:, H:].T)

    operands = (emb2d, lens, wih_f, wih_b, b_f, b_b, whh_f, whh_b,
                wo_f, wo_b, wh_f, wh_b, wc_f, wc_b)

    # ---- right-size the VMEM reservation from the actual padded footprint --
    operand_bytes = sum(int(np.prod(a.shape)) * a.dtype.itemsize for a in operands)
    out_bytes = (T * Bp * Hp + 2 * Bp * Hp) * 4
    scratch_bytes = (2 * T * Bp * 4 * Hp + 2 * T * Bp * Hp) * 4
    vmem_limit = 2 * (operand_bytes + out_bytes + scratch_bytes) + (4 << 20)

    vmem = pl.BlockSpec(memory_space=pltpu.MemorySpace.VMEM)
    out2d, hh, hc = pl.pallas_call(
        _make_encoder_kernel(T, Bp, Hp),
        out_shape=(
            jax.ShapeDtypeStruct((T * Bp, Hp), jnp.float32),  # per-step output
            jax.ShapeDtypeStruct((Bp, Hp), jnp.float32),      # W_h(last_hidden)
            jax.ShapeDtypeStruct((Bp, Hp), jnp.float32),      # W_c(last_cell)
        ),
        in_specs=[vmem] * len(operands),
        out_specs=(vmem, vmem, vmem),
        scratch_shapes=[
            pltpu.VMEM((T * Bp, 4 * Hp), jnp.float32),  # fwd input gates
            pltpu.VMEM((T * Bp, 4 * Hp), jnp.float32),  # bwd input gates
            pltpu.VMEM((T * Bp, Hp), jnp.float32),      # fwd masked hidden
            pltpu.VMEM((T * Bp, Hp), jnp.float32),      # bwd masked hidden
        ],
        compiler_params=pltpu.CompilerParams(vmem_limit_bytes=int(vmem_limit)),
    )(*operands)

    out = out2d.reshape(T, Bp, Hp)[:, :B, :H]               # drop padding
    output = jnp.transpose(out, (1, 0, 2))                  # (B, T, H) batch-first
    hidden = (hh[:B, :H][None], hc[:B, :H][None])           # ((1,B,H), (1,B,H))
    return output, hidden


# ----------------------------------------------------------------------------
# Pure-NumPy reference (mirrors PyTorch packed bidirectional LSTM semantics)
# ----------------------------------------------------------------------------
def encoder_reference(input_ids, input_length, params):
    B, T = input_ids.shape
    H = params["emb"].shape[1]
    emb = np.asarray(params["emb"])[np.asarray(input_ids)]          # (B, T, H)
    lens = np.asarray(input_length)

    def gates_split(g):
        return g[:, 0:H], g[:, H:2*H], g[:, 2*H:3*H], g[:, 3*H:4*H]

    def run(direction):
        wih = np.asarray(params[f"w_ih_{direction}"])
        whh = np.asarray(params[f"w_hh_{direction}"])
        b = np.asarray(params[f"b_ih_{direction}"]) + np.asarray(params[f"b_hh_{direction}"])
        h = np.zeros((B, H), np.float32)
        c = np.zeros((B, H), np.float32)
        outs = np.zeros((T, B, H), np.float32)
        order = range(T) if direction == "f" else range(T - 1, -1, -1)
        for t in order:
            m = (t < lens).astype(np.float32)[:, None]
            g = emb[:, t, :] @ wih.T + h @ whh.T + b
            i, f, gg, o = gates_split(g)
            sig = lambda z: 1.0 / (1.0 + np.exp(-z))
            c_new = sig(f) * c + sig(i) * np.tanh(gg)
            h_new = sig(o) * np.tanh(c_new)
            outs[t] = m * h_new
            h = m * h_new + (1 - m) * h
            c = m * c_new + (1 - m) * c
        return outs, h, c

    of, hf, cf = run("f")
    ob, hb, cb = run("b")
    cat = np.concatenate([of, ob], axis=-1)                          # (T, B, 2H)
    mask = (np.arange(T)[:, None] < lens[None, :]).astype(np.float32)[:, :, None]
    out = mask * (cat @ np.asarray(params["W_o"]).T)                 # (T, B, H)
    hh = np.concatenate([hf, hb], axis=1) @ np.asarray(params["W_h"]).T
    hc = np.concatenate([cf, cb], axis=1) @ np.asarray(params["W_c"]).T
    return np.transpose(out, (1, 0, 2)), hh[None], hc[None]


# ----------------------------------------------------------------------------
def make_params(key, vocab, H):
    k = 1.0 / np.sqrt(H)
    keys = jax.random.split(key, 12)
    u = lambda kk, shape: jax.random.uniform(kk, shape, jnp.float32, -k, k)
    emb = jax.random.normal(keys[0], (vocab, H), jnp.float32) * 0.1
    emb = emb.at[0].set(0.0)                  # padding_idx = 0
    return {
        "emb": emb,
        "w_ih_f": u(keys[1], (4 * H, H)), "w_hh_f": u(keys[2], (4 * H, H)),
        "b_ih_f": u(keys[3], (4 * H,)),   "b_hh_f": u(keys[4], (4 * H,)),
        "w_ih_b": u(keys[5], (4 * H, H)), "w_hh_b": u(keys[6], (4 * H, H)),
        "b_ih_b": u(keys[7], (4 * H,)),   "b_hh_b": u(keys[8], (4 * H,)),
        "W_h": u(keys[9], (H, 2 * H)),
        "W_c": u(keys[10], (H, 2 * H)),
        "W_o": u(keys[11], (H, 2 * H)),
    }


if __name__ == "__main__":
    B, T, H, VOCAB = 4, 8, 32, 20
    key = jax.random.PRNGKey(0)
    pkey, ikey = jax.random.split(key)
    params = make_params(pkey, VOCAB, H)

    lengths = jnp.array([6, 5, 7, 3], dtype=jnp.int32)   # max < T -> exercises padding
    input_ids = jax.random.randint(ikey, (B, T), 1, VOCAB, dtype=jnp.int32)
    # zero (pad token) beyond each sequence length, as in real padded batches
    pad_mask = jnp.arange(T)[None, :] < lengths[:, None]
    input_ids = jnp.where(pad_mask, input_ids, 0)

    output, (hid_h, hid_c) = jax.jit(encoder_forward)(input_ids, lengths, params)
    jax.block_until_ready((output, hid_h, hid_c))

    ref_out, ref_hh, ref_hc = encoder_reference(input_ids, lengths, params)
    # Tolerance loosened vs. the f32 kernel: MXU operands are bf16 now.
    assert np.allclose(np.asarray(output), ref_out, atol=2e-2), "output mismatch"
    assert np.allclose(np.asarray(hid_h), ref_hh, atol=2e-2), "hidden-h mismatch"
    assert np.allclose(np.asarray(hid_c), ref_hc, atol=2e-2), "hidden-c mismatch"

    print("KERNEL_OK")
</pallas_src>

<mosaic_0001>
module attributes {stable_mosaic.version = 11 : i64} {
  func.func @kernel(%arg0: memref<64x128xbf16, #tpu.memory_space<vmem>>, %arg1: memref<8x1xi32, #tpu.memory_space<vmem>>, %arg2: memref<128x512xbf16, #tpu.memory_space<vmem>>, %arg3: memref<128x512xbf16, #tpu.memory_space<vmem>>, %arg4: memref<1x512xf32, #tpu.memory_space<vmem>>, %arg5: memref<1x512xf32, #tpu.memory_space<vmem>>, %arg6: memref<128x512xbf16, #tpu.memory_space<vmem>>, %arg7: memref<128x512xbf16, #tpu.memory_space<vmem>>, %arg8: memref<128x128xbf16, #tpu.memory_space<vmem>>, %arg9: memref<128x128xbf16, #tpu.memory_space<vmem>>, %arg10: memref<128x128xbf16, #tpu.memory_space<vmem>>, %arg11: memref<128x128xbf16, #tpu.memory_space<vmem>>, %arg12: memref<128x128xbf16, #tpu.memory_space<vmem>>, %arg13: memref<128x128xbf16, #tpu.memory_space<vmem>>, %arg14: memref<64x128xf32, #tpu.memory_space<vmem>>, %arg15: memref<8x128xf32, #tpu.memory_space<vmem>>, %arg16: memref<8x128xf32, #tpu.memory_space<vmem>>, %arg17: memref<64x512xf32, #tpu.memory_space<vmem>>, %arg18: memref<64x512xf32, #tpu.memory_space<vmem>>, %arg19: memref<64x128xf32, #tpu.memory_space<vmem>>, %arg20: memref<64x128xf32, #tpu.memory_space<vmem>>) attributes {dimension_semantics = [], scalar_prefetch = 0 : i64, scratch_operands = 4 : i64, tpu.core_type = #tpu.core_type<tc>} {
    %c0 = arith.constant 0 : index
    %c0_0 = arith.constant 0 : index
    %0 = vector.load %arg0[%c0, %c0_0] : memref<64x128xbf16, #tpu.memory_space<vmem>>, vector<64x128xbf16>
    %c0_1 = arith.constant 0 : index
    %c0_2 = arith.constant 0 : index
    %1 = vector.load %arg2[%c0_1, %c0_2] : memref<128x512xbf16, #tpu.memory_space<vmem>>, vector<128x512xbf16>
    %cst = arith.constant dense<0.000000e+00> : vector<64x512xf32>
    %2 = tpu.matmul %0, %1, %cst {dimension_numbers = #tpu.dot_dimension_numbers<[1], [0], [0], [1], [0, 0, 1, 1], [], []>} : vector<64x128xbf16>, vector<128x512xbf16>, vector<64x512xf32> -> vector<64x512xf32>
    %c0_3 = arith.constant 0 : index
    %c0_4 = arith.constant 0 : index
    %3 = vector.load %arg4[%c0_3, %c0_4] : memref<1x512xf32, #tpu.memory_space<vmem>>, vector<1x512xf32>
    %4 = vector.broadcast %3 : vector<1x512xf32> to vector<64x512xf32>
    %5 = arith.addf %2, %4 : vector<64x512xf32>
    %c0_5 = arith.constant 0 : index
    %c0_6 = arith.constant 0 : index
    %6 = vector.load %arg17[%c0_5, %c0_6] : memref<64x512xf32, #tpu.memory_space<vmem>>, vector<64x512xf32>
    tpu.vector_store %arg17[%c0_5, %c0_6], %5 {strides = array<i32>} : memref<64x512xf32, #tpu.memory_space<vmem>>, vector<64x512xf32>,
    %c0_7 = arith.constant 0 : index
    %c0_8 = arith.constant 0 : index
    %7 = vector.load %arg3[%c0_7, %c0_8] : memref<128x512xbf16, #tpu.memory_space<vmem>>, vector<128x512xbf16>
    %cst_9 = arith.constant dense<0.000000e+00> : vector<64x512xf32>
    %8 = tpu.matmul %0, %7, %cst_9 {dimension_numbers = #tpu.dot_dimension_numbers<[1], [0], [0], [1], [0, 0, 1, 1], [], []>} : vector<64x128xbf16>, vector<128x512xbf16>, vector<64x512xf32> -> vector<64x512xf32>
    %c0_10 = arith.constant 0 : index
    %c0_11 = arith.constant 0 : index
    %9 = vector.load %arg5[%c0_10, %c0_11] : memref<1x512xf32, #tpu.memory_space<vmem>>, vector<1x512xf32>
    %10 = vector.broadcast %9 : vector<1x512xf32> to vector<64x512xf32>
    %11 = arith.addf %8, %10 : vector<64x512xf32>
    %c0_12 = arith.constant 0 : index
    %c0_13 = arith.constant 0 : index
    %12 = vector.load %arg18[%c0_12, %c0_13] : memref<64x512xf32, #tpu.memory_space<vmem>>, vector<64x512xf32>
    tpu.vector_store %arg18[%c0_12, %c0_13], %11 {strides = array<i32>} : memref<64x512xf32, #tpu.memory_space<vmem>>, vector<64x512xf32>,
    %c0_14 = arith.constant 0 : index
    %c0_15 = arith.constant 0 : index
    %13 = vector.load %arg1[%c0_14, %c0_15] : memref<8x1xi32, #tpu.memory_space<vmem>>, vector<8x1xi32>
    %cst_16 = arith.constant 0.000000e+00 : f32
    %14 = vector.broadcast %cst_16 : f32 to vector<8x128xf32>
    %c0_i32 = arith.constant 0 : i32
    %c7_i32 = arith.constant 7 : i32
    %15 = arith.subi %c7_i32, %c0_i32 : i32
    %c8_i32 = arith.constant 8 : i32
    %16 = arith.muli %c0_i32, %c8_i32 : i32
    %17 = tpu.assume_multiple %16, 8 : i32
    %c8_i32_17 = arith.constant 8 : i32
    %18 = arith.muli %15, %c8_i32_17 : i32
    %19 = tpu.assume_multiple %18, 8 : i32
    %20 = vector.broadcast %c0_i32 : i32 to vector<8x1xi32>
    %21 = arith.cmpi sgt, %13, %20 : vector<8x1xi32>
    %22 = arith.extui %21 : vector<8x1xi1> to vector<8x1xi32>
    %23 = arith.sitofp %22 : vector<8x1xi32> to vector<8x1xf32>
    %24 = vector.broadcast %15 : i32 to vector<8x1xi32>
    %25 = arith.cmpi sgt, %13, %24 : vector<8x1xi32>
    %26 = arith.extui %25 : vector<8x1xi1> to vector<8x1xi32>
    %27 = arith.sitofp %26 : vector<8x1xi32> to vector<8x1xf32>
    %28 = arith.index_cast %17 : i32 to index
    %c0_18 = arith.constant 0 : index
    %29 = vector.load %arg17[%28, %c0_18] : memref<64x512xf32, #tpu.memory_space<vmem>>, vector<8x512xf32>
    %30 = arith.truncf %14 : vector<8x128xf32> to vector<8x128xbf16>
    %c0_19 = arith.constant 0 : index
    %c0_20 = arith.constant 0 : index
    %31 = vector.load %arg6[%c0_19, %c0_20] : memref<128x512xbf16, #tpu.memory_space<vmem>>, vector<128x512xbf16>
    %cst_21 = arith.constant dense<0.000000e+00> : vector<8x512xf32>
    %32 = tpu.matmul %30, %31, %cst_21 {dimension_numbers = #tpu.dot_dimension_numbers<[1], [0], [0], [1], [0, 0, 1, 1], [], []>} : vector<8x128xbf16>, vector<128x512xbf16>, vector<8x512xf32> -> vector<8x512xf32>
    %33 = arith.addf %29, %32 : vector<8x512xf32>
    %34 = vector.extract_strided_slice %33 {offsets = [0, 0], sizes = [8, 128], strides = [1, 1]} : vector<8x512xf32> to vector<8x128xf32>
    %35 = arith.negf %34 : vector<8x128xf32>
    %36 = math.exp %35 : vector<8x128xf32>
    %cst_22 = arith.constant 1.000000e+00 : f32
    %37 = vector.broadcast %cst_22 : f32 to vector<8x128xf32>
    %38 = arith.addf %37, %36 : vector<8x128xf32>
    %39 = arith.divf %37, %38 : vector<8x128xf32>
    %40 = vector.extract_strided_slice %33 {offsets = [0, 128], sizes = [8, 128], strides = [1, 1]} : vector<8x512xf32> to vector<8x128xf32>
    %41 = arith.negf %40 : vector<8x128xf32>
    %42 = math.exp %41 : vector<8x128xf32>
    %cst_23 = arith.constant 1.000000e+00 : f32
    %43 = vector.broadcast %cst_23 : f32 to vector<8x128xf32>
    %44 = arith.addf %43, %42 : vector<8x128xf32>
    %45 = arith.divf %43, %44 : vector<8x128xf32>
    %46 = vector.extract_strided_slice %33 {offsets = [0, 256], sizes = [8, 128], strides = [1, 1]} : vector<8x512xf32> to vector<8x128xf32>
    %47 = math.tanh %46 : vector<8x128xf32>
    %48 = vector.extract_strided_slice %33 {offsets = [0, 384], sizes = [8, 128], strides = [1, 1]} : vector<8x512xf32> to vector<8x128xf32>
    %49 = arith.negf %48 : vector<8x128xf32>
    %50 = math.exp %49 : vector<8x128xf32>
    %cst_24 = arith.constant 1.000000e+00 : f32
    %51 = vector.broadcast %cst_24 : f32 to vector<8x128xf32>
    %52 = arith.addf %51, %50 : vector<8x128xf32>
    %53 = arith.divf %51, %52 : vector<8x128xf32>
    %54 = arith.mulf %45, %14 : vector<8x128xf32>
    %55 = arith.mulf %39, %47 : vector<8x128xf32>
    %56 = arith.addf %54, %55 : vector<8x128xf32>
    %57 = math.tanh %56 : vector<8x128xf32>
    %58 = arith.mulf %53, %57 : vector<8x128xf32>
    %59 = vector.broadcast %23 : vector<8x1xf32> to vector<8x128xf32>
    %60 = arith.mulf %59, %58 : vector<8x128xf32>
    %61 = arith.index_cast %17 : i32 to index
    %c0_25 = arith.constant 0 : index
    %62 = vector.load %arg19[%61, %c0_25] : memref<64x128xf32, #tpu.memory_space<vmem>>, vector<8x128xf32>
    tpu.vector_store %arg19[%61, %c0_25], %60 {strides = array<i32>} : memref<64x128xf32, #tpu.memory_space<vmem>>, vector<8x128xf32>,
    %63 = arith.subf %58, %14 : vector<8x128xf32>
    %64 = vector.broadcast %23 : vector<8x1xf32> to vector<8x128xf32>
    %65 = arith.mulf %64, %63 : vector<8x128xf32>
    %66 = arith.addf %14, %65 : vector<8x128xf32>
    %67 = arith.subf %56, %14 : vector<8x128xf32>
    %68 = vector.broadcast %23 : vector<8x1xf32> to vector<8x128xf32>
    %69 = arith.mulf %68, %67 : vector<8x128xf32>
    %70 = arith.addf %14, %69 : vector<8x128xf32>
    %71 = arith.index_cast %19 : i32 to index
    %c0_26 = arith.constant 0 : index
    %72 = vector.load %arg18[%71, %c0_26] : memref<64x512xf32, #tpu.memory_space<vmem>>, vector<8x512xf32>
    %73 = arith.truncf %14 : vector<8x128xf32> to vector<8x128xbf16>
    %c0_27 = arith.constant 0 : index
    %c0_28 = arith.constant 0 : index
    %74 = vector.load %arg7[%c0_27, %c0_28] : memref<128x512xbf16, #tpu.memory_space<vmem>>, vector<128x512xbf16>
    %cst_29 = arith.constant dense<0.000000e+00> : vector<8x512xf32>
    %75 = tpu.matmul %73, %74, %cst_29 {dimension_numbers = #tpu.dot_dimension_numbers<[1], [0], [0], [1], [0, 0, 1, 1], [], []>} : vector<8x128xbf16>, vector<128x512xbf16>, vector<8x512xf32> -> vector<8x512xf32>
    %76 = arith.addf %72, %75 : vector<8x512xf32>
    %77 = vector.extract_strided_slice %76 {offsets = [0, 0], sizes = [8, 128], strides = [1, 1]} : vector<8x512xf32> to vector<8x128xf32>
    %78 = arith.negf %77 : vector<8x128xf32>
    %79 = math.exp %78 : vector<8x128xf32>
    %cst_30 = arith.constant 1.000000e+00 : f32
    %80 = vector.broadcast %cst_30 : f32 to vector<8x128xf32>
    %81 = arith.addf %80, %79 : vector<8x128xf32>
    %82 = arith.divf %80, %81 : vector<8x128xf32>
    %83 = vector.extract_strided_slice %76 {offsets = [0, 128], sizes = [8, 128], strides = [1, 1]} : vector<8x512xf32> to vector<8x128xf32>
    %84 = arith.negf %83 : vector<8x128xf32>
    %85 = math.exp %84 : vector<8x128xf32>
    %cst_31 = arith.constant 1.000000e+00 : f32
    %86 = vector.broadcast %cst_31 : f32 to vector<8x128xf32>
    %87 = arith.addf %86, %85 : vector<8x128xf32>
    %88 = arith.divf %86, %87 : vector<8x128xf32>
    %89 = vector.extract_strided_slice %76 {offsets = [0, 256], sizes = [8, 128], strides = [1, 1]} : vector<8x512xf32> to vector<8x128xf32>
    %90 = math.tanh %89 : vector<8x128xf32>
    %91 = vector.extract_strided_slice %76 {offsets = [0, 384], sizes = [8, 128], strides = [1, 1]} : vector<8x512xf32> to vector<8x128xf32>
    %92 = arith.negf %91 : vector<8x128xf32>
    %93 = math.exp %92 : vector<8x128xf32>
    %cst_32 = arith.constant 1.000000e+00 : f32
    %94 = vector.broadcast %cst_32 : f32 to vector<8x128xf32>
    %95 = arith.addf %94, %93 : vector<8x128xf32>
    %96 = arith.divf %94, %95 : vector<8x128xf32>
    %97 = arith.mulf %88, %14 : vector<8x128xf32>
    %98 = arith.mulf %82, %90 : vector<8x128xf32>
    %99 = arith.addf %97, %98 : vector<8x128xf32>
    %100 = math.tanh %99 : vector<8x128xf32>
    %101 = arith.mulf %96, %100 : vector<8x128xf32>
    %102 = vector.broadcast %27 : vector<8x1xf32> to vector<8x128xf32>
    %103 = arith.mulf %102, %101 : vector<8x128xf32>
    %104 = arith.index_cast %19 : i32 to index
    %c0_33 = arith.constant 0 : index
    %105 = vector.load %arg20[%104, %c0_33] : memref<64x128xf32, #tpu.memory_space<vmem>>, vector<8x128xf32>
    tpu.vector_store %arg20[%104, %c0_33], %103 {strides = array<i32>} : memref<64x128xf32, #tpu.memory_space<vmem>>, vector<8x128xf32>,
    %106 = arith.subf %101, %14 : vector<8x128xf32>
    %107 = vector.broadcast %27 : vector<8x1xf32> to vector<8x128xf32>
    %108 = arith.mulf %107, %106 : vector<8x128xf32>
    %109 = arith.addf %14, %108 : vector<8x128xf32>
    %110 = arith.subf %99, %14 : vector<8x128xf32>
    %111 = vector.broadcast %27 : vector<8x1xf32> to vector<8x128xf32>
    %112 = arith.mulf %111, %110 : vector<8x128xf32>
    %113 = arith.addf %14, %112 : vector<8x128xf32>
    %c1_i32 = arith.constant 1 : i32
    %c7_i32_34 = arith.constant 7 : i32
    %114 = arith.subi %c7_i32_34, %c1_i32 : i32
    %c8_i32_35 = arith.constant 8 : i32
    %115 = arith.muli %c1_i32, %c8_i32_35 : i32
    %116 = tpu.assume_multiple %115, 8 : i32
    %c8_i32_36 = arith.constant 8 : i32
    %117 = arith.muli %114, %c8_i32_36 : i32
    %118 = tpu.assume_multiple %117, 8 : i32
    %119 = vector.broadcast %c1_i32 : i32 to vector<8x1xi32>
    %120 = arith.cmpi sgt, %13, %119 : vector<8x1xi32>
    %121 = arith.extui %120 : vector<8x1xi1> to vector<8x1xi32>
    %122 = arith.sitofp %121 : vector<8x1xi32> to vector<8x1xf32>
    %123 = vector.broadcast %114 : i32 to vector<8x1xi32>
    %124 = arith.cmpi sgt, %13, %123 : vector<8x1xi32>
    %125 = arith.extui %124 : vector<8x1xi1> to vector<8x1xi32>
    %126 = arith.sitofp %125 : vector<8x1xi32> to vector<8x1xf32>
    %127 = arith.index_cast %116 : i32 to index
    %c0_37 = arith.constant 0 : index
    %128 = vector.load %arg17[%127, %c0_37] : memref<64x512xf32, #tpu.memory_space<vmem>>, vector<8x512xf32>
    %129 = arith.truncf %66 : vector<8x128xf32> to vector<8x128xbf16>
    %c0_38 = arith.constant 0 : index
    %c0_39 = arith.constant 0 : index
    %130 = vector.load %arg6[%c0_38, %c0_39] : memref<128x512xbf16, #tpu.memory_space<vmem>>, vector<128x512xbf16>
    %cst_40 = arith.constant dense<0.000000e+00> : vector<8x512xf32>
    %131 = tpu.matmul %129, %130, %cst_40 {dimension_numbers = #tpu.dot_dimension_numbers<[1], [0], [0], [1], [0, 0, 1, 1], [], []>} : vector<8x128xbf16>, vector<128x512xbf16>, vector<8x512xf32> -> vector<8x512xf32>
    %132 = arith.addf %128, %131 : vector<8x512xf32>
    %133 = vector.extract_strided_slice %132 {offsets = [0, 0], sizes = [8, 128], strides = [1, 1]} : vector<8x512xf32> to vector<8x128xf32>
    %134 = arith.negf %133 : vector<8x128xf32>
    %135 = math.exp %134 : vector<8x128xf32>
    %cst_41 = arith.constant 1.000000e+00 : f32
    %136 = vector.broadcast %cst_41 : f32 to vector<8x128xf32>
    %137 = arith.addf %136, %135 : vector<8x128xf32>
    %138 = arith.divf %136, %137 : vector<8x128xf32>
    %139 = vector.extract_strided_slice %132 {offsets = [0, 128], sizes = [8, 128], strides = [1, 1]} : vector<8x512xf32> to vector<8x128xf32>
    %140 = arith.negf %139 : vector<8x128xf32>
    %141 = math.exp %140 : vector<8x128xf32>
    %cst_42 = arith.constant 1.000000e+00 : f32
    %142 = vector.broadcast %cst_42 : f32 to vector<8x128xf32>
    %143 = arith.addf %142, %141 : vector<8x128xf32>
    %144 = arith.divf %142, %143 : vector<8x128xf32>
    %145 = vector.extract_strided_slice %132 {offsets = [0, 256], sizes = [8, 128], strides = [1, 1]} : vector<8x512xf32> to vector<8x128xf32>
    %146 = math.tanh %145 : vector<8x128xf32>
    %147 = vector.extract_strided_slice %132 {offsets = [0, 384], sizes = [8, 128], strides = [1, 1]} : vector<8x512xf32> to vector<8x128xf32>
    %148 = arith.negf %147 : vector<8x128xf32>
    %149 = math.exp %148 : vector<8x128xf32>
    %cst_43 = arith.constant 1.000000e+00 : f32
    %150 = vector.broadcast %cst_43 : f32 to vector<8x128xf32>
    %151 = arith.addf %150, %149 : vector<8x128xf32>
    %152 = arith.divf %150, %151 : vector<8x128xf32>
    %153 = arith.mulf %144, %70 : vector<8x128xf32>
    %154 = arith.mulf %138, %146 : vector<8x128xf32>
    %155 = arith.addf %153, %154 : vector<8x128xf32>
    %156 = math.tanh %155 : vector<8x128xf32>
    %157 = arith.mulf %152, %156 : vector<8x128xf32>
    %158 = vector.broadcast %122 : vector<8x1xf32> to vector<8x128xf32>
    %159 = arith.mulf %158, %157 : vector<8x128xf32>
    %160 = arith.index_cast %116 : i32 to index
    %c0_44 = arith.constant 0 : index
    %161 = vector.load %arg19[%160, %c0_44] : memref<64x128xf32, #tpu.memory_space<vmem>>, vector<8x128xf32>
    tpu.vector_store %arg19[%160, %c0_44], %159 {strides = array<i32>} : memref<64x128xf32, #tpu.memory_space<vmem>>, vector<8x128xf32>,
    %162 = arith.subf %157, %66 : vector<8x128xf32>
    %163 = vector.broadcast %122 : vector<8x1xf32> to vector<8x128xf32>
    %164 = arith.mulf %163, %162 : vector<8x128xf32>
    %165 = arith.addf %66, %164 : vector<8x128xf32>
    %166 = arith.subf %155, %70 : vector<8x128xf32>
    %167 = vector.broadcast %122 : vector<8x1xf32> to vector<8x128xf32>
    %168 = arith.mulf %167, %166 : vector<8x128xf32>
    %169 = arith.addf %70, %168 : vector<8x128xf32>
    %170 = arith.index_cast %118 : i32 to index
    %c0_45 = arith.constant 0 : index
    %171 = vector.load %arg18[%170, %c0_45] : memref<64x512xf32, #tpu.memory_space<vmem>>, vector<8x512xf32>
    %172 = arith.truncf %109 : vector<8x128xf32> to vector<8x128xbf16>
    %c0_46 = arith.constant 0 : index
    %c0_47 = arith.constant 0 : index
    %173 = vector.load %arg7[%c0_46, %c0_47] : memref<128x512xbf16, #tpu.memory_space<vmem>>, vector<128x512xbf16>
    %cst_48 = arith.constant dense<0.000000e+00> : vector<8x512xf32>
    %174 = tpu.matmul %172, %173, %cst_48 {dimension_numbers = #tpu.dot_dimension_numbers<[1], [0], [0], [1], [0, 0, 1, 1], [], []>} : vector<8x128xbf16>, vector<128x512xbf16>, vector<8x512xf32> -> vector<8x512xf32>
    %175 = arith.addf %171, %174 : vector<8x512xf32>
    %176 = vector.extract_strided_slice %175 {offsets = [0, 0], sizes = [8, 128], strides = [1, 1]} : vector<8x512xf32> to vector<8x128xf32>
    %177 = arith.negf %176 : vector<8x128xf32>
    %178 = math.exp %177 : vector<8x128xf32>
    %cst_49 = arith.constant 1.000000e+00 : f32
    %179 = vector.broadcast %cst_49 : f32 to vector<8x128xf32>
    %180 = arith.addf %179, %178 : vector<8x128xf32>
    %181 = arith.divf %179, %180 : vector<8x128xf32>
    %182 = vector.extract_strided_slice %175 {offsets = [0, 128], sizes = [8, 128], strides = [1, 1]} : vector<8x512xf32> to vector<8x128xf32>
    %183 = arith.negf %182 : vector<8x128xf32>
    %184 = math.exp %183 : vector<8x128xf32>
    %cst_50 = arith.constant 1.000000e+00 : f32
    %185 = vector.broadcast %cst_50 : f32 to vector<8x128xf32>
    %186 = arith.addf %185, %184 : vector<8x128xf32>
    %187 = arith.divf %185, %186 : vector<8x128xf32>
    %188 = vector.extract_strided_slice %175 {offsets = [0, 256], sizes = [8, 128], strides = [1, 1]} : vector<8x512xf32> to vector<8x128xf32>
    %189 = math.tanh %188 : vector<8x128xf32>
    %190 = vector.extract_strided_slice %175 {offsets = [0, 384], sizes = [8, 128], strides = [1, 1]} : vector<8x512xf32> to vector<8x128xf32>
    %191 = arith.negf %190 : vector<8x128xf32>
    %192 = math.exp %191 : vector<8x128xf32>
    %cst_51 = arith.constant 1.000000e+00 : f32
    %193 = vector.broadcast %cst_51 : f32 to vector<8x128xf32>
    %194 = arith.addf %193, %192 : vector<8x128xf32>
    %195 = arith.divf %193, %194 : vector<8x128xf32>
    %196 = arith.mulf %187, %113 : vector<8x128xf32>
    %197 = arith.mulf %181, %189 : vector<8x128xf32>
    %198 = arith.addf %196, %197 : vector<8x128xf32>
    %199 = math.tanh %198 : vector<8x128xf32>
    %200 = arith.mulf %195, %199 : vector<8x128xf32>
    %201 = vector.broadcast %126 : vector<8x1xf32> to vector<8x128xf32>
    %202 = arith.mulf %201, %200 : vector<8x128xf32>
    %203 = arith.index_cast %118 : i32 to index
    %c0_52 = arith.constant 0 : index
    %204 = vector.load %arg20[%203, %c0_52] : memref<64x128xf32, #tpu.memory_space<vmem>>, vector<8x128xf32>
    tpu.vector_store %arg20[%203, %c0_52], %202 {strides = array<i32>} : memref<64x128xf32, #tpu.memory_space<vmem>>, vector<8x128xf32>,
    %205 = arith.subf %200, %109 : vector<8x128xf32>
    %206 = vector.broadcast %126 : vector<8x1xf32> to vector<8x128xf32>
    %207 = arith.mulf %206, %205 : vector<8x128xf32>
    %208 = arith.addf %109, %207 : vector<8x128xf32>
    %209 = arith.subf %198, %113 : vector<8x128xf32>
    %210 = vector.broadcast %126 : vector<8x1xf32> to vector<8x128xf32>
    %211 = arith.mulf %210, %209 : vector<8x128xf32>
    %212 = arith.addf %113, %211 : vector<8x128xf32>
    %c2_i32 = arith.constant 2 : i32
    %c7_i32_53 = arith.constant 7 : i32
    %213 = arith.subi %c7_i32_53, %c2_i32 : i32
    %c8_i32_54 = arith.constant 8 : i32
    %214 = arith.muli %c2_i32, %c8_i32_54 : i32
    %215 = tpu.assume_multiple %214, 8 : i32
    %c8_i32_55 = arith.constant 8 : i32
    %216 = arith.muli %213, %c8_i32_55 : i32
    %217 = tpu.assume_multiple %216, 8 : i32
    %218 = vector.broadcast %c2_i32 : i32 to vector<8x1xi32>
    %219 = arith.cmpi sgt, %13, %218 : vector<8x1xi32>
    %220 = arith.extui %219 : vector<8x1xi1> to vector<8x1xi32>
    %221 = arith.sitofp %220 : vector<8x1xi32> to vector<8x1xf32>
    %222 = vector.broadcast %213 : i32 to vector<8x1xi32>
    %223 = arith.cmpi sgt, %13, %222 : vector<8x1xi32>
    %224 = arith.extui %223 : vector<8x1xi1> to vector<8x1xi32>
    %225 = arith.sitofp %224 : vector<8x1xi32> to vector<8x1xf32>
    %226 = arith.index_cast %215 : i32 to index
    %c0_56 = arith.constant 0 : index
    %227 = vector.load %arg17[%226, %c0_56] : memref<64x512xf32, #tpu.memory_space<vmem>>, vector<8x512xf32>
    %228 = arith.truncf %165 : vector<8x128xf32> to vector<8x128xbf16>
    %c0_57 = arith.constant 0 : index
    %c0_58 = arith.constant 0 : index
    %229 = vector.load %arg6[%c0_57, %c0_58] : memref<128x512xbf16, #tpu.memory_space<vmem>>, vector<128x512xbf16>
    %cst_59 = arith.constant dense<0.000000e+00> : vector<8x512xf32>
    %230 = tpu.matmul %228, %229, %cst_59 {dimension_numbers = #tpu.dot_dimension_numbers<[1], [0], [0], [1], [0, 0, 1, 1], [], []>} : vector<8x128xbf16>, vector<128x512xbf16>, vector<8x512xf32> -> vector<8x512xf32>
    %231 = arith.addf %227, %230 : vector<8x512xf32>
    %232 = vector.extract_strided_slice %231 {offsets = [0, 0], sizes = [8, 128], strides = [1, 1]} : vector<8x512xf32> to vector<8x128xf32>
    %233 = arith.negf %232 : vector<8x128xf32>
    %234 = math.exp %233 : vector<8x128xf32>
    %cst_60 = arith.constant 1.000000e+00 : f32
    %235 = vector.broadcast %cst_60 : f32 to vector<8x128xf32>
    %236 = arith.addf %235, %234 : vector<8x128xf32>
    %237 = arith.divf %235, %236 : vector<8x128xf32>
    %238 = vector.extract_strided_slice %231 {offsets = [0, 128], sizes = [8, 128], strides = [1, 1]} : vector<8x512xf32> to vector<8x128xf32>
    %239 = arith.negf %238 : vector<8x128xf32>
    %240 = math.exp %239 : vector<8x128xf32>
    %cst_61 = arith.constant 1.000000e+00 : f32
    %241 = vector.broadcast %cst_61 : f32 to vector<8x128xf32>
    %242 = arith.addf %241, %240 : vector<8x128xf32>
    %243 = arith.divf %241, %242 : vector<8x128xf32>
    %244 = vector.extract_strided_slice %231 {offsets = [0, 256], sizes = [8, 128], strides = [1, 1]} : vector<8x512xf32> to vector<8x128xf32>
    %245 = math.tanh %244 : vector<8x128xf32>
    %246 = vector.extract_strided_slice %231 {offsets = [0, 384], sizes = [8, 128], strides = [1, 1]} : vector<8x512xf32> to vector<8x128xf32>
    %247 = arith.negf %246 : vector<8x128xf32>
    %248 = math.exp %247 : vector<8x128xf32>
    %cst_62 = arith.constant 1.000000e+00 : f32
    %249 = vector.broadcast %cst_62 : f32 to vector<8x128xf32>
    %250 = arith.addf %249, %248 : vector<8x128xf32>
    %251 = arith.divf %249, %250 : vector<8x128xf32>
    %252 = arith.mulf %243, %169 : vector<8x128xf32>
    %253 = arith.mulf %237, %245 : vector<8x128xf32>
    %254 = arith.addf %252, %253 : vector<8x128xf32>
    %255 = math.tanh %254 : vector<8x128xf32>
    %256 = arith.mulf %251, %255 : vector<8x128xf32>
    %257 = vector.broadcast %221 : vector<8x1xf32> to vector<8x128xf32>
    %258 = arith.mulf %257, %256 : vector<8x128xf32>
    %259 = arith.index_cast %215 : i32 to index
    %c0_63 = arith.constant 0 : index
    %260 = vector.load %arg19[%259, %c0_63] : memref<64x128xf32, #tpu.memory_space<vmem>>, vector<8x128xf32>
    tpu.vector_store %arg19[%259, %c0_63], %258 {strides = array<i32>} : memref<64x128xf32, #tpu.memory_space<vmem>>, vector<8x128xf32>,
    %261 = arith.subf %256, %165 : vector<8x128xf32>
    %262 = vector.broadcast %221 : vector<8x1xf32> to vector<8x128xf32>
    %263 = arith.mulf %262, %261 : vector<8x128xf32>
    %264 = arith.addf %165, %263 : vector<8x128xf32>
    %265 = arith.subf %254, %169 : vector<8x128xf32>
    %266 = vector.broadcast %221 : vector<8x1xf32> to vector<8x128xf32>
    %267 = arith.mulf %266, %265 : vector<8x128xf32>
    %268 = arith.addf %169, %267 : vector<8x128xf32>
    %269 = arith.index_cast %217 : i32 to index
    %c0_64 = arith.constant 0 : index
    %270 = vector.load %arg18[%269, %c0_64] : memref<64x512xf32, #tpu.memory_space<vmem>>, vector<8x512xf32>
    %271 = arith.truncf %208 : vector<8x128xf32> to vector<8x128xbf16>
    %c0_65 = arith.constant 0 : index
    %c0_66 = arith.constant 0 : index
    %272 = vector.load %arg7[%c0_65, %c0_66] : memref<128x512xbf16, #tpu.memory_space<vmem>>, vector<128x512xbf16>
    %cst_67 = arith.constant dense<0.000000e+00> : vector<8x512xf32>
    %273 = tpu.matmul %271, %272, %cst_67 {dimension_numbers = #tpu.dot_dimension_numbers<[1], [0], [0], [1], [0, 0, 1, 1], [], []>} : vector<8x128xbf16>, vector<128x512xbf16>, vector<8x512xf32> -> vector<8x512xf32>
    %274 = arith.addf %270, %273 : vector<8x512xf32>
    %275 = vector.extract_strided_slice %274 {offsets = [0, 0], sizes = [8, 128], strides = [1, 1]} : vector<8x512xf32> to vector<8x128xf32>
    %276 = arith.negf %275 : vector<8x128xf32>
    %277 = math.exp %276 : vector<8x128xf32>
    %cst_68 = arith.constant 1.000000e+00 : f32
    %278 = vector.broadcast %cst_68 : f32 to vector<8x128xf32>
    %279 = arith.addf %278, %277 : vector<8x128xf32>
    %280 = arith.divf %278, %279 : vector<8x128xf32>
    %281 = vector.extract_strided_slice %274 {offsets = [0, 128], sizes = [8, 128], strides = [1, 1]} : vector<8x512xf32> to vector<8x128xf32>
    %282 = arith.negf %281 : vector<8x128xf32>
    %283 = math.exp %282 : vector<8x128xf32>
    %cst_69 = arith.constant 1.000000e+00 : f32
    %284 = vector.broadcast %cst_69 : f32 to vector<8x128xf32>
    %285 = arith.addf %284, %283 : vector<8x128xf32>
    %286 = arith.divf %284, %285 : vector<8x128xf32>
    %287 = vector.extract_strided_slice %274 {offsets = [0, 256], sizes = [8, 128], strides = [1, 1]} : vector<8x512xf32> to vector<8x128xf32>
    %288 = math.tanh %287 : vector<8x128xf32>
    %289 = vector.extract_strided_slice %274 {offsets = [0, 384], sizes = [8, 128], strides = [1, 1]} : vector<8x512xf32> to vector<8x128xf32>
    %290 = arith.negf %289 : vector<8x128xf32>
    %291 = math.exp %290 : vector<8x128xf32>
    %cst_70 = arith.constant 1.000000e+00 : f32
    %292 = vector.broadcast %cst_70 : f32 to vector<8x128xf32>
    %293 = arith.addf %292, %291 : vector<8x128xf32>
    %294 = arith.divf %292, %293 : vector<8x128xf32>
    %295 = arith.mulf %286, %212 : vector<8x128xf32>
    %296 = arith.mulf %280, %288 : vector<8x128xf32>
    %297 = arith.addf %295, %296 : vector<8x128xf32>
    %298 = math.tanh %297 : vector<8x128xf32>
    %299 = arith.mulf %294, %298 : vector<8x128xf32>
    %300 = vector.broadcast %225 : vector<8x1xf32> to vector<8x128xf32>
    %301 = arith.mulf %300, %299 : vector<8x128xf32>
    %302 = arith.index_cast %217 : i32 to index
    %c0_71 = arith.constant 0 : index
    %303 = vector.load %arg20[%302, %c0_71] : memref<64x128xf32, #tpu.memory_space<vmem>>, vector<8x128xf32>
    tpu.vector_store %arg20[%302, %c0_71], %301 {strides = array<i32>} : memref<64x128xf32, #tpu.memory_space<vmem>>, vector<8x128xf32>,
    %304 = arith.subf %299, %208 : vector<8x128xf32>
    %305 = vector.broadcast %225 : vector<8x1xf32> to vector<8x128xf32>
    %306 = arith.mulf %305, %304 : vector<8x128xf32>
    %307 = arith.addf %208, %306 : vector<8x128xf32>
    %308 = arith.subf %297, %212 : vector<8x128xf32>
    %309 = vector.broadcast %225 : vector<8x1xf32> to vector<8x128xf32>
    %310 = arith.mulf %309, %308 : vector<8x128xf32>
    %311 = arith.addf %212, %310 : vector<8x128xf32>
    %c3_i32 = arith.constant 3 : i32
    %c7_i32_72 = arith.constant 7 : i32
    %312 = arith.subi %c7_i32_72, %c3_i32 : i32
    %c8_i32_73 = arith.constant 8 : i32
    %313 = arith.muli %c3_i32, %c8_i32_73 : i32
    %314 = tpu.assume_multiple %313, 8 : i32
    %c8_i32_74 = arith.constant 8 : i32
    %315 = arith.muli %312, %c8_i32_74 : i32
    %316 = tpu.assume_multiple %315, 8 : i32
    %317 = vector.broadcast %c3_i32 : i32 to vector<8x1xi32>
    %318 = arith.cmpi sgt, %13, %317 : vector<8x1xi32>
    %319 = arith.extui %318 : vector<8x1xi1> to vector<8x1xi32>
    %320 = arith.sitofp %319 : vector<8x1xi32> to vector<8x1xf32>
    %321 = vector.broadcast %312 : i32 to vector<8x1xi32>
    %322 = arith.cmpi sgt, %13, %321 : vector<8x1xi32>
    %323 = arith.extui %322 : vector<8x1xi1> to vector<8x1xi32>
    %324 = arith.sitofp %323 : vector<8x1xi32> to vector<8x1xf32>
    %325 = arith.index_cast %314 : i32 to index
    %c0_75 = arith.constant 0 : index
    %326 = vector.load %arg17[%325, %c0_75] : memref<64x512xf32, #tpu.memory_space<vmem>>, vector<8x512xf32>
    %327 = arith.truncf %264 : vector<8x128xf32> to vector<8x128xbf16>
    %c0_76 = arith.constant 0 : index
    %c0_77 = arith.constant 0 : index
    %328 = vector.load %arg6[%c0_76, %c0_77] : memref<128x512xbf16, #tpu.memory_space<vmem>>, vector<128x512xbf16>
    %cst_78 = arith.constant dense<0.000000e+00> : vector<8x512xf32>
    %329 = tpu.matmul %327, %328, %cst_78 {dimension_numbers = #tpu.dot_dimension_numbers<[1], [0], [0], [1], [0, 0, 1, 1], [], []>} : vector<8x128xbf16>, vector<128x512xbf16>, vector<8x512xf32> -> vector<8x512xf32>
    %330 = arith.addf %326, %329 : vector<8x512xf32>
    %331 = vector.extract_strided_slice %330 {offsets = [0, 0], sizes = [8, 128], strides = [1, 1]} : vector<8x512xf32> to vector<8x128xf32>
    %332 = arith.negf %331 : vector<8x128xf32>
    %333 = math.exp %332 : vector<8x128xf32>
    %cst_79 = arith.constant 1.000000e+00 : f32
    %334 = vector.broadcast %cst_79 : f32 to vector<8x128xf32>
    %335 = arith.addf %334, %333 : vector<8x128xf32>
    %336 = arith.divf %334, %335 : vector<8x128xf32>
    %337 = vector.extract_strided_slice %330 {offsets = [0, 128], sizes = [8, 128], strides = [1, 1]} : vector<8x512xf32> to vector<8x128xf32>
    %338 = arith.negf %337 : vector<8x128xf32>
    %339 = math.exp %338 : vector<8x128xf32>
    %cst_80 = arith.constant 1.000000e+00 : f32
    %340 = vector.broadcast %cst_80 : f32 to vector<8x128xf32>
    %341 = arith.addf %340, %339 : vector<8x128xf32>
    %342 = arith.divf %340, %341 : vector<8x128xf32>
    %343 = vector.extract_strided_slice %330 {offsets = [0, 256], sizes = [8, 128], strides = [1, 1]} : vector<8x512xf32> to vector<8x128xf32>
    %344 = math.tanh %343 : vector<8x128xf32>
    %345 = vector.extract_strided_slice %330 {offsets = [0, 384], sizes = [8, 128], strides = [1, 1]} : vector<8x512xf32> to vector<8x128xf32>
    %346 = arith.negf %345 : vector<8x128xf32>
    %347 = math.exp %346 : vector<8x128xf32>
    %cst_81 = arith.constant 1.000000e+00 : f32
    %348 = vector.broadcast %cst_81 : f32 to vector<8x128xf32>
    %349 = arith.addf %348, %347 : vector<8x128xf32>
    %350 = arith.divf %348, %349 : vector<8x128xf32>
    %351 = arith.mulf %342, %268 : vector<8x128xf32>
    %352 = arith.mulf %336, %344 : vector<8x128xf32>
    %353 = arith.addf %351, %352 : vector<8x128xf32>
    %354 = math.tanh %353 : vector<8x128xf32>
    %355 = arith.mulf %350, %354 : vector<8x128xf32>
    %356 = vector.broadcast %320 : vector<8x1xf32> to vector<8x128xf32>
    %357 = arith.mulf %356, %355 : vector<8x128xf32>
    %358 = arith.index_cast %314 : i32 to index
    %c0_82 = arith.constant 0 : index
    %359 = vector.load %arg19[%358, %c0_82] : memref<64x128xf32, #tpu.memory_space<vmem>>, vector<8x128xf32>
    tpu.vector_store %arg19[%358, %c0_82], %357 {strides = array<i32>} : memref<64x128xf32, #tpu.memory_space<vmem>>, vector<8x128xf32>,
    %360 = arith.subf %355, %264 : vector<8x128xf32>
    %361 = vector.broadcast %320 : vector<8x1xf32> to vector<8x128xf32>
    %362 = arith.mulf %361, %360 : vector<8x128xf32>
    %363 = arith.addf %264, %362 : vector<8x128xf32>
    %364 = arith.subf %353, %268 : vector<8x128xf32>
    %365 = vector.broadcast %320 : vector<8x1xf32> to vector<8x128xf32>
    %366 = arith.mulf %365, %364 : vector<8x128xf32>
    %367 = arith.addf %268, %366 : vector<8x128xf32>
    %368 = arith.index_cast %316 : i32 to index
    %c0_83 = arith.constant 0 : index
    %369 = vector.load %arg18[%368, %c0_83] : memref<64x512xf32, #tpu.memory_space<vmem>>, vector<8x512xf32>
    %370 = arith.truncf %307 : vector<8x128xf32> to vector<8x128xbf16>
    %c0_84 = arith.constant 0 : index
    %c0_85 = arith.constant 0 : index
    %371 = vector.load %arg7[%c0_84, %c0_85] : memref<128x512xbf16, #tpu.memory_space<vmem>>, vector<128x512xbf16>
    %cst_86 = arith.constant dense<0.000000e+00> : vector<8x512xf32>
    %372 = tpu.matmul %370, %371, %cst_86 {dimension_numbers = #tpu.dot_dimension_numbers<[1], [0], [0], [1], [0, 0, 1, 1], [], []>} : vector<8x128xbf16>, vector<128x512xbf16>, vector<8x512xf32> -> vector<8x512xf32>
    %373 = arith.addf %369, %372 : vector<8x512xf32>
    %374 = vector.extract_strided_slice %373 {offsets = [0, 0], sizes = [8, 128], strides = [1, 1]} : vector<8x512xf32> to vector<8x128xf32>
    %375 = arith.negf %374 : vector<8x128xf32>
    %376 = math.exp %375 : vector<8x128xf32>
    %cst_87 = arith.constant 1.000000e+00 : f32
    %377 = vector.broadcast %cst_87 : f32 to vector<8x128xf32>
    %378 = arith.addf %377, %376 : vector<8x128xf32>
    %379 = arith.divf %377, %378 : vector<8x128xf32>
    %380 = vector.extract_strided_slice %373 {offsets = [0, 128], sizes = [8, 128], strides = [1, 1]} : vector<8x512xf32> to vector<8x128xf32>
    %381 = arith.negf %380 : vector<8x128xf32>
    %382 = math.exp %381 : vector<8x128xf32>
    %cst_88 = arith.constant 1.000000e+00 : f32
    %383 = vector.broadcast %cst_88 : f32 to vector<8x128xf32>
    %384 = arith.addf %383, %382 : vector<8x128xf32>
    %385 = arith.divf %383, %384 : vector<8x128xf32>
    %386 = vector.extract_strided_slice %373 {offsets = [0, 256], sizes = [8, 128], strides = [1, 1]} : vector<8x512xf32> to vector<8x128xf32>
    %387 = math.tanh %386 : vector<8x128xf32>
    %388 = vector.extract_strided_slice %373 {offsets = [0, 384], sizes = [8, 128], strides = [1, 1]} : vector<8x512xf32> to vector<8x128xf32>
    %389 = arith.negf %388 : vector<8x128xf32>
    %390 = math.exp %389 : vector<8x128xf32>
    %cst_89 = arith.constant 1.000000e+00 : f32
    %391 = vector.broadcast %cst_89 : f32 to vector<8x128xf32>
    %392 = arith.addf %391, %390 : vector<8x128xf32>
    %393 = arith.divf %391, %392 : vector<8x128xf32>
    %394 = arith.mulf %385, %311 : vector<8x128xf32>
    %395 = arith.mulf %379, %387 : vector<8x128xf32>
    %396 = arith.addf %394, %395 : vector<8x128xf32>
    %397 = math.tanh %396 : vector<8x128xf32>
    %398 = arith.mulf %393, %397 : vector<8x128xf32>
    %399 = vector.broadcast %324 : vector<8x1xf32> to vector<8x128xf32>
    %400 = arith.mulf %399, %398 : vector<8x128xf32>
    %401 = arith.index_cast %316 : i32 to index
    %c0_90 = arith.constant 0 : index
    %402 = vector.load %arg20[%401, %c0_90] : memref<64x128xf32, #tpu.memory_space<vmem>>, vector<8x128xf32>
    tpu.vector_store %arg20[%401, %c0_90], %400 {strides = array<i32>} : memref<64x128xf32, #tpu.memory_space<vmem>>, vector<8x128xf32>,
    %403 = arith.subf %398, %307 : vector<8x128xf32>
    %404 = vector.broadcast %324 : vector<8x1xf32> to vector<8x128xf32>
    %405 = arith.mulf %404, %403 : vector<8x128xf32>
    %406 = arith.addf %307, %405 : vector<8x128xf32>
    %407 = arith.subf %396, %311 : vector<8x128xf32>
    %408 = vector.broadcast %324 : vector<8x1xf32> to vector<8x128xf32>
    %409 = arith.mulf %408, %407 : vector<8x128xf32>
    %410 = arith.addf %311, %409 : vector<8x128xf32>
    %c4_i32 = arith.constant 4 : i32
    %c7_i32_91 = arith.constant 7 : i32
    %411 = arith.subi %c7_i32_91, %c4_i32 : i32
    %c8_i32_92 = arith.constant 8 : i32
    %412 = arith.muli %c4_i32, %c8_i32_92 : i32
    %413 = tpu.assume_multiple %412, 8 : i32
    %c8_i32_93 = arith.constant 8 : i32
    %414 = arith.muli %411, %c8_i32_93 : i32
    %415 = tpu.assume_multiple %414, 8 : i32
    %416 = vector.broadcast %c4_i32 : i32 to vector<8x1xi32>
    %417 = arith.cmpi sgt, %13, %416 : vector<8x1xi32>
    %418 = arith.extui %417 : vector<8x1xi1> to vector<8x1xi32>
    %419 = arith.sitofp %418 : vector<8x1xi32> to vector<8x1xf32>
    %420 = vector.broadcast %411 : i32 to vector<8x1xi32>
    %421 = arith.cmpi sgt, %13, %420 : vector<8x1xi32>
    %422 = arith.extui %421 : vector<8x1xi1> to vector<8x1xi32>
    %423 = arith.sitofp %422 : vector<8x1xi32> to vector<8x1xf32>
    %424 = arith.index_cast %413 : i32 to index
    %c0_94 = arith.constant 0 : index
    %425 = vector.load %arg17[%424, %c0_94] : memref<64x512xf32, #tpu.memory_space<vmem>>, vector<8x512xf32>
    %426 = arith.truncf %363 : vector<8x128xf32> to vector<8x128xbf16>
    %c0_95 = arith.constant 0 : index
    %c0_96 = arith.constant 0 : index
    %427 = vector.load %arg6[%c0_95, %c0_96] : memref<128x512xbf16, #tpu.memory_space<vmem>>, vector<128x512xbf16>
    %cst_97 = arith.constant dense<0.000000e+00> : vector<8x512xf32>
    %428 = tpu.matmul %426, %427, %cst_97 {dimension_numbers = #tpu.dot_dimension_numbers<[1], [0], [0], [1], [0, 0, 1, 1], [], []>} : vector<8x128xbf16>, vector<128x512xbf16>, vector<8x512xf32> -> vector<8x512xf32>
    %429 = arith.addf %425, %428 : vector<8x512xf32>
    %430 = vector.extract_strided_slice %429 {offsets = [0, 0], sizes = [8, 128], strides = [1, 1]} : vector<8x512xf32> to vector<8x128xf32>
    %431 = arith.negf %430 : vector<8x128xf32>
    %432 = math.exp %431 : vector<8x128xf32>
    %cst_98 = arith.constant 1.000000e+00 : f32
    %433 = vector.broadcast %cst_98 : f32 to vector<8x128xf32>
    %434 = arith.addf %433, %432 : vector<8x128xf32>
    %435 = arith.divf %433, %434 : vector<8x128xf32>
    %436 = vector.extract_strided_slice %429 {offsets = [0, 128], sizes = [8, 128], strides = [1, 1]} : vector<8x512xf32> to vector<8x128xf32>
    %437 = arith.negf %436 : vector<8x128xf32>
    %438 = math.exp %437 : vector<8x128xf32>
    %cst_99 = arith.constant 1.000000e+00 : f32
    %439 = vector.broadcast %cst_99 : f32 to vector<8x128xf32>
    %440 = arith.addf %439, %438 : vector<8x128xf32>
    %441 = arith.divf %439, %440 : vector<8x128xf32>
    %442 = vector.extract_strided_slice %429 {offsets = [0, 256], sizes = [8, 128], strides = [1, 1]} : vector<8x512xf32> to vector<8x128xf32>
    %443 = math.tanh %442 : vector<8x128xf32>
    %444 = vector.extract_strided_slice %429 {offsets = [0, 384], sizes = [8, 128], strides = [1, 1]} : vector<8x512xf32> to vector<8x128xf32>
    %445 = arith.negf %444 : vector<8x128xf32>
    %446 = math.exp %445 : vector<8x128xf32>
    %cst_100 = arith.constant 1.000000e+00 : f32
    %447 = vector.broadcast %cst_100 : f32 to vector<8x128xf32>
    %448 = arith.addf %447, %446 : vector<8x128xf32>
    %449 = arith.divf %447, %448 : vector<8x128xf32>
    %450 = arith.mulf %441, %367 : vector<8x128xf32>
    %451 = arith.mulf %435, %443 : vector<8x128xf32>
    %452 = arith.addf %450, %451 : vector<8x128xf32>
    %453 = math.tanh %452 : vector<8x128xf32>
    %454 = arith.mulf %449, %453 : vector<8x128xf32>
    %455 = vector.broadcast %419 : vector<8x1xf32> to vector<8x128xf32>
    %456 = arith.mulf %455, %454 : vector<8x128xf32>
    %457 = arith.index_cast %413 : i32 to index
    %c0_101 = arith.constant 0 : index
    %458 = vector.load %arg19[%457, %c0_101] : memref<64x128xf32, #tpu.memory_space<vmem>>, vector<8x128xf32>
    tpu.vector_store %arg19[%457, %c0_101], %456 {strides = array<i32>} : memref<64x128xf32, #tpu.memory_space<vmem>>, vector<8x128xf32>,
    %459 = arith.subf %454, %363 : vector<8x128xf32>
    %460 = vector.broadcast %419 : vector<8x1xf32> to vector<8x128xf32>
    %461 = arith.mulf %460, %459 : vector<8x128xf32>
    %462 = arith.addf %363, %461 : vector<8x128xf32>
    %463 = arith.subf %452, %367 : vector<8x128xf32>
    %464 = vector.broadcast %419 : vector<8x1xf32> to vector<8x128xf32>
    %465 = arith.mulf %464, %463 : vector<8x128xf32>
    %466 = arith.addf %367, %465 : vector<8x128xf32>
    %467 = arith.index_cast %415 : i32 to index
    %c0_102 = arith.constant 0 : index
    %468 = vector.load %arg18[%467, %c0_102] : memref<64x512xf32, #tpu.memory_space<vmem>>, vector<8x512xf32>
    %469 = arith.truncf %406 : vector<8x128xf32> to vector<8x128xbf16>
    %c0_103 = arith.constant 0 : index
    %c0_104 = arith.constant 0 : index
    %470 = vector.load %arg7[%c0_103, %c0_104] : memref<128x512xbf16, #tpu.memory_space<vmem>>, vector<128x512xbf16>
    %cst_105 = arith.constant dense<0.000000e+00> : vector<8x512xf32>
    %471 = tpu.matmul %469, %470, %cst_105 {dimension_numbers = #tpu.dot_dimension_numbers<[1], [0], [0], [1], [0, 0, 1, 1], [], []>} : vector<8x128xbf16>, vector<128x512xbf16>, vector<8x512xf32> -> vector<8x512xf32>
    %472 = arith.addf %468, %471 : vector<8x512xf32>
    %473 = vector.extract_strided_slice %472 {offsets = [0, 0], sizes = [8, 128], strides = [1, 1]} : vector<8x512xf32> to vector<8x128xf32>
    %474 = arith.negf %473 : vector<8x128xf32>
    %475 = math.exp %474 : vector<8x128xf32>
    %cst_106 = arith.constant 1.000000e+00 : f32
    %476 = vector.broadcast %cst_106 : f32 to vector<8x128xf32>
    %477 = arith.addf %476, %475 : vector<8x128xf32>
    %478 = arith.divf %476, %477 : vector<8x128xf32>
    %479 = vector.extract_strided_slice %472 {offsets = [0, 128], sizes = [8, 128], strides = [1, 1]} : vector<8x512xf32> to vector<8x128xf32>
    %480 = arith.negf %479 : vector<8x128xf32>
    %481 = math.exp %480 : vector<8x128xf32>
    %cst_107 = arith.constant 1.000000e+00 : f32
    %482 = vector.broadcast %cst_107 : f32 to vector<8x128xf32>
    %483 = arith.addf %482, %481 : vector<8x128xf32>
    %484 = arith.divf %482, %483 : vector<8x128xf32>
    %485 = vector.extract_strided_slice %472 {offsets = [0, 256], sizes = [8, 128], strides = [1, 1]} : vector<8x512xf32> to vector<8x128xf32>
    %486 = math.tanh %485 : vector<8x128xf32>
    %487 = vector.extract_strided_slice %472 {offsets = [0, 384], sizes = [8, 128], strides = [1, 1]} : vector<8x512xf32> to vector<8x128xf32>
    %488 = arith.negf %487 : vector<8x128xf32>
    %489 = math.exp %488 : vector<8x128xf32>
    %cst_108 = arith.constant 1.000000e+00 : f32
    %490 = vector.broadcast %cst_108 : f32 to vector<8x128xf32>
    %491 = arith.addf %490, %489 : vector<8x128xf32>
    %492 = arith.divf %490, %491 : vector<8x128xf32>
    %493 = arith.mulf %484, %410 : vector<8x128xf32>
    %494 = arith.mulf %478, %486 : vector<8x128xf32>
    %495 = arith.addf %493, %494 : vector<8x128xf32>
    %496 = math.tanh %495 : vector<8x128xf32>
    %497 = arith.mulf %492, %496 : vector<8x128xf32>
    %498 = vector.broadcast %423 : vector<8x1xf32> to vector<8x128xf32>
    %499 = arith.mulf %498, %497 : vector<8x128xf32>
    %500 = arith.index_cast %415 : i32 to index
    %c0_109 = arith.constant 0 : index
    %501 = vector.load %arg20[%500, %c0_109] : memref<64x128xf32, #tpu.memory_space<vmem>>, vector<8x128xf32>
    tpu.vector_store %arg20[%500, %c0_109], %499 {strides = array<i32>} : memref<64x128xf32, #tpu.memory_space<vmem>>, vector<8x128xf32>,
    %502 = arith.subf %497, %406 : vector<8x128xf32>
    %503 = vector.broadcast %423 : vector<8x1xf32> to vector<8x128xf32>
    %504 = arith.mulf %503, %502 : vector<8x128xf32>
    %505 = arith.addf %406, %504 : vector<8x128xf32>
    %506 = arith.subf %495, %410 : vector<8x128xf32>
    %507 = vector.broadcast %423 : vector<8x1xf32> to vector<8x128xf32>
    %508 = arith.mulf %507, %506 : vector<8x128xf32>
    %509 = arith.addf %410, %508 : vector<8x128xf32>
    %c5_i32 = arith.constant 5 : i32
    %c7_i32_110 = arith.constant 7 : i32
    %510 = arith.subi %c7_i32_110, %c5_i32 : i32
    %c8_i32_111 = arith.constant 8 : i32
    %511 = arith.muli %c5_i32, %c8_i32_111 : i32
    %512 = tpu.assume_multiple %511, 8 : i32
    %c8_i32_112 = arith.constant 8 : i32
    %513 = arith.muli %510, %c8_i32_112 : i32
    %514 = tpu.assume_multiple %513, 8 : i32
    %515 = vector.broadcast %c5_i32 : i32 to vector<8x1xi32>
    %516 = arith.cmpi sgt, %13, %515 : vector<8x1xi32>
    %517 = arith.extui %516 : vector<8x1xi1> to vector<8x1xi32>
    %518 = arith.sitofp %517 : vector<8x1xi32> to vector<8x1xf32>
    %519 = vector.broadcast %510 : i32 to vector<8x1xi32>
    %520 = arith.cmpi sgt, %13, %519 : vector<8x1xi32>
    %521 = arith.extui %520 : vector<8x1xi1> to vector<8x1xi32>
    %522 = arith.sitofp %521 : vector<8x1xi32> to vector<8x1xf32>
    %523 = arith.index_cast %512 : i32 to index
    %c0_113 = arith.constant 0 : index
    %524 = vector.load %arg17[%523, %c0_113] : memref<64x512xf32, #tpu.memory_space<vmem>>, vector<8x512xf32>
    %525 = arith.truncf %462 : vector<8x128xf32> to vector<8x128xbf16>
    %c0_114 = arith.constant 0 : index
    %c0_115 = arith.constant 0 : index
    %526 = vector.load %arg6[%c0_114, %c0_115] : memref<128x512xbf16, #tpu.memory_space<vmem>>, vector<128x512xbf16>
    %cst_116 = arith.constant dense<0.000000e+00> : vector<8x512xf32>
    %527 = tpu.matmul %525, %526, %cst_116 {dimension_numbers = #tpu.dot_dimension_numbers<[1], [0], [0], [1], [0, 0, 1, 1], [], []>} : vector<8x128xbf16>, vector<128x512xbf16>, vector<8x512xf32> -> vector<8x512xf32>
    %528 = arith.addf %524, %527 : vector<8x512xf32>
    %529 = vector.extract_strided_slice %528 {offsets = [0, 0], sizes = [8, 128], strides = [1, 1]} : vector<8x512xf32> to vector<8x128xf32>
    %530 = arith.negf %529 : vector<8x128xf32>
    %531 = math.exp %530 : vector<8x128xf32>
    %cst_117 = arith.constant 1.000000e+00 : f32
    %532 = vector.broadcast %cst_117 : f32 to vector<8x128xf32>
    %533 = arith.addf %532, %531 : vector<8x128xf32>
    %534 = arith.divf %532, %533 : vector<8x128xf32>
    %535 = vector.extract_strided_slice %528 {offsets = [0, 128], sizes = [8, 128], strides = [1, 1]} : vector<8x512xf32> to vector<8x128xf32>
    %536 = arith.negf %535 : vector<8x128xf32>
    %537 = math.exp %536 : vector<8x128xf32>
    %cst_118 = arith.constant 1.000000e+00 : f32
    %538 = vector.broadcast %cst_118 : f32 to vector<8x128xf32>
    %539 = arith.addf %538, %537 : vector<8x128xf32>
    %540 = arith.divf %538, %539 : vector<8x128xf32>
    %541 = vector.extract_strided_slice %528 {offsets = [0, 256], sizes = [8, 128], strides = [1, 1]} : vector<8x512xf32> to vector<8x128xf32>
    %542 = math.tanh %541 : vector<8x128xf32>
    %543 = vector.extract_strided_slice %528 {offsets = [0, 384], sizes = [8, 128], strides = [1, 1]} : vector<8x512xf32> to vector<8x128xf32>
    %544 = arith.negf %543 : vector<8x128xf32>
    %545 = math.exp %544 : vector<8x128xf32>
    %cst_119 = arith.constant 1.000000e+00 : f32
    %546 = vector.broadcast %cst_119 : f32 to vector<8x128xf32>
    %547 = arith.addf %546, %545 : vector<8x128xf32>
    %548 = arith.divf %546, %547 : vector<8x128xf32>
    %549 = arith.mulf %540, %466 : vector<8x128xf32>
    %550 = arith.mulf %534, %542 : vector<8x128xf32>
    %551 = arith.addf %549, %550 : vector<8x128xf32>
    %552 = math.tanh %551 : vector<8x128xf32>
    %553 = arith.mulf %548, %552 : vector<8x128xf32>
    %554 = vector.broadcast %518 : vector<8x1xf32> to vector<8x128xf32>
    %555 = arith.mulf %554, %553 : vector<8x128xf32>
    %556 = arith.index_cast %512 : i32 to index
    %c0_120 = arith.constant 0 : index
    %557 = vector.load %arg19[%556, %c0_120] : memref<64x128xf32, #tpu.memory_space<vmem>>, vector<8x128xf32>
    tpu.vector_store %arg19[%556, %c0_120], %555 {strides = array<i32>} : memref<64x128xf32, #tpu.memory_space<vmem>>, vector<8x128xf32>,
    %558 = arith.subf %553, %462 : vector<8x128xf32>
    %559 = vector.broadcast %518 : vector<8x1xf32> to vector<8x128xf32>
    %560 = arith.mulf %559, %558 : vector<8x128xf32>
    %561 = arith.addf %462, %560 : vector<8x128xf32>
    %562 = arith.subf %551, %466 : vector<8x128xf32>
    %563 = vector.broadcast %518 : vector<8x1xf32> to vector<8x128xf32>
    %564 = arith.mulf %563, %562 : vector<8x128xf32>
    %565 = arith.addf %466, %564 : vector<8x128xf32>
    %566 = arith.index_cast %514 : i32 to index
    %c0_121 = arith.constant 0 : index
    %567 = vector.load %arg18[%566, %c0_121] : memref<64x512xf32, #tpu.memory_space<vmem>>, vector<8x512xf32>
    %568 = arith.truncf %505 : vector<8x128xf32> to vector<8x128xbf16>
    %c0_122 = arith.constant 0 : index
    %c0_123 = arith.constant 0 : index
    %569 = vector.load %arg7[%c0_122, %c0_123] : memref<128x512xbf16, #tpu.memory_space<vmem>>, vector<128x512xbf16>
    %cst_124 = arith.constant dense<0.000000e+00> : vector<8x512xf32>
    %570 = tpu.matmul %568, %569, %cst_124 {dimension_numbers = #tpu.dot_dimension_numbers<[1], [0], [0], [1], [0, 0, 1, 1], [], []>} : vector<8x128xbf16>, vector<128x512xbf16>, vector<8x512xf32> -> vector<8x512xf32>
    %571 = arith.addf %567, %570 : vector<8x512xf32>
    %572 = vector.extract_strided_slice %571 {offsets = [0, 0], sizes = [8, 128], strides = [1, 1]} : vector<8x512xf32> to vector<8x128xf32>
    %573 = arith.negf %572 : vector<8x128xf32>
    %574 = math.exp %573 : vector<8x128xf32>
    %cst_125 = arith.constant 1.000000e+00 : f32
    %575 = vector.broadcast %cst_125 : f32 to vector<8x128xf32>
    %576 = arith.addf %575, %574 : vector<8x128xf32>
    %577 = arith.divf %575, %576 : vector<8x128xf32>
    %578 = vector.extract_strided_slice %571 {offsets = [0, 128], sizes = [8, 128], strides = [1, 1]} : vector<8x512xf32> to vector<8x128xf32>
    %579 = arith.negf %578 : vector<8x128xf32>
    %580 = math.exp %579 : vector<8x128xf32>
    %cst_126 = arith.constant 1.000000e+00 : f32
    %581 = vector.broadcast %cst_126 : f32 to vector<8x128xf32>
    %582 = arith.addf %581, %580 : vector<8x128xf32>
    %583 = arith.divf %581, %582 : vector<8x128xf32>
    %584 = vector.extract_strided_slice %571 {offsets = [0, 256], sizes = [8, 128], strides = [1, 1]} : vector<8x512xf32> to vector<8x128xf32>
    %585 = math.tanh %584 : vector<8x128xf32>
    %586 = vector.extract_strided_slice %571 {offsets = [0, 384], sizes = [8, 128], strides = [1, 1]} : vector<8x512xf32> to vector<8x128xf32>
    %587 = arith.negf %586 : vector<8x128xf32>
    %588 = math.exp %587 : vector<8x128xf32>
    %cst_127 = arith.constant 1.000000e+00 : f32
    %589 = vector.broadcast %cst_127 : f32 to vector<8x128xf32>
    %590 = arith.addf %589, %588 : vector<8x128xf32>
    %591 = arith.divf %589, %590 : vector<8x128xf32>
    %592 = arith.mulf %583, %509 : vector<8x128xf32>
    %593 = arith.mulf %577, %585 : vector<8x128xf32>
    %594 = arith.addf %592, %593 : vector<8x128xf32>
    %595 = math.tanh %594 : vector<8x128xf32>
    %596 = arith.mulf %591, %595 : vector<8x128xf32>
    %597 = vector.broadcast %522 : vector<8x1xf32> to vector<8x128xf32>
    %598 = arith.mulf %597, %596 : vector<8x128xf32>
    %599 = arith.index_cast %514 : i32 to index
    %c0_128 = arith.constant 0 : index
    %600 = vector.load %arg20[%599, %c0_128] : memref<64x128xf32, #tpu.memory_space<vmem>>, vector<8x128xf32>
    tpu.vector_store %arg20[%599, %c0_128], %598 {strides = array<i32>} : memref<64x128xf32, #tpu.memory_space<vmem>>, vector<8x128xf32>,
    %601 = arith.subf %596, %505 : vector<8x128xf32>
    %602 = vector.broadcast %522 : vector<8x1xf32> to vector<8x128xf32>
    %603 = arith.mulf %602, %601 : vector<8x128xf32>
    %604 = arith.addf %505, %603 : vector<8x128xf32>
    %605 = arith.subf %594, %509 : vector<8x128xf32>
    %606 = vector.broadcast %522 : vector<8x1xf32> to vector<8x128xf32>
    %607 = arith.mulf %606, %605 : vector<8x128xf32>
    %608 = arith.addf %509, %607 : vector<8x128xf32>
    %c6_i32 = arith.constant 6 : i32
    %c7_i32_129 = arith.constant 7 : i32
    %609 = arith.subi %c7_i32_129, %c6_i32 : i32
    %c8_i32_130 = arith.constant 8 : i32
    %610 = arith.muli %c6_i32, %c8_i32_130 : i32
    %611 = tpu.assume_multiple %610, 8 : i32
    %c8_i32_131 = arith.constant 8 : i32
    %612 = arith.muli %609, %c8_i32_131 : i32
    %613 = tpu.assume_multiple %612, 8 : i32
    %614 = vector.broadcast %c6_i32 : i32 to vector<8x1xi32>
    %615 = arith.cmpi sgt, %13, %614 : vector<8x1xi32>
    %616 = arith.extui %615 : vector<8x1xi1> to vector<8x1xi32>
    %617 = arith.sitofp %616 : vector<8x1xi32> to vector<8x1xf32>
    %618 = vector.broadcast %609 : i32 to vector<8x1xi32>
    %619 = arith.cmpi sgt, %13, %618 : vector<8x1xi32>
    %620 = arith.extui %619 : vector<8x1xi1> to vector<8x1xi32>
    %621 = arith.sitofp %620 : vector<8x1xi32> to vector<8x1xf32>
    %622 = arith.index_cast %611 : i32 to index
    %c0_132 = arith.constant 0 : index
    %623 = vector.load %arg17[%622, %c0_132] : memref<64x512xf32, #tpu.memory_space<vmem>>, vector<8x512xf32>
    %624 = arith.truncf %561 : vector<8x128xf32> to vector<8x128xbf16>
    %c0_133 = arith.constant 0 : index
    %c0_134 = arith.constant 0 : index
    %625 = vector.load %arg6[%c0_133, %c0_134] : memref<128x512xbf16, #tpu.memory_space<vmem>>, vector<128x512xbf16>
    %cst_135 = arith.constant dense<0.000000e+00> : vector<8x512xf32>
    %626 = tpu.matmul %624, %625, %cst_135 {dimension_numbers = #tpu.dot_dimension_numbers<[1], [0], [0], [1], [0, 0, 1, 1], [], []>} : vector<8x128xbf16>, vector<128x512xbf16>, vector<8x512xf32> -> vector<8x512xf32>
    %627 = arith.addf %623, %626 : vector<8x512xf32>
    %628 = vector.extract_strided_slice %627 {offsets = [0, 0], sizes = [8, 128], strides = [1, 1]} : vector<8x512xf32> to vector<8x128xf32>
    %629 = arith.negf %628 : vector<8x128xf32>
    %630 = math.exp %629 : vector<8x128xf32>
    %cst_136 = arith.constant 1.000000e+00 : f32
    %631 = vector.broadcast %cst_136 : f32 to vector<8x128xf32>
    %632 = arith.addf %631, %630 : vector<8x128xf32>
    %633 = arith.divf %631, %632 : vector<8x128xf32>
    %634 = vector.extract_strided_slice %627 {offsets = [0, 128], sizes = [8, 128], strides = [1, 1]} : vector<8x512xf32> to vector<8x128xf32>
    %635 = arith.negf %634 : vector<8x128xf32>
    %636 = math.exp %635 : vector<8x128xf32>
    %cst_137 = arith.constant 1.000000e+00 : f32
    %637 = vector.broadcast %cst_137 : f32 to vector<8x128xf32>
    %638 = arith.addf %637, %636 : vector<8x128xf32>
    %639 = arith.divf %637, %638 : vector<8x128xf32>
    %640 = vector.extract_strided_slice %627 {offsets = [0, 256], sizes = [8, 128], strides = [1, 1]} : vector<8x512xf32> to vector<8x128xf32>
    %641 = math.tanh %640 : vector<8x128xf32>
    %642 = vector.extract_strided_slice %627 {offsets = [0, 384], sizes = [8, 128], strides = [1, 1]} : vector<8x512xf32> to vector<8x128xf32>
    %643 = arith.negf %642 : vector<8x128xf32>
    %644 = math.exp %643 : vector<8x128xf32>
    %cst_138 = arith.constant 1.000000e+00 : f32
    %645 = vector.broadcast %cst_138 : f32 to vector<8x128xf32>
    %646 = arith.addf %645, %644 : vector<8x128xf32>
    %647 = arith.divf %645, %646 : vector<8x128xf32>
    %648 = arith.mulf %639, %565 : vector<8x128xf32>
    %649 = arith.mulf %633, %641 : vector<8x128xf32>
    %650 = arith.addf %648, %649 : vector<8x128xf32>
    %651 = math.tanh %650 : vector<8x128xf32>
    %652 = arith.mulf %647, %651 : vector<8x128xf32>
    %653 = vector.broadcast %617 : vector<8x1xf32> to vector<8x128xf32>
    %654 = arith.mulf %653, %652 : vector<8x128xf32>
    %655 = arith.index_cast %611 : i32 to index
    %c0_139 = arith.constant 0 : index
    %656 = vector.load %arg19[%655, %c0_139] : memref<64x128xf32, #tpu.memory_space<vmem>>, vector<8x128xf32>
    tpu.vector_store %arg19[%655, %c0_139], %654 {strides = array<i32>} : memref<64x128xf32, #tpu.memory_space<vmem>>, vector<8x128xf32>,
    %657 = arith.subf %652, %561 : vector<8x128xf32>
    %658 = vector.broadcast %617 : vector<8x1xf32> to vector<8x128xf32>
    %659 = arith.mulf %658, %657 : vector<8x128xf32>
    %660 = arith.addf %561, %659 : vector<8x128xf32>
    %661 = arith.subf %650, %565 : vector<8x128xf32>
    %662 = vector.broadcast %617 : vector<8x1xf32> to vector<8x128xf32>
    %663 = arith.mulf %662, %661 : vector<8x128xf32>
    %664 = arith.addf %565, %663 : vector<8x128xf32>
    %665 = arith.index_cast %613 : i32 to index
    %c0_140 = arith.constant 0 : index
    %666 = vector.load %arg18[%665, %c0_140] : memref<64x512xf32, #tpu.memory_space<vmem>>, vector<8x512xf32>
    %667 = arith.truncf %604 : vector<8x128xf32> to vector<8x128xbf16>
    %c0_141 = arith.constant 0 : index
    %c0_142 = arith.constant 0 : index
    %668 = vector.load %arg7[%c0_141, %c0_142] : memref<128x512xbf16, #tpu.memory_space<vmem>>, vector<128x512xbf16>
    %cst_143 = arith.constant dense<0.000000e+00> : vector<8x512xf32>
    %669 = tpu.matmul %667, %668, %cst_143 {dimension_numbers = #tpu.dot_dimension_numbers<[1], [0], [0], [1], [0, 0, 1, 1], [], []>} : vector<8x128xbf16>, vector<128x512xbf16>, vector<8x512xf32> -> vector<8x512xf32>
    %670 = arith.addf %666, %669 : vector<8x512xf32>
    %671 = vector.extract_strided_slice %670 {offsets = [0, 0], sizes = [8, 128], strides = [1, 1]} : vector<8x512xf32> to vector<8x128xf32>
    %672 = arith.negf %671 : vector<8x128xf32>
    %673 = math.exp %672 : vector<8x128xf32>
    %cst_144 = arith.constant 1.000000e+00 : f32
    %674 = vector.broadcast %cst_144 : f32 to vector<8x128xf32>
    %675 = arith.addf %674, %673 : vector<8x128xf32>
    %676 = arith.divf %674, %675 : vector<8x128xf32>
    %677 = vector.extract_strided_slice %670 {offsets = [0, 128], sizes = [8, 128], strides = [1, 1]} : vector<8x512xf32> to vector<8x128xf32>
    %678 = arith.negf %677 : vector<8x128xf32>
    %679 = math.exp %678 : vector<8x128xf32>
    %cst_145 = arith.constant 1.000000e+00 : f32
    %680 = vector.broadcast %cst_145 : f32 to vector<8x128xf32>
    %681 = arith.addf %680, %679 : vector<8x128xf32>
    %682 = arith.divf %680, %681 : vector<8x128xf32>
    %683 = vector.extract_strided_slice %670 {offsets = [0, 256], sizes = [8, 128], strides = [1, 1]} : vector<8x512xf32> to vector<8x128xf32>
    %684 = math.tanh %683 : vector<8x128xf32>
    %685 = vector.extract_strided_slice %670 {offsets = [0, 384], sizes = [8, 128], strides = [1, 1]} : vector<8x512xf32> to vector<8x128xf32>
    %686 = arith.negf %685 : vector<8x128xf32>
    %687 = math.exp %686 : vector<8x128xf32>
    %cst_146 = arith.constant 1.000000e+00 : f32
    %688 = vector.broadcast %cst_146 : f32 to vector<8x128xf32>
    %689 = arith.addf %688, %687 : vector<8x128xf32>
    %690 = arith.divf %688, %689 : vector<8x128xf32>
    %691 = arith.mulf %682, %608 : vector<8x128xf32>
    %692 = arith.mulf %676, %684 : vector<8x128xf32>
    %693 = arith.addf %691, %692 : vector<8x128xf32>
    %694 = math.tanh %693 : vector<8x128xf32>
    %695 = arith.mulf %690, %694 : vector<8x128xf32>
    %696 = vector.broadcast %621 : vector<8x1xf32> to vector<8x128xf32>
    %697 = arith.mulf %696, %695 : vector<8x128xf32>
    %698 = arith.index_cast %613 : i32 to index
    %c0_147 = arith.constant 0 : index
    %699 = vector.load %arg20[%698, %c0_147] : memref<64x128xf32, #tpu.memory_space<vmem>>, vector<8x128xf32>
    tpu.vector_store %arg20[%698, %c0_147], %697 {strides = array<i32>} : memref<64x128xf32, #tpu.memory_space<vmem>>, vector<8x128xf32>,
    %700 = arith.subf %695, %604 : vector<8x128xf32>
    %701 = vector.broadcast %621 : vector<8x1xf32> to vector<8x128xf32>
    %702 = arith.mulf %701, %700 : vector<8x128xf32>
    %703 = arith.addf %604, %702 : vector<8x128xf32>
    %704 = arith.subf %693, %608 : vector<8x128xf32>
    %705 = vector.broadcast %621 : vector<8x1xf32> to vector<8x128xf32>
    %706 = arith.mulf %705, %704 : vector<8x128xf32>
    %707 = arith.addf %608, %706 : vector<8x128xf32>
    %c7_i32_148 = arith.constant 7 : i32
    %c7_i32_149 = arith.constant 7 : i32
    %708 = arith.subi %c7_i32_149, %c7_i32_148 : i32
    %c8_i32_150 = arith.constant 8 : i32
    %709 = arith.muli %c7_i32_148, %c8_i32_150 : i32
    %710 = tpu.assume_multiple %709, 8 : i32
    %c8_i32_151 = arith.constant 8 : i32
    %711 = arith.muli %708, %c8_i32_151 : i32
    %712 = tpu.assume_multiple %711, 8 : i32
    %713 = vector.broadcast %c7_i32_148 : i32 to vector<8x1xi32>
    %714 = arith.cmpi sgt, %13, %713 : vector<8x1xi32>
    %715 = arith.extui %714 : vector<8x1xi1> to vector<8x1xi32>
    %716 = arith.sitofp %715 : vector<8x1xi32> to vector<8x1xf32>
    %717 = vector.broadcast %708 : i32 to vector<8x1xi32>
    %718 = arith.cmpi sgt, %13, %717 : vector<8x1xi32>
    %719 = arith.extui %718 : vector<8x1xi1> to vector<8x1xi32>
    %720 = arith.sitofp %719 : vector<8x1xi32> to vector<8x1xf32>
    %721 = arith.index_cast %710 : i32 to index
    %c0_152 = arith.constant 0 : index
    %722 = vector.load %arg17[%721, %c0_152] : memref<64x512xf32, #tpu.memory_space<vmem>>, vector<8x512xf32>
    %723 = arith.truncf %660 : vector<8x128xf32> to vector<8x128xbf16>
    %c0_153 = arith.constant 0 : index
    %c0_154 = arith.constant 0 : index
    %724 = vector.load %arg6[%c0_153, %c0_154] : memref<128x512xbf16, #tpu.memory_space<vmem>>, vector<128x512xbf16>
    %cst_155 = arith.constant dense<0.000000e+00> : vector<8x512xf32>
    %725 = tpu.matmul %723, %724, %cst_155 {dimension_numbers = #tpu.dot_dimension_numbers<[1], [0], [0], [1], [0, 0, 1, 1], [], []>} : vector<8x128xbf16>, vector<128x512xbf16>, vector<8x512xf32> -> vector<8x512xf32>
    %726 = arith.addf %722, %725 : vector<8x512xf32>
    %727 = vector.extract_strided_slice %726 {offsets = [0, 0], sizes = [8, 128], strides = [1, 1]} : vector<8x512xf32> to vector<8x128xf32>
    %728 = arith.negf %727 : vector<8x128xf32>
    %729 = math.exp %728 : vector<8x128xf32>
    %cst_156 = arith.constant 1.000000e+00 : f32
    %730 = vector.broadcast %cst_156 : f32 to vector<8x128xf32>
    %731 = arith.addf %730, %729 : vector<8x128xf32>
    %732 = arith.divf %730, %731 : vector<8x128xf32>
    %733 = vector.extract_strided_slice %726 {offsets = [0, 128], sizes = [8, 128], strides = [1, 1]} : vector<8x512xf32> to vector<8x128xf32>
    %734 = arith.negf %733 : vector<8x128xf32>
    %735 = math.exp %734 : vector<8x128xf32>
    %cst_157 = arith.constant 1.000000e+00 : f32
    %736 = vector.broadcast %cst_157 : f32 to vector<8x128xf32>
    %737 = arith.addf %736, %735 : vector<8x128xf32>
    %738 = arith.divf %736, %737 : vector<8x128xf32>
    %739 = vector.extract_strided_slice %726 {offsets = [0, 256], sizes = [8, 128], strides = [1, 1]} : vector<8x512xf32> to vector<8x128xf32>
    %740 = math.tanh %739 : vector<8x128xf32>
    %741 = vector.extract_strided_slice %726 {offsets = [0, 384], sizes = [8, 128], strides = [1, 1]} : vector<8x512xf32> to vector<8x128xf32>
    %742 = arith.negf %741 : vector<8x128xf32>
    %743 = math.exp %742 : vector<8x128xf32>
    %cst_158 = arith.constant 1.000000e+00 : f32
    %744 = vector.broadcast %cst_158 : f32 to vector<8x128xf32>
    %745 = arith.addf %744, %743 : vector<8x128xf32>
    %746 = arith.divf %744, %745 : vector<8x128xf32>
    %747 = arith.mulf %738, %664 : vector<8x128xf32>
    %748 = arith.mulf %732, %740 : vector<8x128xf32>
    %749 = arith.addf %747, %748 : vector<8x128xf32>
    %750 = math.tanh %749 : vector<8x128xf32>
    %751 = arith.mulf %746, %750 : vector<8x128xf32>
    %752 = vector.broadcast %716 : vector<8x1xf32> to vector<8x128xf32>
    %753 = arith.mulf %752, %751 : vector<8x128xf32>
    %754 = arith.index_cast %710 : i32 to index
    %c0_159 = arith.constant 0 : index
    %755 = vector.load %arg19[%754, %c0_159] : memref<64x128xf32, #tpu.memory_space<vmem>>, vector<8x128xf32>
    tpu.vector_store %arg19[%754, %c0_159], %753 {strides = array<i32>} : memref<64x128xf32, #tpu.memory_space<vmem>>, vector<8x128xf32>,
    %756 = arith.subf %751, %660 : vector<8x128xf32>
    %757 = vector.broadcast %716 : vector<8x1xf32> to vector<8x128xf32>
    %758 = arith.mulf %757, %756 : vector<8x128xf32>
    %759 = arith.addf %660, %758 : vector<8x128xf32>
    %760 = arith.subf %749, %664 : vector<8x128xf32>
    %761 = vector.broadcast %716 : vector<8x1xf32> to vector<8x128xf32>
    %762 = arith.mulf %761, %760 : vector<8x128xf32>
    %763 = arith.addf %664, %762 : vector<8x128xf32>
    %764 = arith.index_cast %712 : i32 to index
    %c0_160 = arith.constant 0 : index
    %765 = vector.load %arg18[%764, %c0_160] : memref<64x512xf32, #tpu.memory_space<vmem>>, vector<8x512xf32>
    %766 = arith.truncf %703 : vector<8x128xf32> to vector<8x128xbf16>
    %c0_161 = arith.constant 0 : index
    %c0_162 = arith.constant 0 : index
    %767 = vector.load %arg7[%c0_161, %c0_162] : memref<128x512xbf16, #tpu.memory_space<vmem>>, vector<128x512xbf16>
    %cst_163 = arith.constant dense<0.000000e+00> : vector<8x512xf32>
    %768 = tpu.matmul %766, %767, %cst_163 {dimension_numbers = #tpu.dot_dimension_numbers<[1], [0], [0], [1], [0, 0, 1, 1], [], []>} : vector<8x128xbf16>, vector<128x512xbf16>, vector<8x512xf32> -> vector<8x512xf32>
    %769 = arith.addf %765, %768 : vector<8x512xf32>
    %770 = vector.extract_strided_slice %769 {offsets = [0, 0], sizes = [8, 128], strides = [1, 1]} : vector<8x512xf32> to vector<8x128xf32>
    %771 = arith.negf %770 : vector<8x128xf32>
    %772 = math.exp %771 : vector<8x128xf32>
    %cst_164 = arith.constant 1.000000e+00 : f32
    %773 = vector.broadcast %cst_164 : f32 to vector<8x128xf32>
    %774 = arith.addf %773, %772 : vector<8x128xf32>
    %775 = arith.divf %773, %774 : vector<8x128xf32>
    %776 = vector.extract_strided_slice %769 {offsets = [0, 128], sizes = [8, 128], strides = [1, 1]} : vector<8x512xf32> to vector<8x128xf32>
    %777 = arith.negf %776 : vector<8x128xf32>
    %778 = math.exp %777 : vector<8x128xf32>
    %cst_165 = arith.constant 1.000000e+00 : f32
    %779 = vector.broadcast %cst_165 : f32 to vector<8x128xf32>
    %780 = arith.addf %779, %778 : vector<8x128xf32>
    %781 = arith.divf %779, %780 : vector<8x128xf32>
    %782 = vector.extract_strided_slice %769 {offsets = [0, 256], sizes = [8, 128], strides = [1, 1]} : vector<8x512xf32> to vector<8x128xf32>
    %783 = math.tanh %782 : vector<8x128xf32>
    %784 = vector.extract_strided_slice %769 {offsets = [0, 384], sizes = [8, 128], strides = [1, 1]} : vector<8x512xf32> to vector<8x128xf32>
    %785 = arith.negf %784 : vector<8x128xf32>
    %786 = math.exp %785 : vector<8x128xf32>
    %cst_166 = arith.constant 1.000000e+00 : f32
    %787 = vector.broadcast %cst_166 : f32 to vector<8x128xf32>
    %788 = arith.addf %787, %786 : vector<8x128xf32>
    %789 = arith.divf %787, %788 : vector<8x128xf32>
    %790 = arith.mulf %781, %707 : vector<8x128xf32>
    %791 = arith.mulf %775, %783 : vector<8x128xf32>
    %792 = arith.addf %790, %791 : vector<8x128xf32>
    %793 = math.tanh %792 : vector<8x128xf32>
    %794 = arith.mulf %789, %793 : vector<8x128xf32>
    %795 = vector.broadcast %720 : vector<8x1xf32> to vector<8x128xf32>
    %796 = arith.mulf %795, %794 : vector<8x128xf32>
    %797 = arith.index_cast %712 : i32 to index
    %c0_167 = arith.constant 0 : index
    %798 = vector.load %arg20[%797, %c0_167] : memref<64x128xf32, #tpu.memory_space<vmem>>, vector<8x128xf32>
    tpu.vector_store %arg20[%797, %c0_167], %796 {strides = array<i32>} : memref<64x128xf32, #tpu.memory_space<vmem>>, vector<8x128xf32>,
    %799 = arith.subf %794, %703 : vector<8x128xf32>
    %800 = vector.broadcast %720 : vector<8x1xf32> to vector<8x128xf32>
    %801 = arith.mulf %800, %799 : vector<8x128xf32>
    %802 = arith.addf %703, %801 : vector<8x128xf32>
    %803 = arith.subf %792, %707 : vector<8x128xf32>
    %804 = vector.broadcast %720 : vector<8x1xf32> to vector<8x128xf32>
    %805 = arith.mulf %804, %803 : vector<8x128xf32>
    %806 = arith.addf %707, %805 : vector<8x128xf32>
    %c8_i32_168 = arith.constant 8 : i32
    %c0_169 = arith.constant 0 : index
    %c0_170 = arith.constant 0 : index
    %807 = vector.load %arg19[%c0_169, %c0_170] : memref<64x128xf32, #tpu.memory_space<vmem>>, vector<64x128xf32>
    %808 = arith.truncf %807 : vector<64x128xf32> to vector<64x128xbf16>
    %c0_171 = arith.constant 0 : index
    %c0_172 = arith.constant 0 : index
    %809 = vector.load %arg8[%c0_171, %c0_172] : memref<128x128xbf16, #tpu.memory_space<vmem>>, vector<128x128xbf16>
    %cst_173 = arith.constant dense<0.000000e+00> : vector<64x128xf32>
    %810 = tpu.matmul %808, %809, %cst_173 {dimension_numbers = #tpu.dot_dimension_numbers<[1], [0], [0], [1], [0, 0, 1, 1], [], []>} : vector<64x128xbf16>, vector<128x128xbf16>, vector<64x128xf32> -> vector<64x128xf32>
    %c0_174 = arith.constant 0 : index
    %c0_175 = arith.constant 0 : index
    %811 = vector.load %arg20[%c0_174, %c0_175] : memref<64x128xf32, #tpu.memory_space<vmem>>, vector<64x128xf32>
    %812 = arith.truncf %811 : vector<64x128xf32> to vector<64x128xbf16>
    %c0_176 = arith.constant 0 : index
    %c0_177 = arith.constant 0 : index
    %813 = vector.load %arg9[%c0_176, %c0_177] : memref<128x128xbf16, #tpu.memory_space<vmem>>, vector<128x128xbf16>
    %cst_178 = arith.constant dense<0.000000e+00> : vector<64x128xf32>
    %814 = tpu.matmul %812, %813, %cst_178 {dimension_numbers = #tpu.dot_dimension_numbers<[1], [0], [0], [1], [0, 0, 1, 1], [], []>} : vector<64x128xbf16>, vector<128x128xbf16>, vector<64x128xf32> -> vector<64x128xf32>
    %815 = arith.addf %810, %814 : vector<64x128xf32>
    %c0_179 = arith.constant 0 : index
    %c0_180 = arith.constant 0 : index
    %816 = vector.load %arg14[%c0_179, %c0_180] : memref<64x128xf32, #tpu.memory_space<vmem>>, vector<64x128xf32>
    tpu.vector_store %arg14[%c0_179, %c0_180], %815 {strides = array<i32>} : memref<64x128xf32, #tpu.memory_space<vmem>>, vector<64x128xf32>,
    %817 = arith.truncf %759 : vector<8x128xf32> to vector<8x128xbf16>
    %c0_181 = arith.constant 0 : index
    %c0_182 = arith.constant 0 : index
    %818 = vector.load %arg10[%c0_181, %c0_182] : memref<128x128xbf16, #tpu.memory_space<vmem>>, vector<128x128xbf16>
    %cst_183 = arith.constant dense<0.000000e+00> : vector<8x128xf32>
    %819 = tpu.matmul %817, %818, %cst_183 {dimension_numbers = #tpu.dot_dimension_numbers<[1], [0], [0], [1], [0, 0, 1, 1], [], []>} : vector<8x128xbf16>, vector<128x128xbf16>, vector<8x128xf32> -> vector<8x128xf32>
    %820 = arith.truncf %802 : vector<8x128xf32> to vector<8x128xbf16>
    %c0_184 = arith.constant 0 : index
    %c0_185 = arith.constant 0 : index
    %821 = vector.load %arg11[%c0_184, %c0_185] : memref<128x128xbf16, #tpu.memory_space<vmem>>, vector<128x128xbf16>
    %cst_186 = arith.constant dense<0.000000e+00> : vector<8x128xf32>
    %822 = tpu.matmul %820, %821, %cst_186 {dimension_numbers = #tpu.dot_dimension_numbers<[1], [0], [0], [1], [0, 0, 1, 1], [], []>} : vector<8x128xbf16>, vector<128x128xbf16>, vector<8x128xf32> -> vector<8x128xf32>
    %823 = arith.addf %819, %822 : vector<8x128xf32>
    %c0_187 = arith.constant 0 : index
    %c0_188 = arith.constant 0 : index
    %824 = vector.load %arg15[%c0_187, %c0_188] : memref<8x128xf32, #tpu.memory_space<vmem>>, vector<8x128xf32>
    tpu.vector_store %arg15[%c0_187, %c0_188], %823 {strides = array<i32>} : memref<8x128xf32, #tpu.memory_space<vmem>>, vector<8x128xf32>,
    %825 = arith.truncf %763 : vector<8x128xf32> to vector<8x128xbf16>
    %c0_189 = arith.constant 0 : index
    %c0_190 = arith.constant 0 : index
    %826 = vector.load %arg12[%c0_189, %c0_190] : memref<128x128xbf16, #tpu.memory_space<vmem>>, vector<128x128xbf16>
    %cst_191 = arith.constant dense<0.000000e+00> : vector<8x128xf32>
    %827 = tpu.matmul %825, %826, %cst_191 {dimension_numbers = #tpu.dot_dimension_numbers<[1], [0], [0], [1], [0, 0, 1, 1], [], []>} : vector<8x128xbf16>, vector<128x128xbf16>, vector<8x128xf32> -> vector<8x128xf32>
    %828 = arith.truncf %806 : vector<8x128xf32> to vector<8x128xbf16>
    %c0_192 = arith.constant 0 : index
    %c0_193 = arith.constant 0 : index
    %829 = vector.load %arg13[%c0_192, %c0_193] : memref<128x128xbf16, #tpu.memory_space<vmem>>, vector<128x128xbf16>
    %cst_194 = arith.constant dense<0.000000e+00> : vector<8x128xf32>
    %830 = tpu.matmul %828, %829, %cst_194 {dimension_numbers = #tpu.dot_dimension_numbers<[1], [0], [0], [1], [0, 0, 1, 1], [], []>} : vector<8x128xbf16>, vector<128x128xbf16>, vector<8x128xf32> -> vector<8x128xf32>
    %831 = arith.addf %827, %830 : vector<8x128xf32>
    %c0_195 = arith.constant 0 : index
    %c0_196 = arith.constant 0 : index
    %832 = vector.load %arg16[%c0_195, %c0_196] : memref<8x128xf32, #tpu.memory_space<vmem>>, vector<8x128xf32>
    tpu.vector_store %arg16[%c0_195, %c0_196], %831 {strides = array<i32>} : memref<8x128xf32, #tpu.memory_space<vmem>>, vector<8x128xf32>,
    return
  }
}

</mosaic_0001>

<llo_original>
// kernel: encoder_forward.1
$region0: #{encoder_forward.1}
  #allocation0 [shape = 'u32[]', space=smem, size = 0x4, offset = 0x4, fixed_abs, tag = 'smem constant byte address 0x4 - core index']
  #allocation1 [shape = 'u32[72,128]{1,0:T(1,128)}', space=vmem, size = 0x9000, scoped, tag = 'internal scratch']
  #allocation2 [shape = 'f32[64,512]{1,0:T(8,128)}', space=vmem, size = 0x20000, scoped, tag = 'scratch operand']
  #allocation3 [shape = 'f32[64,512]{1,0:T(8,128)}', space=vmem, size = 0x20000, scoped, tag = 'scratch operand']
  #allocation4 [shape = 'f32[64,128]{1,0:T(8,128)}', space=vmem, size = 0x8000, scoped, tag = 'scratch operand']
  #allocation5 [shape = 'f32[64,128]{1,0:T(8,128)}', space=vmem, size = 0x8000, scoped, tag = 'scratch operand']
  %s0 = inlined_call_operand.vmem [shape: bf16[64,128], index: 0, kind: input, shape index: {}]
  %s1 = inlined_call_operand.vmem [shape: s32[8,1], index: 1, kind: input, shape index: {}]
  %s2 = inlined_call_operand.vmem [shape: bf16[128,512], index: 2, kind: input, shape index: {}]
  %s3 = inlined_call_operand.vmem [shape: bf16[128,512], index: 3, kind: input, shape index: {}]
  %s4 = inlined_call_operand.vmem [shape: f32[1,512], index: 4, kind: input, shape index: {}]
  %s5 = inlined_call_operand.vmem [shape: f32[1,512], index: 5, kind: input, shape index: {}]
  %s6 = inlined_call_operand.vmem [shape: bf16[128,512], index: 6, kind: input, shape index: {}]
  %s7 = inlined_call_operand.vmem [shape: bf16[128,512], index: 7, kind: input, shape index: {}]
  %s8 = inlined_call_operand.vmem [shape: bf16[128,128], index: 8, kind: input, shape index: {}]
  %s9 = inlined_call_operand.vmem [shape: bf16[128,128], index: 9, kind: input, shape index: {}]
  %s10 = inlined_call_operand.vmem [shape: bf16[128,128], index: 10, kind: input, shape index: {}]
  %s11 = inlined_call_operand.vmem [shape: bf16[128,128], index: 11, kind: input, shape index: {}]
  %s12 = inlined_call_operand.vmem [shape: bf16[128,128], index: 12, kind: input, shape index: {}]
  %s13 = inlined_call_operand.vmem [shape: bf16[128,128], index: 13, kind: input, shape index: {}]
  %s14 = inlined_call_operand.vmem [shape: f32[64,128], index: 14, kind: output, shape index: {0}]
  %s15 = inlined_call_operand.vmem [shape: f32[8,128], index: 15, kind: output, shape index: {1}]
  %s16 = inlined_call_operand.vmem [shape: f32[8,128], index: 16, kind: output, shape index: {2}]
  %17 = xla_tuple %s14, %s15, %s16
  %s18 = sld [smem:[#allocation0]]
  $region82: #{encoder_forward.1} parent=0
    _
  %s20 = ssub.s32 1, %s18
  %s21 = scalar_select 0, %s20, %s18
  // Predicated region
  $region2: #{encoder_forward.1} parent=0 // pred_check
    _
  $region3: #{encoder_forward.1} parent=0 // pred_check_branch
    %23 = sbr.rel (0) target = $region5
  $region4: #{encoder_forward.1} parent=0 // pred_region
    _
  $region5: #{encoder_forward.1} parent=0 // pred_fallthru
    _
  // Predicated region
  $region6: #{encoder_forward.1} parent=0 // pred_check
    _
  $region7: #{encoder_forward.1} parent=0 // pred_check_branch
    %25 = sbr.rel (0) target = $region9
  $region8: #{encoder_forward.1} parent=0 // pred_region
    _
  $region9: #{encoder_forward.1} parent=0 // pred_fallthru
    _
  // Predicated region
  $region10: #{encoder_forward.1} parent=0 // pred_check
    _
  $region11: #{encoder_forward.1} parent=0 // pred_check_branch
    %27 = sbr.rel (0) target = $region13
  $region12: #{encoder_forward.1} parent=0 // pred_region
    _
  $region13: #{encoder_forward.1} parent=0 // pred_fallthru
    _
  // Predicated region
  $region14: #{encoder_forward.1} parent=0 // pred_check
    _
  $region15: #{encoder_forward.1} parent=0 // pred_check_branch
    %29 = sbr.rel (0) target = $region17
  $region16: #{encoder_forward.1} parent=0 // pred_region
    _
  $region17: #{encoder_forward.1} parent=0 // pred_fallthru
    _
  // Predicated region
  $region18: #{encoder_forward.1} parent=0 // pred_check
    _
  $region19: #{encoder_forward.1} parent=0 // pred_check_branch
    %31 = sbr.rel (0) target = $region21
  $region20: #{encoder_forward.1} parent=0 // pred_region
    _
  $region21: #{encoder_forward.1} parent=0 // pred_fallthru
    _
  // Predicated region
  $region22: #{encoder_forward.1} parent=0 // pred_check
    _
  $region23: #{encoder_forward.1} parent=0 // pred_check_branch
    %33 = sbr.rel (0) target = $region25
  $region24: #{encoder_forward.1} parent=0 // pred_region
    _
  $region25: #{encoder_forward.1} parent=0 // pred_fallthru
    _
  // Predicated region
  $region26: #{encoder_forward.1} parent=0 // pred_check
    _
  $region27: #{encoder_forward.1} parent=0 // pred_check_branch
    %35 = sbr.rel (0) target = $region29
  $region28: #{encoder_forward.1} parent=0 // pred_region
    _
  $region29: #{encoder_forward.1} parent=0 // pred_fallthru
    _
  // Predicated region
  $region30: #{encoder_forward.1} parent=0 // pred_check
    _
  $region31: #{encoder_forward.1} parent=0 // pred_check_branch
    %37 = sbr.rel (0) target = $region33
  $region32: #{encoder_forward.1} parent=0 // pred_region
    _
  $region33: #{encoder_forward.1} parent=0 // pred_fallthru
    _
  // Predicated region
  $region34: #{encoder_forward.1} parent=0 // pred_check
    _
  $region35: #{encoder_forward.1} parent=0 // pred_check_branch
    %39 = sbr.rel (0) target = $region37
  $region36: #{encoder_forward.1} parent=0 // pred_region
    _
  $region37: #{encoder_forward.1} parent=0 // pred_fallthru
    _
  // Predicated region
  $region38: #{encoder_forward.1} parent=0 // pred_check
    _
  $region39: #{encoder_forward.1} parent=0 // pred_check_branch
    %41 = sbr.rel (0) target = $region41
  $region40: #{encoder_forward.1} parent=0 // pred_region
    _
  $region41: #{encoder_forward.1} parent=0 // pred_fallthru
    _
  // Predicated region
  $region42: #{encoder_forward.1} parent=0 // pred_check
    _
  $region43: #{encoder_forward.1} parent=0 // pred_check_branch
    %43 = sbr.rel (0) target = $region45
  $region44: #{encoder_forward.1} parent=0 // pred_region
    _
  $region45: #{encoder_forward.1} parent=0 // pred_fallthru
    _
  // Predicated region
  $region46: #{encoder_forward.1} parent=0 // pred_check
    _
  $region47: #{encoder_forward.1} parent=0 // pred_check_branch
    %45 = sbr.rel (0) target = $region49
  $region48: #{encoder_forward.1} parent=0 // pred_region
    _
  $region49: #{encoder_forward.1} parent=0 // pred_fallthru
    _
  // Predicated region
  $region50: #{encoder_forward.1} parent=0 // pred_check
    _
  $region51: #{encoder_forward.1} parent=0 // pred_check_branch
    %47 = sbr.rel (0) target = $region53
  $region52: #{encoder_forward.1} parent=0 // pred_region
    _
  $region53: #{encoder_forward.1} parent=0 // pred_fallthru
    _
  // Predicated region
  $region54: #{encoder_forward.1} parent=0 // pred_check
    _
  $region55: #{encoder_forward.1} parent=0 // pred_check_branch
    %49 = sbr.rel (0) target = $region57
  $region56: #{encoder_forward.1} parent=0 // pred_region
    _
  $region57: #{encoder_forward.1} parent=0 // pred_fallthru
    _
  %v51 = vld [vmem:[%s0] sm:$0xf]
  %v52 = vld [vmem:[%s0 + $0x4] sm:$0xf]
  %v53 = vld [vmem:[%s0 + $0x8] sm:$0xf]
  %v54 = vld [vmem:[%s0 + $0xc] sm:$0xf]
  %v55 = vld [vmem:[%s0 + $0x10] sm:$0xf]
  %v56 = vld [vmem:[%s0 + $0x14] sm:$0xf]
  %v57 = vld [vmem:[%s0 + $0x18] sm:$0xf]
  %v58 = vld [vmem:[%s0 + $0x1c] sm:$0xf]
  %v59 = vld [vmem:[%s2] sm:$0xff]
  %v60 = vld [vmem:[%s2 + $0x8] sm:$0xff]
  %v61 = vld [vmem:[%s2 + $0x10] sm:$0xff]
  %v62 = vld [vmem:[%s2 + $0x18] sm:$0xff]
  %v63 = vld [vmem:[%s2 + $0x20] sm:$0xff]
  %v64 = vld [vmem:[%s2 + $0x28] sm:$0xff]
  %v65 = vld [vmem:[%s2 + $0x30] sm:$0xff]
  %v66 = vld [vmem:[%s2 + $0x38] sm:$0xff]
  %v67 = vld [vmem:[%s2 + $0x40] sm:$0xff]
  %v68 = vld [vmem:[%s2 + $0x48] sm:$0xff]
  %v69 = vld [vmem:[%s2 + $0x50] sm:$0xff]
  %v70 = vld [vmem:[%s2 + $0x58] sm:$0xff]
  %v71 = vld [vmem:[%s2 + $0x60] sm:$0xff]
  %v72 = vld [vmem:[%s2 + $0x68] sm:$0xff]
  %v73 = vld [vmem:[%s2 + $0x70] sm:$0xff]
  %v74 = vld [vmem:[%s2 + $0x78] sm:$0xff]
  %v75 = vld [vmem:[%s2 + $0x80] sm:$0xff]
  %v76 = vld [vmem:[%s2 + $0x88] sm:$0xff]
  %v77 = vld [vmem:[%s2 + $0x90] sm:$0xff]
  %v78 = vld [vmem:[%s2 + $0x98] sm:$0xff]
  %v79 = vld [vmem:[%s2 + $0xa0] sm:$0xff]
  %v80 = vld [vmem:[%s2 + $0xa8] sm:$0xff]
  %v81 = vld [vmem:[%s2 + $0xb0] sm:$0xff]
  %v82 = vld [vmem:[%s2 + $0xb8] sm:$0xff]
  %v83 = vld [vmem:[%s2 + $0xc0] sm:$0xff]
  %v84 = vld [vmem:[%s2 + $0xc8] sm:$0xff]
  %v85 = vld [vmem:[%s2 + $0xd0] sm:$0xff]
  %v86 = vld [vmem:[%s2 + $0xd8] sm:$0xff]
  %v87 = vld [vmem:[%s2 + $0xe0] sm:$0xff]
  %v88 = vld [vmem:[%s2 + $0xe8] sm:$0xff]
  %v89 = vld [vmem:[%s2 + $0xf0] sm:$0xff]
  %v90 = vld [vmem:[%s2 + $0xf8] sm:$0xff]
  %v91 = vld [vmem:[%s4] sm:$0xf]
  %v93 = vperm.slane %v91, 0
  %v94 = vperm.slane %v91, 1
  %v95 = vperm.slane %v91, 2
  %v96 = vperm.slane %v91, 3
  %v109 = vunpack.c.l.b16 %v51
  %v110 = vunpack.c.l.b16 %v52
  %v111 = vunpack.c.l.b16 %v53
  %v112 = vunpack.c.l.b16 %v54
  %v113 = vunpack.c.l.b16 %v55
  %v114 = vunpack.c.l.b16 %v56
  %v115 = vunpack.c.l.b16 %v57
  %v116 = vunpack.c.l.b16 %v58
  %v117 = vpack.c.b16 %v110, %v109
  %v118 = vpack.c.b16 %v112, %v111
  %v119 = vpack.c.b16 %v114, %v113
  %v120 = vpack.c.b16 %v116, %v115
  %v157 = vunpack.c.l.b16 %v59
  %v158 = vunpack.c.h.b16 %v59
  %v159 = vunpack.c.l.b16 %v60
  %v160 = vunpack.c.h.b16 %v60
  %v161 = vunpack.c.l.b16 %v61
  %v162 = vunpack.c.h.b16 %v61
  %v163 = vunpack.c.l.b16 %v62
  %v164 = vunpack.c.h.b16 %v62
  %v165 = vunpack.c.l.b16 %v63
  %v166 = vunpack.c.h.b16 %v63
  %v167 = vunpack.c.l.b16 %v64
  %v168 = vunpack.c.h.b16 %v64
  %v169 = vunpack.c.l.b16 %v65
  %v170 = vunpack.c.h.b16 %v65
  %v171 = vunpack.c.l.b16 %v66
  %v172 = vunpack.c.h.b16 %v66
  %v173 = vunpack.c.l.b16 %v67
  %v174 = vunpack.c.h.b16 %v67
  %v175 = vunpack.c.l.b16 %v68
  %v176 = vunpack.c.h.b16 %v68
  %v177 = vunpack.c.l.b16 %v69
  %v178 = vunpack.c.h.b16 %v69
  %v179 = vunpack.c.l.b16 %v70
  %v180 = vunpack.c.h.b16 %v70
  %v181 = vunpack.c.l.b16 %v71
  %v182 = vunpack.c.h.b16 %v71
  %v183 = vunpack.c.l.b16 %v72
  %v184 = vunpack.c.h.b16 %v72
  %v185 = vunpack.c.l.b16 %v73
  %v186 = vunpack.c.h.b16 %v73
  %v187 = vunpack.c.l.b16 %v74
  %v188 = vunpack.c.h.b16 %v74
  %v189 = vunpack.c.l.b16 %v75
  %v190 = vunpack.c.h.b16 %v75
  %v191 = vunpack.c.l.b16 %v76
  %v192 = vunpack.c.h.b16 %v76
  %v193 = vunpack.c.l.b16 %v77
  %v194 = vunpack.c.h.b16 %v77
  %v195 = vunpack.c.l.b16 %v78
  %v196 = vunpack.c.h.b16 %v78
  %v197 = vunpack.c.l.b16 %v79
  %v198 = vunpack.c.h.b16 %v79
  %v199 = vunpack.c.l.b16 %v80
  %v200 = vunpack.c.h.b16 %v80
  %v201 = vunpack.c.l.b16 %v81
  %v202 = vunpack.c.h.b16 %v81
  %v203 = vunpack.c.l.b16 %v82
  %v204 = vunpack.c.h.b16 %v82
  %v205 = vunpack.c.l.b16 %v83
  %v206 = vunpack.c.h.b16 %v83
  %v207 = vunpack.c.l.b16 %v84
  %v208 = vunpack.c.h.b16 %v84
  %v209 = vunpack.c.l.b16 %v85
  %v210 = vunpack.c.h.b16 %v85
  %v211 = vunpack.c.l.b16 %v86
  %v212 = vunpack.c.h.b16 %v86
  %v213 = vunpack.c.l.b16 %v87
  %v214 = vunpack.c.h.b16 %v87
  %v215 = vunpack.c.l.b16 %v88
  %v216 = vunpack.c.h.b16 %v88
  %v217 = vunpack.c.l.b16 %v89
  %v218 = vunpack.c.h.b16 %v89
  %v219 = vunpack.c.l.b16 %v90
  %v220 = vunpack.c.h.b16 %v90
  %v221 = vpack.c.b16 %v161, %v157
  %v222 = vpack.c.b16 %v162, %v158
  %v223 = vpack.c.b16 %v163, %v159
  %v224 = vpack.c.b16 %v164, %v160
  %v225 = vpack.c.b16 %v169, %v165
  %v226 = vpack.c.b16 %v170, %v166
  %v227 = vpack.c.b16 %v171, %v167
  %v228 = vpack.c.b16 %v172, %v168
  %v229 = vpack.c.b16 %v177, %v173
  %v230 = vpack.c.b16 %v178, %v174
  %v231 = vpack.c.b16 %v179, %v175
  %v232 = vpack.c.b16 %v180, %v176
  %v233 = vpack.c.b16 %v185, %v181
  %v234 = vpack.c.b16 %v186, %v182
  %v235 = vpack.c.b16 %v187, %v183
  %v236 = vpack.c.b16 %v188, %v184
  %v237 = vpack.c.b16 %v193, %v189
  %v238 = vpack.c.b16 %v194, %v190
  %v239 = vpack.c.b16 %v195, %v191
  %v240 = vpack.c.b16 %v196, %v192
  %v241 = vpack.c.b16 %v201, %v197
  %v242 = vpack.c.b16 %v202, %v198
  %v243 = vpack.c.b16 %v203, %v199
  %v244 = vpack.c.b16 %v204, %v200
  %v245 = vpack.c.b16 %v209, %v205
  %v246 = vpack.c.b16 %v210, %v206
  %v247 = vpack.c.b16 %v211, %v207
  %v248 = vpack.c.b16 %v212, %v208
  %v249 = vpack.c.b16 %v217, %v213
  %v250 = vpack.c.b16 %v218, %v214
  %v251 = vpack.c.b16 %v219, %v215
  %v252 = vpack.c.b16 %v220, %v216
  %285 = vmatpush.bf16.msra.mxu0 %v249
  %286 = vmatpush.bf16.msra.mxu0 %v245
  %287 = vmatpush.bf16.msra.mxu0 %v241
  %288 = vmatpush.bf16.msra.mxu0 %v237
  %289 = vmatpush.bf16.msra.mxu0 %v233
  %290 = vmatpush.bf16.msra.mxu0 %v229
  %291 = vmatpush.bf16.msra.mxu0 %v225
  %292 = vmatpush.bf16.msra.mxu0 %v221
  %293 = vmatmul.bf16.gmra.mxu0 %v117
  %v294 = vpop.f32.mrf.mxu0
  %v295 = vadd.f32 %v93, %v294
  %v296 = vpop.f32.mrf.mxu0
  %v297 = vadd.f32 %v93, %v296
  %298 = vmatmul.bf16.gmra.mxu0 %v118
  %v299 = vpop.f32.mrf.mxu0
  %v300 = vadd.f32 %v93, %v299
  %v301 = vpop.f32.mrf.mxu0
  %v302 = vadd.f32 %v93, %v301
  %303 = vmatmul.bf16.gmra.mxu0 %v119
  %v304 = vpop.f32.mrf.mxu0
  %v305 = vadd.f32 %v93, %v304
  %v306 = vpop.f32.mrf.mxu0
  %v307 = vadd.f32 %v93, %v306
  %308 = vmatmul.bf16.gmra.mxu0 %v120
  %v309 = vpop.f32.mrf.mxu0
  %v310 = vadd.f32 %v93, %v309
  %v311 = vpop.f32.mrf.mxu0
  %v312 = vadd.f32 %v93, %v311
  %313 = vdwg.mxu0
  %314 = vmatpush.bf16.msra.mxu0 %v250
  %315 = vmatpush.bf16.msra.mxu0 %v246
  %316 = vmatpush.bf16.msra.mxu0 %v242
  %317 = vmatpush.bf16.msra.mxu0 %v238
  %318 = vmatpush.bf16.msra.mxu0 %v234
  %319 = vmatpush.bf16.msra.mxu0 %v230
  %320 = vmatpush.bf16.msra.mxu0 %v226
  %321 = vmatpush.bf16.msra.mxu0 %v222
  %322 = vmatmul.bf16.gmra.mxu0 %v117
  %v323 = vpop.f32.mrf.mxu0
  %v324 = vadd.f32 %v94, %v323
  %v325 = vpop.f32.mrf.mxu0
  %v326 = vadd.f32 %v94, %v325
  %327 = vmatmul.bf16.gmra.mxu0 %v118
  %v328 = vpop.f32.mrf.mxu0
  %v329 = vadd.f32 %v94, %v328
  %v330 = vpop.f32.mrf.mxu0
  %v331 = vadd.f32 %v94, %v330
  %332 = vmatmul.bf16.gmra.mxu0 %v119
  %v333 = vpop.f32.mrf.mxu0
  %v334 = vadd.f32 %v94, %v333
  %v335 = vpop.f32.mrf.mxu0
  %v336 = vadd.f32 %v94, %v335
  %337 = vmatmul.bf16.gmra.mxu0 %v120
  %v338 = vpop.f32.mrf.mxu0
  %v339 = vadd.f32 %v94, %v338
  %v340 = vpop.f32.mrf.mxu0
  %v341 = vadd.f32 %v94, %v340
  %342 = vdwg.mxu0
  %343 = vmatpush.bf16.msra.mxu0 %v251
  %344 = vmatpush.bf16.msra.mxu0 %v247
  %345 = vmatpush.bf16.msra.mxu0 %v243
  %346 = vmatpush.bf16.msra.mxu0 %v239
  %347 = vmatpush.bf16.msra.mxu0 %v235
  %348 = vmatpush.bf16.msra.mxu0 %v231
  %349 = vmatpush.bf16.msra.mxu0 %v227
  %350 = vmatpush.bf16.msra.mxu0 %v223
  %351 = vmatmul.bf16.gmra.mxu0 %v117
  %v352 = vpop.f32.mrf.mxu0
  %v353 = vadd.f32 %v95, %v352
  %v354 = vpop.f32.mrf.mxu0
  %v355 = vadd.f32 %v95, %v354
  %356 = vmatmul.bf16.gmra.mxu0 %v118
  %v357 = vpop.f32.mrf.mxu0
  %v358 = vadd.f32 %v95, %v357
  %v359 = vpop.f32.mrf.mxu0
  %v360 = vadd.f32 %v95, %v359
  %361 = vmatmul.bf16.gmra.mxu0 %v119
  %v362 = vpop.f32.mrf.mxu0
  %v363 = vadd.f32 %v95, %v362
  %v364 = vpop.f32.mrf.mxu0
  %v365 = vadd.f32 %v95, %v364
  %366 = vmatmul.bf16.gmra.mxu0 %v120
  %v367 = vpop.f32.mrf.mxu0
  %v368 = vadd.f32 %v95, %v367
  %v369 = vpop.f32.mrf.mxu0
  %v370 = vadd.f32 %v95, %v369
  %371 = vdwg.mxu0
  %372 = vmatpush.bf16.msra.mxu0 %v252
  %373 = vmatpush.bf16.msra.mxu0 %v248
  %374 = vmatpush.bf16.msra.mxu0 %v244
  %375 = vmatpush.bf16.msra.mxu0 %v240
  %376 = vmatpush.bf16.msra.mxu0 %v236
  %377 = vmatpush.bf16.msra.mxu0 %v232
  %378 = vmatpush.bf16.msra.mxu0 %v228
  %379 = vmatpush.bf16.msra.mxu0 %v224
  %380 = vmatmul.bf16.gmra.mxu0 %v117
  %v381 = vpop.f32.mrf.mxu0
  %v382 = vadd.f32 %v96, %v381
  %v383 = vpop.f32.mrf.mxu0
  %v384 = vadd.f32 %v96, %v383
  %385 = vmatmul.bf16.gmra.mxu0 %v118
  %v386 = vpop.f32.mrf.mxu0
  %v387 = vadd.f32 %v96, %v386
  %v388 = vpop.f32.mrf.mxu0
  %v389 = vadd.f32 %v96, %v388
  %390 = vmatmul.bf16.gmra.mxu0 %v119
  %v391 = vpop.f32.mrf.mxu0
  %v392 = vadd.f32 %v96, %v391
  %v393 = vpop.f32.mrf.mxu0
  %v394 = vadd.f32 %v96, %v393
  %395 = vmatmul.bf16.gmra.mxu0 %v120
  %v396 = vpop.f32.mrf.mxu0
  %v397 = vadd.f32 %v96, %v396
  %v398 = vpop.f32.mrf.mxu0
  %v399 = vadd.f32 %v96, %v398
  %400 = vdwg.mxu0
  %401 = vst [vmem:[#allocation2] sm:$0xff] %v295
  %402 = vst [vmem:[#allocation2 + $0x8] sm:$0xff] %v324
  %403 = vst [vmem:[#allocation2 + $0x10] sm:$0xff] %v353
  %404 = vst [vmem:[#allocation2 + $0x18] sm:$0xff] %v382
  %405 = vst [vmem:[#allocation2 + $0x20] sm:$0xff] %v297
  %406 = vst [vmem:[#allocation2 + $0x28] sm:$0xff] %v326
  %407 = vst [vmem:[#allocation2 + $0x30] sm:$0xff] %v355
  %408 = vst [vmem:[#allocation2 + $0x38] sm:$0xff] %v384
  %409 = vst [vmem:[#allocation2 + $0x40] sm:$0xff] %v300
  %410 = vst [vmem:[#allocation2 + $0x48] sm:$0xff] %v329
  %411 = vst [vmem:[#allocation2 + $0x50] sm:$0xff] %v358
  %412 = vst [vmem:[#allocation2 + $0x58] sm:$0xff] %v387
  %413 = vst [vmem:[#allocation2 + $0x60] sm:$0xff] %v302
  %414 = vst [vmem:[#allocation2 + $0x68] sm:$0xff] %v331
  %415 = vst [vmem:[#allocation2 + $0x70] sm:$0xff] %v360
  %416 = vst [vmem:[#allocation2 + $0x78] sm:$0xff] %v389
  %417 = vst [vmem:[#allocation2 + $0x80] sm:$0xff] %v305
  %418 = vst [vmem:[#allocation2 + $0x88] sm:$0xff] %v334
  %419 = vst [vmem:[#allocation2 + $0x90] sm:$0xff] %v363
  %420 = vst [vmem:[#allocation2 + $0x98] sm:$0xff] %v392
  %421 = vst [vmem:[#allocation2 + $0xa0] sm:$0xff] %v307
  %422 = vst [vmem:[#allocation2 + $0xa8] sm:$0xff] %v336
  %423 = vst [vmem:[#allocation2 + $0xb0] sm:$0xff] %v365
  %424 = vst [vmem:[#allocation2 + $0xb8] sm:$0xff] %v394
  %425 = vst [vmem:[#allocation2 + $0xc0] sm:$0xff] %v310
  %426 = vst [vmem:[#allocation2 + $0xc8] sm:$0xff] %v339
  %427 = vst [vmem:[#allocation2 + $0xd0] sm:$0xff] %v368
  %428 = vst [vmem:[#allocation2 + $0xd8] sm:$0xff] %v397
  %429 = vst [vmem:[#allocation2 + $0xe0] sm:$0xff] %v312
  %430 = vst [vmem:[#allocation2 + $0xe8] sm:$0xff] %v341
  %431 = vst [vmem:[#allocation2 + $0xf0] sm:$0xff] %v370
  %432 = vst [vmem:[#allocation2 + $0xf8] sm:$0xff] %v399
  %v433 = vld [vmem:[%s3] sm:$0xff]
  %v434 = vld [vmem:[%s3 + $0x8] sm:$0xff]
  %v435 = vld [vmem:[%s3 + $0x10] sm:$0xff]
  %v436 = vld [vmem:[%s3 + $0x18] sm:$0xff]
  %v437 = vld [vmem:[%s3 + $0x20] sm:$0xff]
  %v438 = vld [vmem:[%s3 + $0x28] sm:$0xff]
  %v439 = vld [vmem:[%s3 + $0x30] sm:$0xff]
  %v440 = vld [vmem:[%s3 + $0x38] sm:$0xff]
  %v441 = vld [vmem:[%s3 + $0x40] sm:$0xff]
  %v442 = vld [vmem:[%s3 + $0x48] sm:$0xff]
  %v443 = vld [vmem:[%s3 + $0x50] sm:$0xff]
  %v444 = vld [vmem:[%s3 + $0x58] sm:$0xff]
  %v445 = vld [vmem:[%s3 + $0x60] sm:$0xff]
  %v446 = vld [vmem:[%s3 + $0x68] sm:$0xff]
  %v447 = vld [vmem:[%s3 + $0x70] sm:$0xff]
  %v448 = vld [vmem:[%s3 + $0x78] sm:$0xff]
  %v449 = vld [vmem:[%s3 + $0x80] sm:$0xff]
  %v450 = vld [vmem:[%s3 + $0x88] sm:$0xff]
  %v451 = vld [vmem:[%s3 + $0x90] sm:$0xff]
  %v452 = vld [vmem:[%s3 + $0x98] sm:$0xff]
  %v453 = vld [vmem:[%s3 + $0xa0] sm:$0xff]
  %v454 = vld [vmem:[%s3 + $0xa8] sm:$0xff]
  %v455 = vld [vmem:[%s3 + $0xb0] sm:$0xff]
  %v456 = vld [vmem:[%s3 + $0xb8] sm:$0xff]
  %v457 = vld [vmem:[%s3 + $0xc0] sm:$0xff]
  %v458 = vld [vmem:[%s3 + $0xc8] sm:$0xff]
  %v459 = vld [vmem:[%s3 + $0xd0] sm:$0xff]
  %v460 = vld [vmem:[%s3 + $0xd8] sm:$0xff]
  %v461 = vld [vmem:[%s3 + $0xe0] sm:$0xff]
  %v462 = vld [vmem:[%s3 + $0xe8] sm:$0xff]
  %v463 = vld [vmem:[%s3 + $0xf0] sm:$0xff]
  %v464 = vld [vmem:[%s3 + $0xf8] sm:$0xff]
  %v465 = vld [vmem:[%s5] sm:$0xf]
  %v467 = vperm.slane %v465, 0
  %v468 = vperm.slane %v465, 1
  %v469 = vperm.slane %v465, 2
  %v470 = vperm.slane %v465, 3
  %v507 = vunpack.c.l.b16 %v433
  %v508 = vunpack.c.h.b16 %v433
  %v509 = vunpack.c.l.b16 %v434
  %v510 = vunpack.c.h.b16 %v434
  %v511 = vunpack.c.l.b16 %v435
  %v512 = vunpack.c.h.b16 %v435
  %v513 = vunpack.c.l.b16 %v436
  %v514 = vunpack.c.h.b16 %v436
  %v515 = vunpack.c.l.b16 %v437
  %v516 = vunpack.c.h.b16 %v437
  %v517 = vunpack.c.l.b16 %v438
  %v518 = vunpack.c.h.b16 %v438
  %v519 = vunpack.c.l.b16 %v439
  %v520 = vunpack.c.h.b16 %v439
  %v521 = vunpack.c.l.b16 %v440
  %v522 = vunpack.c.h.b16 %v440
  %v523 = vunpack.c.l.b16 %v441
  %v524 = vunpack.c.h.b16 %v441
  %v525 = vunpack.c.l.b16 %v442
  %v526 = vunpack.c.h.b16 %v442
  %v527 = vunpack.c.l.b16 %v443
  %v528 = vunpack.c.h.b16 %v443
  %v529 = vunpack.c.l.b16 %v444
  %v530 = vunpack.c.h.b16 %v444
  %v531 = vunpack.c.l.b16 %v445
  %v532 = vunpack.c.h.b16 %v445
  %v533 = vunpack.c.l.b16 %v446
  %v534 = vunpack.c.h.b16 %v446
  %v535 = vunpack.c.l.b16 %v447
  %v536 = vunpack.c.h.b16 %v447
  %v537 = vunpack.c.l.b16 %v448
  %v538 = vunpack.c.h.b16 %v448
  %v539 = vunpack.c.l.b16 %v449
  %v540 = vunpack.c.h.b16 %v449
  %v541 = vunpack.c.l.b16 %v450
  %v542 = vunpack.c.h.b16 %v450
  %v543 = vunpack.c.l.b16 %v451
  %v544 = vunpack.c.h.b16 %v451
  %v545 = vunpack.c.l.b16 %v452
  %v546 = vunpack.c.h.b16 %v452
  %v547 = vunpack.c.l.b16 %v453
  %v548 = vunpack.c.h.b16 %v453
  %v549 = vunpack.c.l.b16 %v454
  %v550 = vunpack.c.h.b16 %v454
  %v551 = vunpack.c.l.b16 %v455
  %v552 = vunpack.c.h.b16 %v455
  %v553 = vunpack.c.l.b16 %v456
  %v554 = vunpack.c.h.b16 %v456
  %v555 = vunpack.c.l.b16 %v457
  %v556 = vunpack.c.h.b16 %v457
  %v557 = vunpack.c.l.b16 %v458
  %v558 = vunpack.c.h.b16 %v458
  %v559 = vunpack.c.l.b16 %v459
  %v560 = vunpack.c.h.b16 %v459
  %v561 = vunpack.c.l.b16 %v460
  %v562 = vunpack.c.h.b16 %v460
  %v563 = vunpack.c.l.b16 %v461
  %v564 = vunpack.c.h.b16 %v461
  %v565 = vunpack.c.l.b16 %v462
  %v566 = vunpack.c.h.b16 %v462
  %v567 = vunpack.c.l.b16 %v463
  %v568 = vunpack.c.h.b16 %v463
  %v569 = vunpack.c.l.b16 %v464
  %v570 = vunpack.c.h.b16 %v464
  %v571 = vpack.c.b16 %v511, %v507
  %v572 = vpack.c.b16 %v512, %v508
  %v573 = vpack.c.b16 %v513, %v509
  %v574 = vpack.c.b16 %v514, %v510
  %v575 = vpack.c.b16 %v519, %v515
  %v576 = vpack.c.b16 %v520, %v516
  %v577 = vpack.c.b16 %v521, %v517
  %v578 = vpack.c.b16 %v522, %v518
  %v579 = vpack.c.b16 %v527, %v523
  %v580 = vpack.c.b16 %v528, %v524
  %v581 = vpack.c.b16 %v529, %v525
  %v582 = vpack.c.b16 %v530, %v526
  %v583 = vpack.c.b16 %v535, %v531
  %v584 = vpack.c.b16 %v536, %v532
  %v585 = vpack.c.b16 %v537, %v533
  %v586 = vpack.c.b16 %v538, %v534
  %v587 = vpack.c.b16 %v543, %v539
  %v588 = vpack.c.b16 %v544, %v540
  %v589 = vpack.c.b16 %v545, %v541
  %v590 = vpack.c.b16 %v546, %v542
  %v591 = vpack.c.b16 %v551, %v547
  %v592 = vpack.c.b16 %v552, %v548
  %v593 = vpack.c.b16 %v553, %v549
  %v594 = vpack.c.b16 %v554, %v550
  %v595 = vpack.c.b16 %v559, %v555
  %v596 = vpack.c.b16 %v560, %v556
  %v597 = vpack.c.b16 %v561, %v557
  %v598 = vpack.c.b16 %v562, %v558
  %v599 = vpack.c.b16 %v567, %v563
  %v600 = vpack.c.b16 %v568, %v564
  %v601 = vpack.c.b16 %v569, %v565
  %v602 = vpack.c.b16 %v570, %v566
  %635 = vmatpush.bf16.msra.mxu0 %v599
  %636 = vmatpush.bf16.msra.mxu0 %v595
  %637 = vmatpush.bf16.msra.mxu0 %v591
  %638 = vmatpush.bf16.msra.mxu0 %v587
  %639 = vmatpush.bf16.msra.mxu0 %v583
  %640 = vmatpush.bf16.msra.mxu0 %v579
  %641 = vmatpush.bf16.msra.mxu0 %v575
  %642 = vmatpush.bf16.msra.mxu0 %v571
  %643 = vmatmul.bf16.gmra.mxu0 %v117
  %v644 = vpop.f32.mrf.mxu0
  %v645 = vadd.f32 %v467, %v644
  %v646 = vpop.f32.mrf.mxu0
  %v647 = vadd.f32 %v467, %v646
  %648 = vmatmul.bf16.gmra.mxu0 %v118
  %v649 = vpop.f32.mrf.mxu0
  %v650 = vadd.f32 %v467, %v649
  %v651 = vpop.f32.mrf.mxu0
  %v652 = vadd.f32 %v467, %v651
  %653 = vmatmul.bf16.gmra.mxu0 %v119
  %v654 = vpop.f32.mrf.mxu0
  %v655 = vadd.f32 %v467, %v654
  %v656 = vpop.f32.mrf.mxu0
  %v657 = vadd.f32 %v467, %v656
  %658 = vmatmul.bf16.gmra.mxu0 %v120
  %v659 = vpop.f32.mrf.mxu0
  %v660 = vadd.f32 %v467, %v659
  %v661 = vpop.f32.mrf.mxu0
  %v662 = vadd.f32 %v467, %v661
  %663 = vdwg.mxu0
  %664 = vmatpush.bf16.msra.mxu0 %v600
  %665 = vmatpush.bf16.msra.mxu0 %v596
  %666 = vmatpush.bf16.msra.mxu0 %v592
  %667 = vmatpush.bf16.msra.mxu0 %v588
  %668 = vmatpush.bf16.msra.mxu0 %v584
  %669 = vmatpush.bf16.msra.mxu0 %v580
  %670 = vmatpush.bf16.msra.mxu0 %v576
  %671 = vmatpush.bf16.msra.mxu0 %v572
  %672 = vmatmul.bf16.gmra.mxu0 %v117
  %v673 = vpop.f32.mrf.mxu0
  %v674 = vadd.f32 %v468, %v673
  %v675 = vpop.f32.mrf.mxu0
  %v676 = vadd.f32 %v468, %v675
  %677 = vmatmul.bf16.gmra.mxu0 %v118
  %v678 = vpop.f32.mrf.mxu0
  %v679 = vadd.f32 %v468, %v678
  %v680 = vpop.f32.mrf.mxu0
  %v681 = vadd.f32 %v468, %v680
  %682 = vmatmul.bf16.gmra.mxu0 %v119
  %v683 = vpop.f32.mrf.mxu0
  %v684 = vadd.f32 %v468, %v683
  %v685 = vpop.f32.mrf.mxu0
  %v686 = vadd.f32 %v468, %v685
  %687 = vmatmul.bf16.gmra.mxu0 %v120
  %v688 = vpop.f32.mrf.mxu0
  %v689 = vadd.f32 %v468, %v688
  %v690 = vpop.f32.mrf.mxu0
  %v691 = vadd.f32 %v468, %v690
  %692 = vdwg.mxu0
  %693 = vmatpush.bf16.msra.mxu0 %v601
  %694 = vmatpush.bf16.msra.mxu0 %v597
  %695 = vmatpush.bf16.msra.mxu0 %v593
  %696 = vmatpush.bf16.msra.mxu0 %v589
  %697 = vmatpush.bf16.msra.mxu0 %v585
  %698 = vmatpush.bf16.msra.mxu0 %v581
  %699 = vmatpush.bf16.msra.mxu0 %v577
  %700 = vmatpush.bf16.msra.mxu0 %v573
  %701 = vmatmul.bf16.gmra.mxu0 %v117
  %v702 = vpop.f32.mrf.mxu0
  %v703 = vadd.f32 %v469, %v702
  %v704 = vpop.f32.mrf.mxu0
  %v705 = vadd.f32 %v469, %v704
  %706 = vmatmul.bf16.gmra.mxu0 %v118
  %v707 = vpop.f32.mrf.mxu0
  %v708 = vadd.f32 %v469, %v707
  %v709 = vpop.f32.mrf.mxu0
  %v710 = vadd.f32 %v469, %v709
  %711 = vmatmul.bf16.gmra.mxu0 %v119
  %v712 = vpop.f32.mrf.mxu0
  %v713 = vadd.f32 %v469, %v712
  %v714 = vpop.f32.mrf.mxu0
  %v715 = vadd.f32 %v469, %v714
  %716 = vmatmul.bf16.gmra.mxu0 %v120
  %v717 = vpop.f32.mrf.mxu0
  %v718 = vadd.f32 %v469, %v717
  %v719 = vpop.f32.mrf.mxu0
  %v720 = vadd.f32 %v469, %v719
  %721 = vdwg.mxu0
  %722 = vmatpush.bf16.msra.mxu0 %v602
  %723 = vmatpush.bf16.msra.mxu0 %v598
  %724 = vmatpush.bf16.msra.mxu0 %v594
  %725 = vmatpush.bf16.msra.mxu0 %v590
  %726 = vmatpush.bf16.msra.mxu0 %v586
  %727 = vmatpush.bf16.msra.mxu0 %v582
  %728 = vmatpush.bf16.msra.mxu0 %v578
  %729 = vmatpush.bf16.msra.mxu0 %v574
  %730 = vmatmul.bf16.gmra.mxu0 %v117
  %v731 = vpop.f32.mrf.mxu0
  %v732 = vadd.f32 %v470, %v731
  %v733 = vpop.f32.mrf.mxu0
  %v734 = vadd.f32 %v470, %v733
  %735 = vmatmul.bf16.gmra.mxu0 %v118
  %v736 = vpop.f32.mrf.mxu0
  %v737 = vadd.f32 %v470, %v736
  %v738 = vpop.f32.mrf.mxu0
  %v739 = vadd.f32 %v470, %v738
  %740 = vmatmul.bf16.gmra.mxu0 %v119
  %v741 = vpop.f32.mrf.mxu0
  %v742 = vadd.f32 %v470, %v741
  %v743 = vpop.f32.mrf.mxu0
  %v744 = vadd.f32 %v470, %v743
  %745 = vmatmul.bf16.gmra.mxu0 %v120
  %v746 = vpop.f32.mrf.mxu0
  %v747 = vadd.f32 %v470, %v746
  %v748 = vpop.f32.mrf.mxu0
  %v749 = vadd.f32 %v470, %v748
  %750 = vdwg.mxu0
  %751 = vst [vmem:[#allocation3] sm:$0xff] %v645
  %752 = vst [vmem:[#allocation3 + $0x8] sm:$0xff] %v674
  %753 = vst [vmem:[#allocation3 + $0x10] sm:$0xff] %v703
  %754 = vst [vmem:[#allocation3 + $0x18] sm:$0xff] %v732
  %755 = vst [vmem:[#allocation3 + $0x20] sm:$0xff] %v647
  %756 = vst [vmem:[#allocation3 + $0x28] sm:$0xff] %v676
  %757 = vst [vmem:[#allocation3 + $0x30] sm:$0xff] %v705
  %758 = vst [vmem:[#allocation3 + $0x38] sm:$0xff] %v734
  %759 = vst [vmem:[#allocation3 + $0x40] sm:$0xff] %v650
  %760 = vst [vmem:[#allocation3 + $0x48] sm:$0xff] %v679
  %761 = vst [vmem:[#allocation3 + $0x50] sm:$0xff] %v708
  %762 = vst [vmem:[#allocation3 + $0x58] sm:$0xff] %v737
  %763 = vst [vmem:[#allocation3 + $0x60] sm:$0xff] %v652
  %764 = vst [vmem:[#allocation3 + $0x68] sm:$0xff] %v681
  %765 = vst [vmem:[#allocation3 + $0x70] sm:$0xff] %v710
  %766 = vst [vmem:[#allocation3 + $0x78] sm:$0xff] %v739
  %767 = vst [vmem:[#allocation3 + $0x80] sm:$0xff] %v655
  %768 = vst [vmem:[#allocation3 + $0x88] sm:$0xff] %v684
  %769 = vst [vmem:[#allocation3 + $0x90] sm:$0xff] %v713
  %770 = vst [vmem:[#allocation3 + $0x98] sm:$0xff] %v742
  %771 = vst [vmem:[#allocation3 + $0xa0] sm:$0xff] %v657
  %772 = vst [vmem:[#allocation3 + $0xa8] sm:$0xff] %v686
  %773 = vst [vmem:[#allocation3 + $0xb0] sm:$0xff] %v715
  %774 = vst [vmem:[#allocation3 + $0xb8] sm:$0xff] %v744
  %775 = vst [vmem:[#allocation3 + $0xc0] sm:$0xff] %v660
  %776 = vst [vmem:[#allocation3 + $0xc8] sm:$0xff] %v689
  %777 = vst [vmem:[#allocation3 + $0xd0] sm:$0xff] %v718
  %778 = vst [vmem:[#allocation3 + $0xd8] sm:$0xff] %v747
  %779 = vst [vmem:[#allocation3 + $0xe0] sm:$0xff] %v662
  %780 = vst [vmem:[#allocation3 + $0xe8] sm:$0xff] %v691
  %781 = vst [vmem:[#allocation3 + $0xf0] sm:$0xff] %v720
  %782 = vst [vmem:[#allocation3 + $0xf8] sm:$0xff] %v749
  %v783 = vld [vmem:[%s1] sm:$0xff]
  %vm784 = vcmp.gt.s32.totalorder %v783, 0
  %v785 = vsel %vm784, 1, 0
  %v786 = vcvt.s32.f32 %v785
  %vm787 = vcmp.gt.s32.totalorder %v783, 7
  %v788 = vsel %vm787, 1, 0
  %v789 = vcvt.s32.f32 %v788
  %s790 = smul.u32 0, 4
  %s791 = smul.addr %s790, 8
  %s792 = scalar_lea.vmem [#allocation2], %s791
  %v793 = vld [vmem:[%s792] sm:$0xff]
  %v794 = vld [vmem:[%s792 + $0x8] sm:$0xff]
  %v795 = vld [vmem:[%s792 + $0x10] sm:$0xff]
  %v796 = vld [vmem:[%s792 + $0x18] sm:$0xff]
  %v797 = vld [vmem:[%s6] sm:$0xff]
  %v798 = vld [vmem:[%s6 + $0x8] sm:$0xff]
  %v799 = vld [vmem:[%s6 + $0x10] sm:$0xff]
  %v800 = vld [vmem:[%s6 + $0x18] sm:$0xff]
  %v801 = vld [vmem:[%s6 + $0x20] sm:$0xff]
  %v802 = vld [vmem:[%s6 + $0x28] sm:$0xff]
  %v803 = vld [vmem:[%s6 + $0x30] sm:$0xff]
  %v804 = vld [vmem:[%s6 + $0x38] sm:$0xff]
  %v805 = vld [vmem:[%s6 + $0x40] sm:$0xff]
  %v806 = vld [vmem:[%s6 + $0x48] sm:$0xff]
  %v807 = vld [vmem:[%s6 + $0x50] sm:$0xff]
  %v808 = vld [vmem:[%s6 + $0x58] sm:$0xff]
  %v809 = vld [vmem:[%s6 + $0x60] sm:$0xff]
  %v810 = vld [vmem:[%s6 + $0x68] sm:$0xff]
  %v811 = vld [vmem:[%s6 + $0x70] sm:$0xff]
  %v812 = vld [vmem:[%s6 + $0x78] sm:$0xff]
  %v813 = vld [vmem:[%s6 + $0x80] sm:$0xff]
  %v814 = vld [vmem:[%s6 + $0x88] sm:$0xff]
  %v815 = vld [vmem:[%s6 + $0x90] sm:$0xff]
  %v816 = vld [vmem:[%s6 + $0x98] sm:$0xff]
  %v817 = vld [vmem:[%s6 + $0xa0] sm:$0xff]
  %v818 = vld [vmem:[%s6 + $0xa8] sm:$0xff]
  %v819 = vld [vmem:[%s6 + $0xb0] sm:$0xff]
  %v820 = vld [vmem:[%s6 + $0xb8] sm:$0xff]
  %v821 = vld [vmem:[%s6 + $0xc0] sm:$0xff]
  %v822 = vld [vmem:[%s6 + $0xc8] sm:$0xff]
  %v823 = vld [vmem:[%s6 + $0xd0] sm:$0xff]
  %v824 = vld [vmem:[%s6 + $0xd8] sm:$0xff]
  %v825 = vld [vmem:[%s6 + $0xe0] sm:$0xff]
  %v826 = vld [vmem:[%s6 + $0xe8] sm:$0xff]
  %v827 = vld [vmem:[%s6 + $0xf0] sm:$0xff]
  %v828 = vld [vmem:[%s6 + $0xf8] sm:$0xff]
  %v861 = vunpack.c.l.b16 %v797
  %v862 = vunpack.c.h.b16 %v797
  %v863 = vunpack.c.l.b16 %v798
  %v864 = vunpack.c.h.b16 %v798
  %v865 = vunpack.c.l.b16 %v799
  %v866 = vunpack.c.h.b16 %v799
  %v867 = vunpack.c.l.b16 %v800
  %v868 = vunpack.c.h.b16 %v800
  %v869 = vunpack.c.l.b16 %v801
  %v870 = vunpack.c.h.b16 %v801
  %v871 = vunpack.c.l.b16 %v802
  %v872 = vunpack.c.h.b16 %v802
  %v873 = vunpack.c.l.b16 %v803
  %v874 = vunpack.c.h.b16 %v803
  %v875 = vunpack.c.l.b16 %v804
  %v876 = vunpack.c.h.b16 %v804
  %v877 = vunpack.c.l.b16 %v805
  %v878 = vunpack.c.h.b16 %v805
  %v879 = vunpack.c.l.b16 %v806
  %v880 = vunpack.c.h.b16 %v806
  %v881 = vunpack.c.l.b16 %v807
  %v882 = vunpack.c.h.b16 %v807
  %v883 = vunpack.c.l.b16 %v808
  %v884 = vunpack.c.h.b16 %v808
  %v885 = vunpack.c.l.b16 %v809
  %v886 = vunpack.c.h.b16 %v809
  %v887 = vunpack.c.l.b16 %v810
  %v888 = vunpack.c.h.b16 %v810
  %v889 = vunpack.c.l.b16 %v811
  %v890 = vunpack.c.h.b16 %v811
  %v891 = vunpack.c.l.b16 %v812
  %v892 = vunpack.c.h.b16 %v812
  %v893 = vunpack.c.l.b16 %v813
  %v894 = vunpack.c.h.b16 %v813
  %v895 = vunpack.c.l.b16 %v814
  %v896 = vunpack.c.h.b16 %v814
  %v897 = vunpack.c.l.b16 %v815
  %v898 = vunpack.c.h.b16 %v815
  %v899 = vunpack.c.l.b16 %v816
  %v900 = vunpack.c.h.b16 %v816
  %v901 = vunpack.c.l.b16 %v817
  %v902 = vunpack.c.h.b16 %v817
  %v903 = vunpack.c.l.b16 %v818
  %v904 = vunpack.c.h.b16 %v818
  %v905 = vunpack.c.l.b16 %v819
  %v906 = vunpack.c.h.b16 %v819
  %v907 = vunpack.c.l.b16 %v820
  %v908 = vunpack.c.h.b16 %v820
  %v909 = vunpack.c.l.b16 %v821
  %v910 = vunpack.c.h.b16 %v821
  %v911 = vunpack.c.l.b16 %v822
  %v912 = vunpack.c.h.b16 %v822
  %v913 = vunpack.c.l.b16 %v823
  %v914 = vunpack.c.h.b16 %v823
  %v915 = vunpack.c.l.b16 %v824
  %v916 = vunpack.c.h.b16 %v824
  %v917 = vunpack.c.l.b16 %v825
  %v918 = vunpack.c.h.b16 %v825
  %v919 = vunpack.c.l.b16 %v826
  %v920 = vunpack.c.h.b16 %v826
  %v921 = vunpack.c.l.b16 %v827
  %v922 = vunpack.c.h.b16 %v827
  %v923 = vunpack.c.l.b16 %v828
  %v924 = vunpack.c.h.b16 %v828
  %v925 = vpack.c.b16 %v865, %v861
  %v926 = vpack.c.b16 %v866, %v862
  %v927 = vpack.c.b16 %v867, %v863
  %v928 = vpack.c.b16 %v868, %v864
  %v929 = vpack.c.b16 %v873, %v869
  %v930 = vpack.c.b16 %v874, %v870
  %v931 = vpack.c.b16 %v875, %v871
  %v932 = vpack.c.b16 %v876, %v872
  %v933 = vpack.c.b16 %v881, %v877
  %v934 = vpack.c.b16 %v882, %v878
  %v935 = vpack.c.b16 %v883, %v879
  %v936 = vpack.c.b16 %v884, %v880
  %v937 = vpack.c.b16 %v889, %v885
  %v938 = vpack.c.b16 %v890, %v886
  %v939 = vpack.c.b16 %v891, %v887
  %v940 = vpack.c.b16 %v892, %v888
  %v941 = vpack.c.b16 %v897, %v893
  %v942 = vpack.c.b16 %v898, %v894
  %v943 = vpack.c.b16 %v899, %v895
  %v944 = vpack.c.b16 %v900, %v896
  %v945 = vpack.c.b16 %v905, %v901
  %v946 = vpack.c.b16 %v906, %v902
  %v947 = vpack.c.b16 %v907, %v903
  %v948 = vpack.c.b16 %v908, %v904
  %v949 = vpack.c.b16 %v913, %v909
  %v950 = vpack.c.b16 %v914, %v910
  %v951 = vpack.c.b16 %v915, %v911
  %v952 = vpack.c.b16 %v916, %v912
  %v953 = vpack.c.b16 %v921, %v917
  %v954 = vpack.c.b16 %v922, %v918
  %v955 = vpack.c.b16 %v923, %v919
  %v956 = vpack.c.b16 %v924, %v920
  %989 = vmatpush.bf16.msra.mxu0 %v953
  %990 = vmatpush.bf16.msra.mxu0 %v949
  %991 = vmatpush.bf16.msra.mxu0 %v945
  %992 = vmatpush.bf16.msra.mxu0 %v941
  %993 = vmatpush.bf16.msra.mxu0 %v937
  %994 = vmatpush.bf16.msra.mxu0 %v933
  %995 = vmatpush.bf16.msra.mxu0 %v929
  %996 = vmatpush.bf16.msra.mxu0 %v925
  %997 = vmatmul.bf16.gmra.mxu0 0
  %v998 = vpop.f32.mrf.mxu0
  %v999 = vadd.f32 0.0, %v998
  %v1000 = vpop.f32.mrf.mxu0
  %1001 = vdwg.mxu0
  %1002 = vmatpush.bf16.msra.mxu0 %v954
  %1003 = vmatpush.bf16.msra.mxu0 %v950
  %1004 = vmatpush.bf16.msra.mxu0 %v946
  %1005 = vmatpush.bf16.msra.mxu0 %v942
  %1006 = vmatpush.bf16.msra.mxu0 %v938
  %1007 = vmatpush.bf16.msra.mxu0 %v934
  %1008 = vmatpush.bf16.msra.mxu0 %v930
  %1009 = vmatpush.bf16.msra.mxu0 %v926
  %1010 = vmatmul.bf16.gmra.mxu0 0
  %v1011 = vpop.f32.mrf.mxu0
  %v1012 = vadd.f32 0.0, %v1011
  %v1013 = vpop.f32.mrf.mxu0
  %1014 = vdwg.mxu0
  %1015 = vmatpush.bf16.msra.mxu0 %v955
  %1016 = vmatpush.bf16.msra.mxu0 %v951
  %1017 = vmatpush.bf16.msra.mxu0 %v947
  %1018 = vmatpush.bf16.msra.mxu0 %v943
  %1019 = vmatpush.bf16.msra.mxu0 %v939
  %1020 = vmatpush.bf16.msra.mxu0 %v935
  %1021 = vmatpush.bf16.msra.mxu0 %v931
  %1022 = vmatpush.bf16.msra.mxu0 %v927
  %1023 = vmatmul.bf16.gmra.mxu0 0
  %v1024 = vpop.f32.mrf.mxu0
  %v1025 = vadd.f32 0.0, %v1024
  %v1026 = vpop.f32.mrf.mxu0
  %1027 = vdwg.mxu0
  %1028 = vmatpush.bf16.msra.mxu0 %v956
  %1029 = vmatpush.bf16.msra.mxu0 %v952
  %1030 = vmatpush.bf16.msra.mxu0 %v948
  %1031 = vmatpush.bf16.msra.mxu0 %v944
  %1032 = vmatpush.bf16.msra.mxu0 %v940
  %1033 = vmatpush.bf16.msra.mxu0 %v936
  %1034 = vmatpush.bf16.msra.mxu0 %v932
  %1035 = vmatpush.bf16.msra.mxu0 %v928
  %1036 = vmatmul.bf16.gmra.mxu0 0
  %v1037 = vpop.f32.mrf.mxu0
  %v1038 = vadd.f32 0.0, %v1037
  %v1039 = vpop.f32.mrf.mxu0
  %1040 = vdwg.mxu0
  %v1041 = vadd.f32 %v793, %v999
  %v1042 = vadd.f32 %v794, %v1012
  %v1043 = vadd.f32 %v795, %v1025
  %v1044 = vadd.f32 %v796, %v1038
  %v1045 = vxor.u32 %v1041, 2147483648
  %v1046 = vmul.f32 %v1045, 1.442695
  %v1047 = vpow.pop %v1046
  %v1048 = vadd.f32 %v1047, 1.0
  %v1049 = vrcp.pop %v1048
  %v1050 = vmul.f32 %v1048, %v1049
  %v1051 = vsub.f32 1.0, %v1050
  %v1052 = vmul.f32 %v1049, %v1051
  %v1053 = vadd.f32 %v1049, %v1052
  %vm1054 = vweird.f32 %v1048
  %vm1055 = vweird.f32 %v1049
  %vm1056 = vmor %vm1054, %vm1055
  %v1057 = vsel %vm1056, %v1049, %v1053
  %v1058 = vand.u32 2147483647, %v1048
  %vm1059 = vcmp.eq.f32.partialorder %v1058, 8.507059e+37
  %v1060 = vand.u32 %v1048, 2147483648
  %v1061 = vor.u32 1.1754944e-38, %v1060
  %v1062 = vsel %vm1059, %v1061, %v1057
  %v1063 = vmul.f32 1.0, %v1062
  %v1064 = vxor.u32 %v1042, 2147483648
  %v1065 = vmul.f32 %v1064, 1.442695
  %v1066 = vpow.pop %v1065
  %v1067 = vadd.f32 %v1066, 1.0
  %v1068 = vrcp.pop %v1067
  %v1069 = vmul.f32 %v1067, %v1068
  %v1070 = vsub.f32 1.0, %v1069
  %v1071 = vmul.f32 %v1068, %v1070
  %v1072 = vadd.f32 %v1068, %v1071
  %vm1073 = vweird.f32 %v1067
  %vm1074 = vweird.f32 %v1068
  %vm1075 = vmor %vm1073, %vm1074
  %v1076 = vsel %vm1075, %v1068, %v1072
  %v1077 = vand.u32 2147483647, %v1067
  %vm1078 = vcmp.eq.f32.partialorder %v1077, 8.507059e+37
  %v1079 = vand.u32 %v1067, 2147483648
  %v1080 = vor.u32 1.1754944e-38, %v1079
  %v1081 = vsel %vm1078, %v1080, %v1076
  %v1082 = vmul.f32 1.0, %v1081
  %v1083 = vtanh.pop %v1043
  %v1084 = vxor.u32 %v1044, 2147483648
  %v1085 = vmul.f32 %v1084, 1.442695
  %v1086 = vpow.pop %v1085
  %v1087 = vadd.f32 %v1086, 1.0
  %v1088 = vrcp.pop %v1087
  %v1089 = vmul.f32 %v1087, %v1088
  %v1090 = vsub.f32 1.0, %v1089
  %v1091 = vmul.f32 %v1088, %v1090
  %v1092 = vadd.f32 %v1088, %v1091
  %vm1093 = vweird.f32 %v1087
  %vm1094 = vweird.f32 %v1088
  %vm1095 = vmor %vm1093, %vm1094
  %v1096 = vsel %vm1095, %v1088, %v1092
  %v1097 = vand.u32 2147483647, %v1087
  %vm1098 = vcmp.eq.f32.partialorder %v1097, 8.507059e+37
  %v1099 = vand.u32 %v1087, 2147483648
  %v1100 = vor.u32 1.1754944e-38, %v1099
  %v1101 = vsel %vm1098, %v1100, %v1096
  %v1102 = vmul.f32 1.0, %v1101
  %v1103 = vmul.f32 %v1082, 0.0
  %v1104 = vmul.f32 %v1063, %v1083
  %v1105 = vadd.f32 %v1103, %v1104
  %v1106 = vtanh.pop %v1105
  %v1107 = vmul.f32 %v1102, %v1106
  %1109 = vset.pattern.permute.xlu0 0
  %1110 = vperm.xlu0 %1109, %v786
  %v1111 = vpop.permute.xlu0 %1110
  %v1113 = vmul.f32 %v1111, %v1107
  %1114 = vst [vmem:[#allocation4] sm:$0xff] %v1113
  %v1115 = vadd.f32 %v1113, 0.0
  %v1116 = vmul.f32 %v1111, %v1105
  %v1117 = vadd.f32 %v1116, 0.0
  %s1118 = smul.u32 7, 4
  %s1119 = smul.addr %s1118, 8
  %s1120 = scalar_lea.vmem [#allocation3], %s1119
  %v1121 = vld [vmem:[%s1120] sm:$0xff]
  %v1122 = vld [vmem:[%s1120 + $0x8] sm:$0xff]
  %v1123 = vld [vmem:[%s1120 + $0x10] sm:$0xff]
  %v1124 = vld [vmem:[%s1120 + $0x18] sm:$0xff]
  %v1125 = vld [vmem:[%s7] sm:$0xff]
  %v1126 = vld [vmem:[%s7 + $0x8] sm:$0xff]
  %v1127 = vld [vmem:[%s7 + $0x10] sm:$0xff]
  %v1128 = vld [vmem:[%s7 + $0x18] sm:$0xff]
  %v1129 = vld [vmem:[%s7 + $0x20] sm:$0xff]
  %v1130 = vld [vmem:[%s7 + $0x28] sm:$0xff]
  %v1131 = vld [vmem:[%s7 + $0x30] sm:$0xff]
  %v1132 = vld [vmem:[%s7 + $0x38] sm:$0xff]
  %v1133 = vld [vmem:[%s7 + $0x40] sm:$0xff]
  %v1134 = vld [vmem:[%s7 + $0x48] sm:$0xff]
  %v1135 = vld [vmem:[%s7 + $0x50] sm:$0xff]
  %v1136 = vld [vmem:[%s7 + $0x58] sm:$0xff]
  %v1137 = vld [vmem:[%s7 + $0x60] sm:$0xff]
  %v1138 = vld [vmem:[%s7 + $0x68] sm:$0xff]
  %v1139 = vld [vmem:[%s7 + $0x70] sm:$0xff]
  %v1140 = vld [vmem:[%s7 + $0x78] sm:$0xff]
  %v1141 = vld [vmem:[%s7 + $0x80] sm:$0xff]
  %v1142 = vld [vmem:[%s7 + $0x88] sm:$0xff]
  %v1143 = vld [vmem:[%s7 + $0x90] sm:$0xff]
  %v1144 = vld [vmem:[%s7 + $0x98] sm:$0xff]
  %v1145 = vld [vmem:[%s7 + $0xa0] sm:$0xff]
  %v1146 = vld [vmem:[%s7 + $0xa8] sm:$0xff]
  %v1147 = vld [vmem:[%s7 + $0xb0] sm:$0xff]
  %v1148 = vld [vmem:[%s7 + $0xb8] sm:$0xff]
  %v1149 = vld [vmem:[%s7 + $0xc0] sm:$0xff]
  %v1150 = vld [vmem:[%s7 + $0xc8] sm:$0xff]
  %v1151 = vld [vmem:[%s7 + $0xd0] sm:$0xff]
  %v1152 = vld [vmem:[%s7 + $0xd8] sm:$0xff]
  %v1153 = vld [vmem:[%s7 + $0xe0] sm:$0xff]
  %v1154 = vld [vmem:[%s7 + $0xe8] sm:$0xff]
  %v1155 = vld [vmem:[%s7 + $0xf0] sm:$0xff]
  %v1156 = vld [vmem:[%s7 + $0xf8] sm:$0xff]
  %v1189 = vunpack.c.l.b16 %v1125
  %v1190 = vunpack.c.h.b16 %v1125
  %v1191 = vunpack.c.l.b16 %v1126
  %v1192 = vunpack.c.h.b16 %v1126
  %v1193 = vunpack.c.l.b16 %v1127
  %v1194 = vunpack.c.h.b16 %v1127
  %v1195 = vunpack.c.l.b16 %v1128
  %v1196 = vunpack.c.h.b16 %v1128
  %v1197 = vunpack.c.l.b16 %v1129
  %v1198 = vunpack.c.h.b16 %v1129
  %v1199 = vunpack.c.l.b16 %v1130
  %v1200 = vunpack.c.h.b16 %v1130
  %v1201 = vunpack.c.l.b16 %v1131
  %v1202 = vunpack.c.h.b16 %v1131
  %v1203 = vunpack.c.l.b16 %v1132
  %v1204 = vunpack.c.h.b16 %v1132
  %v1205 = vunpack.c.l.b16 %v1133
  %v1206 = vunpack.c.h.b16 %v1133
  %v1207 = vunpack.c.l.b16 %v1134
  %v1208 = vunpack.c.h.b16 %v1134
  %v1209 = vunpack.c.l.b16 %v1135
  %v1210 = vunpack.c.h.b16 %v1135
  %v1211 = vunpack.c.l.b16 %v1136
  %v1212 = vunpack.c.h.b16 %v1136
  %v1213 = vunpack.c.l.b16 %v1137
  %v1214 = vunpack.c.h.b16 %v1137
  %v1215 = vunpack.c.l.b16 %v1138
  %v1216 = vunpack.c.h.b16 %v1138
  %v1217 = vunpack.c.l.b16 %v1139
  %v1218 = vunpack.c.h.b16 %v1139
  %v1219 = vunpack.c.l.b16 %v1140
  %v1220 = vunpack.c.h.b16 %v1140
  %v1221 = vunpack.c.l.b16 %v1141
  %v1222 = vunpack.c.h.b16 %v1141
  %v1223 = vunpack.c.l.b16 %v1142
  %v1224 = vunpack.c.h.b16 %v1142
  %v1225 = vunpack.c.l.b16 %v1143
  %v1226 = vunpack.c.h.b16 %v1143
  %v1227 = vunpack.c.l.b16 %v1144
  %v1228 = vunpack.c.h.b16 %v1144
  %v1229 = vunpack.c.l.b16 %v1145
  %v1230 = vunpack.c.h.b16 %v1145
  %v1231 = vunpack.c.l.b16 %v1146
  %v1232 = vunpack.c.h.b16 %v1146
  %v1233 = vunpack.c.l.b16 %v1147
  %v1234 = vunpack.c.h.b16 %v1147
  %v1235 = vunpack.c.l.b16 %v1148
  %v1236 = vunpack.c.h.b16 %v1148
  %v1237 = vunpack.c.l.b16 %v1149
  %v1238 = vunpack.c.h.b16 %v1149
  %v1239 = vunpack.c.l.b16 %v1150
  %v1240 = vunpack.c.h.b16 %v1150
  %v1241 = vunpack.c.l.b16 %v1151
  %v1242 = vunpack.c.h.b16 %v1151
  %v1243 = vunpack.c.l.b16 %v1152
  %v1244 = vunpack.c.h.b16 %v1152
  %v1245 = vunpack.c.l.b16 %v1153
  %v1246 = vunpack.c.h.b16 %v1153
  %v1247 = vunpack.c.l.b16 %v1154
  %v1248 = vunpack.c.h.b16 %v1154
  %v1249 = vunpack.c.l.b16 %v1155
  %v1250 = vunpack.c.h.b16 %v1155
  %v1251 = vunpack.c.l.b16 %v1156
  %v1252 = vunpack.c.h.b16 %v1156
  %v1253 = vpack.c.b16 %v1193, %v1189
  %v1254 = vpack.c.b16 %v1194, %v1190
  %v1255 = vpack.c.b16 %v1195, %v1191
  %v1256 = vpack.c.b16 %v1196, %v1192
  %v1257 = vpack.c.b16 %v1201, %v1197
  %v1258 = vpack.c.b16 %v1202, %v1198
  %v1259 = vpack.c.b16 %v1203, %v1199
  %v1260 = vpack.c.b16 %v1204, %v1200
  %v1261 = vpack.c.b16 %v1209, %v1205
  %v1262 = vpack.c.b16 %v1210, %v1206
  %v1263 = vpack.c.b16 %v1211, %v1207
  %v1264 = vpack.c.b16 %v1212, %v1208
  %v1265 = vpack.c.b16 %v1217, %v1213
  %v1266 = vpack.c.b16 %v1218, %v1214
  %v1267 = vpack.c.b16 %v1219, %v1215
  %v1268 = vpack.c.b16 %v1220, %v1216
  %v1269 = vpack.c.b16 %v1225, %v1221
  %v1270 = vpack.c.b16 %v1226, %v1222
  %v1271 = vpack.c.b16 %v1227, %v1223
  %v1272 = vpack.c.b16 %v1228, %v1224
  %v1273 = vpack.c.b16 %v1233, %v1229
  %v1274 = vpack.c.b16 %v1234, %v1230
  %v1275 = vpack.c.b16 %v1235, %v1231
  %v1276 = vpack.c.b16 %v1236, %v1232
  %v1277 = vpack.c.b16 %v1241, %v1237
  %v1278 = vpack.c.b16 %v1242, %v1238
  %v1279 = vpack.c.b16 %v1243, %v1239
  %v1280 = vpack.c.b16 %v1244, %v1240
  %v1281 = vpack.c.b16 %v1249, %v1245
  %v1282 = vpack.c.b16 %v1250, %v1246
  %v1283 = vpack.c.b16 %v1251, %v1247
  %v1284 = vpack.c.b16 %v1252, %v1248
  %1317 = vmatpush.bf16.msra.mxu0 %v1281
  %1318 = vmatpush.bf16.msra.mxu0 %v1277
  %1319 = vmatpush.bf16.msra.mxu0 %v1273
  %1320 = vmatpush.bf16.msra.mxu0 %v1269
  %1321 = vmatpush.bf16.msra.mxu0 %v1265
  %1322 = vmatpush.bf16.msra.mxu0 %v1261
  %1323 = vmatpush.bf16.msra.mxu0 %v1257
  %1324 = vmatpush.bf16.msra.mxu0 %v1253
  %1325 = vmatmul.bf16.gmra.mxu0 0
  %v1326 = vpop.f32.mrf.mxu0
  %v1327 = vadd.f32 0.0, %v1326
  %v1328 = vpop.f32.mrf.mxu0
  %1329 = vdwg.mxu0
  %1330 = vmatpush.bf16.msra.mxu0 %v1282
  %1331 = vmatpush.bf16.msra.mxu0 %v1278
  %1332 = vmatpush.bf16.msra.mxu0 %v1274
  %1333 = vmatpush.bf16.msra.mxu0 %v1270
  %1334 = vmatpush.bf16.msra.mxu0 %v1266
  %1335 = vmatpush.bf16.msra.mxu0 %v1262
  %1336 = vmatpush.bf16.msra.mxu0 %v1258
  %1337 = vmatpush.bf16.msra.mxu0 %v1254
  %1338 = vmatmul.bf16.gmra.mxu0 0
  %v1339 = vpop.f32.mrf.mxu0
  %v1340 = vadd.f32 0.0, %v1339
  %v1341 = vpop.f32.mrf.mxu0
  %1342 = vdwg.mxu0
  %1343 = vmatpush.bf16.msra.mxu0 %v1283
  %1344 = vmatpush.bf16.msra.mxu0 %v1279
  %1345 = vmatpush.bf16.msra.mxu0 %v1275
  %1346 = vmatpush.bf16.msra.mxu0 %v1271
  %1347 = vmatpush.bf16.msra.mxu0 %v1267
  %1348 = vmatpush.bf16.msra.mxu0 %v1263
  %1349 = vmatpush.bf16.msra.mxu0 %v1259
  %1350 = vmatpush.bf16.msra.mxu0 %v1255
  %1351 = vmatmul.bf16.gmra.mxu0 0
  %v1352 = vpop.f32.mrf.mxu0
  %v1353 = vadd.f32 0.0, %v1352
  %v1354 = vpop.f32.mrf.mxu0
  %1355 = vdwg.mxu0
  %1356 = vmatpush.bf16.msra.mxu0 %v1284
  %1357 = vmatpush.bf16.msra.mxu0 %v1280
  %1358 = vmatpush.bf16.msra.mxu0 %v1276
  %1359 = vmatpush.bf16.msra.mxu0 %v1272
  %1360 = vmatpush.bf16.msra.mxu0 %v1268
  %1361 = vmatpush.bf16.msra.mxu0 %v1264
  %1362 = vmatpush.bf16.msra.mxu0 %v1260
  %1363 = vmatpush.bf16.msra.mxu0 %v1256
  %1364 = vmatmul.bf16.gmra.mxu0 0
  %v1365 = vpop.f32.mrf.mxu0
  %v1366 = vadd.f32 0.0, %v1365
  %v1367 = vpop.f32.mrf.mxu0
  %1368 = vdwg.mxu0
  %v1369 = vadd.f32 %v1121, %v1327
  %v1370 = vadd.f32 %v1122, %v1340
  %v1371 = vadd.f32 %v1123, %v1353
  %v1372 = vadd.f32 %v1124, %v1366
  %v1373 = vxor.u32 %v1369, 2147483648
  %v1374 = vmul.f32 %v1373, 1.442695
  %v1375 = vpow.pop %v1374
  %v1376 = vadd.f32 %v1375, 1.0
  %v1377 = vrcp.pop %v1376
  %v1378 = vmul.f32 %v1376, %v1377
  %v1379 = vsub.f32 1.0, %v1378
  %v1380 = vmul.f32 %v1377, %v1379
  %v1381 = vadd.f32 %v1377, %v1380
  %vm1382 = vweird.f32 %v1376
  %vm1383 = vweird.f32 %v1377
  %vm1384 = vmor %vm1382, %vm1383
  %v1385 = vsel %vm1384, %v1377, %v1381
  %v1386 = vand.u32 2147483647, %v1376
  %vm1387 = vcmp.eq.f32.partialorder %v1386, 8.507059e+37
  %v1388 = vand.u32 %v1376, 2147483648
  %v1389 = vor.u32 1.1754944e-38, %v1388
  %v1390 = vsel %vm1387, %v1389, %v1385
  %v1391 = vmul.f32 1.0, %v1390
  %v1392 = vxor.u32 %v1370, 2147483648
  %v1393 = vmul.f32 %v1392, 1.442695
  %v1394 = vpow.pop %v1393
  %v1395 = vadd.f32 %v1394, 1.0
  %v1396 = vrcp.pop %v1395
  %v1397 = vmul.f32 %v1395, %v1396
  %v1398 = vsub.f32 1.0, %v1397
  %v1399 = vmul.f32 %v1396, %v1398
  %v1400 = vadd.f32 %v1396, %v1399
  %vm1401 = vweird.f32 %v1395
  %vm1402 = vweird.f32 %v1396
  %vm1403 = vmor %vm1401, %vm1402
  %v1404 = vsel %vm1403, %v1396, %v1400
  %v1405 = vand.u32 2147483647, %v1395
  %vm1406 = vcmp.eq.f32.partialorder %v1405, 8.507059e+37
  %v1407 = vand.u32 %v1395, 2147483648
  %v1408 = vor.u32 1.1754944e-38, %v1407
  %v1409 = vsel %vm1406, %v1408, %v1404
  %v1410 = vmul.f32 1.0, %v1409
  %v1411 = vtanh.pop %v1371
  %v1412 = vxor.u32 %v1372, 2147483648
  %v1413 = vmul.f32 %v1412, 1.442695
  %v1414 = vpow.pop %v1413
  %v1415 = vadd.f32 %v1414, 1.0
  %v1416 = vrcp.pop %v1415
  %v1417 = vmul.f32 %v1415, %v1416
  %v1418 = vsub.f32 1.0, %v1417
  %v1419 = vmul.f32 %v1416, %v1418
  %v1420 = vadd.f32 %v1416, %v1419
  %vm1421 = vweird.f32 %v1415
  %vm1422 = vweird.f32 %v1416
  %vm1423 = vmor %vm1421, %vm1422
  %v1424 = vsel %vm1423, %v1416, %v1420
  %v1425 = vand.u32 2147483647, %v1415
  %vm1426 = vcmp.eq.f32.partialorder %v1425, 8.507059e+37
  %v1427 = vand.u32 %v1415, 2147483648
  %v1428 = vor.u32 1.1754944e-38, %v1427
  %v1429 = vsel %vm1426, %v1428, %v1424
  %v1430 = vmul.f32 1.0, %v1429
  %v1431 = vmul.f32 %v1410, 0.0
  %v1432 = vmul.f32 %v1391, %v1411
  %v1433 = vadd.f32 %v1431, %v1432
  %v1434 = vtanh.pop %v1433
  %v1435 = vmul.f32 %v1430, %v1434
  %1437 = vset.pattern.permute.xlu0 0
  %1438 = vperm.xlu0 %1437, %v789
  %v1439 = vpop.permute.xlu0 %1438
  %v1441 = vmul.f32 %v1439, %v1435
  %s1442 = scalar_lea.vmem [#allocation5], 56
  %1443 = vst [vmem:[%s1442] sm:$0xff] %v1441
  %v1444 = vadd.f32 %v1441, 0.0
  %v1445 = vmul.f32 %v1439, %v1433
  %v1446 = vadd.f32 %v1445, 0.0
  %vm1447 = vcmp.gt.s32.totalorder %v783, 1
  %v1448 = vsel %vm1447, 1, 0
  %v1449 = vcvt.s32.f32 %v1448
  %vm1450 = vcmp.gt.s32.totalorder %v783, 6
  %v1451 = vsel %vm1450, 1, 0
  %v1452 = vcvt.s32.f32 %v1451
  %s1453 = smul.u32 1, 4
  %s1454 = smul.addr %s1453, 8
  %s1455 = scalar_lea.vmem [#allocation2], %s1454
  %v1456 = vld [vmem:[%s1455] sm:$0xff]
  %v1457 = vld [vmem:[%s1455 + $0x8] sm:$0xff]
  %v1458 = vld [vmem:[%s1455 + $0x10] sm:$0xff]
  %v1459 = vld [vmem:[%s1455 + $0x18] sm:$0xff]
  %v1460 = vpack.c.bf16 %v1115, %v1115
  %v1461 = vld [vmem:[%s6] sm:$0xff]
  %v1462 = vld [vmem:[%s6 + $0x8] sm:$0xff]
  %v1463 = vld [vmem:[%s6 + $0x10] sm:$0xff]
  %v1464 = vld [vmem:[%s6 + $0x18] sm:$0xff]
  %v1465 = vld [vmem:[%s6 + $0x20] sm:$0xff]
  %v1466 = vld [vmem:[%s6 + $0x28] sm:$0xff]
  %v1467 = vld [vmem:[%s6 + $0x30] sm:$0xff]
  %v1468 = vld [vmem:[%s6 + $0x38] sm:$0xff]
  %v1469 = vld [vmem:[%s6 + $0x40] sm:$0xff]
  %v1470 = vld [vmem:[%s6 + $0x48] sm:$0xff]
  %v1471 = vld [vmem:[%s6 + $0x50] sm:$0xff]
  %v1472 = vld [vmem:[%s6 + $0x58] sm:$0xff]
  %v1473 = vld [vmem:[%s6 + $0x60] sm:$0xff]
  %v1474 = vld [vmem:[%s6 + $0x68] sm:$0xff]
  %v1475 = vld [vmem:[%s6 + $0x70] sm:$0xff]
  %v1476 = vld [vmem:[%s6 + $0x78] sm:$0xff]
  %v1477 = vld [vmem:[%s6 + $0x80] sm:$0xff]
  %v1478 = vld [vmem:[%s6 + $0x88] sm:$0xff]
  %v1479 = vld [vmem:[%s6 + $0x90] sm:$0xff]
  %v1480 = vld [vmem:[%s6 + $0x98] sm:$0xff]
  %v1481 = vld [vmem:[%s6 + $0xa0] sm:$0xff]
  %v1482 = vld [vmem:[%s6 + $0xa8] sm:$0xff]
  %v1483 = vld [vmem:[%s6 + $0xb0] sm:$0xff]
  %v1484 = vld [vmem:[%s6 + $0xb8] sm:$0xff]
  %v1485 = vld [vmem:[%s6 + $0xc0] sm:$0xff]
  %v1486 = vld [vmem:[%s6 + $0xc8] sm:$0xff]
  %v1487 = vld [vmem:[%s6 + $0xd0] sm:$0xff]
  %v1488 = vld [vmem:[%s6 + $0xd8] sm:$0xff]
  %v1489 = vld [vmem:[%s6 + $0xe0] sm:$0xff]
  %v1490 = vld [vmem:[%s6 + $0xe8] sm:$0xff]
  %v1491 = vld [vmem:[%s6 + $0xf0] sm:$0xff]
  %v1492 = vld [vmem:[%s6 + $0xf8] sm:$0xff]
  %v1525 = vunpack.c.l.b16 %v1461
  %v1526 = vunpack.c.h.b16 %v1461
  %v1527 = vunpack.c.l.b16 %v1462
  %v1528 = vunpack.c.h.b16 %v1462
  %v1529 = vunpack.c.l.b16 %v1463
  %v1530 = vunpack.c.h.b16 %v1463
  %v1531 = vunpack.c.l.b16 %v1464
  %v1532 = vunpack.c.h.b16 %v1464
  %v1533 = vunpack.c.l.b16 %v1465
  %v1534 = vunpack.c.h.b16 %v1465
  %v1535 = vunpack.c.l.b16 %v1466
  %v1536 = vunpack.c.h.b16 %v1466
  %v1537 = vunpack.c.l.b16 %v1467
  %v1538 = vunpack.c.h.b16 %v1467
  %v1539 = vunpack.c.l.b16 %v1468
  %v1540 = vunpack.c.h.b16 %v1468
  %v1541 = vunpack.c.l.b16 %v1469
  %v1542 = vunpack.c.h.b16 %v1469
  %v1543 = vunpack.c.l.b16 %v1470
  %v1544 = vunpack.c.h.b16 %v1470
  %v1545 = vunpack.c.l.b16 %v1471
  %v1546 = vunpack.c.h.b16 %v1471
  %v1547 = vunpack.c.l.b16 %v1472
  %v1548 = vunpack.c.h.b16 %v1472
  %v1549 = vunpack.c.l.b16 %v1473
  %v1550 = vunpack.c.h.b16 %v1473
  %v1551 = vunpack.c.l.b16 %v1474
  %v1552 = vunpack.c.h.b16 %v1474
  %v1553 = vunpack.c.l.b16 %v1475
  %v1554 = vunpack.c.h.b16 %v1475
  %v1555 = vunpack.c.l.b16 %v1476
  %v1556 = vunpack.c.h.b16 %v1476
  %v1557 = vunpack.c.l.b16 %v1477
  %v1558 = vunpack.c.h.b16 %v1477
  %v1559 = vunpack.c.l.b16 %v1478
  %v1560 = vunpack.c.h.b16 %v1478
  %v1561 = vunpack.c.l.b16 %v1479
  %v1562 = vunpack.c.h.b16 %v1479
  %v1563 = vunpack.c.l.b16 %v1480
  %v1564 = vunpack.c.h.b16 %v1480
  %v1565 = vunpack.c.l.b16 %v1481
  %v1566 = vunpack.c.h.b16 %v1481
  %v1567 = vunpack.c.l.b16 %v1482
  %v1568 = vunpack.c.h.b16 %v1482
  %v1569 = vunpack.c.l.b16 %v1483
  %v1570 = vunpack.c.h.b16 %v1483
  %v1571 = vunpack.c.l.b16 %v1484
  %v1572 = vunpack.c.h.b16 %v1484
  %v1573 = vunpack.c.l.b16 %v1485
  %v1574 = vunpack.c.h.b16 %v1485
  %v1575 = vunpack.c.l.b16 %v1486
  %v1576 = vunpack.c.h.b16 %v1486
  %v1577 = vunpack.c.l.b16 %v1487
  %v1578 = vunpack.c.h.b16 %v1487
  %v1579 = vunpack.c.l.b16 %v1488
  %v1580 = vunpack.c.h.b16 %v1488
  %v1581 = vunpack.c.l.b16 %v1489
  %v1582 = vunpack.c.h.b16 %v1489
  %v1583 = vunpack.c.l.b16 %v1490
  %v1584 = vunpack.c.h.b16 %v1490
  %v1585 = vunpack.c.l.b16 %v1491
  %v1586 = vunpack.c.h.b16 %v1491
  %v1587 = vunpack.c.l.b16 %v1492
  %v1588 = vunpack.c.h.b16 %v1492
  %v1589 = vpack.c.b16 %v1529, %v1525
  %v1590 = vpack.c.b16 %v1530, %v1526
  %v1591 = vpack.c.b16 %v1531, %v1527
  %v1592 = vpack.c.b16 %v1532, %v1528
  %v1593 = vpack.c.b16 %v1537, %v1533
  %v1594 = vpack.c.b16 %v1538, %v1534
  %v1595 = vpack.c.b16 %v1539, %v1535
  %v1596 = vpack.c.b16 %v1540, %v1536
  %v1597 = vpack.c.b16 %v1545, %v1541
  %v1598 = vpack.c.b16 %v1546, %v1542
  %v1599 = vpack.c.b16 %v1547, %v1543
  %v1600 = vpack.c.b16 %v1548, %v1544
  %v1601 = vpack.c.b16 %v1553, %v1549
  %v1602 = vpack.c.b16 %v1554, %v1550
  %v1603 = vpack.c.b16 %v1555, %v1551
  %v1604 = vpack.c.b16 %v1556, %v1552
  %v1605 = vpack.c.b16 %v1561, %v1557
  %v1606 = vpack.c.b16 %v1562, %v1558
  %v1607 = vpack.c.b16 %v1563, %v1559
  %v1608 = vpack.c.b16 %v1564, %v1560
  %v1609 = vpack.c.b16 %v1569, %v1565
  %v1610 = vpack.c.b16 %v1570, %v1566
  %v1611 = vpack.c.b16 %v1571, %v1567
  %v1612 = vpack.c.b16 %v1572, %v1568
  %v1613 = vpack.c.b16 %v1577, %v1573
  %v1614 = vpack.c.b16 %v1578, %v1574
  %v1615 = vpack.c.b16 %v1579, %v1575
  %v1616 = vpack.c.b16 %v1580, %v1576
  %v1617 = vpack.c.b16 %v1585, %v1581
  %v1618 = vpack.c.b16 %v1586, %v1582
  %v1619 = vpack.c.b16 %v1587, %v1583
  %v1620 = vpack.c.b16 %v1588, %v1584
  %1653 = vmatpush.bf16.msra.mxu0 %v1617
  %1654 = vmatpush.bf16.msra.mxu0 %v1613
  %1655 = vmatpush.bf16.msra.mxu0 %v1609
  %1656 = vmatpush.bf16.msra.mxu0 %v1605
  %1657 = vmatpush.bf16.msra.mxu0 %v1601
  %1658 = vmatpush.bf16.msra.mxu0 %v1597
  %1659 = vmatpush.bf16.msra.mxu0 %v1593
  %1660 = vmatpush.bf16.msra.mxu0 %v1589
  %1661 = vmatmul.bf16.gmra.mxu0 %v1460
  %v1662 = vpop.f32.mrf.mxu0
  %v1663 = vadd.f32 0.0, %v1662
  %v1664 = vpop.f32.mrf.mxu0
  %1665 = vdwg.mxu0
  %1666 = vmatpush.bf16.msra.mxu0 %v1618
  %1667 = vmatpush.bf16.msra.mxu0 %v1614
  %1668 = vmatpush.bf16.msra.mxu0 %v1610
  %1669 = vmatpush.bf16.msra.mxu0 %v1606
  %1670 = vmatpush.bf16.msra.mxu0 %v1602
  %1671 = vmatpush.bf16.msra.mxu0 %v1598
  %1672 = vmatpush.bf16.msra.mxu0 %v1594
  %1673 = vmatpush.bf16.msra.mxu0 %v1590
  %1674 = vmatmul.bf16.gmra.mxu0 %v1460
  %v1675 = vpop.f32.mrf.mxu0
  %v1676 = vadd.f32 0.0, %v1675
  %v1677 = vpop.f32.mrf.mxu0
  %1678 = vdwg.mxu0
  %1679 = vmatpush.bf16.msra.mxu0 %v1619
  %1680 = vmatpush.bf16.msra.mxu0 %v1615
  %1681 = vmatpush.bf16.msra.mxu0 %v1611
  %1682 = vmatpush.bf16.msra.mxu0 %v1607
  %1683 = vmatpush.bf16.msra.mxu0 %v1603
  %1684 = vmatpush.bf16.msra.mxu0 %v1599
  %1685 = vmatpush.bf16.msra.mxu0 %v1595
  %1686 = vmatpush.bf16.msra.mxu0 %v1591
  %1687 = vmatmul.bf16.gmra.mxu0 %v1460
  %v1688 = vpop.f32.mrf.mxu0
  %v1689 = vadd.f32 0.0, %v1688
  %v1690 = vpop.f32.mrf.mxu0
  %1691 = vdwg.mxu0
  %1692 = vmatpush.bf16.msra.mxu0 %v1620
  %1693 = vmatpush.bf16.msra.mxu0 %v1616
  %1694 = vmatpush.bf16.msra.mxu0 %v1612
  %1695 = vmatpush.bf16.msra.mxu0 %v1608
  %1696 = vmatpush.bf16.msra.mxu0 %v1604
  %1697 = vmatpush.bf16.msra.mxu0 %v1600
  %1698 = vmatpush.bf16.msra.mxu0 %v1596
  %1699 = vmatpush.bf16.msra.mxu0 %v1592
  %1700 = vmatmul.bf16.gmra.mxu0 %v1460
  %v1701 = vpop.f32.mrf.mxu0
  %v1702 = vadd.f32 0.0, %v1701
  %v1703 = vpop.f32.mrf.mxu0
  %1704 = vdwg.mxu0
  %v1705 = vadd.f32 %v1456, %v1663
  %v1706 = vadd.f32 %v1457, %v1676
  %v1707 = vadd.f32 %v1458, %v1689
  %v1708 = vadd.f32 %v1459, %v1702
  %v1709 = vxor.u32 %v1705, 2147483648
  %v1710 = vmul.f32 %v1709, 1.442695
  %v1711 = vpow.pop %v1710
  %v1712 = vadd.f32 %v1711, 1.0
  %v1713 = vrcp.pop %v1712
  %v1714 = vmul.f32 %v1712, %v1713
  %v1715 = vsub.f32 1.0, %v1714
  %v1716 = vmul.f32 %v1713, %v1715
  %v1717 = vadd.f32 %v1713, %v1716
  %vm1718 = vweird.f32 %v1712
  %vm1719 = vweird.f32 %v1713
  %vm1720 = vmor %vm1718, %vm1719
  %v1721 = vsel %vm1720, %v1713, %v1717
  %v1722 = vand.u32 2147483647, %v1712
  %vm1723 = vcmp.eq.f32.partialorder %v1722, 8.507059e+37
  %v1724 = vand.u32 %v1712, 2147483648
  %v1725 = vor.u32 1.1754944e-38, %v1724
  %v1726 = vsel %vm1723, %v1725, %v1721
  %v1727 = vmul.f32 1.0, %v1726
  %v1728 = vxor.u32 %v1706, 2147483648
  %v1729 = vmul.f32 %v1728, 1.442695
  %v1730 = vpow.pop %v1729
  %v1731 = vadd.f32 %v1730, 1.0
  %v1732 = vrcp.pop %v1731
  %v1733 = vmul.f32 %v1731, %v1732
  %v1734 = vsub.f32 1.0, %v1733
  %v1735 = vmul.f32 %v1732, %v1734
  %v1736 = vadd.f32 %v1732, %v1735
  %vm1737 = vweird.f32 %v1731
  %vm1738 = vweird.f32 %v1732
  %vm1739 = vmor %vm1737, %vm1738
  %v1740 = vsel %vm1739, %v1732, %v1736
  %v1741 = vand.u32 2147483647, %v1731
  %vm1742 = vcmp.eq.f32.partialorder %v1741, 8.507059e+37
  %v1743 = vand.u32 %v1731, 2147483648
  %v1744 = vor.u32 1.1754944e-38, %v1743
  %v1745 = vsel %vm1742, %v1744, %v1740
  %v1746 = vmul.f32 1.0, %v1745
  %v1747 = vtanh.pop %v1707
  %v1748 = vxor.u32 %v1708, 2147483648
  %v1749 = vmul.f32 %v1748, 1.442695
  %v1750 = vpow.pop %v1749
  %v1751 = vadd.f32 %v1750, 1.0
  %v1752 = vrcp.pop %v1751
  %v1753 = vmul.f32 %v1751, %v1752
  %v1754 = vsub.f32 1.0, %v1753
  %v1755 = vmul.f32 %v1752, %v1754
  %v1756 = vadd.f32 %v1752, %v1755
  %vm1757 = vweird.f32 %v1751
  %vm1758 = vweird.f32 %v1752
  %vm1759 = vmor %vm1757, %vm1758
  %v1760 = vsel %vm1759, %v1752, %v1756
  %v1761 = vand.u32 2147483647, %v1751
  %vm1762 = vcmp.eq.f32.partialorder %v1761, 8.507059e+37
  %v1763 = vand.u32 %v1751, 2147483648
  %v1764 = vor.u32 1.1754944e-38, %v1763
  %v1765 = vsel %vm1762, %v1764, %v1760
  %v1766 = vmul.f32 1.0, %v1765
  %v1767 = vmul.f32 %v1746, %v1117
  %v1768 = vmul.f32 %v1727, %v1747
  %v1769 = vadd.f32 %v1767, %v1768
  %v1770 = vtanh.pop %v1769
  %v1771 = vmul.f32 %v1766, %v1770
  %1773 = vset.pattern.permute.xlu0 0
  %1774 = vperm.xlu0 %1773, %v1449
  %v1775 = vpop.permute.xlu0 %1774
  %v1777 = vmul.f32 %v1775, %v1771
  %s1778 = scalar_lea.vmem [#allocation4], 8
  %1779 = vst [vmem:[%s1778] sm:$0xff] %v1777
  %v1780 = vsub.f32 %v1771, %v1115
  %v1781 = vmul.f32 %v1775, %v1780
  %v1782 = vadd.f32 %v1115, %v1781
  %v1783 = vsub.f32 %v1769, %v1117
  %v1784 = vmul.f32 %v1775, %v1783
  %v1785 = vadd.f32 %v1117, %v1784
  %s1786 = smul.u32 6, 4
  %s1787 = smul.addr %s1786, 8
  %s1788 = scalar_lea.vmem [#allocation3], %s1787
  %v1789 = vld [vmem:[%s1788] sm:$0xff]
  %v1790 = vld [vmem:[%s1788 + $0x8] sm:$0xff]
  %v1791 = vld [vmem:[%s1788 + $0x10] sm:$0xff]
  %v1792 = vld [vmem:[%s1788 + $0x18] sm:$0xff]
  %v1793 = vpack.c.bf16 %v1444, %v1444
  %v1794 = vld [vmem:[%s7] sm:$0xff]
  %v1795 = vld [vmem:[%s7 + $0x8] sm:$0xff]
  %v1796 = vld [vmem:[%s7 + $0x10] sm:$0xff]
  %v1797 = vld [vmem:[%s7 + $0x18] sm:$0xff]
  %v1798 = vld [vmem:[%s7 + $0x20] sm:$0xff]
  %v1799 = vld [vmem:[%s7 + $0x28] sm:$0xff]
  %v1800 = vld [vmem:[%s7 + $0x30] sm:$0xff]
  %v1801 = vld [vmem:[%s7 + $0x38] sm:$0xff]
  %v1802 = vld [vmem:[%s7 + $0x40] sm:$0xff]
  %v1803 = vld [vmem:[%s7 + $0x48] sm:$0xff]
  %v1804 = vld [vmem:[%s7 + $0x50] sm:$0xff]
  %v1805 = vld [vmem:[%s7 + $0x58] sm:$0xff]
  %v1806 = vld [vmem:[%s7 + $0x60] sm:$0xff]
  %v1807 = vld [vmem:[%s7 + $0x68] sm:$0xff]
  %v1808 = vld [vmem:[%s7 + $0x70] sm:$0xff]
  %v1809 = vld [vmem:[%s7 + $0x78] sm:$0xff]
  %v1810 = vld [vmem:[%s7 + $0x80] sm:$0xff]
  %v1811 = vld [vmem:[%s7 + $0x88] sm:$0xff]
  %v1812 = vld [vmem:[%s7 + $0x90] sm:$0xff]
  %v1813 = vld [vmem:[%s7 + $0x98] sm:$0xff]
  %v1814 = vld [vmem:[%s7 + $0xa0] sm:$0xff]
  %v1815 = vld [vmem:[%s7 + $0xa8] sm:$0xff]
  %v1816 = vld [vmem:[%s7 + $0xb0] sm:$0xff]
  %v1817 = vld [vmem:[%s7 + $0xb8] sm:$0xff]
  %v1818 = vld [vmem:[%s7 + $0xc0] sm:$0xff]
  %v1819 = vld [vmem:[%s7 + $0xc8] sm:$0xff]
  %v1820 = vld [vmem:[%s7 + $0xd0] sm:$0xff]
  %v1821 = vld [vmem:[%s7 + $0xd8] sm:$0xff]
  %v1822 = vld [vmem:[%s7 + $0xe0] sm:$0xff]
  %v1823 = vld [vmem:[%s7 + $0xe8] sm:$0xff]
  %v1824 = vld [vmem:[%s7 + $0xf0] sm:$0xff]
  %v1825 = vld [vmem:[%s7 + $0xf8] sm:$0xff]
  %v1858 = vunpack.c.l.b16 %v1794
  %v1859 = vunpack.c.h.b16 %v1794
  %v1860 = vunpack.c.l.b16 %v1795
  %v1861 = vunpack.c.h.b16 %v1795
  %v1862 = vunpack.c.l.b16 %v1796
  %v1863 = vunpack.c.h.b16 %v1796
  %v1864 = vunpack.c.l.b16 %v1797
  %v1865 = vunpack.c.h.b16 %v1797
  %v1866 = vunpack.c.l.b16 %v1798
  %v1867 = vunpack.c.h.b16 %v1798
  %v1868 = vunpack.c.l.b16 %v1799
  %v1869 = vunpack.c.h.b16 %v1799
  %v1870 = vunpack.c.l.b16 %v1800
  %v1871 = vunpack.c.h.b16 %v1800
  %v1872 = vunpack.c.l.b16 %v1801
  %v1873 = vunpack.c.h.b16 %v1801
  %v1874 = vunpack.c.l.b16 %v1802
  %v1875 = vunpack.c.h.b16 %v1802
  %v1876 = vunpack.c.l.b16 %v1803
  %v1877 = vunpack.c.h.b16 %v1803
  %v1878 = vunpack.c.l.b16 %v1804
  %v1879 = vunpack.c.h.b16 %v1804
  %v1880 = vunpack.c.l.b16 %v1805
  %v1881 = vunpack.c.h.b16 %v1805
  %v1882 = vunpack.c.l.b16 %v1806
  %v1883 = vunpack.c.h.b16 %v1806
  %v1884 = vunpack.c.l.b16 %v1807
  %v1885 = vunpack.c.h.b16 %v1807
  %v1886 = vunpack.c.l.b16 %v1808
  %v1887 = vunpack.c.h.b16 %v1808
  %v1888 = vunpack.c.l.b16 %v1809
  %v1889 = vunpack.c.h.b16 %v1809
  %v1890 = vunpack.c.l.b16 %v1810
  %v1891 = vunpack.c.h.b16 %v1810
  %v1892 = vunpack.c.l.b16 %v1811
  %v1893 = vunpack.c.h.b16 %v1811
  %v1894 = vunpack.c.l.b16 %v1812
  %v1895 = vunpack.c.h.b16 %v1812
  %v1896 = vunpack.c.l.b16 %v1813
  %v1897 = vunpack.c.h.b16 %v1813
  %v1898 = vunpack.c.l.b16 %v1814
  %v1899 = vunpack.c.h.b16 %v1814
  %v1900 = vunpack.c.l.b16 %v1815
  %v1901 = vunpack.c.h.b16 %v1815
  %v1902 = vunpack.c.l.b16 %v1816
  %v1903 = vunpack.c.h.b16 %v1816
  %v1904 = vunpack.c.l.b16 %v1817
  %v1905 = vunpack.c.h.b16 %v1817
  %v1906 = vunpack.c.l.b16 %v1818
  %v1907 = vunpack.c.h.b16 %v1818
  %v1908 = vunpack.c.l.b16 %v1819
  %v1909 = vunpack.c.h.b16 %v1819
  %v1910 = vunpack.c.l.b16 %v1820
  %v1911 = vunpack.c.h.b16 %v1820
  %v1912 = vunpack.c.l.b16 %v1821
  %v1913 = vunpack.c.h.b16 %v1821
  %v1914 = vunpack.c.l.b16 %v1822
  %v1915 = vunpack.c.h.b16 %v1822
  %v1916 = vunpack.c.l.b16 %v1823
  %v1917 = vunpack.c.h.b16 %v1823
  %v1918 = vunpack.c.l.b16 %v1824
  %v1919 = vunpack.c.h.b16 %v1824
  %v1920 = vunpack.c.l.b16 %v1825
  %v1921 = vunpack.c.h.b16 %v1825
  %v1922 = vpack.c.b16 %v1862, %v1858
  %v1923 = vpack.c.b16 %v1863, %v1859
  %v1924 = vpack.c.b16 %v1864, %v1860
  %v1925 = vpack.c.b16 %v1865, %v1861
  %v1926 = vpack.c.b16 %v1870, %v1866
  %v1927 = vpack.c.b16 %v1871, %v1867
  %v1928 = vpack.c.b16 %v1872, %v1868
  %v1929 = vpack.c.b16 %v1873, %v1869
  %v1930 = vpack.c.b16 %v1878, %v1874
  %v1931 = vpack.c.b16 %v1879, %v1875
  %v1932 = vpack.c.b16 %v1880, %v1876
  %v1933 = vpack.c.b16 %v1881, %v1877
  %v1934 = vpack.c.b16 %v1886, %v1882
  %v1935 = vpack.c.b16 %v1887, %v1883
  %v1936 = vpack.c.b16 %v1888, %v1884
  %v1937 = vpack.c.b16 %v1889, %v1885
  %v1938 = vpack.c.b16 %v1894, %v1890
  %v1939 = vpack.c.b16 %v1895, %v1891
  %v1940 = vpack.c.b16 %v1896, %v1892
  %v1941 = vpack.c.b16 %v1897, %v1893
  %v1942 = vpack.c.b16 %v1902, %v1898
  %v1943 = vpack.c.b16 %v1903, %v1899
  %v1944 = vpack.c.b16 %v1904, %v1900
  %v1945 = vpack.c.b16 %v1905, %v1901
  %v1946 = vpack.c.b16 %v1910, %v1906
  %v1947 = vpack.c.b16 %v1911, %v1907
  %v1948 = vpack.c.b16 %v1912, %v1908
  %v1949 = vpack.c.b16 %v1913, %v1909
  %v1950 = vpack.c.b16 %v1918, %v1914
  %v1951 = vpack.c.b16 %v1919, %v1915
  %v1952 = vpack.c.b16 %v1920, %v1916
  %v1953 = vpack.c.b16 %v1921, %v1917
  %1986 = vmatpush.bf16.msra.mxu0 %v1950
  %1987 = vmatpush.bf16.msra.mxu0 %v1946
  %1988 = vmatpush.bf16.msra.mxu0 %v1942
  %1989 = vmatpush.bf16.msra.mxu0 %v1938
  %1990 = vmatpush.bf16.msra.mxu0 %v1934
  %1991 = vmatpush.bf16.msra.mxu0 %v1930
  %1992 = vmatpush.bf16.msra.mxu0 %v1926
  %1993 = vmatpush.bf16.msra.mxu0 %v1922
  %1994 = vmatmul.bf16.gmra.mxu0 %v1793
  %v1995 = vpop.f32.mrf.mxu0
  %v1996 = vadd.f32 0.0, %v1995
  %v1997 = vpop.f32.mrf.mxu0
  %1998 = vdwg.mxu0
  %1999 = vmatpush.bf16.msra.mxu0 %v1951
  %2000 = vmatpush.bf16.msra.mxu0 %v1947
  %2001 = vmatpush.bf16.msra.mxu0 %v1943
  %2002 = vmatpush.bf16.msra.mxu0 %v1939
  %2003 = vmatpush.bf16.msra.mxu0 %v1935
  %2004 = vmatpush.bf16.msra.mxu0 %v1931
  %2005 = vmatpush.bf16.msra.mxu0 %v1927
  %2006 = vmatpush.bf16.msra.mxu0 %v1923
  %2007 = vmatmul.bf16.gmra.mxu0 %v1793
  %v2008 = vpop.f32.mrf.mxu0
  %v2009 = vadd.f32 0.0, %v2008
  %v2010 = vpop.f32.mrf.mxu0
  %2011 = vdwg.mxu0
  %2012 = vmatpush.bf16.msra.mxu0 %v1952
  %2013 = vmatpush.bf16.msra.mxu0 %v1948
  %2014 = vmatpush.bf16.msra.mxu0 %v1944
  %2015 = vmatpush.bf16.msra.mxu0 %v1940
  %2016 = vmatpush.bf16.msra.mxu0 %v1936
  %2017 = vmatpush.bf16.msra.mxu0 %v1932
  %2018 = vmatpush.bf16.msra.mxu0 %v1928
  %2019 = vmatpush.bf16.msra.mxu0 %v1924
  %2020 = vmatmul.bf16.gmra.mxu0 %v1793
  %v2021 = vpop.f32.mrf.mxu0
  %v2022 = vadd.f32 0.0, %v2021
  %v2023 = vpop.f32.mrf.mxu0
  %2024 = vdwg.mxu0
  %2025 = vmatpush.bf16.msra.mxu0 %v1953
  %2026 = vmatpush.bf16.msra.mxu0 %v1949
  %2027 = vmatpush.bf16.msra.mxu0 %v1945
  %2028 = vmatpush.bf16.msra.mxu0 %v1941
  %2029 = vmatpush.bf16.msra.mxu0 %v1937
  %2030 = vmatpush.bf16.msra.mxu0 %v1933
  %2031 = vmatpush.bf16.msra.mxu0 %v1929
  %2032 = vmatpush.bf16.msra.mxu0 %v1925
  %2033 = vmatmul.bf16.gmra.mxu0 %v1793
  %v2034 = vpop.f32.mrf.mxu0
  %v2035 = vadd.f32 0.0, %v2034
  %v2036 = vpop.f32.mrf.mxu0
  %2037 = vdwg.mxu0
  %v2038 = vadd.f32 %v1789, %v1996
  %v2039 = vadd.f32 %v1790, %v2009
  %v2040 = vadd.f32 %v1791, %v2022
  %v2041 = vadd.f32 %v1792, %v2035
  %v2042 = vxor.u32 %v2038, 2147483648
  %v2043 = vmul.f32 %v2042, 1.442695
  %v2044 = vpow.pop %v2043
  %v2045 = vadd.f32 %v2044, 1.0
  %v2046 = vrcp.pop %v2045
  %v2047 = vmul.f32 %v2045, %v2046
  %v2048 = vsub.f32 1.0, %v2047
  %v2049 = vmul.f32 %v2046, %v2048
  %v2050 = vadd.f32 %v2046, %v2049
  %vm2051 = vweird.f32 %v2045
  %vm2052 = vweird.f32 %v2046
  %vm2053 = vmor %vm2051, %vm2052
  %v2054 = vsel %vm2053, %v2046, %v2050
  %v2055 = vand.u32 2147483647, %v2045
  %vm2056 = vcmp.eq.f32.partialorder %v2055, 8.507059e+37
  %v2057 = vand.u32 %v2045, 2147483648
  %v2058 = vor.u32 1.1754944e-38, %v2057
  %v2059 = vsel %vm2056, %v2058, %v2054
  %v2060 = vmul.f32 1.0, %v2059
  %v2061 = vxor.u32 %v2039, 2147483648
  %v2062 = vmul.f32 %v2061, 1.442695
  %v2063 = vpow.pop %v2062
  %v2064 = vadd.f32 %v2063, 1.0
  %v2065 = vrcp.pop %v2064
  %v2066 = vmul.f32 %v2064, %v2065
  %v2067 = vsub.f32 1.0, %v2066
  %v2068 = vmul.f32 %v2065, %v2067
  %v2069 = vadd.f32 %v2065, %v2068
  %vm2070 = vweird.f32 %v2064
  %vm2071 = vweird.f32 %v2065
  %vm2072 = vmor %vm2070, %vm2071
  %v2073 = vsel %vm2072, %v2065, %v2069
  %v2074 = vand.u32 2147483647, %v2064
  %vm2075 = vcmp.eq.f32.partialorder %v2074, 8.507059e+37
  %v2076 = vand.u32 %v2064, 2147483648
  %v2077 = vor.u32 1.1754944e-38, %v2076
  %v2078 = vsel %vm2075, %v2077, %v2073
  %v2079 = vmul.f32 1.0, %v2078
  %v2080 = vtanh.pop %v2040
  %v2081 = vxor.u32 %v2041, 2147483648
  %v2082 = vmul.f32 %v2081, 1.442695
  %v2083 = vpow.pop %v2082
  %v2084 = vadd.f32 %v2083, 1.0
  %v2085 = vrcp.pop %v2084
  %v2086 = vmul.f32 %v2084, %v2085
  %v2087 = vsub.f32 1.0, %v2086
  %v2088 = vmul.f32 %v2085, %v2087
  %v2089 = vadd.f32 %v2085, %v2088
  %vm2090 = vweird.f32 %v2084
  %vm2091 = vweird.f32 %v2085
  %vm2092 = vmor %vm2090, %vm2091
  %v2093 = vsel %vm2092, %v2085, %v2089
  %v2094 = vand.u32 2147483647, %v2084
  %vm2095 = vcmp.eq.f32.partialorder %v2094, 8.507059e+37
  %v2096 = vand.u32 %v2084, 2147483648
  %v2097 = vor.u32 1.1754944e-38, %v2096
  %v2098 = vsel %vm2095, %v2097, %v2093
  %v2099 = vmul.f32 1.0, %v2098
  %v2100 = vmul.f32 %v2079, %v1446
  %v2101 = vmul.f32 %v2060, %v2080
  %v2102 = vadd.f32 %v2100, %v2101
  %v2103 = vtanh.pop %v2102
  %v2104 = vmul.f32 %v2099, %v2103
  %2106 = vset.pattern.permute.xlu0 0
  %2107 = vperm.xlu0 %2106, %v1452
  %v2108 = vpop.permute.xlu0 %2107
  %v2110 = vmul.f32 %v2108, %v2104
  %s2111 = scalar_lea.vmem [#allocation5], 48
  %2112 = vst [vmem:[%s2111] sm:$0xff] %v2110
  %v2113 = vsub.f32 %v2104, %v1444
  %v2114 = vmul.f32 %v2108, %v2113
  %v2115 = vadd.f32 %v1444, %v2114
  %v2116 = vsub.f32 %v2102, %v1446
  %v2117 = vmul.f32 %v2108, %v2116
  %v2118 = vadd.f32 %v1446, %v2117
  %vm2119 = vcmp.gt.s32.totalorder %v783, 2
  %v2120 = vsel %vm2119, 1, 0
  %v2121 = vcvt.s32.f32 %v2120
  %vm2122 = vcmp.gt.s32.totalorder %v783, 5
  %v2123 = vsel %vm2122, 1, 0
  %v2124 = vcvt.s32.f32 %v2123
  %s2125 = smul.u32 2, 4
  %s2126 = smul.addr %s2125, 8
  %s2127 = scalar_lea.vmem [#allocation2], %s2126
  %v2128 = vld [vmem:[%s2127] sm:$0xff]
  %v2129 = vld [vmem:[%s2127 + $0x8] sm:$0xff]
  %v2130 = vld [vmem:[%s2127 + $0x10] sm:$0xff]
  %v2131 = vld [vmem:[%s2127 + $0x18] sm:$0xff]
  %v2132 = vpack.c.bf16 %v1782, %v1782
  %v2133 = vld [vmem:[%s6] sm:$0xff]
  %v2134 = vld [vmem:[%s6 + $0x8] sm:$0xff]
  %v2135 = vld [vmem:[%s6 + $0x10] sm:$0xff]
  %v2136 = vld [vmem:[%s6 + $0x18] sm:$0xff]
  %v2137 = vld [vmem:[%s6 + $0x20] sm:$0xff]
  %v2138 = vld [vmem:[%s6 + $0x28] sm:$0xff]
  %v2139 = vld [vmem:[%s6 + $0x30] sm:$0xff]
  %v2140 = vld [vmem:[%s6 + $0x38] sm:$0xff]
  %v2141 = vld [vmem:[%s6 + $0x40] sm:$0xff]
  %v2142 = vld [vmem:[%s6 + $0x48] sm:$0xff]
  %v2143 = vld [vmem:[%s6 + $0x50] sm:$0xff]
  %v2144 = vld [vmem:[%s6 + $0x58] sm:$0xff]
  %v2145 = vld [vmem:[%s6 + $0x60] sm:$0xff]
  %v2146 = vld [vmem:[%s6 + $0x68] sm:$0xff]
  %v2147 = vld [vmem:[%s6 + $0x70] sm:$0xff]
  %v2148 = vld [vmem:[%s6 + $0x78] sm:$0xff]
  %v2149 = vld [vmem:[%s6 + $0x80] sm:$0xff]
  %v2150 = vld [vmem:[%s6 + $0x88] sm:$0xff]
  %v2151 = vld [vmem:[%s6 + $0x90] sm:$0xff]
  %v2152 = vld [vmem:[%s6 + $0x98] sm:$0xff]
  %v2153 = vld [vmem:[%s6 + $0xa0] sm:$0xff]
  %v2154 = vld [vmem:[%s6 + $0xa8] sm:$0xff]
  %v2155 = vld [vmem:[%s6 + $0xb0] sm:$0xff]
  %v2156 = vld [vmem:[%s6 + $0xb8] sm:$0xff]
  %v2157 = vld [vmem:[%s6 + $0xc0] sm:$0xff]
  %v2158 = vld [vmem:[%s6 + $0xc8] sm:$0xff]
  %v2159 = vld [vmem:[%s6 + $0xd0] sm:$0xff]
  %v2160 = vld [vmem:[%s6 + $0xd8] sm:$0xff]
  %v2161 = vld [vmem:[%s6 + $0xe0] sm:$0xff]
  %v2162 = vld [vmem:[%s6 + $0xe8] sm:$0xff]
  %v2163 = vld [vmem:[%s6 + $0xf0] sm:$0xff]
  %v2164 = vld [vmem:[%s6 + $0xf8] sm:$0xff]
  %v2197 = vunpack.c.l.b16 %v2133
  %v2198 = vunpack.c.h.b16 %v2133
  %v2199 = vunpack.c.l.b16 %v2134
  %v2200 = vunpack.c.h.b16 %v2134
  %v2201 = vunpack.c.l.b16 %v2135
  %v2202 = vunpack.c.h.b16 %v2135
  %v2203 = vunpack.c.l.b16 %v2136
  %v2204 = vunpack.c.h.b16 %v2136
  %v2205 = vunpack.c.l.b16 %v2137
  %v2206 = vunpack.c.h.b16 %v2137
  %v2207 = vunpack.c.l.b16 %v2138
  %v2208 = vunpack.c.h.b16 %v2138
  %v2209 = vunpack.c.l.b16 %v2139
  %v2210 = vunpack.c.h.b16 %v2139
  %v2211 = vunpack.c.l.b16 %v2140
  %v2212 = vunpack.c.h.b16 %v2140
  %v2213 = vunpack.c.l.b16 %v2141
  %v2214 = vunpack.c.h.b16 %v2141
  %v2215 = vunpack.c.l.b16 %v2142
  %v2216 = vunpack.c.h.b16 %v2142
  %v2217 = vunpack.c.l.b16 %v2143
  %v2218 = vunpack.c.h.b16 %v2143
  %v2219 = vunpack.c.l.b16 %v2144
  %v2220 = vunpack.c.h.b16 %v2144
  %v2221 = vunpack.c.l.b16 %v2145
  %v2222 = vunpack.c.h.b16 %v2145
  %v2223 = vunpack.c.l.b16 %v2146
  %v2224 = vunpack.c.h.b16 %v2146
  %v2225 = vunpack.c.l.b16 %v2147
  %v2226 = vunpack.c.h.b16 %v2147
  %v2227 = vunpack.c.l.b16 %v2148
  %v2228 = vunpack.c.h.b16 %v2148
  %v2229 = vunpack.c.l.b16 %v2149
  %v2230 = vunpack.c.h.b16 %v2149
  %v2231 = vunpack.c.l.b16 %v2150
  %v2232 = vunpack.c.h.b16 %v2150
  %v2233 = vunpack.c.l.b16 %v2151
  %v2234 = vunpack.c.h.b16 %v2151
  %v2235 = vunpack.c.l.b16 %v2152
  %v2236 = vunpack.c.h.b16 %v2152
  %v2237 = vunpack.c.l.b16 %v2153
  %v2238 = vunpack.c.h.b16 %v2153
  %v2239 = vunpack.c.l.b16 %v2154
  %v2240 = vunpack.c.h.b16 %v2154
  %v2241 = vunpack.c.l.b16 %v2155
  %v2242 = vunpack.c.h.b16 %v2155
  %v2243 = vunpack.c.l.b16 %v2156
  %v2244 = vunpack.c.h.b16 %v2156
  %v2245 = vunpack.c.l.b16 %v2157
  %v2246 = vunpack.c.h.b16 %v2157
  %v2247 = vunpack.c.l.b16 %v2158
  %v2248 = vunpack.c.h.b16 %v2158
  %v2249 = vunpack.c.l.b16 %v2159
  %v2250 = vunpack.c.h.b16 %v2159
  %v2251 = vunpack.c.l.b16 %v2160
  %v2252 = vunpack.c.h.b16 %v2160
  %v2253 = vunpack.c.l.b16 %v2161
  %v2254 = vunpack.c.h.b16 %v2161
  %v2255 = vunpack.c.l.b16 %v2162
  %v2256 = vunpack.c.h.b16 %v2162
  %v2257 = vunpack.c.l.b16 %v2163
  %v2258 = vunpack.c.h.b16 %v2163
  %v2259 = vunpack.c.l.b16 %v2164
  %v2260 = vunpack.c.h.b16 %v2164
  %v2261 = vpack.c.b16 %v2201, %v2197
  %v2262 = vpack.c.b16 %v2202, %v2198
  %v2263 = vpack.c.b16 %v2203, %v2199
  %v2264 = vpack.c.b16 %v2204, %v2200
  %v2265 = vpack.c.b16 %v2209, %v2205
  %v2266 = vpack.c.b16 %v2210, %v2206
  %v2267 = vpack.c.b16 %v2211, %v2207
  %v2268 = vpack.c.b16 %v2212, %v2208
  %v2269 = vpack.c.b16 %v2217, %v2213
  %v2270 = vpack.c.b16 %v2218, %v2214
  %v2271 = vpack.c.b16 %v2219, %v2215
  %v2272 = vpack.c.b16 %v2220, %v2216
  %v2273 = vpack.c.b16 %v2225, %v2221
  %v2274 = vpack.c.b16 %v2226, %v2222
  %v2275 = vpack.c.b16 %v2227, %v2223
  %v2276 = vpack.c.b16 %v2228, %v2224
  %v2277 = vpack.c.b16 %v2233, %v2229
  %v2278 = vpack.c.b16 %v2234, %v2230
  %v2279 = vpack.c.b16 %v2235, %v2231
  %v2280 = vpack.c.b16 %v2236, %v2232
  %v2281 = vpack.c.b16 %v2241, %v2237
  %v2282 = vpack.c.b16 %v2242, %v2238
  %v2283 = vpack.c.b16 %v2243, %v2239
  %v2284 = vpack.c.b16 %v2244, %v2240
  %v2285 = vpack.c.b16 %v2249, %v2245
  %v2286 = vpack.c.b16 %v2250, %v2246
  %v2287 = vpack.c.b16 %v2251, %v2247
  %v2288 = vpack.c.b16 %v2252, %v2248
  %v2289 = vpack.c.b16 %v2257, %v2253
  %v2290 = vpack.c.b16 %v2258, %v2254
  %v2291 = vpack.c.b16 %v2259, %v2255
  %v2292 = vpack.c.b16 %v2260, %v2256
  %2325 = vmatpush.bf16.msra.mxu0 %v2289
  %2326 = vmatpush.bf16.msra.mxu0 %v2285
  %2327 = vmatpush.bf16.msra.mxu0 %v2281
  %2328 = vmatpush.bf16.msra.mxu0 %v2277
  %2329 = vmatpush.bf16.msra.mxu0 %v2273
  %2330 = vmatpush.bf16.msra.mxu0 %v2269
  %2331 = vmatpush.bf16.msra.mxu0 %v2265
  %2332 = vmatpush.bf16.msra.mxu0 %v2261
  %2333 = vmatmul.bf16.gmra.mxu0 %v2132
  %v2334 = vpop.f32.mrf.mxu0
  %v2335 = vadd.f32 0.0, %v2334
  %v2336 = vpop.f32.mrf.mxu0
  %2337 = vdwg.mxu0
  %2338 = vmatpush.bf16.msra.mxu0 %v2290
  %2339 = vmatpush.bf16.msra.mxu0 %v2286
  %2340 = vmatpush.bf16.msra.mxu0 %v2282
  %2341 = vmatpush.bf16.msra.mxu0 %v2278
  %2342 = vmatpush.bf16.msra.mxu0 %v2274
  %2343 = vmatpush.bf16.msra.mxu0 %v2270
  %2344 = vmatpush.bf16.msra.mxu0 %v2266
  %2345 = vmatpush.bf16.msra.mxu0 %v2262
  %2346 = vmatmul.bf16.gmra.mxu0 %v2132
  %v2347 = vpop.f32.mrf.mxu0
  %v2348 = vadd.f32 0.0, %v2347
  %v2349 = vpop.f32.mrf.mxu0
  %2350 = vdwg.mxu0
  %2351 = vmatpush.bf16.msra.mxu0 %v2291
  %2352 = vmatpush.bf16.msra.mxu0 %v2287
  %2353 = vmatpush.bf16.msra.mxu0 %v2283
  %2354 = vmatpush.bf16.msra.mxu0 %v2279
  %2355 = vmatpush.bf16.msra.mxu0 %v2275
  %2356 = vmatpush.bf16.msra.mxu0 %v2271
  %2357 = vmatpush.bf16.msra.mxu0 %v2267
  %2358 = vmatpush.bf16.msra.mxu0 %v2263
  %2359 = vmatmul.bf16.gmra.mxu0 %v2132
  %v2360 = vpop.f32.mrf.mxu0
  %v2361 = vadd.f32 0.0, %v2360
  %v2362 = vpop.f32.mrf.mxu0
  %2363 = vdwg.mxu0
  %2364 = vmatpush.bf16.msra.mxu0 %v2292
  %2365 = vmatpush.bf16.msra.mxu0 %v2288
  %2366 = vmatpush.bf16.msra.mxu0 %v2284
  %2367 = vmatpush.bf16.msra.mxu0 %v2280
  %2368 = vmatpush.bf16.msra.mxu0 %v2276
  %2369 = vmatpush.bf16.msra.mxu0 %v2272
  %2370 = vmatpush.bf16.msra.mxu0 %v2268
  %2371 = vmatpush.bf16.msra.mxu0 %v2264
  %2372 = vmatmul.bf16.gmra.mxu0 %v2132
  %v2373 = vpop.f32.mrf.mxu0
  %v2374 = vadd.f32 0.0, %v2373
  %v2375 = vpop.f32.mrf.mxu0
  %2376 = vdwg.mxu0
  %v2377 = vadd.f32 %v2128, %v2335
  %v2378 = vadd.f32 %v2129, %v2348
  %v2379 = vadd.f32 %v2130, %v2361
  %v2380 = vadd.f32 %v2131, %v2374
  %v2381 = vxor.u32 %v2377, 2147483648
  %v2382 = vmul.f32 %v2381, 1.442695
  %v2383 = vpow.pop %v2382
  %v2384 = vadd.f32 %v2383, 1.0
  %v2385 = vrcp.pop %v2384
  %v2386 = vmul.f32 %v2384, %v2385
  %v2387 = vsub.f32 1.0, %v2386
  %v2388 = vmul.f32 %v2385, %v2387
  %v2389 = vadd.f32 %v2385, %v2388
  %vm2390 = vweird.f32 %v2384
  %vm2391 = vweird.f32 %v2385
  %vm2392 = vmor %vm2390, %vm2391
  %v2393 = vsel %vm2392, %v2385, %v2389
  %v2394 = vand.u32 2147483647, %v2384
  %vm2395 = vcmp.eq.f32.partialorder %v2394, 8.507059e+37
  %v2396 = vand.u32 %v2384, 2147483648
  %v2397 = vor.u32 1.1754944e-38, %v2396
  %v2398 = vsel %vm2395, %v2397, %v2393
  %v2399 = vmul.f32 1.0, %v2398
  %v2400 = vxor.u32 %v2378, 2147483648
  %v2401 = vmul.f32 %v2400, 1.442695
  %v2402 = vpow.pop %v2401
  %v2403 = vadd.f32 %v2402, 1.0
  %v2404 = vrcp.pop %v2403
  %v2405 = vmul.f32 %v2403, %v2404
  %v2406 = vsub.f32 1.0, %v2405
  %v2407 = vmul.f32 %v2404, %v2406
  %v2408 = vadd.f32 %v2404, %v2407
  %vm2409 = vweird.f32 %v2403
  %vm2410 = vweird.f32 %v2404
  %vm2411 = vmor %vm2409, %vm2410
  %v2412 = vsel %vm2411, %v2404, %v2408
  %v2413 = vand.u32 2147483647, %v2403
  %vm2414 = vcmp.eq.f32.partialorder %v2413, 8.507059e+37
  %v2415 = vand.u32 %v2403, 2147483648
  %v2416 = vor.u32 1.1754944e-38, %v2415
  %v2417 = vsel %vm2414, %v2416, %v2412
  %v2418 = vmul.f32 1.0, %v2417
  %v2419 = vtanh.pop %v2379
  %v2420 = vxor.u32 %v2380, 2147483648
  %v2421 = vmul.f32 %v2420, 1.442695
  %v2422 = vpow.pop %v2421
  %v2423 = vadd.f32 %v2422, 1.0
  %v2424 = vrcp.pop %v2423
  %v2425 = vmul.f32 %v2423, %v2424
  %v2426 = vsub.f32 1.0, %v2425
  %v2427 = vmul.f32 %v2424, %v2426
  %v2428 = vadd.f32 %v2424, %v2427
  %vm2429 = vweird.f32 %v2423
  %vm2430 = vweird.f32 %v2424
  %vm2431 = vmor %vm2429, %vm2430
  %v2432 = vsel %vm2431, %v2424, %v2428
  %v2433 = vand.u32 2147483647, %v2423
  %vm2434 = vcmp.eq.f32.partialorder %v2433, 8.507059e+37
  %v2435 = vand.u32 %v2423, 2147483648
  %v2436 = vor.u32 1.1754944e-38, %v2435
  %v2437 = vsel %vm2434, %v2436, %v2432
  %v2438 = vmul.f32 1.0, %v2437
  %v2439 = vmul.f32 %v2418, %v1785
  %v2440 = vmul.f32 %v2399, %v2419
  %v2441 = vadd.f32 %v2439, %v2440
  %v2442 = vtanh.pop %v2441
  %v2443 = vmul.f32 %v2438, %v2442
  %2445 = vset.pattern.permute.xlu0 0
  %2446 = vperm.xlu0 %2445, %v2121
  %v2447 = vpop.permute.xlu0 %2446
  %v2449 = vmul.f32 %v2447, %v2443
  %s2450 = scalar_lea.vmem [#allocation4], 16
  %2451 = vst [vmem:[%s2450] sm:$0xff] %v2449
  %v2452 = vsub.f32 %v2443, %v1782
  %v2453 = vmul.f32 %v2447, %v2452
  %v2454 = vadd.f32 %v1782, %v2453
  %v2455 = vsub.f32 %v2441, %v1785
  %v2456 = vmul.f32 %v2447, %v2455
  %v2457 = vadd.f32 %v1785, %v2456
  %s2458 = smul.u32 5, 4
  %s2459 = smul.addr %s2458, 8
  %s2460 = scalar_lea.vmem [#allocation3], %s2459
  %v2461 = vld [vmem:[%s2460] sm:$0xff]
  %v2462 = vld [vmem:[%s2460 + $0x8] sm:$0xff]
  %v2463 = vld [vmem:[%s2460 + $0x10] sm:$0xff]
  %v2464 = vld [vmem:[%s2460 + $0x18] sm:$0xff]
  %v2465 = vpack.c.bf16 %v2115, %v2115
  %v2466 = vld [vmem:[%s7] sm:$0xff]
  %v2467 = vld [vmem:[%s7 + $0x8] sm:$0xff]
  %v2468 = vld [vmem:[%s7 + $0x10] sm:$0xff]
  %v2469 = vld [vmem:[%s7 + $0x18] sm:$0xff]
  %v2470 = vld [vmem:[%s7 + $0x20] sm:$0xff]
  %v2471 = vld [vmem:[%s7 + $0x28] sm:$0xff]
  %v2472 = vld [vmem:[%s7 + $0x30] sm:$0xff]
  %v2473 = vld [vmem:[%s7 + $0x38] sm:$0xff]
  %v2474 = vld [vmem:[%s7 + $0x40] sm:$0xff]
  %v2475 = vld [vmem:[%s7 + $0x48] sm:$0xff]
  %v2476 = vld [vmem:[%s7 + $0x50] sm:$0xff]
  %v2477 = vld [vmem:[%s7 + $0x58] sm:$0xff]
  %v2478 = vld [vmem:[%s7 + $0x60] sm:$0xff]
  %v2479 = vld [vmem:[%s7 + $0x68] sm:$0xff]
  %v2480 = vld [vmem:[%s7 + $0x70] sm:$0xff]
  %v2481 = vld [vmem:[%s7 + $0x78] sm:$0xff]
  %v2482 = vld [vmem:[%s7 + $0x80] sm:$0xff]
  %v2483 = vld [vmem:[%s7 + $0x88] sm:$0xff]
  %v2484 = vld [vmem:[%s7 + $0x90] sm:$0xff]
  %v2485 = vld [vmem:[%s7 + $0x98] sm:$0xff]
  %v2486 = vld [vmem:[%s7 + $0xa0] sm:$0xff]
  %v2487 = vld [vmem:[%s7 + $0xa8] sm:$0xff]
  %v2488 = vld [vmem:[%s7 + $0xb0] sm:$0xff]
  %v2489 = vld [vmem:[%s7 + $0xb8] sm:$0xff]
  %v2490 = vld [vmem:[%s7 + $0xc0] sm:$0xff]
  %v2491 = vld [vmem:[%s7 + $0xc8] sm:$0xff]
  %v2492 = vld [vmem:[%s7 + $0xd0] sm:$0xff]
  %v2493 = vld [vmem:[%s7 + $0xd8] sm:$0xff]
  %v2494 = vld [vmem:[%s7 + $0xe0] sm:$0xff]
  %v2495 = vld [vmem:[%s7 + $0xe8] sm:$0xff]
  %v2496 = vld [vmem:[%s7 + $0xf0] sm:$0xff]
  %v2497 = vld [vmem:[%s7 + $0xf8] sm:$0xff]
  %v2530 = vunpack.c.l.b16 %v2466
  %v2531 = vunpack.c.h.b16 %v2466
  %v2532 = vunpack.c.l.b16 %v2467
  %v2533 = vunpack.c.h.b16 %v2467
  %v2534 = vunpack.c.l.b16 %v2468
  %v2535 = vunpack.c.h.b16 %v2468
  %v2536 = vunpack.c.l.b16 %v2469
  %v2537 = vunpack.c.h.b16 %v2469
  %v2538 = vunpack.c.l.b16 %v2470
  %v2539 = vunpack.c.h.b16 %v2470
  %v2540 = vunpack.c.l.b16 %v2471
  %v2541 = vunpack.c.h.b16 %v2471
  %v2542 = vunpack.c.l.b16 %v2472
  %v2543 = vunpack.c.h.b16 %v2472
  %v2544 = vunpack.c.l.b16 %v2473
  %v2545 = vunpack.c.h.b16 %v2473
  %v2546 = vunpack.c.l.b16 %v2474
  %v2547 = vunpack.c.h.b16 %v2474
  %v2548 = vunpack.c.l.b16 %v2475
  %v2549 = vunpack.c.h.b16 %v2475
  %v2550 = vunpack.c.l.b16 %v2476
  %v2551 = vunpack.c.h.b16 %v2476
  %v2552 = vunpack.c.l.b16 %v2477
  %v2553 = vunpack.c.h.b16 %v2477
  %v2554 = vunpack.c.l.b16 %v2478
  %v2555 = vunpack.c.h.b16 %v2478
  %v2556 = vunpack.c.l.b16 %v2479
  %v2557 = vunpack.c.h.b16 %v2479
  %v2558 = vunpack.c.l.b16 %v2480
  %v2559 = vunpack.c.h.b16 %v2480
  %v2560 = vunpack.c.l.b16 %v2481
  %v2561 = vunpack.c.h.b16 %v2481
  %v2562 = vunpack.c.l.b16 %v2482
  %v2563 = vunpack.c.h.b16 %v2482
  %v2564 = vunpack.c.l.b16 %v2483
  %v2565 = vunpack.c.h.b16 %v2483
  %v2566 = vunpack.c.l.b16 %v2484
  %v2567 = vunpack.c.h.b16 %v2484
  %v2568 = vunpack.c.l.b16 %v2485
  %v2569 = vunpack.c.h.b16 %v2485
  %v2570 = vunpack.c.l.b16 %v2486
  %v2571 = vunpack.c.h.b16 %v2486
  %v2572 = vunpack.c.l.b16 %v2487
  %v2573 = vunpack.c.h.b16 %v2487
  %v2574 = vunpack.c.l.b16 %v2488
  %v2575 = vunpack.c.h.b16 %v2488
  %v2576 = vunpack.c.l.b16 %v2489
  %v2577 = vunpack.c.h.b16 %v2489
  %v2578 = vunpack.c.l.b16 %v2490
  %v2579 = vunpack.c.h.b16 %v2490
  %v2580 = vunpack.c.l.b16 %v2491
  %v2581 = vunpack.c.h.b16 %v2491
  %v2582 = vunpack.c.l.b16 %v2492
  %v2583 = vunpack.c.h.b16 %v2492
  %v2584 = vunpack.c.l.b16 %v2493
  %v2585 = vunpack.c.h.b16 %v2493
  %v2586 = vunpack.c.l.b16 %v2494
  %v2587 = vunpack.c.h.b16 %v2494
  %v2588 = vunpack.c.l.b16 %v2495
  %v2589 = vunpack.c.h.b16 %v2495
  %v2590 = vunpack.c.l.b16 %v2496
  %v2591 = vunpack.c.h.b16 %v2496
  %v2592 = vunpack.c.l.b16 %v2497
  %v2593 = vunpack.c.h.b16 %v2497
  %v2594 = vpack.c.b16 %v2534, %v2530
  %v2595 = vpack.c.b16 %v2535, %v2531
  %v2596 = vpack.c.b16 %v2536, %v2532
  %v2597 = vpack.c.b16 %v2537, %v2533
  %v2598 = vpack.c.b16 %v2542, %v2538
  %v2599 = vpack.c.b16 %v2543, %v2539
  %v2600 = vpack.c.b16 %v2544, %v2540
  %v2601 = vpack.c.b16 %v2545, %v2541
  %v2602 = vpack.c.b16 %v2550, %v2546
  %v2603 = vpack.c.b16 %v2551, %v2547
  %v2604 = vpack.c.b16 %v2552, %v2548
  %v2605 = vpack.c.b16 %v2553, %v2549
  %v2606 = vpack.c.b16 %v2558, %v2554
  %v2607 = vpack.c.b16 %v2559, %v2555
  %v2608 = vpack.c.b16 %v2560, %v2556
  %v2609 = vpack.c.b16 %v2561, %v2557
  %v2610 = vpack.c.b16 %v2566, %v2562
  %v2611 = vpack.c.b16 %v2567, %v2563
  %v2612 = vpack.c.b16 %v2568, %v2564
  %v2613 = vpack.c.b16 %v2569, %v2565
  %v2614 = vpack.c.b16 %v2574, %v2570
  %v2615 = vpack.c.b16 %v2575, %v2571
  %v2616 = vpack.c.b16 %v2576, %v2572
  %v2617 = vpack.c.b16 %v2577, %v2573
  %v2618 = vpack.c.b16 %v2582, %v2578
  %v2619 = vpack.c.b16 %v2583, %v2579
  %v2620 = vpack.c.b16 %v2584, %v2580
  %v2621 = vpack.c.b16 %v2585, %v2581
  %v2622 = vpack.c.b16 %v2590, %v2586
  %v2623 = vpack.c.b16 %v2591, %v2587
  %v2624 = vpack.c.b16 %v2592, %v2588
  %v2625 = vpack.c.b16 %v2593, %v2589
  %2658 = vmatpush.bf16.msra.mxu0 %v2622
  %2659 = vmatpush.bf16.msra.mxu0 %v2618
  %2660 = vmatpush.bf16.msra.mxu0 %v2614
  %2661 = vmatpush.bf16.msra.mxu0 %v2610
  %2662 = vmatpush.bf16.msra.mxu0 %v2606
  %2663 = vmatpush.bf16.msra.mxu0 %v2602
  %2664 = vmatpush.bf16.msra.mxu0 %v2598
  %2665 = vmatpush.bf16.msra.mxu0 %v2594
  %2666 = vmatmul.bf16.gmra.mxu0 %v2465
  %v2667 = vpop.f32.mrf.mxu0
  %v2668 = vadd.f32 0.0, %v2667
  %v2669 = vpop.f32.mrf.mxu0
  %2670 = vdwg.mxu0
  %2671 = vmatpush.bf16.msra.mxu0 %v2623
  %2672 = vmatpush.bf16.msra.mxu0 %v2619
  %2673 = vmatpush.bf16.msra.mxu0 %v2615
  %2674 = vmatpush.bf16.msra.mxu0 %v2611
  %2675 = vmatpush.bf16.msra.mxu0 %v2607
  %2676 = vmatpush.bf16.msra.mxu0 %v2603
  %2677 = vmatpush.bf16.msra.mxu0 %v2599
  %2678 = vmatpush.bf16.msra.mxu0 %v2595
  %2679 = vmatmul.bf16.gmra.mxu0 %v2465
  %v2680 = vpop.f32.mrf.mxu0
  %v2681 = vadd.f32 0.0, %v2680
  %v2682 = vpop.f32.mrf.mxu0
  %2683 = vdwg.mxu0
  %2684 = vmatpush.bf16.msra.mxu0 %v2624
  %2685 = vmatpush.bf16.msra.mxu0 %v2620
  %2686 = vmatpush.bf16.msra.mxu0 %v2616
  %2687 = vmatpush.bf16.msra.mxu0 %v2612
  %2688 = vmatpush.bf16.msra.mxu0 %v2608
  %2689 = vmatpush.bf16.msra.mxu0 %v2604
  %2690 = vmatpush.bf16.msra.mxu0 %v2600
  %2691 = vmatpush.bf16.msra.mxu0 %v2596
  %2692 = vmatmul.bf16.gmra.mxu0 %v2465
  %v2693 = vpop.f32.mrf.mxu0
  %v2694 = vadd.f32 0.0, %v2693
  %v2695 = vpop.f32.mrf.mxu0
  %2696 = vdwg.mxu0
  %2697 = vmatpush.bf16.msra.mxu0 %v2625
  %2698 = vmatpush.bf16.msra.mxu0 %v2621
  %2699 = vmatpush.bf16.msra.mxu0 %v2617
  %2700 = vmatpush.bf16.msra.mxu0 %v2613
  %2701 = vmatpush.bf16.msra.mxu0 %v2609
  %2702 = vmatpush.bf16.msra.mxu0 %v2605
  %2703 = vmatpush.bf16.msra.mxu0 %v2601
  %2704 = vmatpush.bf16.msra.mxu0 %v2597
  %2705 = vmatmul.bf16.gmra.mxu0 %v2465
  %v2706 = vpop.f32.mrf.mxu0
  %v2707 = vadd.f32 0.0, %v2706
  %v2708 = vpop.f32.mrf.mxu0
  %2709 = vdwg.mxu0
  %v2710 = vadd.f32 %v2461, %v2668
  %v2711 = vadd.f32 %v2462, %v2681
  %v2712 = vadd.f32 %v2463, %v2694
  %v2713 = vadd.f32 %v2464, %v2707
  %v2714 = vxor.u32 %v2710, 2147483648
  %v2715 = vmul.f32 %v2714, 1.442695
  %v2716 = vpow.pop %v2715
  %v2717 = vadd.f32 %v2716, 1.0
  %v2718 = vrcp.pop %v2717
  %v2719 = vmul.f32 %v2717, %v2718
  %v2720 = vsub.f32 1.0, %v2719
  %v2721 = vmul.f32 %v2718, %v2720
  %v2722 = vadd.f32 %v2718, %v2721
  %vm2723 = vweird.f32 %v2717
  %vm2724 = vweird.f32 %v2718
  %vm2725 = vmor %vm2723, %vm2724
  %v2726 = vsel %vm2725, %v2718, %v2722
  %v2727 = vand.u32 2147483647, %v2717
  %vm2728 = vcmp.eq.f32.partialorder %v2727, 8.507059e+37
  %v2729 = vand.u32 %v2717, 2147483648
  %v2730 = vor.u32 1.1754944e-38, %v2729
  %v2731 = vsel %vm2728, %v2730, %v2726
  %v2732 = vmul.f32 1.0, %v2731
  %v2733 = vxor.u32 %v2711, 2147483648
  %v2734 = vmul.f32 %v2733, 1.442695
  %v2735 = vpow.pop %v2734
  %v2736 = vadd.f32 %v2735, 1.0
  %v2737 = vrcp.pop %v2736
  %v2738 = vmul.f32 %v2736, %v2737
  %v2739 = vsub.f32 1.0, %v2738
  %v2740 = vmul.f32 %v2737, %v2739
  %v2741 = vadd.f32 %v2737, %v2740
  %vm2742 = vweird.f32 %v2736
  %vm2743 = vweird.f32 %v2737
  %vm2744 = vmor %vm2742, %vm2743
  %v2745 = vsel %vm2744, %v2737, %v2741
  %v2746 = vand.u32 2147483647, %v2736
  %vm2747 = vcmp.eq.f32.partialorder %v2746, 8.507059e+37
  %v2748 = vand.u32 %v2736, 2147483648
  %v2749 = vor.u32 1.1754944e-38, %v2748
  %v2750 = vsel %vm2747, %v2749, %v2745
  %v2751 = vmul.f32 1.0, %v2750
  %v2752 = vtanh.pop %v2712
  %v2753 = vxor.u32 %v2713, 2147483648
  %v2754 = vmul.f32 %v2753, 1.442695
  %v2755 = vpow.pop %v2754
  %v2756 = vadd.f32 %v2755, 1.0
  %v2757 = vrcp.pop %v2756
  %v2758 = vmul.f32 %v2756, %v2757
  %v2759 = vsub.f32 1.0, %v2758
  %v2760 = vmul.f32 %v2757, %v2759
  %v2761 = vadd.f32 %v2757, %v2760
  %vm2762 = vweird.f32 %v2756
  %vm2763 = vweird.f32 %v2757
  %vm2764 = vmor %vm2762, %vm2763
  %v2765 = vsel %vm2764, %v2757, %v2761
  %v2766 = vand.u32 2147483647, %v2756
  %vm2767 = vcmp.eq.f32.partialorder %v2766, 8.507059e+37
  %v2768 = vand.u32 %v2756, 2147483648
  %v2769 = vor.u32 1.1754944e-38, %v2768
  %v2770 = vsel %vm2767, %v2769, %v2765
  %v2771 = vmul.f32 1.0, %v2770
  %v2772 = vmul.f32 %v2751, %v2118
  %v2773 = vmul.f32 %v2732, %v2752
  %v2774 = vadd.f32 %v2772, %v2773
  %v2775 = vtanh.pop %v2774
  %v2776 = vmul.f32 %v2771, %v2775
  %2778 = vset.pattern.permute.xlu0 0
  %2779 = vperm.xlu0 %2778, %v2124
  %v2780 = vpop.permute.xlu0 %2779
  %v2782 = vmul.f32 %v2780, %v2776
  %s2783 = scalar_lea.vmem [#allocation5], 40
  %2784 = vst [vmem:[%s2783] sm:$0xff] %v2782
  %v2785 = vsub.f32 %v2776, %v2115
  %v2786 = vmul.f32 %v2780, %v2785
  %v2787 = vadd.f32 %v2115, %v2786
  %v2788 = vsub.f32 %v2774, %v2118
  %v2789 = vmul.f32 %v2780, %v2788
  %v2790 = vadd.f32 %v2118, %v2789
  %vm2791 = vcmp.gt.s32.totalorder %v783, 3
  %v2792 = vsel %vm2791, 1, 0
  %v2793 = vcvt.s32.f32 %v2792
  %vm2794 = vcmp.gt.s32.totalorder %v783, 4
  %v2795 = vsel %vm2794, 1, 0
  %v2796 = vcvt.s32.f32 %v2795
  %s2797 = smul.u32 3, 4
  %s2798 = smul.addr %s2797, 8
  %s2799 = scalar_lea.vmem [#allocation2], %s2798
  %v2800 = vld [vmem:[%s2799] sm:$0xff]
  %v2801 = vld [vmem:[%s2799 + $0x8] sm:$0xff]
  %v2802 = vld [vmem:[%s2799 + $0x10] sm:$0xff]
  %v2803 = vld [vmem:[%s2799 + $0x18] sm:$0xff]
  %v2804 = vpack.c.bf16 %v2454, %v2454
  %v2805 = vld [vmem:[%s6] sm:$0xff]
  %v2806 = vld [vmem:[%s6 + $0x8] sm:$0xff]
  %v2807 = vld [vmem:[%s6 + $0x10] sm:$0xff]
  %v2808 = vld [vmem:[%s6 + $0x18] sm:$0xff]
  %v2809 = vld [vmem:[%s6 + $0x20] sm:$0xff]
  %v2810 = vld [vmem:[%s6 + $0x28] sm:$0xff]
  %v2811 = vld [vmem:[%s6 + $0x30] sm:$0xff]
  %v2812 = vld [vmem:[%s6 + $0x38] sm:$0xff]
  %v2813 = vld [vmem:[%s6 + $0x40] sm:$0xff]
  %v2814 = vld [vmem:[%s6 + $0x48] sm:$0xff]
  %v2815 = vld [vmem:[%s6 + $0x50] sm:$0xff]
  %v2816 = vld [vmem:[%s6 + $0x58] sm:$0xff]
  %v2817 = vld [vmem:[%s6 + $0x60] sm:$0xff]
  %v2818 = vld [vmem:[%s6 + $0x68] sm:$0xff]
  %v2819 = vld [vmem:[%s6 + $0x70] sm:$0xff]
  %v2820 = vld [vmem:[%s6 + $0x78] sm:$0xff]
  %v2821 = vld [vmem:[%s6 + $0x80] sm:$0xff]
  %v2822 = vld [vmem:[%s6 + $0x88] sm:$0xff]
  %v2823 = vld [vmem:[%s6 + $0x90] sm:$0xff]
  %v2824 = vld [vmem:[%s6 + $0x98] sm:$0xff]
  %v2825 = vld [vmem:[%s6 + $0xa0] sm:$0xff]
  %v2826 = vld [vmem:[%s6 + $0xa8] sm:$0xff]
  %v2827 = vld [vmem:[%s6 + $0xb0] sm:$0xff]
  %v2828 = vld [vmem:[%s6 + $0xb8] sm:$0xff]
  %v2829 = vld [vmem:[%s6 + $0xc0] sm:$0xff]
  %v2830 = vld [vmem:[%s6 + $0xc8] sm:$0xff]
  %v2831 = vld [vmem:[%s6 + $0xd0] sm:$0xff]
  %v2832 = vld [vmem:[%s6 + $0xd8] sm:$0xff]
  %v2833 = vld [vmem:[%s6 + $0xe0] sm:$0xff]
  %v2834 = vld [vmem:[%s6 + $0xe8] sm:$0xff]
  %v2835 = vld [vmem:[%s6 + $0xf0] sm:$0xff]
  %v2836 = vld [vmem:[%s6 + $0xf8] sm:$0xff]
  %v2869 = vunpack.c.l.b16 %v2805
  %v2870 = vunpack.c.h.b16 %v2805
  %v2871 = vunpack.c.l.b16 %v2806
  %v2872 = vunpack.c.h.b16 %v2806
  %v2873 = vunpack.c.l.b16 %v2807
  %v2874 = vunpack.c.h.b16 %v2807
  %v2875 = vunpack.c.l.b16 %v2808
  %v2876 = vunpack.c.h.b16 %v2808
  %v2877 = vunpack.c.l.b16 %v2809
  %v2878 = vunpack.c.h.b16 %v2809
  %v2879 = vunpack.c.l.b16 %v2810
  %v2880 = vunpack.c.h.b16 %v2810
  %v2881 = vunpack.c.l.b16 %v2811
  %v2882 = vunpack.c.h.b16 %v2811
  %v2883 = vunpack.c.l.b16 %v2812
  %v2884 = vunpack.c.h.b16 %v2812
  %v2885 = vunpack.c.l.b16 %v2813
  %v2886 = vunpack.c.h.b16 %v2813
  %v2887 = vunpack.c.l.b16 %v2814
  %v2888 = vunpack.c.h.b16 %v2814
  %v2889 = vunpack.c.l.b16 %v2815
  %v2890 = vunpack.c.h.b16 %v2815
  %v2891 = vunpack.c.l.b16 %v2816
  %v2892 = vunpack.c.h.b16 %v2816
  %v2893 = vunpack.c.l.b16 %v2817
  %v2894 = vunpack.c.h.b16 %v2817
  %v2895 = vunpack.c.l.b16 %v2818
  %v2896 = vunpack.c.h.b16 %v2818
  %v2897 = vunpack.c.l.b16 %v2819
  %v2898 = vunpack.c.h.b16 %v2819
  %v2899 = vunpack.c.l.b16 %v2820
  %v2900 = vunpack.c.h.b16 %v2820
  %v2901 = vunpack.c.l.b16 %v2821
  %v2902 = vunpack.c.h.b16 %v2821
  %v2903 = vunpack.c.l.b16 %v2822
  %v2904 = vunpack.c.h.b16 %v2822
  %v2905 = vunpack.c.l.b16 %v2823
  %v2906 = vunpack.c.h.b16 %v2823
  %v2907 = vunpack.c.l.b16 %v2824
  %v2908 = vunpack.c.h.b16 %v2824
  %v2909 = vunpack.c.l.b16 %v2825
  %v2910 = vunpack.c.h.b16 %v2825
  %v2911 = vunpack.c.l.b16 %v2826
  %v2912 = vunpack.c.h.b16 %v2826
  %v2913 = vunpack.c.l.b16 %v2827
  %v2914 = vunpack.c.h.b16 %v2827
  %v2915 = vunpack.c.l.b16 %v2828
  %v2916 = vunpack.c.h.b16 %v2828
  %v2917 = vunpack.c.l.b16 %v2829
  %v2918 = vunpack.c.h.b16 %v2829
  %v2919 = vunpack.c.l.b16 %v2830
  %v2920 = vunpack.c.h.b16 %v2830
  %v2921 = vunpack.c.l.b16 %v2831
  %v2922 = vunpack.c.h.b16 %v2831
  %v2923 = vunpack.c.l.b16 %v2832
  %v2924 = vunpack.c.h.b16 %v2832
  %v2925 = vunpack.c.l.b16 %v2833
  %v2926 = vunpack.c.h.b16 %v2833
  %v2927 = vunpack.c.l.b16 %v2834
  %v2928 = vunpack.c.h.b16 %v2834
  %v2929 = vunpack.c.l.b16 %v2835
  %v2930 = vunpack.c.h.b16 %v2835
  %v2931 = vunpack.c.l.b16 %v2836
  %v2932 = vunpack.c.h.b16 %v2836
  %v2933 = vpack.c.b16 %v2873, %v2869
  %v2934 = vpack.c.b16 %v2874, %v2870
  %v2935 = vpack.c.b16 %v2875, %v2871
  %v2936 = vpack.c.b16 %v2876, %v2872
  %v2937 = vpack.c.b16 %v2881, %v2877
  %v2938 = vpack.c.b16 %v2882, %v2878
  %v2939 = vpack.c.b16 %v2883, %v2879
  %v2940 = vpack.c.b16 %v2884, %v2880
  %v2941 = vpack.c.b16 %v2889, %v2885
  %v2942 = vpack.c.b16 %v2890, %v2886
  %v2943 = vpack.c.b16 %v2891, %v2887
  %v2944 = vpack.c.b16 %v2892, %v2888
  %v2945 = vpack.c.b16 %v2897, %v2893
  %v2946 = vpack.c.b16 %v2898, %v2894
  %v2947 = vpack.c.b16 %v2899, %v2895
  %v2948 = vpack.c.b16 %v2900, %v2896
  %v2949 = vpack.c.b16 %v2905, %v2901
  %v2950 = vpack.c.b16 %v2906, %v2902
  %v2951 = vpack.c.b16 %v2907, %v2903
  %v2952 = vpack.c.b16 %v2908, %v2904
  %v2953 = vpack.c.b16 %v2913, %v2909
  %v2954 = vpack.c.b16 %v2914, %v2910
  %v2955 = vpack.c.b16 %v2915, %v2911
  %v2956 = vpack.c.b16 %v2916, %v2912
  %v2957 = vpack.c.b16 %v2921, %v2917
  %v2958 = vpack.c.b16 %v2922, %v2918
  %v2959 = vpack.c.b16 %v2923, %v2919
  %v2960 = vpack.c.b16 %v2924, %v2920
  %v2961 = vpack.c.b16 %v2929, %v2925
  %v2962 = vpack.c.b16 %v2930, %v2926
  %v2963 = vpack.c.b16 %v2931, %v2927
  %v2964 = vpack.c.b16 %v2932, %v2928
  %2997 = vmatpush.bf16.msra.mxu0 %v2961
  %2998 = vmatpush.bf16.msra.mxu0 %v2957
  %2999 = vmatpush.bf16.msra.mxu0 %v2953
  %3000 = vmatpush.bf16.msra.mxu0 %v2949
  %3001 = vmatpush.bf16.msra.mxu0 %v2945
  %3002 = vmatpush.bf16.msra.mxu0 %v2941
  %3003 = vmatpush.bf16.msra.mxu0 %v2937
  %3004 = vmatpush.bf16.msra.mxu0 %v2933
  %3005 = vmatmul.bf16.gmra.mxu0 %v2804
  %v3006 = vpop.f32.mrf.mxu0
  %v3007 = vadd.f32 0.0, %v3006
  %v3008 = vpop.f32.mrf.mxu0
  %3009 = vdwg.mxu0
  %3010 = vmatpush.bf16.msra.mxu0 %v2962
  %3011 = vmatpush.bf16.msra.mxu0 %v2958
  %3012 = vmatpush.bf16.msra.mxu0 %v2954
  %3013 = vmatpush.bf16.msra.mxu0 %v2950
  %3014 = vmatpush.bf16.msra.mxu0 %v2946
  %3015 = vmatpush.bf16.msra.mxu0 %v2942
  %3016 = vmatpush.bf16.msra.mxu0 %v2938
  %3017 = vmatpush.bf16.msra.mxu0 %v2934
  %3018 = vmatmul.bf16.gmra.mxu0 %v2804
  %v3019 = vpop.f32.mrf.mxu0
  %v3020 = vadd.f32 0.0, %v3019
  %v3021 = vpop.f32.mrf.mxu0
  %3022 = vdwg.mxu0
  %3023 = vmatpush.bf16.msra.mxu0 %v2963
  %3024 = vmatpush.bf16.msra.mxu0 %v2959
  %3025 = vmatpush.bf16.msra.mxu0 %v2955
  %3026 = vmatpush.bf16.msra.mxu0 %v2951
  %3027 = vmatpush.bf16.msra.mxu0 %v2947
  %3028 = vmatpush.bf16.msra.mxu0 %v2943
  %3029 = vmatpush.bf16.msra.mxu0 %v2939
  %3030 = vmatpush.bf16.msra.mxu0 %v2935
  %3031 = vmatmul.bf16.gmra.mxu0 %v2804
  %v3032 = vpop.f32.mrf.mxu0
  %v3033 = vadd.f32 0.0, %v3032
  %v3034 = vpop.f32.mrf.mxu0
  %3035 = vdwg.mxu0
  %3036 = vmatpush.bf16.msra.mxu0 %v2964
  %3037 = vmatpush.bf16.msra.mxu0 %v2960
  %3038 = vmatpush.bf16.msra.mxu0 %v2956
  %3039 = vmatpush.bf16.msra.mxu0 %v2952
  %3040 = vmatpush.bf16.msra.mxu0 %v2948
  %3041 = vmatpush.bf16.msra.mxu0 %v2944
  %3042 = vmatpush.bf16.msra.mxu0 %v2940
  %3043 = vmatpush.bf16.msra.mxu0 %v2936
  %3044 = vmatmul.bf16.gmra.mxu0 %v2804
  %v3045 = vpop.f32.mrf.mxu0
  %v3046 = vadd.f32 0.0, %v3045
  %v3047 = vpop.f32.mrf.mxu0
  %3048 = vdwg.mxu0
  %v3049 = vadd.f32 %v2800, %v3007
  %v3050 = vadd.f32 %v2801, %v3020
  %v3051 = vadd.f32 %v2802, %v3033
  %v3052 = vadd.f32 %v2803, %v3046
  %v3053 = vxor.u32 %v3049, 2147483648
  %v3054 = vmul.f32 %v3053, 1.442695
  %v3055 = vpow.pop %v3054
  %v3056 = vadd.f32 %v3055, 1.0
  %v3057 = vrcp.pop %v3056
  %v3058 = vmul.f32 %v3056, %v3057
  %v3059 = vsub.f32 1.0, %v3058
  %v3060 = vmul.f32 %v3057, %v3059
  %v3061 = vadd.f32 %v3057, %v3060
  %vm3062 = vweird.f32 %v3056
  %vm3063 = vweird.f32 %v3057
  %vm3064 = vmor %vm3062, %vm3063
  %v3065 = vsel %vm3064, %v3057, %v3061
  %v3066 = vand.u32 2147483647, %v3056
  %vm3067 = vcmp.eq.f32.partialorder %v3066, 8.507059e+37
  %v3068 = vand.u32 %v3056, 2147483648
  %v3069 = vor.u32 1.1754944e-38, %v3068
  %v3070 = vsel %vm3067, %v3069, %v3065
  %v3071 = vmul.f32 1.0, %v3070
  %v3072 = vxor.u32 %v3050, 2147483648
  %v3073 = vmul.f32 %v3072, 1.442695
  %v3074 = vpow.pop %v3073
  %v3075 = vadd.f32 %v3074, 1.0
  %v3076 = vrcp.pop %v3075
  %v3077 = vmul.f32 %v3075, %v3076
  %v3078 = vsub.f32 1.0, %v3077
  %v3079 = vmul.f32 %v3076, %v3078
  %v3080 = vadd.f32 %v3076, %v3079
  %vm3081 = vweird.f32 %v3075
  %vm3082 = vweird.f32 %v3076
  %vm3083 = vmor %vm3081, %vm3082
  %v3084 = vsel %vm3083, %v3076, %v3080
  %v3085 = vand.u32 2147483647, %v3075
  %vm3086 = vcmp.eq.f32.partialorder %v3085, 8.507059e+37
  %v3087 = vand.u32 %v3075, 2147483648
  %v3088 = vor.u32 1.1754944e-38, %v3087
  %v3089 = vsel %vm3086, %v3088, %v3084
  %v3090 = vmul.f32 1.0, %v3089
  %v3091 = vtanh.pop %v3051
  %v3092 = vxor.u32 %v3052, 2147483648
  %v3093 = vmul.f32 %v3092, 1.442695
  %v3094 = vpow.pop %v3093
  %v3095 = vadd.f32 %v3094, 1.0
  %v3096 = vrcp.pop %v3095
  %v3097 = vmul.f32 %v3095, %v3096
  %v3098 = vsub.f32 1.0, %v3097
  %v3099 = vmul.f32 %v3096, %v3098
  %v3100 = vadd.f32 %v3096, %v3099
  %vm3101 = vweird.f32 %v3095
  %vm3102 = vweird.f32 %v3096
  %vm3103 = vmor %vm3101, %vm3102
  %v3104 = vsel %vm3103, %v3096, %v3100
  %v3105 = vand.u32 2147483647, %v3095
  %vm3106 = vcmp.eq.f32.partialorder %v3105, 8.507059e+37
  %v3107 = vand.u32 %v3095, 2147483648
  %v3108 = vor.u32 1.1754944e-38, %v3107
  %v3109 = vsel %vm3106, %v3108, %v3104
  %v3110 = vmul.f32 1.0, %v3109
  %v3111 = vmul.f32 %v3090, %v2457
  %v3112 = vmul.f32 %v3071, %v3091
  %v3113 = vadd.f32 %v3111, %v3112
  %v3114 = vtanh.pop %v3113
  %v3115 = vmul.f32 %v3110, %v3114
  %3117 = vset.pattern.permute.xlu0 0
  %3118 = vperm.xlu0 %3117, %v2793
  %v3119 = vpop.permute.xlu0 %3118
  %v3121 = vmul.f32 %v3119, %v3115
  %s3122 = scalar_lea.vmem [#allocation4], 24
  %3123 = vst [vmem:[%s3122] sm:$0xff] %v3121
  %v3124 = vsub.f32 %v3115, %v2454
  %v3125 = vmul.f32 %v3119, %v3124
  %v3126 = vadd.f32 %v2454, %v3125
  %v3127 = vsub.f32 %v3113, %v2457
  %v3128 = vmul.f32 %v3119, %v3127
  %v3129 = vadd.f32 %v2457, %v3128
  %s3130 = smul.u32 4, 4
  %s3131 = smul.addr %s3130, 8
  %s3132 = scalar_lea.vmem [#allocation3], %s3131
  %v3133 = vld [vmem:[%s3132] sm:$0xff]
  %v3134 = vld [vmem:[%s3132 + $0x8] sm:$0xff]
  %v3135 = vld [vmem:[%s3132 + $0x10] sm:$0xff]
  %v3136 = vld [vmem:[%s3132 + $0x18] sm:$0xff]
  %v3137 = vpack.c.bf16 %v2787, %v2787
  %v3138 = vld [vmem:[%s7] sm:$0xff]
  %v3139 = vld [vmem:[%s7 + $0x8] sm:$0xff]
  %v3140 = vld [vmem:[%s7 + $0x10] sm:$0xff]
  %v3141 = vld [vmem:[%s7 + $0x18] sm:$0xff]
  %v3142 = vld [vmem:[%s7 + $0x20] sm:$0xff]
  %v3143 = vld [vmem:[%s7 + $0x28] sm:$0xff]
  %v3144 = vld [vmem:[%s7 + $0x30] sm:$0xff]
  %v3145 = vld [vmem:[%s7 + $0x38] sm:$0xff]
  %v3146 = vld [vmem:[%s7 + $0x40] sm:$0xff]
  %v3147 = vld [vmem:[%s7 + $0x48] sm:$0xff]
  %v3148 = vld [vmem:[%s7 + $0x50] sm:$0xff]
  %v3149 = vld [vmem:[%s7 + $0x58] sm:$0xff]
  %v3150 = vld [vmem:[%s7 + $0x60] sm:$0xff]
  %v3151 = vld [vmem:[%s7 + $0x68] sm:$0xff]
  %v3152 = vld [vmem:[%s7 + $0x70] sm:$0xff]
  %v3153 = vld [vmem:[%s7 + $0x78] sm:$0xff]
  %v3154 = vld [vmem:[%s7 + $0x80] sm:$0xff]
  %v3155 = vld [vmem:[%s7 + $0x88] sm:$0xff]
  %v3156 = vld [vmem:[%s7 + $0x90] sm:$0xff]
  %v3157 = vld [vmem:[%s7 + $0x98] sm:$0xff]
  %v3158 = vld [vmem:[%s7 + $0xa0] sm:$0xff]
  %v3159 = vld [vmem:[%s7 + $0xa8] sm:$0xff]
  %v3160 = vld [vmem:[%s7 + $0xb0] sm:$0xff]
  %v3161 = vld [vmem:[%s7 + $0xb8] sm:$0xff]
  %v3162 = vld [vmem:[%s7 + $0xc0] sm:$0xff]
  %v3163 = vld [vmem:[%s7 + $0xc8] sm:$0xff]
  %v3164 = vld [vmem:[%s7 + $0xd0] sm:$0xff]
  %v3165 = vld [vmem:[%s7 + $0xd8] sm:$0xff]
  %v3166 = vld [vmem:[%s7 + $0xe0] sm:$0xff]
  %v3167 = vld [vmem:[%s7 + $0xe8] sm:$0xff]
  %v3168 = vld [vmem:[%s7 + $0xf0] sm:$0xff]
  %v3169 = vld [vmem:[%s7 + $0xf8] sm:$0xff]
  %v3202 = vunpack.c.l.b16 %v3138
  %v3203 = vunpack.c.h.b16 %v3138
  %v3204 = vunpack.c.l.b16 %v3139
  %v3205 = vunpack.c.h.b16 %v3139
  %v3206 = vunpack.c.l.b16 %v3140
  %v3207 = vunpack.c.h.b16 %v3140
  %v3208 = vunpack.c.l.b16 %v3141
  %v3209 = vunpack.c.h.b16 %v3141
  %v3210 = vunpack.c.l.b16 %v3142
  %v3211 = vunpack.c.h.b16 %v3142
  %v3212 = vunpack.c.l.b16 %v3143
  %v3213 = vunpack.c.h.b16 %v3143
  %v3214 = vunpack.c.l.b16 %v3144
  %v3215 = vunpack.c.h.b16 %v3144
  %v3216 = vunpack.c.l.b16 %v3145
  %v3217 = vunpack.c.h.b16 %v3145
  %v3218 = vunpack.c.l.b16 %v3146
  %v3219 = vunpack.c.h.b16 %v3146
  %v3220 = vunpack.c.l.b16 %v3147
  %v3221 = vunpack.c.h.b16 %v3147
  %v3222 = vunpack.c.l.b16 %v3148
  %v3223 = vunpack.c.h.b16 %v3148
  %v3224 = vunpack.c.l.b16 %v3149
  %v3225 = vunpack.c.h.b16 %v3149
  %v3226 = vunpack.c.l.b16 %v3150
  %v3227 = vunpack.c.h.b16 %v3150
  %v3228 = vunpack.c.l.b16 %v3151
  %v3229 = vunpack.c.h.b16 %v3151
  %v3230 = vunpack.c.l.b16 %v3152
  %v3231 = vunpack.c.h.b16 %v3152
  %v3232 = vunpack.c.l.b16 %v3153
  %v3233 = vunpack.c.h.b16 %v3153
  %v3234 = vunpack.c.l.b16 %v3154
  %v3235 = vunpack.c.h.b16 %v3154
  %v3236 = vunpack.c.l.b16 %v3155
  %v3237 = vunpack.c.h.b16 %v3155
  %v3238 = vunpack.c.l.b16 %v3156
  %v3239 = vunpack.c.h.b16 %v3156
  %v3240 = vunpack.c.l.b16 %v3157
  %v3241 = vunpack.c.h.b16 %v3157
  %v3242 = vunpack.c.l.b16 %v3158
  %v3243 = vunpack.c.h.b16 %v3158
  %v3244 = vunpack.c.l.b16 %v3159
  %v3245 = vunpack.c.h.b16 %v3159
  %v3246 = vunpack.c.l.b16 %v3160
  %v3247 = vunpack.c.h.b16 %v3160
  %v3248 = vunpack.c.l.b16 %v3161
  %v3249 = vunpack.c.h.b16 %v3161
  %v3250 = vunpack.c.l.b16 %v3162
  %v3251 = vunpack.c.h.b16 %v3162
  %v3252 = vunpack.c.l.b16 %v3163
  %v3253 = vunpack.c.h.b16 %v3163
  %v3254 = vunpack.c.l.b16 %v3164
  %v3255 = vunpack.c.h.b16 %v3164
  %v3256 = vunpack.c.l.b16 %v3165
  %v3257 = vunpack.c.h.b16 %v3165
  %v3258 = vunpack.c.l.b16 %v3166
  %v3259 = vunpack.c.h.b16 %v3166
  %v3260 = vunpack.c.l.b16 %v3167
  %v3261 = vunpack.c.h.b16 %v3167
  %v3262 = vunpack.c.l.b16 %v3168
  %v3263 = vunpack.c.h.b16 %v3168
  %v3264 = vunpack.c.l.b16 %v3169
  %v3265 = vunpack.c.h.b16 %v3169
  %v3266 = vpack.c.b16 %v3206, %v3202
  %v3267 = vpack.c.b16 %v3207, %v3203
  %v3268 = vpack.c.b16 %v3208, %v3204
  %v3269 = vpack.c.b16 %v3209, %v3205
  %v3270 = vpack.c.b16 %v3214, %v3210
  %v3271 = vpack.c.b16 %v3215, %v3211
  %v3272 = vpack.c.b16 %v3216, %v3212
  %v3273 = vpack.c.b16 %v3217, %v3213
  %v3274 = vpack.c.b16 %v3222, %v3218
  %v3275 = vpack.c.b16 %v3223, %v3219
  %v3276 = vpack.c.b16 %v3224, %v3220
  %v3277 = vpack.c.b16 %v3225, %v3221
  %v3278 = vpack.c.b16 %v3230, %v3226
  %v3279 = vpack.c.b16 %v3231, %v3227
  %v3280 = vpack.c.b16 %v3232, %v3228
  %v3281 = vpack.c.b16 %v3233, %v3229
  %v3282 = vpack.c.b16 %v3238, %v3234
  %v3283 = vpack.c.b16 %v3239, %v3235
  %v3284 = vpack.c.b16 %v3240, %v3236
  %v3285 = vpack.c.b16 %v3241, %v3237
  %v3286 = vpack.c.b16 %v3246, %v3242
  %v3287 = vpack.c.b16 %v3247, %v3243
  %v3288 = vpack.c.b16 %v3248, %v3244
  %v3289 = vpack.c.b16 %v3249, %v3245
  %v3290 = vpack.c.b16 %v3254, %v3250
  %v3291 = vpack.c.b16 %v3255, %v3251
  %v3292 = vpack.c.b16 %v3256, %v3252
  %v3293 = vpack.c.b16 %v3257, %v3253
  %v3294 = vpack.c.b16 %v3262, %v3258
  %v3295 = vpack.c.b16 %v3263, %v3259
  %v3296 = vpack.c.b16 %v3264, %v3260
  %v3297 = vpack.c.b16 %v3265, %v3261
  %3330 = vmatpush.bf16.msra.mxu0 %v3294
  %3331 = vmatpush.bf16.msra.mxu0 %v3290
  %3332 = vmatpush.bf16.msra.mxu0 %v3286
  %3333 = vmatpush.bf16.msra.mxu0 %v3282
  %3334 = vmatpush.bf16.msra.mxu0 %v3278
  %3335 = vmatpush.bf16.msra.mxu0 %v3274
  %3336 = vmatpush.bf16.msra.mxu0 %v3270
  %3337 = vmatpush.bf16.msra.mxu0 %v3266
  %3338 = vmatmul.bf16.gmra.mxu0 %v3137
  %v3339 = vpop.f32.mrf.mxu0
  %v3340 = vadd.f32 0.0, %v3339
  %v3341 = vpop.f32.mrf.mxu0
  %3342 = vdwg.mxu0
  %3343 = vmatpush.bf16.msra.mxu0 %v3295
  %3344 = vmatpush.bf16.msra.mxu0 %v3291
  %3345 = vmatpush.bf16.msra.mxu0 %v3287
  %3346 = vmatpush.bf16.msra.mxu0 %v3283
  %3347 = vmatpush.bf16.msra.mxu0 %v3279
  %3348 = vmatpush.bf16.msra.mxu0 %v3275
  %3349 = vmatpush.bf16.msra.mxu0 %v3271
  %3350 = vmatpush.bf16.msra.mxu0 %v3267
  %3351 = vmatmul.bf16.gmra.mxu0 %v3137
  %v3352 = vpop.f32.mrf.mxu0
  %v3353 = vadd.f32 0.0, %v3352
  %v3354 = vpop.f32.mrf.mxu0
  %3355 = vdwg.mxu0
  %3356 = vmatpush.bf16.msra.mxu0 %v3296
  %3357 = vmatpush.bf16.msra.mxu0 %v3292
  %3358 = vmatpush.bf16.msra.mxu0 %v3288
  %3359 = vmatpush.bf16.msra.mxu0 %v3284
  %3360 = vmatpush.bf16.msra.mxu0 %v3280
  %3361 = vmatpush.bf16.msra.mxu0 %v3276
  %3362 = vmatpush.bf16.msra.mxu0 %v3272
  %3363 = vmatpush.bf16.msra.mxu0 %v3268
  %3364 = vmatmul.bf16.gmra.mxu0 %v3137
  %v3365 = vpop.f32.mrf.mxu0
  %v3366 = vadd.f32 0.0, %v3365
  %v3367 = vpop.f32.mrf.mxu0
  %3368 = vdwg.mxu0
  %3369 = vmatpush.bf16.msra.mxu0 %v3297
  %3370 = vmatpush.bf16.msra.mxu0 %v3293
  %3371 = vmatpush.bf16.msra.mxu0 %v3289
  %3372 = vmatpush.bf16.msra.mxu0 %v3285
  %3373 = vmatpush.bf16.msra.mxu0 %v3281
  %3374 = vmatpush.bf16.msra.mxu0 %v3277
  %3375 = vmatpush.bf16.msra.mxu0 %v3273
  %3376 = vmatpush.bf16.msra.mxu0 %v3269
  %3377 = vmatmul.bf16.gmra.mxu0 %v3137
  %v3378 = vpop.f32.mrf.mxu0
  %v3379 = vadd.f32 0.0, %v3378
  %v3380 = vpop.f32.mrf.mxu0
  %3381 = vdwg.mxu0
  %v3382 = vadd.f32 %v3133, %v3340
  %v3383 = vadd.f32 %v3134, %v3353
  %v3384 = vadd.f32 %v3135, %v3366
  %v3385 = vadd.f32 %v3136, %v3379
  %v3386 = vxor.u32 %v3382, 2147483648
  %v3387 = vmul.f32 %v3386, 1.442695
  %v3388 = vpow.pop %v3387
  %v3389 = vadd.f32 %v3388, 1.0
  %v3390 = vrcp.pop %v3389
  %v3391 = vmul.f32 %v3389, %v3390
  %v3392 = vsub.f32 1.0, %v3391
  %v3393 = vmul.f32 %v3390, %v3392
  %v3394 = vadd.f32 %v3390, %v3393
  %vm3395 = vweird.f32 %v3389
  %vm3396 = vweird.f32 %v3390
  %vm3397 = vmor %vm3395, %vm3396
  %v3398 = vsel %vm3397, %v3390, %v3394
  %v3399 = vand.u32 2147483647, %v3389
  %vm3400 = vcmp.eq.f32.partialorder %v3399, 8.507059e+37
  %v3401 = vand.u32 %v3389, 2147483648
  %v3402 = vor.u32 1.1754944e-38, %v3401
  %v3403 = vsel %vm3400, %v3402, %v3398
  %v3404 = vmul.f32 1.0, %v3403
  %v3405 = vxor.u32 %v3383, 2147483648
  %v3406 = vmul.f32 %v3405, 1.442695
  %v3407 = vpow.pop %v3406
  %v3408 = vadd.f32 %v3407, 1.0
  %v3409 = vrcp.pop %v3408
  %v3410 = vmul.f32 %v3408, %v3409
  %v3411 = vsub.f32 1.0, %v3410
  %v3412 = vmul.f32 %v3409, %v3411
  %v3413 = vadd.f32 %v3409, %v3412
  %vm3414 = vweird.f32 %v3408
  %vm3415 = vweird.f32 %v3409
  %vm3416 = vmor %vm3414, %vm3415
  %v3417 = vsel %vm3416, %v3409, %v3413
  %v3418 = vand.u32 2147483647, %v3408
  %vm3419 = vcmp.eq.f32.partialorder %v3418, 8.507059e+37
  %v3420 = vand.u32 %v3408, 2147483648
  %v3421 = vor.u32 1.1754944e-38, %v3420
  %v3422 = vsel %vm3419, %v3421, %v3417
  %v3423 = vmul.f32 1.0, %v3422
  %v3424 = vtanh.pop %v3384
  %v3425 = vxor.u32 %v3385, 2147483648
  %v3426 = vmul.f32 %v3425, 1.442695
  %v3427 = vpow.pop %v3426
  %v3428 = vadd.f32 %v3427, 1.0
  %v3429 = vrcp.pop %v3428
  %v3430 = vmul.f32 %v3428, %v3429
  %v3431 = vsub.f32 1.0, %v3430
  %v3432 = vmul.f32 %v3429, %v3431
  %v3433 = vadd.f32 %v3429, %v3432
  %vm3434 = vweird.f32 %v3428
  %vm3435 = vweird.f32 %v3429
  %vm3436 = vmor %vm3434, %vm3435
  %v3437 = vsel %vm3436, %v3429, %v3433
  %v3438 = vand.u32 2147483647, %v3428
  %vm3439 = vcmp.eq.f32.partialorder %v3438, 8.507059e+37
  %v3440 = vand.u32 %v3428, 2147483648
  %v3441 = vor.u32 1.1754944e-38, %v3440
  %v3442 = vsel %vm3439, %v3441, %v3437
  %v3443 = vmul.f32 1.0, %v3442
  %v3444 = vmul.f32 %v3423, %v2790
  %v3445 = vmul.f32 %v3404, %v3424
  %v3446 = vadd.f32 %v3444, %v3445
  %v3447 = vtanh.pop %v3446
  %v3448 = vmul.f32 %v3443, %v3447
  %3450 = vset.pattern.permute.xlu0 0
  %3451 = vperm.xlu0 %3450, %v2796
  %v3452 = vpop.permute.xlu0 %3451
  %v3454 = vmul.f32 %v3452, %v3448
  %s3455 = scalar_lea.vmem [#allocation5], 32
  %3456 = vst [vmem:[%s3455] sm:$0xff] %v3454
  %v3457 = vsub.f32 %v3448, %v2787
  %v3458 = vmul.f32 %v3452, %v3457
  %v3459 = vadd.f32 %v2787, %v3458
  %v3460 = vsub.f32 %v3446, %v2790
  %v3461 = vmul.f32 %v3452, %v3460
  %v3462 = vadd.f32 %v2790, %v3461
  %s3463 = smul.addr %s3130, 8
  %s3464 = scalar_lea.vmem [#allocation2], %s3463
  %v3465 = vld [vmem:[%s3464] sm:$0xff]
  %v3466 = vld [vmem:[%s3464 + $0x8] sm:$0xff]
  %v3467 = vld [vmem:[%s3464 + $0x10] sm:$0xff]
  %v3468 = vld [vmem:[%s3464 + $0x18] sm:$0xff]
  %v3469 = vpack.c.bf16 %v3126, %v3126
  %v3470 = vld [vmem:[%s6] sm:$0xff]
  %v3471 = vld [vmem:[%s6 + $0x8] sm:$0xff]
  %v3472 = vld [vmem:[%s6 + $0x10] sm:$0xff]
  %v3473 = vld [vmem:[%s6 + $0x18] sm:$0xff]
  %v3474 = vld [vmem:[%s6 + $0x20] sm:$0xff]
  %v3475 = vld [vmem:[%s6 + $0x28] sm:$0xff]
  %v3476 = vld [vmem:[%s6 + $0x30] sm:$0xff]
  %v3477 = vld [vmem:[%s6 + $0x38] sm:$0xff]
  %v3478 = vld [vmem:[%s6 + $0x40] sm:$0xff]
  %v3479 = vld [vmem:[%s6 + $0x48] sm:$0xff]
  %v3480 = vld [vmem:[%s6 + $0x50] sm:$0xff]
  %v3481 = vld [vmem:[%s6 + $0x58] sm:$0xff]
  %v3482 = vld [vmem:[%s6 + $0x60] sm:$0xff]
  %v3483 = vld [vmem:[%s6 + $0x68] sm:$0xff]
  %v3484 = vld [vmem:[%s6 + $0x70] sm:$0xff]
  %v3485 = vld [vmem:[%s6 + $0x78] sm:$0xff]
  %v3486 = vld [vmem:[%s6 + $0x80] sm:$0xff]
  %v3487 = vld [vmem:[%s6 + $0x88] sm:$0xff]
  %v3488 = vld [vmem:[%s6 + $0x90] sm:$0xff]
  %v3489 = vld [vmem:[%s6 + $0x98] sm:$0xff]
  %v3490 = vld [vmem:[%s6 + $0xa0] sm:$0xff]
  %v3491 = vld [vmem:[%s6 + $0xa8] sm:$0xff]
  %v3492 = vld [vmem:[%s6 + $0xb0] sm:$0xff]
  %v3493 = vld [vmem:[%s6 + $0xb8] sm:$0xff]
  %v3494 = vld [vmem:[%s6 + $0xc0] sm:$0xff]
  %v3495 = vld [vmem:[%s6 + $0xc8] sm:$0xff]
  %v3496 = vld [vmem:[%s6 + $0xd0] sm:$0xff]
  %v3497 = vld [vmem:[%s6 + $0xd8] sm:$0xff]
  %v3498 = vld [vmem:[%s6 + $0xe0] sm:$0xff]
  %v3499 = vld [vmem:[%s6 + $0xe8] sm:$0xff]
  %v3500 = vld [vmem:[%s6 + $0xf0] sm:$0xff]
  %v3501 = vld [vmem:[%s6 + $0xf8] sm:$0xff]
  %v3534 = vunpack.c.l.b16 %v3470
  %v3535 = vunpack.c.h.b16 %v3470
  %v3536 = vunpack.c.l.b16 %v3471
  %v3537 = vunpack.c.h.b16 %v3471
  %v3538 = vunpack.c.l.b16 %v3472
  %v3539 = vunpack.c.h.b16 %v3472
  %v3540 = vunpack.c.l.b16 %v3473
  %v3541 = vunpack.c.h.b16 %v3473
  %v3542 = vunpack.c.l.b16 %v3474
  %v3543 = vunpack.c.h.b16 %v3474
  %v3544 = vunpack.c.l.b16 %v3475
  %v3545 = vunpack.c.h.b16 %v3475
  %v3546 = vunpack.c.l.b16 %v3476
  %v3547 = vunpack.c.h.b16 %v3476
  %v3548 = vunpack.c.l.b16 %v3477
  %v3549 = vunpack.c.h.b16 %v3477
  %v3550 = vunpack.c.l.b16 %v3478
  %v3551 = vunpack.c.h.b16 %v3478
  %v3552 = vunpack.c.l.b16 %v3479
  %v3553 = vunpack.c.h.b16 %v3479
  %v3554 = vunpack.c.l.b16 %v3480
  %v3555 = vunpack.c.h.b16 %v3480
  %v3556 = vunpack.c.l.b16 %v3481
  %v3557 = vunpack.c.h.b16 %v3481
  %v3558 = vunpack.c.l.b16 %v3482
  %v3559 = vunpack.c.h.b16 %v3482
  %v3560 = vunpack.c.l.b16 %v3483
  %v3561 = vunpack.c.h.b16 %v3483
  %v3562 = vunpack.c.l.b16 %v3484
  %v3563 = vunpack.c.h.b16 %v3484
  %v3564 = vunpack.c.l.b16 %v3485
  %v3565 = vunpack.c.h.b16 %v3485
  %v3566 = vunpack.c.l.b16 %v3486
  %v3567 = vunpack.c.h.b16 %v3486
  %v3568 = vunpack.c.l.b16 %v3487
  %v3569 = vunpack.c.h.b16 %v3487
  %v3570 = vunpack.c.l.b16 %v3488
  %v3571 = vunpack.c.h.b16 %v3488
  %v3572 = vunpack.c.l.b16 %v3489
  %v3573 = vunpack.c.h.b16 %v3489
  %v3574 = vunpack.c.l.b16 %v3490
  %v3575 = vunpack.c.h.b16 %v3490
  %v3576 = vunpack.c.l.b16 %v3491
  %v3577 = vunpack.c.h.b16 %v3491
  %v3578 = vunpack.c.l.b16 %v3492
  %v3579 = vunpack.c.h.b16 %v3492
  %v3580 = vunpack.c.l.b16 %v3493
  %v3581 = vunpack.c.h.b16 %v3493
  %v3582 = vunpack.c.l.b16 %v3494
  %v3583 = vunpack.c.h.b16 %v3494
  %v3584 = vunpack.c.l.b16 %v3495
  %v3585 = vunpack.c.h.b16 %v3495
  %v3586 = vunpack.c.l.b16 %v3496
  %v3587 = vunpack.c.h.b16 %v3496
  %v3588 = vunpack.c.l.b16 %v3497
  %v3589 = vunpack.c.h.b16 %v3497
  %v3590 = vunpack.c.l.b16 %v3498
  %v3591 = vunpack.c.h.b16 %v3498
  %v3592 = vunpack.c.l.b16 %v3499
  %v3593 = vunpack.c.h.b16 %v3499
  %v3594 = vunpack.c.l.b16 %v3500
  %v3595 = vunpack.c.h.b16 %v3500
  %v3596 = vunpack.c.l.b16 %v3501
  %v3597 = vunpack.c.h.b16 %v3501
  %v3598 = vpack.c.b16 %v3538, %v3534
  %v3599 = vpack.c.b16 %v3539, %v3535
  %v3600 = vpack.c.b16 %v3540, %v3536
  %v3601 = vpack.c.b16 %v3541, %v3537
  %v3602 = vpack.c.b16 %v3546, %v3542
  %v3603 = vpack.c.b16 %v3547, %v3543
  %v3604 = vpack.c.b16 %v3548, %v3544
  %v3605 = vpack.c.b16 %v3549, %v3545
  %v3606 = vpack.c.b16 %v3554, %v3550
  %v3607 = vpack.c.b16 %v3555, %v3551
  %v3608 = vpack.c.b16 %v3556, %v3552
  %v3609 = vpack.c.b16 %v3557, %v3553
  %v3610 = vpack.c.b16 %v3562, %v3558
  %v3611 = vpack.c.b16 %v3563, %v3559
  %v3612 = vpack.c.b16 %v3564, %v3560
  %v3613 = vpack.c.b16 %v3565, %v3561
  %v3614 = vpack.c.b16 %v3570, %v3566
  %v3615 = vpack.c.b16 %v3571, %v3567
  %v3616 = vpack.c.b16 %v3572, %v3568
  %v3617 = vpack.c.b16 %v3573, %v3569
  %v3618 = vpack.c.b16 %v3578, %v3574
  %v3619 = vpack.c.b16 %v3579, %v3575
  %v3620 = vpack.c.b16 %v3580, %v3576
  %v3621 = vpack.c.b16 %v3581, %v3577
  %v3622 = vpack.c.b16 %v3586, %v3582
  %v3623 = vpack.c.b16 %v3587, %v3583
  %v3624 = vpack.c.b16 %v3588, %v3584
  %v3625 = vpack.c.b16 %v3589, %v3585
  %v3626 = vpack.c.b16 %v3594, %v3590
  %v3627 = vpack.c.b16 %v3595, %v3591
  %v3628 = vpack.c.b16 %v3596, %v3592
  %v3629 = vpack.c.b16 %v3597, %v3593
  %3662 = vmatpush.bf16.msra.mxu0 %v3626
  %3663 = vmatpush.bf16.msra.mxu0 %v3622
  %3664 = vmatpush.bf16.msra.mxu0 %v3618
  %3665 = vmatpush.bf16.msra.mxu0 %v3614
  %3666 = vmatpush.bf16.msra.mxu0 %v3610
  %3667 = vmatpush.bf16.msra.mxu0 %v3606
  %3668 = vmatpush.bf16.msra.mxu0 %v3602
  %3669 = vmatpush.bf16.msra.mxu0 %v3598
  %3670 = vmatmul.bf16.gmra.mxu0 %v3469
  %v3671 = vpop.f32.mrf.mxu0
  %v3672 = vadd.f32 0.0, %v3671
  %v3673 = vpop.f32.mrf.mxu0
  %3674 = vdwg.mxu0
  %3675 = vmatpush.bf16.msra.mxu0 %v3627
  %3676 = vmatpush.bf16.msra.mxu0 %v3623
  %3677 = vmatpush.bf16.msra.mxu0 %v3619
  %3678 = vmatpush.bf16.msra.mxu0 %v3615
  %3679 = vmatpush.bf16.msra.mxu0 %v3611
  %3680 = vmatpush.bf16.msra.mxu0 %v3607
  %3681 = vmatpush.bf16.msra.mxu0 %v3603
  %3682 = vmatpush.bf16.msra.mxu0 %v3599
  %3683 = vmatmul.bf16.gmra.mxu0 %v3469
  %v3684 = vpop.f32.mrf.mxu0
  %v3685 = vadd.f32 0.0, %v3684
  %v3686 = vpop.f32.mrf.mxu0
  %3687 = vdwg.mxu0
  %3688 = vmatpush.bf16.msra.mxu0 %v3628
  %3689 = vmatpush.bf16.msra.mxu0 %v3624
  %3690 = vmatpush.bf16.msra.mxu0 %v3620
  %3691 = vmatpush.bf16.msra.mxu0 %v3616
  %3692 = vmatpush.bf16.msra.mxu0 %v3612
  %3693 = vmatpush.bf16.msra.mxu0 %v3608
  %3694 = vmatpush.bf16.msra.mxu0 %v3604
  %3695 = vmatpush.bf16.msra.mxu0 %v3600
  %3696 = vmatmul.bf16.gmra.mxu0 %v3469
  %v3697 = vpop.f32.mrf.mxu0
  %v3698 = vadd.f32 0.0, %v3697
  %v3699 = vpop.f32.mrf.mxu0
  %3700 = vdwg.mxu0
  %3701 = vmatpush.bf16.msra.mxu0 %v3629
  %3702 = vmatpush.bf16.msra.mxu0 %v3625
  %3703 = vmatpush.bf16.msra.mxu0 %v3621
  %3704 = vmatpush.bf16.msra.mxu0 %v3617
  %3705 = vmatpush.bf16.msra.mxu0 %v3613
  %3706 = vmatpush.bf16.msra.mxu0 %v3609
  %3707 = vmatpush.bf16.msra.mxu0 %v3605
  %3708 = vmatpush.bf16.msra.mxu0 %v3601
  %3709 = vmatmul.bf16.gmra.mxu0 %v3469
  %v3710 = vpop.f32.mrf.mxu0
  %v3711 = vadd.f32 0.0, %v3710
  %v3712 = vpop.f32.mrf.mxu0
  %3713 = vdwg.mxu0
  %v3714 = vadd.f32 %v3465, %v3672
  %v3715 = vadd.f32 %v3466, %v3685
  %v3716 = vadd.f32 %v3467, %v3698
  %v3717 = vadd.f32 %v3468, %v3711
  %v3718 = vxor.u32 %v3714, 2147483648
  %v3719 = vmul.f32 %v3718, 1.442695
  %v3720 = vpow.pop %v3719
  %v3721 = vadd.f32 %v3720, 1.0
  %v3722 = vrcp.pop %v3721
  %v3723 = vmul.f32 %v3721, %v3722
  %v3724 = vsub.f32 1.0, %v3723
  %v3725 = vmul.f32 %v3722, %v3724
  %v3726 = vadd.f32 %v3722, %v3725
  %vm3727 = vweird.f32 %v3721
  %vm3728 = vweird.f32 %v3722
  %vm3729 = vmor %vm3727, %vm3728
  %v3730 = vsel %vm3729, %v3722, %v3726
  %v3731 = vand.u32 2147483647, %v3721
  %vm3732 = vcmp.eq.f32.partialorder %v3731, 8.507059e+37
  %v3733 = vand.u32 %v3721, 2147483648
  %v3734 = vor.u32 1.1754944e-38, %v3733
  %v3735 = vsel %vm3732, %v3734, %v3730
  %v3736 = vmul.f32 1.0, %v3735
  %v3737 = vxor.u32 %v3715, 2147483648
  %v3738 = vmul.f32 %v3737, 1.442695
  %v3739 = vpow.pop %v3738
  %v3740 = vadd.f32 %v3739, 1.0
  %v3741 = vrcp.pop %v3740
  %v3742 = vmul.f32 %v3740, %v3741
  %v3743 = vsub.f32 1.0, %v3742
  %v3744 = vmul.f32 %v3741, %v3743
  %v3745 = vadd.f32 %v3741, %v3744
  %vm3746 = vweird.f32 %v3740
  %vm3747 = vweird.f32 %v3741
  %vm3748 = vmor %vm3746, %vm3747
  %v3749 = vsel %vm3748, %v3741, %v3745
  %v3750 = vand.u32 2147483647, %v3740
  %vm3751 = vcmp.eq.f32.partialorder %v3750, 8.507059e+37
  %v3752 = vand.u32 %v3740, 2147483648
  %v3753 = vor.u32 1.1754944e-38, %v3752
  %v3754 = vsel %vm3751, %v3753, %v3749
  %v3755 = vmul.f32 1.0, %v3754
  %v3756 = vtanh.pop %v3716
  %v3757 = vxor.u32 %v3717, 2147483648
  %v3758 = vmul.f32 %v3757, 1.442695
  %v3759 = vpow.pop %v3758
  %v3760 = vadd.f32 %v3759, 1.0
  %v3761 = vrcp.pop %v3760
  %v3762 = vmul.f32 %v3760, %v3761
  %v3763 = vsub.f32 1.0, %v3762
  %v3764 = vmul.f32 %v3761, %v3763
  %v3765 = vadd.f32 %v3761, %v3764
  %vm3766 = vweird.f32 %v3760
  %vm3767 = vweird.f32 %v3761
  %vm3768 = vmor %vm3766, %vm3767
  %v3769 = vsel %vm3768, %v3761, %v3765
  %v3770 = vand.u32 2147483647, %v3760
  %vm3771 = vcmp.eq.f32.partialorder %v3770, 8.507059e+37
  %v3772 = vand.u32 %v3760, 2147483648
  %v3773 = vor.u32 1.1754944e-38, %v3772
  %v3774 = vsel %vm3771, %v3773, %v3769
  %v3775 = vmul.f32 1.0, %v3774
  %v3776 = vmul.f32 %v3755, %v3129
  %v3777 = vmul.f32 %v3736, %v3756
  %v3778 = vadd.f32 %v3776, %v3777
  %v3779 = vtanh.pop %v3778
  %v3780 = vmul.f32 %v3775, %v3779
  %v3781 = vmul.f32 %v3452, %v3780
  %s3782 = scalar_lea.vmem [#allocation4], 32
  %3783 = vst [vmem:[%s3782] sm:$0xff] %v3781
  %v3784 = vsub.f32 %v3780, %v3126
  %v3785 = vmul.f32 %v3452, %v3784
  %v3786 = vadd.f32 %v3126, %v3785
  %v3787 = vsub.f32 %v3778, %v3129
  %v3788 = vmul.f32 %v3452, %v3787
  %v3789 = vadd.f32 %v3129, %v3788
  %s3790 = smul.addr %s2797, 8
  %s3791 = scalar_lea.vmem [#allocation3], %s3790
  %v3792 = vld [vmem:[%s3791] sm:$0xff]
  %v3793 = vld [vmem:[%s3791 + $0x8] sm:$0xff]
  %v3794 = vld [vmem:[%s3791 + $0x10] sm:$0xff]
  %v3795 = vld [vmem:[%s3791 + $0x18] sm:$0xff]
  %v3796 = vpack.c.bf16 %v3459, %v3459
  %v3797 = vld [vmem:[%s7] sm:$0xff]
  %v3798 = vld [vmem:[%s7 + $0x8] sm:$0xff]
  %v3799 = vld [vmem:[%s7 + $0x10] sm:$0xff]
  %v3800 = vld [vmem:[%s7 + $0x18] sm:$0xff]
  %v3801 = vld [vmem:[%s7 + $0x20] sm:$0xff]
  %v3802 = vld [vmem:[%s7 + $0x28] sm:$0xff]
  %v3803 = vld [vmem:[%s7 + $0x30] sm:$0xff]
  %v3804 = vld [vmem:[%s7 + $0x38] sm:$0xff]
  %v3805 = vld [vmem:[%s7 + $0x40] sm:$0xff]
  %v3806 = vld [vmem:[%s7 + $0x48] sm:$0xff]
  %v3807 = vld [vmem:[%s7 + $0x50] sm:$0xff]
  %v3808 = vld [vmem:[%s7 + $0x58] sm:$0xff]
  %v3809 = vld [vmem:[%s7 + $0x60] sm:$0xff]
  %v3810 = vld [vmem:[%s7 + $0x68] sm:$0xff]
  %v3811 = vld [vmem:[%s7 + $0x70] sm:$0xff]
  %v3812 = vld [vmem:[%s7 + $0x78] sm:$0xff]
  %v3813 = vld [vmem:[%s7 + $0x80] sm:$0xff]
  %v3814 = vld [vmem:[%s7 + $0x88] sm:$0xff]
  %v3815 = vld [vmem:[%s7 + $0x90] sm:$0xff]
  %v3816 = vld [vmem:[%s7 + $0x98] sm:$0xff]
  %v3817 = vld [vmem:[%s7 + $0xa0] sm:$0xff]
  %v3818 = vld [vmem:[%s7 + $0xa8] sm:$0xff]
  %v3819 = vld [vmem:[%s7 + $0xb0] sm:$0xff]
  %v3820 = vld [vmem:[%s7 + $0xb8] sm:$0xff]
  %v3821 = vld [vmem:[%s7 + $0xc0] sm:$0xff]
  %v3822 = vld [vmem:[%s7 + $0xc8] sm:$0xff]
  %v3823 = vld [vmem:[%s7 + $0xd0] sm:$0xff]
  %v3824 = vld [vmem:[%s7 + $0xd8] sm:$0xff]
  %v3825 = vld [vmem:[%s7 + $0xe0] sm:$0xff]
  %v3826 = vld [vmem:[%s7 + $0xe8] sm:$0xff]
  %v3827 = vld [vmem:[%s7 + $0xf0] sm:$0xff]
  %v3828 = vld [vmem:[%s7 + $0xf8] sm:$0xff]
  %v3861 = vunpack.c.l.b16 %v3797
  %v3862 = vunpack.c.h.b16 %v3797
  %v3863 = vunpack.c.l.b16 %v3798
  %v3864 = vunpack.c.h.b16 %v3798
  %v3865 = vunpack.c.l.b16 %v3799
  %v3866 = vunpack.c.h.b16 %v3799
  %v3867 = vunpack.c.l.b16 %v3800
  %v3868 = vunpack.c.h.b16 %v3800
  %v3869 = vunpack.c.l.b16 %v3801
  %v3870 = vunpack.c.h.b16 %v3801
  %v3871 = vunpack.c.l.b16 %v3802
  %v3872 = vunpack.c.h.b16 %v3802
  %v3873 = vunpack.c.l.b16 %v3803
  %v3874 = vunpack.c.h.b16 %v3803
  %v3875 = vunpack.c.l.b16 %v3804
  %v3876 = vunpack.c.h.b16 %v3804
  %v3877 = vunpack.c.l.b16 %v3805
  %v3878 = vunpack.c.h.b16 %v3805
  %v3879 = vunpack.c.l.b16 %v3806
  %v3880 = vunpack.c.h.b16 %v3806
  %v3881 = vunpack.c.l.b16 %v3807
  %v3882 = vunpack.c.h.b16 %v3807
  %v3883 = vunpack.c.l.b16 %v3808
  %v3884 = vunpack.c.h.b16 %v3808
  %v3885 = vunpack.c.l.b16 %v3809
  %v3886 = vunpack.c.h.b16 %v3809
  %v3887 = vunpack.c.l.b16 %v3810
  %v3888 = vunpack.c.h.b16 %v3810
  %v3889 = vunpack.c.l.b16 %v3811
  %v3890 = vunpack.c.h.b16 %v3811
  %v3891 = vunpack.c.l.b16 %v3812
  %v3892 = vunpack.c.h.b16 %v3812
  %v3893 = vunpack.c.l.b16 %v3813
  %v3894 = vunpack.c.h.b16 %v3813
  %v3895 = vunpack.c.l.b16 %v3814
  %v3896 = vunpack.c.h.b16 %v3814
  %v3897 = vunpack.c.l.b16 %v3815
  %v3898 = vunpack.c.h.b16 %v3815
  %v3899 = vunpack.c.l.b16 %v3816
  %v3900 = vunpack.c.h.b16 %v3816
  %v3901 = vunpack.c.l.b16 %v3817
  %v3902 = vunpack.c.h.b16 %v3817
  %v3903 = vunpack.c.l.b16 %v3818
  %v3904 = vunpack.c.h.b16 %v3818
  %v3905 = vunpack.c.l.b16 %v3819
  %v3906 = vunpack.c.h.b16 %v3819
  %v3907 = vunpack.c.l.b16 %v3820
  %v3908 = vunpack.c.h.b16 %v3820
  %v3909 = vunpack.c.l.b16 %v3821
  %v3910 = vunpack.c.h.b16 %v3821
  %v3911 = vunpack.c.l.b16 %v3822
  %v3912 = vunpack.c.h.b16 %v3822
  %v3913 = vunpack.c.l.b16 %v3823
  %v3914 = vunpack.c.h.b16 %v3823
  %v3915 = vunpack.c.l.b16 %v3824
  %v3916 = vunpack.c.h.b16 %v3824
  %v3917 = vunpack.c.l.b16 %v3825
  %v3918 = vunpack.c.h.b16 %v3825
  %v3919 = vunpack.c.l.b16 %v3826
  %v3920 = vunpack.c.h.b16 %v3826
  %v3921 = vunpack.c.l.b16 %v3827
  %v3922 = vunpack.c.h.b16 %v3827
  %v3923 = vunpack.c.l.b16 %v3828
  %v3924 = vunpack.c.h.b16 %v3828
  %v3925 = vpack.c.b16 %v3865, %v3861
  %v3926 = vpack.c.b16 %v3866, %v3862
  %v3927 = vpack.c.b16 %v3867, %v3863
  %v3928 = vpack.c.b16 %v3868, %v3864
  %v3929 = vpack.c.b16 %v3873, %v3869
  %v3930 = vpack.c.b16 %v3874, %v3870
  %v3931 = vpack.c.b16 %v3875, %v3871
  %v3932 = vpack.c.b16 %v3876, %v3872
  %v3933 = vpack.c.b16 %v3881, %v3877
  %v3934 = vpack.c.b16 %v3882, %v3878
  %v3935 = vpack.c.b16 %v3883, %v3879
  %v3936 = vpack.c.b16 %v3884, %v3880
  %v3937 = vpack.c.b16 %v3889, %v3885
  %v3938 = vpack.c.b16 %v3890, %v3886
  %v3939 = vpack.c.b16 %v3891, %v3887
  %v3940 = vpack.c.b16 %v3892, %v3888
  %v3941 = vpack.c.b16 %v3897, %v3893
  %v3942 = vpack.c.b16 %v3898, %v3894
  %v3943 = vpack.c.b16 %v3899, %v3895
  %v3944 = vpack.c.b16 %v3900, %v3896
  %v3945 = vpack.c.b16 %v3905, %v3901
  %v3946 = vpack.c.b16 %v3906, %v3902
  %v3947 = vpack.c.b16 %v3907, %v3903
  %v3948 = vpack.c.b16 %v3908, %v3904
  %v3949 = vpack.c.b16 %v3913, %v3909
  %v3950 = vpack.c.b16 %v3914, %v3910
  %v3951 = vpack.c.b16 %v3915, %v3911
  %v3952 = vpack.c.b16 %v3916, %v3912
  %v3953 = vpack.c.b16 %v3921, %v3917
  %v3954 = vpack.c.b16 %v3922, %v3918
  %v3955 = vpack.c.b16 %v3923, %v3919
  %v3956 = vpack.c.b16 %v3924, %v3920
  %3989 = vmatpush.bf16.msra.mxu0 %v3953
  %3990 = vmatpush.bf16.msra.mxu0 %v3949
  %3991 = vmatpush.bf16.msra.mxu0 %v3945
  %3992 = vmatpush.bf16.msra.mxu0 %v3941
  %3993 = vmatpush.bf16.msra.mxu0 %v3937
  %3994 = vmatpush.bf16.msra.mxu0 %v3933
  %3995 = vmatpush.bf16.msra.mxu0 %v3929
  %3996 = vmatpush.bf16.msra.mxu0 %v3925
  %3997 = vmatmul.bf16.gmra.mxu0 %v3796
  %v3998 = vpop.f32.mrf.mxu0
  %v3999 = vadd.f32 0.0, %v3998
  %v4000 = vpop.f32.mrf.mxu0
  %4001 = vdwg.mxu0
  %4002 = vmatpush.bf16.msra.mxu0 %v3954
  %4003 = vmatpush.bf16.msra.mxu0 %v3950
  %4004 = vmatpush.bf16.msra.mxu0 %v3946
  %4005 = vmatpush.bf16.msra.mxu0 %v3942
  %4006 = vmatpush.bf16.msra.mxu0 %v3938
  %4007 = vmatpush.bf16.msra.mxu0 %v3934
  %4008 = vmatpush.bf16.msra.mxu0 %v3930
  %4009 = vmatpush.bf16.msra.mxu0 %v3926
  %4010 = vmatmul.bf16.gmra.mxu0 %v3796
  %v4011 = vpop.f32.mrf.mxu0
  %v4012 = vadd.f32 0.0, %v4011
  %v4013 = vpop.f32.mrf.mxu0
  %4014 = vdwg.mxu0
  %4015 = vmatpush.bf16.msra.mxu0 %v3955
  %4016 = vmatpush.bf16.msra.mxu0 %v3951
  %4017 = vmatpush.bf16.msra.mxu0 %v3947
  %4018 = vmatpush.bf16.msra.mxu0 %v3943
  %4019 = vmatpush.bf16.msra.mxu0 %v3939
  %4020 = vmatpush.bf16.msra.mxu0 %v3935
  %4021 = vmatpush.bf16.msra.mxu0 %v3931
  %4022 = vmatpush.bf16.msra.mxu0 %v3927
  %4023 = vmatmul.bf16.gmra.mxu0 %v3796
  %v4024 = vpop.f32.mrf.mxu0
  %v4025 = vadd.f32 0.0, %v4024
  %v4026 = vpop.f32.mrf.mxu0
  %4027 = vdwg.mxu0
  %4028 = vmatpush.bf16.msra.mxu0 %v3956
  %4029 = vmatpush.bf16.msra.mxu0 %v3952
  %4030 = vmatpush.bf16.msra.mxu0 %v3948
  %4031 = vmatpush.bf16.msra.mxu0 %v3944
  %4032 = vmatpush.bf16.msra.mxu0 %v3940
  %4033 = vmatpush.bf16.msra.mxu0 %v3936
  %4034 = vmatpush.bf16.msra.mxu0 %v3932
  %4035 = vmatpush.bf16.msra.mxu0 %v3928
  %4036 = vmatmul.bf16.gmra.mxu0 %v3796
  %v4037 = vpop.f32.mrf.mxu0
  %v4038 = vadd.f32 0.0, %v4037
  %v4039 = vpop.f32.mrf.mxu0
  %4040 = vdwg.mxu0
  %v4041 = vadd.f32 %v3792, %v3999
  %v4042 = vadd.f32 %v3793, %v4012
  %v4043 = vadd.f32 %v3794, %v4025
  %v4044 = vadd.f32 %v3795, %v4038
  %v4045 = vxor.u32 %v4041, 2147483648
  %v4046 = vmul.f32 %v4045, 1.442695
  %v4047 = vpow.pop %v4046
  %v4048 = vadd.f32 %v4047, 1.0
  %v4049 = vrcp.pop %v4048
  %v4050 = vmul.f32 %v4048, %v4049
  %v4051 = vsub.f32 1.0, %v4050
  %v4052 = vmul.f32 %v4049, %v4051
  %v4053 = vadd.f32 %v4049, %v4052
  %vm4054 = vweird.f32 %v4048
  %vm4055 = vweird.f32 %v4049
  %vm4056 = vmor %vm4054, %vm4055
  %v4057 = vsel %vm4056, %v4049, %v4053
  %v4058 = vand.u32 2147483647, %v4048
  %vm4059 = vcmp.eq.f32.partialorder %v4058, 8.507059e+37
  %v4060 = vand.u32 %v4048, 2147483648
  %v4061 = vor.u32 1.1754944e-38, %v4060
  %v4062 = vsel %vm4059, %v4061, %v4057
  %v4063 = vmul.f32 1.0, %v4062
  %v4064 = vxor.u32 %v4042, 2147483648
  %v4065 = vmul.f32 %v4064, 1.442695
  %v4066 = vpow.pop %v4065
  %v4067 = vadd.f32 %v4066, 1.0
  %v4068 = vrcp.pop %v4067
  %v4069 = vmul.f32 %v4067, %v4068
  %v4070 = vsub.f32 1.0, %v4069
  %v4071 = vmul.f32 %v4068, %v4070
  %v4072 = vadd.f32 %v4068, %v4071
  %vm4073 = vweird.f32 %v4067
  %vm4074 = vweird.f32 %v4068
  %vm4075 = vmor %vm4073, %vm4074
  %v4076 = vsel %vm4075, %v4068, %v4072
  %v4077 = vand.u32 2147483647, %v4067
  %vm4078 = vcmp.eq.f32.partialorder %v4077, 8.507059e+37
  %v4079 = vand.u32 %v4067, 2147483648
  %v4080 = vor.u32 1.1754944e-38, %v4079
  %v4081 = vsel %vm4078, %v4080, %v4076
  %v4082 = vmul.f32 1.0, %v4081
  %v4083 = vtanh.pop %v4043
  %v4084 = vxor.u32 %v4044, 2147483648
  %v4085 = vmul.f32 %v4084, 1.442695
  %v4086 = vpow.pop %v4085
  %v4087 = vadd.f32 %v4086, 1.0
  %v4088 = vrcp.pop %v4087
  %v4089 = vmul.f32 %v4087, %v4088
  %v4090 = vsub.f32 1.0, %v4089
  %v4091 = vmul.f32 %v4088, %v4090
  %v4092 = vadd.f32 %v4088, %v4091
  %vm4093 = vweird.f32 %v4087
  %vm4094 = vweird.f32 %v4088
  %vm4095 = vmor %vm4093, %vm4094
  %v4096 = vsel %vm4095, %v4088, %v4092
  %v4097 = vand.u32 2147483647, %v4087
  %vm4098 = vcmp.eq.f32.partialorder %v4097, 8.507059e+37
  %v4099 = vand.u32 %v4087, 2147483648
  %v4100 = vor.u32 1.1754944e-38, %v4099
  %v4101 = vsel %vm4098, %v4100, %v4096
  %v4102 = vmul.f32 1.0, %v4101
  %v4103 = vmul.f32 %v4082, %v3462
  %v4104 = vmul.f32 %v4063, %v4083
  %v4105 = vadd.f32 %v4103, %v4104
  %v4106 = vtanh.pop %v4105
  %v4107 = vmul.f32 %v4102, %v4106
  %v4108 = vmul.f32 %v3119, %v4107
  %s4109 = scalar_lea.vmem [#allocation5], 24
  %4110 = vst [vmem:[%s4109] sm:$0xff] %v4108
  %v4111 = vsub.f32 %v4107, %v3459
  %v4112 = vmul.f32 %v3119, %v4111
  %v4113 = vadd.f32 %v3459, %v4112
  %v4114 = vsub.f32 %v4105, %v3462
  %v4115 = vmul.f32 %v3119, %v4114
  %v4116 = vadd.f32 %v3462, %v4115
  %s4117 = smul.addr %s2458, 8
  %s4118 = scalar_lea.vmem [#allocation2], %s4117
  %v4119 = vld [vmem:[%s4118] sm:$0xff]
  %v4120 = vld [vmem:[%s4118 + $0x8] sm:$0xff]
  %v4121 = vld [vmem:[%s4118 + $0x10] sm:$0xff]
  %v4122 = vld [vmem:[%s4118 + $0x18] sm:$0xff]
  %v4123 = vpack.c.bf16 %v3786, %v3786
  %v4124 = vld [vmem:[%s6] sm:$0xff]
  %v4125 = vld [vmem:[%s6 + $0x8] sm:$0xff]
  %v4126 = vld [vmem:[%s6 + $0x10] sm:$0xff]
  %v4127 = vld [vmem:[%s6 + $0x18] sm:$0xff]
  %v4128 = vld [vmem:[%s6 + $0x20] sm:$0xff]
  %v4129 = vld [vmem:[%s6 + $0x28] sm:$0xff]
  %v4130 = vld [vmem:[%s6 + $0x30] sm:$0xff]
  %v4131 = vld [vmem:[%s6 + $0x38] sm:$0xff]
  %v4132 = vld [vmem:[%s6 + $0x40] sm:$0xff]
  %v4133 = vld [vmem:[%s6 + $0x48] sm:$0xff]
  %v4134 = vld [vmem:[%s6 + $0x50] sm:$0xff]
  %v4135 = vld [vmem:[%s6 + $0x58] sm:$0xff]
  %v4136 = vld [vmem:[%s6 + $0x60] sm:$0xff]
  %v4137 = vld [vmem:[%s6 + $0x68] sm:$0xff]
  %v4138 = vld [vmem:[%s6 + $0x70] sm:$0xff]
  %v4139 = vld [vmem:[%s6 + $0x78] sm:$0xff]
  %v4140 = vld [vmem:[%s6 + $0x80] sm:$0xff]
  %v4141 = vld [vmem:[%s6 + $0x88] sm:$0xff]
  %v4142 = vld [vmem:[%s6 + $0x90] sm:$0xff]
  %v4143 = vld [vmem:[%s6 + $0x98] sm:$0xff]
  %v4144 = vld [vmem:[%s6 + $0xa0] sm:$0xff]
  %v4145 = vld [vmem:[%s6 + $0xa8] sm:$0xff]
  %v4146 = vld [vmem:[%s6 + $0xb0] sm:$0xff]
  %v4147 = vld [vmem:[%s6 + $0xb8] sm:$0xff]
  %v4148 = vld [vmem:[%s6 + $0xc0] sm:$0xff]
  %v4149 = vld [vmem:[%s6 + $0xc8] sm:$0xff]
  %v4150 = vld [vmem:[%s6 + $0xd0] sm:$0xff]
  %v4151 = vld [vmem:[%s6 + $0xd8] sm:$0xff]
  %v4152 = vld [vmem:[%s6 + $0xe0] sm:$0xff]
  %v4153 = vld [vmem:[%s6 + $0xe8] sm:$0xff]
  %v4154 = vld [vmem:[%s6 + $0xf0] sm:$0xff]
  %v4155 = vld [vmem:[%s6 + $0xf8] sm:$0xff]
  %v4188 = vunpack.c.l.b16 %v4124
  %v4189 = vunpack.c.h.b16 %v4124
  %v4190 = vunpack.c.l.b16 %v4125
  %v4191 = vunpack.c.h.b16 %v4125
  %v4192 = vunpack.c.l.b16 %v4126
  %v4193 = vunpack.c.h.b16 %v4126
  %v4194 = vunpack.c.l.b16 %v4127
  %v4195 = vunpack.c.h.b16 %v4127
  %v4196 = vunpack.c.l.b16 %v4128
  %v4197 = vunpack.c.h.b16 %v4128
  %v4198 = vunpack.c.l.b16 %v4129
  %v4199 = vunpack.c.h.b16 %v4129
  %v4200 = vunpack.c.l.b16 %v4130
  %v4201 = vunpack.c.h.b16 %v4130
  %v4202 = vunpack.c.l.b16 %v4131
  %v4203 = vunpack.c.h.b16 %v4131
  %v4204 = vunpack.c.l.b16 %v4132
  %v4205 = vunpack.c.h.b16 %v4132
  %v4206 = vunpack.c.l.b16 %v4133
  %v4207 = vunpack.c.h.b16 %v4133
  %v4208 = vunpack.c.l.b16 %v4134
  %v4209 = vunpack.c.h.b16 %v4134
  %v4210 = vunpack.c.l.b16 %v4135
  %v4211 = vunpack.c.h.b16 %v4135
  %v4212 = vunpack.c.l.b16 %v4136
  %v4213 = vunpack.c.h.b16 %v4136
  %v4214 = vunpack.c.l.b16 %v4137
  %v4215 = vunpack.c.h.b16 %v4137
  %v4216 = vunpack.c.l.b16 %v4138
  %v4217 = vunpack.c.h.b16 %v4138
  %v4218 = vunpack.c.l.b16 %v4139
  %v4219 = vunpack.c.h.b16 %v4139
  %v4220 = vunpack.c.l.b16 %v4140
  %v4221 = vunpack.c.h.b16 %v4140
  %v4222 = vunpack.c.l.b16 %v4141
  %v4223 = vunpack.c.h.b16 %v4141
  %v4224 = vunpack.c.l.b16 %v4142
  %v4225 = vunpack.c.h.b16 %v4142
  %v4226 = vunpack.c.l.b16 %v4143
  %v4227 = vunpack.c.h.b16 %v4143
  %v4228 = vunpack.c.l.b16 %v4144
  %v4229 = vunpack.c.h.b16 %v4144
  %v4230 = vunpack.c.l.b16 %v4145
  %v4231 = vunpack.c.h.b16 %v4145
  %v4232 = vunpack.c.l.b16 %v4146
  %v4233 = vunpack.c.h.b16 %v4146
  %v4234 = vunpack.c.l.b16 %v4147
  %v4235 = vunpack.c.h.b16 %v4147
  %v4236 = vunpack.c.l.b16 %v4148
  %v4237 = vunpack.c.h.b16 %v4148
  %v4238 = vunpack.c.l.b16 %v4149
  %v4239 = vunpack.c.h.b16 %v4149
  %v4240 = vunpack.c.l.b16 %v4150
  %v4241 = vunpack.c.h.b16 %v4150
  %v4242 = vunpack.c.l.b16 %v4151
  %v4243 = vunpack.c.h.b16 %v4151
  %v4244 = vunpack.c.l.b16 %v4152
  %v4245 = vunpack.c.h.b16 %v4152
  %v4246 = vunpack.c.l.b16 %v4153
  %v4247 = vunpack.c.h.b16 %v4153
  %v4248 = vunpack.c.l.b16 %v4154
  %v4249 = vunpack.c.h.b16 %v4154
  %v4250 = vunpack.c.l.b16 %v4155
  %v4251 = vunpack.c.h.b16 %v4155
  %v4252 = vpack.c.b16 %v4192, %v4188
  %v4253 = vpack.c.b16 %v4193, %v4189
  %v4254 = vpack.c.b16 %v4194, %v4190
  %v4255 = vpack.c.b16 %v4195, %v4191
  %v4256 = vpack.c.b16 %v4200, %v4196
  %v4257 = vpack.c.b16 %v4201, %v4197
  %v4258 = vpack.c.b16 %v4202, %v4198
  %v4259 = vpack.c.b16 %v4203, %v4199
  %v4260 = vpack.c.b16 %v4208, %v4204
  %v4261 = vpack.c.b16 %v4209, %v4205
  %v4262 = vpack.c.b16 %v4210, %v4206
  %v4263 = vpack.c.b16 %v4211, %v4207
  %v4264 = vpack.c.b16 %v4216, %v4212
  %v4265 = vpack.c.b16 %v4217, %v4213
  %v4266 = vpack.c.b16 %v4218, %v4214
  %v4267 = vpack.c.b16 %v4219, %v4215
  %v4268 = vpack.c.b16 %v4224, %v4220
  %v4269 = vpack.c.b16 %v4225, %v4221
  %v4270 = vpack.c.b16 %v4226, %v4222
  %v4271 = vpack.c.b16 %v4227, %v4223
  %v4272 = vpack.c.b16 %v4232, %v4228
  %v4273 = vpack.c.b16 %v4233, %v4229
  %v4274 = vpack.c.b16 %v4234, %v4230
  %v4275 = vpack.c.b16 %v4235, %v4231
  %v4276 = vpack.c.b16 %v4240, %v4236
  %v4277 = vpack.c.b16 %v4241, %v4237
  %v4278 = vpack.c.b16 %v4242, %v4238
  %v4279 = vpack.c.b16 %v4243, %v4239
  %v4280 = vpack.c.b16 %v4248, %v4244
  %v4281 = vpack.c.b16 %v4249, %v4245
  %v4282 = vpack.c.b16 %v4250, %v4246
  %v4283 = vpack.c.b16 %v4251, %v4247
  %4316 = vmatpush.bf16.msra.mxu0 %v4280
  %4317 = vmatpush.bf16.msra.mxu0 %v4276
  %4318 = vmatpush.bf16.msra.mxu0 %v4272
  %4319 = vmatpush.bf16.msra.mxu0 %v4268
  %4320 = vmatpush.bf16.msra.mxu0 %v4264
  %4321 = vmatpush.bf16.msra.mxu0 %v4260
  %4322 = vmatpush.bf16.msra.mxu0 %v4256
  %4323 = vmatpush.bf16.msra.mxu0 %v4252
  %4324 = vmatmul.bf16.gmra.mxu0 %v4123
  %v4325 = vpop.f32.mrf.mxu0
  %v4326 = vadd.f32 0.0, %v4325
  %v4327 = vpop.f32.mrf.mxu0
  %4328 = vdwg.mxu0
  %4329 = vmatpush.bf16.msra.mxu0 %v4281
  %4330 = vmatpush.bf16.msra.mxu0 %v4277
  %4331 = vmatpush.bf16.msra.mxu0 %v4273
  %4332 = vmatpush.bf16.msra.mxu0 %v4269
  %4333 = vmatpush.bf16.msra.mxu0 %v4265
  %4334 = vmatpush.bf16.msra.mxu0 %v4261
  %4335 = vmatpush.bf16.msra.mxu0 %v4257
  %4336 = vmatpush.bf16.msra.mxu0 %v4253
  %4337 = vmatmul.bf16.gmra.mxu0 %v4123
  %v4338 = vpop.f32.mrf.mxu0
  %v4339 = vadd.f32 0.0, %v4338
  %v4340 = vpop.f32.mrf.mxu0
  %4341 = vdwg.mxu0
  %4342 = vmatpush.bf16.msra.mxu0 %v4282
  %4343 = vmatpush.bf16.msra.mxu0 %v4278
  %4344 = vmatpush.bf16.msra.mxu0 %v4274
  %4345 = vmatpush.bf16.msra.mxu0 %v4270
  %4346 = vmatpush.bf16.msra.mxu0 %v4266
  %4347 = vmatpush.bf16.msra.mxu0 %v4262
  %4348 = vmatpush.bf16.msra.mxu0 %v4258
  %4349 = vmatpush.bf16.msra.mxu0 %v4254
  %4350 = vmatmul.bf16.gmra.mxu0 %v4123
  %v4351 = vpop.f32.mrf.mxu0
  %v4352 = vadd.f32 0.0, %v4351
  %v4353 = vpop.f32.mrf.mxu0
  %4354 = vdwg.mxu0
  %4355 = vmatpush.bf16.msra.mxu0 %v4283
  %4356 = vmatpush.bf16.msra.mxu0 %v4279
  %4357 = vmatpush.bf16.msra.mxu0 %v4275
  %4358 = vmatpush.bf16.msra.mxu0 %v4271
  %4359 = vmatpush.bf16.msra.mxu0 %v4267
  %4360 = vmatpush.bf16.msra.mxu0 %v4263
  %4361 = vmatpush.bf16.msra.mxu0 %v4259
  %4362 = vmatpush.bf16.msra.mxu0 %v4255
  %4363 = vmatmul.bf16.gmra.mxu0 %v4123
  %v4364 = vpop.f32.mrf.mxu0
  %v4365 = vadd.f32 0.0, %v4364
  %v4366 = vpop.f32.mrf.mxu0
  %4367 = vdwg.mxu0
  %v4368 = vadd.f32 %v4119, %v4326
  %v4369 = vadd.f32 %v4120, %v4339
  %v4370 = vadd.f32 %v4121, %v4352
  %v4371 = vadd.f32 %v4122, %v4365
  %v4372 = vxor.u32 %v4368, 2147483648
  %v4373 = vmul.f32 %v4372, 1.442695
  %v4374 = vpow.pop %v4373
  %v4375 = vadd.f32 %v4374, 1.0
  %v4376 = vrcp.pop %v4375
  %v4377 = vmul.f32 %v4375, %v4376
  %v4378 = vsub.f32 1.0, %v4377
  %v4379 = vmul.f32 %v4376, %v4378
  %v4380 = vadd.f32 %v4376, %v4379
  %vm4381 = vweird.f32 %v4375
  %vm4382 = vweird.f32 %v4376
  %vm4383 = vmor %vm4381, %vm4382
  %v4384 = vsel %vm4383, %v4376, %v4380
  %v4385 = vand.u32 2147483647, %v4375
  %vm4386 = vcmp.eq.f32.partialorder %v4385, 8.507059e+37
  %v4387 = vand.u32 %v4375, 2147483648
  %v4388 = vor.u32 1.1754944e-38, %v4387
  %v4389 = vsel %vm4386, %v4388, %v4384
  %v4390 = vmul.f32 1.0, %v4389
  %v4391 = vxor.u32 %v4369, 2147483648
  %v4392 = vmul.f32 %v4391, 1.442695
  %v4393 = vpow.pop %v4392
  %v4394 = vadd.f32 %v4393, 1.0
  %v4395 = vrcp.pop %v4394
  %v4396 = vmul.f32 %v4394, %v4395
  %v4397 = vsub.f32 1.0, %v4396
  %v4398 = vmul.f32 %v4395, %v4397
  %v4399 = vadd.f32 %v4395, %v4398
  %vm4400 = vweird.f32 %v4394
  %vm4401 = vweird.f32 %v4395
  %vm4402 = vmor %vm4400, %vm4401
  %v4403 = vsel %vm4402, %v4395, %v4399
  %v4404 = vand.u32 2147483647, %v4394
  %vm4405 = vcmp.eq.f32.partialorder %v4404, 8.507059e+37
  %v4406 = vand.u32 %v4394, 2147483648
  %v4407 = vor.u32 1.1754944e-38, %v4406
  %v4408 = vsel %vm4405, %v4407, %v4403
  %v4409 = vmul.f32 1.0, %v4408
  %v4410 = vtanh.pop %v4370
  %v4411 = vxor.u32 %v4371, 2147483648
  %v4412 = vmul.f32 %v4411, 1.442695
  %v4413 = vpow.pop %v4412
  %v4414 = vadd.f32 %v4413, 1.0
  %v4415 = vrcp.pop %v4414
  %v4416 = vmul.f32 %v4414, %v4415
  %v4417 = vsub.f32 1.0, %v4416
  %v4418 = vmul.f32 %v4415, %v4417
  %v4419 = vadd.f32 %v4415, %v4418
  %vm4420 = vweird.f32 %v4414
  %vm4421 = vweird.f32 %v4415
  %vm4422 = vmor %vm4420, %vm4421
  %v4423 = vsel %vm4422, %v4415, %v4419
  %v4424 = vand.u32 2147483647, %v4414
  %vm4425 = vcmp.eq.f32.partialorder %v4424, 8.507059e+37
  %v4426 = vand.u32 %v4414, 2147483648
  %v4427 = vor.u32 1.1754944e-38, %v4426
  %v4428 = vsel %vm4425, %v4427, %v4423
  %v4429 = vmul.f32 1.0, %v4428
  %v4430 = vmul.f32 %v4409, %v3789
  %v4431 = vmul.f32 %v4390, %v4410
  %v4432 = vadd.f32 %v4430, %v4431
  %v4433 = vtanh.pop %v4432
  %v4434 = vmul.f32 %v4429, %v4433
  %v4435 = vmul.f32 %v2780, %v4434
  %s4436 = scalar_lea.vmem [#allocation4], 40
  %4437 = vst [vmem:[%s4436] sm:$0xff] %v4435
  %v4438 = vsub.f32 %v4434, %v3786
  %v4439 = vmul.f32 %v2780, %v4438
  %v4440 = vadd.f32 %v3786, %v4439
  %v4441 = vsub.f32 %v4432, %v3789
  %v4442 = vmul.f32 %v2780, %v4441
  %v4443 = vadd.f32 %v3789, %v4442
  %s4444 = smul.addr %s2125, 8
  %s4445 = scalar_lea.vmem [#allocation3], %s4444
  %v4446 = vld [vmem:[%s4445] sm:$0xff]
  %v4447 = vld [vmem:[%s4445 + $0x8] sm:$0xff]
  %v4448 = vld [vmem:[%s4445 + $0x10] sm:$0xff]
  %v4449 = vld [vmem:[%s4445 + $0x18] sm:$0xff]
  %v4450 = vpack.c.bf16 %v4113, %v4113
  %v4451 = vld [vmem:[%s7] sm:$0xff]
  %v4452 = vld [vmem:[%s7 + $0x8] sm:$0xff]
  %v4453 = vld [vmem:[%s7 + $0x10] sm:$0xff]
  %v4454 = vld [vmem:[%s7 + $0x18] sm:$0xff]
  %v4455 = vld [vmem:[%s7 + $0x20] sm:$0xff]
  %v4456 = vld [vmem:[%s7 + $0x28] sm:$0xff]
  %v4457 = vld [vmem:[%s7 + $0x30] sm:$0xff]
  %v4458 = vld [vmem:[%s7 + $0x38] sm:$0xff]
  %v4459 = vld [vmem:[%s7 + $0x40] sm:$0xff]
  %v4460 = vld [vmem:[%s7 + $0x48] sm:$0xff]
  %v4461 = vld [vmem:[%s7 + $0x50] sm:$0xff]
  %v4462 = vld [vmem:[%s7 + $0x58] sm:$0xff]
  %v4463 = vld [vmem:[%s7 + $0x60] sm:$0xff]
  %v4464 = vld [vmem:[%s7 + $0x68] sm:$0xff]
  %v4465 = vld [vmem:[%s7 + $0x70] sm:$0xff]
  %v4466 = vld [vmem:[%s7 + $0x78] sm:$0xff]
  %v4467 = vld [vmem:[%s7 + $0x80] sm:$0xff]
  %v4468 = vld [vmem:[%s7 + $0x88] sm:$0xff]
  %v4469 = vld [vmem:[%s7 + $0x90] sm:$0xff]
  %v4470 = vld [vmem:[%s7 + $0x98] sm:$0xff]
  %v4471 = vld [vmem:[%s7 + $0xa0] sm:$0xff]
  %v4472 = vld [vmem:[%s7 + $0xa8] sm:$0xff]
  %v4473 = vld [vmem:[%s7 + $0xb0] sm:$0xff]
  %v4474 = vld [vmem:[%s7 + $0xb8] sm:$0xff]
  %v4475 = vld [vmem:[%s7 + $0xc0] sm:$0xff]
  %v4476 = vld [vmem:[%s7 + $0xc8] sm:$0xff]
  %v4477 = vld [vmem:[%s7 + $0xd0] sm:$0xff]
  %v4478 = vld [vmem:[%s7 + $0xd8] sm:$0xff]
  %v4479 = vld [vmem:[%s7 + $0xe0] sm:$0xff]
  %v4480 = vld [vmem:[%s7 + $0xe8] sm:$0xff]
  %v4481 = vld [vmem:[%s7 + $0xf0] sm:$0xff]
  %v4482 = vld [vmem:[%s7 + $0xf8] sm:$0xff]
  %v4515 = vunpack.c.l.b16 %v4451
  %v4516 = vunpack.c.h.b16 %v4451
  %v4517 = vunpack.c.l.b16 %v4452
  %v4518 = vunpack.c.h.b16 %v4452
  %v4519 = vunpack.c.l.b16 %v4453
  %v4520 = vunpack.c.h.b16 %v4453
  %v4521 = vunpack.c.l.b16 %v4454
  %v4522 = vunpack.c.h.b16 %v4454
  %v4523 = vunpack.c.l.b16 %v4455
  %v4524 = vunpack.c.h.b16 %v4455
  %v4525 = vunpack.c.l.b16 %v4456
  %v4526 = vunpack.c.h.b16 %v4456
  %v4527 = vunpack.c.l.b16 %v4457
  %v4528 = vunpack.c.h.b16 %v4457
  %v4529 = vunpack.c.l.b16 %v4458
  %v4530 = vunpack.c.h.b16 %v4458
  %v4531 = vunpack.c.l.b16 %v4459
  %v4532 = vunpack.c.h.b16 %v4459
  %v4533 = vunpack.c.l.b16 %v4460
  %v4534 = vunpack.c.h.b16 %v4460
  %v4535 = vunpack.c.l.b16 %v4461
  %v4536 = vunpack.c.h.b16 %v4461
  %v4537 = vunpack.c.l.b16 %v4462
  %v4538 = vunpack.c.h.b16 %v4462
  %v4539 = vunpack.c.l.b16 %v4463
  %v4540 = vunpack.c.h.b16 %v4463
  %v4541 = vunpack.c.l.b16 %v4464
  %v4542 = vunpack.c.h.b16 %v4464
  %v4543 = vunpack.c.l.b16 %v4465
  %v4544 = vunpack.c.h.b16 %v4465
  %v4545 = vunpack.c.l.b16 %v4466
  %v4546 = vunpack.c.h.b16 %v4466
  %v4547 = vunpack.c.l.b16 %v4467
  %v4548 = vunpack.c.h.b16 %v4467
  %v4549 = vunpack.c.l.b16 %v4468
  %v4550 = vunpack.c.h.b16 %v4468
  %v4551 = vunpack.c.l.b16 %v4469
  %v4552 = vunpack.c.h.b16 %v4469
  %v4553 = vunpack.c.l.b16 %v4470
  %v4554 = vunpack.c.h.b16 %v4470
  %v4555 = vunpack.c.l.b16 %v4471
  %v4556 = vunpack.c.h.b16 %v4471
  %v4557 = vunpack.c.l.b16 %v4472
  %v4558 = vunpack.c.h.b16 %v4472
  %v4559 = vunpack.c.l.b16 %v4473
  %v4560 = vunpack.c.h.b16 %v4473
  %v4561 = vunpack.c.l.b16 %v4474
  %v4562 = vunpack.c.h.b16 %v4474
  %v4563 = vunpack.c.l.b16 %v4475
  %v4564 = vunpack.c.h.b16 %v4475
  %v4565 = vunpack.c.l.b16 %v4476
  %v4566 = vunpack.c.h.b16 %v4476
  %v4567 = vunpack.c.l.b16 %v4477
  %v4568 = vunpack.c.h.b16 %v4477
  %v4569 = vunpack.c.l.b16 %v4478
  %v4570 = vunpack.c.h.b16 %v4478
  %v4571 = vunpack.c.l.b16 %v4479
  %v4572 = vunpack.c.h.b16 %v4479
  %v4573 = vunpack.c.l.b16 %v4480
  %v4574 = vunpack.c.h.b16 %v4480
  %v4575 = vunpack.c.l.b16 %v4481
  %v4576 = vunpack.c.h.b16 %v4481
  %v4577 = vunpack.c.l.b16 %v4482
  %v4578 = vunpack.c.h.b16 %v4482
  %v4579 = vpack.c.b16 %v4519, %v4515
  %v4580 = vpack.c.b16 %v4520, %v4516
  %v4581 = vpack.c.b16 %v4521, %v4517
  %v4582 = vpack.c.b16 %v4522, %v4518
  %v4583 = vpack.c.b16 %v4527, %v4523
  %v4584 = vpack.c.b16 %v4528, %v4524
  %v4585 = vpack.c.b16 %v4529, %v4525
  %v4586 = vpack.c.b16 %v4530, %v4526
  %v4587 = vpack.c.b16 %v4535, %v4531
  %v4588 = vpack.c.b16 %v4536, %v4532
  %v4589 = vpack.c.b16 %v4537, %v4533
  %v4590 = vpack.c.b16 %v4538, %v4534
  %v4591 = vpack.c.b16 %v4543, %v4539
  %v4592 = vpack.c.b16 %v4544, %v4540
  %v4593 = vpack.c.b16 %v4545, %v4541
  %v4594 = vpack.c.b16 %v4546, %v4542
  %v4595 = vpack.c.b16 %v4551, %v4547
  %v4596 = vpack.c.b16 %v4552, %v4548
  %v4597 = vpack.c.b16 %v4553, %v4549
  %v4598 = vpack.c.b16 %v4554, %v4550
  %v4599 = vpack.c.b16 %v4559, %v4555
  %v4600 = vpack.c.b16 %v4560, %v4556
  %v4601 = vpack.c.b16 %v4561, %v4557
  %v4602 = vpack.c.b16 %v4562, %v4558
  %v4603 = vpack.c.b16 %v4567, %v4563
  %v4604 = vpack.c.b16 %v4568, %v4564
  %v4605 = vpack.c.b16 %v4569, %v4565
  %v4606 = vpack.c.b16 %v4570, %v4566
  %v4607 = vpack.c.b16 %v4575, %v4571
  %v4608 = vpack.c.b16 %v4576, %v4572
  %v4609 = vpack.c.b16 %v4577, %v4573
  %v4610 = vpack.c.b16 %v4578, %v4574
  %4643 = vmatpush.bf16.msra.mxu0 %v4607
  %4644 = vmatpush.bf16.msra.mxu0 %v4603
  %4645 = vmatpush.bf16.msra.mxu0 %v4599
  %4646 = vmatpush.bf16.msra.mxu0 %v4595
  %4647 = vmatpush.bf16.msra.mxu0 %v4591
  %4648 = vmatpush.bf16.msra.mxu0 %v4587
  %4649 = vmatpush.bf16.msra.mxu0 %v4583
  %4650 = vmatpush.bf16.msra.mxu0 %v4579
  %4651 = vmatmul.bf16.gmra.mxu0 %v4450
  %v4652 = vpop.f32.mrf.mxu0
  %v4653 = vadd.f32 0.0, %v4652
  %v4654 = vpop.f32.mrf.mxu0
  %4655 = vdwg.mxu0
  %4656 = vmatpush.bf16.msra.mxu0 %v4608
  %4657 = vmatpush.bf16.msra.mxu0 %v4604
  %4658 = vmatpush.bf16.msra.mxu0 %v4600
  %4659 = vmatpush.bf16.msra.mxu0 %v4596
  %4660 = vmatpush.bf16.msra.mxu0 %v4592
  %4661 = vmatpush.bf16.msra.mxu0 %v4588
  %4662 = vmatpush.bf16.msra.mxu0 %v4584
  %4663 = vmatpush.bf16.msra.mxu0 %v4580
  %4664 = vmatmul.bf16.gmra.mxu0 %v4450
  %v4665 = vpop.f32.mrf.mxu0
  %v4666 = vadd.f32 0.0, %v4665
  %v4667 = vpop.f32.mrf.mxu0
  %4668 = vdwg.mxu0
  %4669 = vmatpush.bf16.msra.mxu0 %v4609
  %4670 = vmatpush.bf16.msra.mxu0 %v4605
  %4671 = vmatpush.bf16.msra.mxu0 %v4601
  %4672 = vmatpush.bf16.msra.mxu0 %v4597
  %4673 = vmatpush.bf16.msra.mxu0 %v4593
  %4674 = vmatpush.bf16.msra.mxu0 %v4589
  %4675 = vmatpush.bf16.msra.mxu0 %v4585
  %4676 = vmatpush.bf16.msra.mxu0 %v4581
  %4677 = vmatmul.bf16.gmra.mxu0 %v4450
  %v4678 = vpop.f32.mrf.mxu0
  %v4679 = vadd.f32 0.0, %v4678
  %v4680 = vpop.f32.mrf.mxu0
  %4681 = vdwg.mxu0
  %4682 = vmatpush.bf16.msra.mxu0 %v4610
  %4683 = vmatpush.bf16.msra.mxu0 %v4606
  %4684 = vmatpush.bf16.msra.mxu0 %v4602
  %4685 = vmatpush.bf16.msra.mxu0 %v4598
  %4686 = vmatpush.bf16.msra.mxu0 %v4594
  %4687 = vmatpush.bf16.msra.mxu0 %v4590
  %4688 = vmatpush.bf16.msra.mxu0 %v4586
  %4689 = vmatpush.bf16.msra.mxu0 %v4582
  %4690 = vmatmul.bf16.gmra.mxu0 %v4450
  %v4691 = vpop.f32.mrf.mxu0
  %v4692 = vadd.f32 0.0, %v4691
  %v4693 = vpop.f32.mrf.mxu0
  %4694 = vdwg.mxu0
  %v4695 = vadd.f32 %v4446, %v4653
  %v4696 = vadd.f32 %v4447, %v4666
  %v4697 = vadd.f32 %v4448, %v4679
  %v4698 = vadd.f32 %v4449, %v4692
  %v4699 = vxor.u32 %v4695, 2147483648
  %v4700 = vmul.f32 %v4699, 1.442695
  %v4701 = vpow.pop %v4700
  %v4702 = vadd.f32 %v4701, 1.0
  %v4703 = vrcp.pop %v4702
  %v4704 = vmul.f32 %v4702, %v4703
  %v4705 = vsub.f32 1.0, %v4704
  %v4706 = vmul.f32 %v4703, %v4705
  %v4707 = vadd.f32 %v4703, %v4706
  %vm4708 = vweird.f32 %v4702
  %vm4709 = vweird.f32 %v4703
  %vm4710 = vmor %vm4708, %vm4709
  %v4711 = vsel %vm4710, %v4703, %v4707
  %v4712 = vand.u32 2147483647, %v4702
  %vm4713 = vcmp.eq.f32.partialorder %v4712, 8.507059e+37
  %v4714 = vand.u32 %v4702, 2147483648
  %v4715 = vor.u32 1.1754944e-38, %v4714
  %v4716 = vsel %vm4713, %v4715, %v4711
  %v4717 = vmul.f32 1.0, %v4716
  %v4718 = vxor.u32 %v4696, 2147483648
  %v4719 = vmul.f32 %v4718, 1.442695
  %v4720 = vpow.pop %v4719
  %v4721 = vadd.f32 %v4720, 1.0
  %v4722 = vrcp.pop %v4721
  %v4723 = vmul.f32 %v4721, %v4722
  %v4724 = vsub.f32 1.0, %v4723
  %v4725 = vmul.f32 %v4722, %v4724
  %v4726 = vadd.f32 %v4722, %v4725
  %vm4727 = vweird.f32 %v4721
  %vm4728 = vweird.f32 %v4722
  %vm4729 = vmor %vm4727, %vm4728
  %v4730 = vsel %vm4729, %v4722, %v4726
  %v4731 = vand.u32 2147483647, %v4721
  %vm4732 = vcmp.eq.f32.partialorder %v4731, 8.507059e+37
  %v4733 = vand.u32 %v4721, 2147483648
  %v4734 = vor.u32 1.1754944e-38, %v4733
  %v4735 = vsel %vm4732, %v4734, %v4730
  %v4736 = vmul.f32 1.0, %v4735
  %v4737 = vtanh.pop %v4697
  %v4738 = vxor.u32 %v4698, 2147483648
  %v4739 = vmul.f32 %v4738, 1.442695
  %v4740 = vpow.pop %v4739
  %v4741 = vadd.f32 %v4740, 1.0
  %v4742 = vrcp.pop %v4741
  %v4743 = vmul.f32 %v4741, %v4742
  %v4744 = vsub.f32 1.0, %v4743
  %v4745 = vmul.f32 %v4742, %v4744
  %v4746 = vadd.f32 %v4742, %v4745
  %vm4747 = vweird.f32 %v4741
  %vm4748 = vweird.f32 %v4742
  %vm4749 = vmor %vm4747, %vm4748
  %v4750 = vsel %vm4749, %v4742, %v4746
  %v4751 = vand.u32 2147483647, %v4741
  %vm4752 = vcmp.eq.f32.partialorder %v4751, 8.507059e+37
  %v4753 = vand.u32 %v4741, 2147483648
  %v4754 = vor.u32 1.1754944e-38, %v4753
  %v4755 = vsel %vm4752, %v4754, %v4750
  %v4756 = vmul.f32 1.0, %v4755
  %v4757 = vmul.f32 %v4736, %v4116
  %v4758 = vmul.f32 %v4717, %v4737
  %v4759 = vadd.f32 %v4757, %v4758
  %v4760 = vtanh.pop %v4759
  %v4761 = vmul.f32 %v4756, %v4760
  %v4762 = vmul.f32 %v2447, %v4761
  %s4763 = scalar_lea.vmem [#allocation5], 16
  %4764 = vst [vmem:[%s4763] sm:$0xff] %v4762
  %v4765 = vsub.f32 %v4761, %v4113
  %v4766 = vmul.f32 %v2447, %v4765
  %v4767 = vadd.f32 %v4113, %v4766
  %v4768 = vsub.f32 %v4759, %v4116
  %v4769 = vmul.f32 %v2447, %v4768
  %v4770 = vadd.f32 %v4116, %v4769
  %s4771 = smul.addr %s1786, 8
  %s4772 = scalar_lea.vmem [#allocation2], %s4771
  %v4773 = vld [vmem:[%s4772] sm:$0xff]
  %v4774 = vld [vmem:[%s4772 + $0x8] sm:$0xff]
  %v4775 = vld [vmem:[%s4772 + $0x10] sm:$0xff]
  %v4776 = vld [vmem:[%s4772 + $0x18] sm:$0xff]
  %v4777 = vpack.c.bf16 %v4440, %v4440
  %v4778 = vld [vmem:[%s6] sm:$0xff]
  %v4779 = vld [vmem:[%s6 + $0x8] sm:$0xff]
  %v4780 = vld [vmem:[%s6 + $0x10] sm:$0xff]
  %v4781 = vld [vmem:[%s6 + $0x18] sm:$0xff]
  %v4782 = vld [vmem:[%s6 + $0x20] sm:$0xff]
  %v4783 = vld [vmem:[%s6 + $0x28] sm:$0xff]
  %v4784 = vld [vmem:[%s6 + $0x30] sm:$0xff]
  %v4785 = vld [vmem:[%s6 + $0x38] sm:$0xff]
  %v4786 = vld [vmem:[%s6 + $0x40] sm:$0xff]
  %v4787 = vld [vmem:[%s6 + $0x48] sm:$0xff]
  %v4788 = vld [vmem:[%s6 + $0x50] sm:$0xff]
  %v4789 = vld [vmem:[%s6 + $0x58] sm:$0xff]
  %v4790 = vld [vmem:[%s6 + $0x60] sm:$0xff]
  %v4791 = vld [vmem:[%s6 + $0x68] sm:$0xff]
  %v4792 = vld [vmem:[%s6 + $0x70] sm:$0xff]
  %v4793 = vld [vmem:[%s6 + $0x78] sm:$0xff]
  %v4794 = vld [vmem:[%s6 + $0x80] sm:$0xff]
  %v4795 = vld [vmem:[%s6 + $0x88] sm:$0xff]
  %v4796 = vld [vmem:[%s6 + $0x90] sm:$0xff]
  %v4797 = vld [vmem:[%s6 + $0x98] sm:$0xff]
  %v4798 = vld [vmem:[%s6 + $0xa0] sm:$0xff]
  %v4799 = vld [vmem:[%s6 + $0xa8] sm:$0xff]
  %v4800 = vld [vmem:[%s6 + $0xb0] sm:$0xff]
  %v4801 = vld [vmem:[%s6 + $0xb8] sm:$0xff]
  %v4802 = vld [vmem:[%s6 + $0xc0] sm:$0xff]
  %v4803 = vld [vmem:[%s6 + $0xc8] sm:$0xff]
  %v4804 = vld [vmem:[%s6 + $0xd0] sm:$0xff]
  %v4805 = vld [vmem:[%s6 + $0xd8] sm:$0xff]
  %v4806 = vld [vmem:[%s6 + $0xe0] sm:$0xff]
  %v4807 = vld [vmem:[%s6 + $0xe8] sm:$0xff]
  %v4808 = vld [vmem:[%s6 + $0xf0] sm:$0xff]
  %v4809 = vld [vmem:[%s6 + $0xf8] sm:$0xff]
  %v4842 = vunpack.c.l.b16 %v4778
  %v4843 = vunpack.c.h.b16 %v4778
  %v4844 = vunpack.c.l.b16 %v4779
  %v4845 = vunpack.c.h.b16 %v4779
  %v4846 = vunpack.c.l.b16 %v4780
  %v4847 = vunpack.c.h.b16 %v4780
  %v4848 = vunpack.c.l.b16 %v4781
  %v4849 = vunpack.c.h.b16 %v4781
  %v4850 = vunpack.c.l.b16 %v4782
  %v4851 = vunpack.c.h.b16 %v4782
  %v4852 = vunpack.c.l.b16 %v4783
  %v4853 = vunpack.c.h.b16 %v4783
  %v4854 = vunpack.c.l.b16 %v4784
  %v4855 = vunpack.c.h.b16 %v4784
  %v4856 = vunpack.c.l.b16 %v4785
  %v4857 = vunpack.c.h.b16 %v4785
  %v4858 = vunpack.c.l.b16 %v4786
  %v4859 = vunpack.c.h.b16 %v4786
  %v4860 = vunpack.c.l.b16 %v4787
  %v4861 = vunpack.c.h.b16 %v4787
  %v4862 = vunpack.c.l.b16 %v4788
  %v4863 = vunpack.c.h.b16 %v4788
  %v4864 = vunpack.c.l.b16 %v4789
  %v4865 = vunpack.c.h.b16 %v4789
  %v4866 = vunpack.c.l.b16 %v4790
  %v4867 = vunpack.c.h.b16 %v4790
  %v4868 = vunpack.c.l.b16 %v4791
  %v4869 = vunpack.c.h.b16 %v4791
  %v4870 = vunpack.c.l.b16 %v4792
  %v4871 = vunpack.c.h.b16 %v4792
  %v4872 = vunpack.c.l.b16 %v4793
  %v4873 = vunpack.c.h.b16 %v4793
  %v4874 = vunpack.c.l.b16 %v4794
  %v4875 = vunpack.c.h.b16 %v4794
  %v4876 = vunpack.c.l.b16 %v4795
  %v4877 = vunpack.c.h.b16 %v4795
  %v4878 = vunpack.c.l.b16 %v4796
  %v4879 = vunpack.c.h.b16 %v4796
  %v4880 = vunpack.c.l.b16 %v4797
  %v4881 = vunpack.c.h.b16 %v4797
  %v4882 = vunpack.c.l.b16 %v4798
  %v4883 = vunpack.c.h.b16 %v4798
  %v4884 = vunpack.c.l.b16 %v4799
  %v4885 = vunpack.c.h.b16 %v4799
  %v4886 = vunpack.c.l.b16 %v4800
  %v4887 = vunpack.c.h.b16 %v4800
  %v4888 = vunpack.c.l.b16 %v4801
  %v4889 = vunpack.c.h.b16 %v4801
  %v4890 = vunpack.c.l.b16 %v4802
  %v4891 = vunpack.c.h.b16 %v4802
  %v4892 = vunpack.c.l.b16 %v4803
  %v4893 = vunpack.c.h.b16 %v4803
  %v4894 = vunpack.c.l.b16 %v4804
  %v4895 = vunpack.c.h.b16 %v4804
  %v4896 = vunpack.c.l.b16 %v4805
  %v4897 = vunpack.c.h.b16 %v4805
  %v4898 = vunpack.c.l.b16 %v4806
  %v4899 = vunpack.c.h.b16 %v4806
  %v4900 = vunpack.c.l.b16 %v4807
  %v4901 = vunpack.c.h.b16 %v4807
  %v4902 = vunpack.c.l.b16 %v4808
  %v4903 = vunpack.c.h.b16 %v4808
  %v4904 = vunpack.c.l.b16 %v4809
  %v4905 = vunpack.c.h.b16 %v4809
  %v4906 = vpack.c.b16 %v4846, %v4842
  %v4907 = vpack.c.b16 %v4847, %v4843
  %v4908 = vpack.c.b16 %v4848, %v4844
  %v4909 = vpack.c.b16 %v4849, %v4845
  %v4910 = vpack.c.b16 %v4854, %v4850
  %v4911 = vpack.c.b16 %v4855, %v4851
  %v4912 = vpack.c.b16 %v4856, %v4852
  %v4913 = vpack.c.b16 %v4857, %v4853
  %v4914 = vpack.c.b16 %v4862, %v4858
  %v4915 = vpack.c.b16 %v4863, %v4859
  %v4916 = vpack.c.b16 %v4864, %v4860
  %v4917 = vpack.c.b16 %v4865, %v4861
  %v4918 = vpack.c.b16 %v4870, %v4866
  %v4919 = vpack.c.b16 %v4871, %v4867
  %v4920 = vpack.c.b16 %v4872, %v4868
  %v4921 = vpack.c.b16 %v4873, %v4869
  %v4922 = vpack.c.b16 %v4878, %v4874
  %v4923 = vpack.c.b16 %v4879, %v4875
  %v4924 = vpack.c.b16 %v4880, %v4876
  %v4925 = vpack.c.b16 %v4881, %v4877
  %v4926 = vpack.c.b16 %v4886, %v4882
  %v4927 = vpack.c.b16 %v4887, %v4883
  %v4928 = vpack.c.b16 %v4888, %v4884
  %v4929 = vpack.c.b16 %v4889, %v4885
  %v4930 = vpack.c.b16 %v4894, %v4890
  %v4931 = vpack.c.b16 %v4895, %v4891
  %v4932 = vpack.c.b16 %v4896, %v4892
  %v4933 = vpack.c.b16 %v4897, %v4893
  %v4934 = vpack.c.b16 %v4902, %v4898
  %v4935 = vpack.c.b16 %v4903, %v4899
  %v4936 = vpack.c.b16 %v4904, %v4900
  %v4937 = vpack.c.b16 %v4905, %v4901
  %4970 = vmatpush.bf16.msra.mxu0 %v4934
  %4971 = vmatpush.bf16.msra.mxu0 %v4930
  %4972 = vmatpush.bf16.msra.mxu0 %v4926
  %4973 = vmatpush.bf16.msra.mxu0 %v4922
  %4974 = vmatpush.bf16.msra.mxu0 %v4918
  %4975 = vmatpush.bf16.msra.mxu0 %v4914
  %4976 = vmatpush.bf16.msra.mxu0 %v4910
  %4977 = vmatpush.bf16.msra.mxu0 %v4906
  %4978 = vmatmul.bf16.gmra.mxu0 %v4777
  %v4979 = vpop.f32.mrf.mxu0
  %v4980 = vadd.f32 0.0, %v4979
  %v4981 = vpop.f32.mrf.mxu0
  %4982 = vdwg.mxu0
  %4983 = vmatpush.bf16.msra.mxu0 %v4935
  %4984 = vmatpush.bf16.msra.mxu0 %v4931
  %4985 = vmatpush.bf16.msra.mxu0 %v4927
  %4986 = vmatpush.bf16.msra.mxu0 %v4923
  %4987 = vmatpush.bf16.msra.mxu0 %v4919
  %4988 = vmatpush.bf16.msra.mxu0 %v4915
  %4989 = vmatpush.bf16.msra.mxu0 %v4911
  %4990 = vmatpush.bf16.msra.mxu0 %v4907
  %4991 = vmatmul.bf16.gmra.mxu0 %v4777
  %v4992 = vpop.f32.mrf.mxu0
  %v4993 = vadd.f32 0.0, %v4992
  %v4994 = vpop.f32.mrf.mxu0
  %4995 = vdwg.mxu0
  %4996 = vmatpush.bf16.msra.mxu0 %v4936
  %4997 = vmatpush.bf16.msra.mxu0 %v4932
  %4998 = vmatpush.bf16.msra.mxu0 %v4928
  %4999 = vmatpush.bf16.msra.mxu0 %v4924
  %5000 = vmatpush.bf16.msra.mxu0 %v4920
  %5001 = vmatpush.bf16.msra.mxu0 %v4916
  %5002 = vmatpush.bf16.msra.mxu0 %v4912
  %5003 = vmatpush.bf16.msra.mxu0 %v4908
  %5004 = vmatmul.bf16.gmra.mxu0 %v4777
  %v5005 = vpop.f32.mrf.mxu0
  %v5006 = vadd.f32 0.0, %v5005
  %v5007 = vpop.f32.mrf.mxu0
  %5008 = vdwg.mxu0
  %5009 = vmatpush.bf16.msra.mxu0 %v4937
  %5010 = vmatpush.bf16.msra.mxu0 %v4933
  %5011 = vmatpush.bf16.msra.mxu0 %v4929
  %5012 = vmatpush.bf16.msra.mxu0 %v4925
  %5013 = vmatpush.bf16.msra.mxu0 %v4921
  %5014 = vmatpush.bf16.msra.mxu0 %v4917
  %5015 = vmatpush.bf16.msra.mxu0 %v4913
  %5016 = vmatpush.bf16.msra.mxu0 %v4909
  %5017 = vmatmul.bf16.gmra.mxu0 %v4777
  %v5018 = vpop.f32.mrf.mxu0
  %v5019 = vadd.f32 0.0, %v5018
  %v5020 = vpop.f32.mrf.mxu0
  %5021 = vdwg.mxu0
  %v5022 = vadd.f32 %v4773, %v4980
  %v5023 = vadd.f32 %v4774, %v4993
  %v5024 = vadd.f32 %v4775, %v5006
  %v5025 = vadd.f32 %v4776, %v5019
  %v5026 = vxor.u32 %v5022, 2147483648
  %v5027 = vmul.f32 %v5026, 1.442695
  %v5028 = vpow.pop %v5027
  %v5029 = vadd.f32 %v5028, 1.0
  %v5030 = vrcp.pop %v5029
  %v5031 = vmul.f32 %v5029, %v5030
  %v5032 = vsub.f32 1.0, %v5031
  %v5033 = vmul.f32 %v5030, %v5032
  %v5034 = vadd.f32 %v5030, %v5033
  %vm5035 = vweird.f32 %v5029
  %vm5036 = vweird.f32 %v5030
  %vm5037 = vmor %vm5035, %vm5036
  %v5038 = vsel %vm5037, %v5030, %v5034
  %v5039 = vand.u32 2147483647, %v5029
  %vm5040 = vcmp.eq.f32.partialorder %v5039, 8.507059e+37
  %v5041 = vand.u32 %v5029, 2147483648
  %v5042 = vor.u32 1.1754944e-38, %v5041
  %v5043 = vsel %vm5040, %v5042, %v5038
  %v5044 = vmul.f32 1.0, %v5043
  %v5045 = vxor.u32 %v5023, 2147483648
  %v5046 = vmul.f32 %v5045, 1.442695
  %v5047 = vpow.pop %v5046
  %v5048 = vadd.f32 %v5047, 1.0
  %v5049 = vrcp.pop %v5048
  %v5050 = vmul.f32 %v5048, %v5049
  %v5051 = vsub.f32 1.0, %v5050
  %v5052 = vmul.f32 %v5049, %v5051
  %v5053 = vadd.f32 %v5049, %v5052
  %vm5054 = vweird.f32 %v5048
  %vm5055 = vweird.f32 %v5049
  %vm5056 = vmor %vm5054, %vm5055
  %v5057 = vsel %vm5056, %v5049, %v5053
  %v5058 = vand.u32 2147483647, %v5048
  %vm5059 = vcmp.eq.f32.partialorder %v5058, 8.507059e+37
  %v5060 = vand.u32 %v5048, 2147483648
  %v5061 = vor.u32 1.1754944e-38, %v5060
  %v5062 = vsel %vm5059, %v5061, %v5057
  %v5063 = vmul.f32 1.0, %v5062
  %v5064 = vtanh.pop %v5024
  %v5065 = vxor.u32 %v5025, 2147483648
  %v5066 = vmul.f32 %v5065, 1.442695
  %v5067 = vpow.pop %v5066
  %v5068 = vadd.f32 %v5067, 1.0
  %v5069 = vrcp.pop %v5068
  %v5070 = vmul.f32 %v5068, %v5069
  %v5071 = vsub.f32 1.0, %v5070
  %v5072 = vmul.f32 %v5069, %v5071
  %v5073 = vadd.f32 %v5069, %v5072
  %vm5074 = vweird.f32 %v5068
  %vm5075 = vweird.f32 %v5069
  %vm5076 = vmor %vm5074, %vm5075
  %v5077 = vsel %vm5076, %v5069, %v5073
  %v5078 = vand.u32 2147483647, %v5068
  %vm5079 = vcmp.eq.f32.partialorder %v5078, 8.507059e+37
  %v5080 = vand.u32 %v5068, 2147483648
  %v5081 = vor.u32 1.1754944e-38, %v5080
  %v5082 = vsel %vm5079, %v5081, %v5077
  %v5083 = vmul.f32 1.0, %v5082
  %v5084 = vmul.f32 %v5063, %v4443
  %v5085 = vmul.f32 %v5044, %v5064
  %v5086 = vadd.f32 %v5084, %v5085
  %v5087 = vtanh.pop %v5086
  %v5088 = vmul.f32 %v5083, %v5087
  %v5089 = vmul.f32 %v2108, %v5088
  %s5090 = scalar_lea.vmem [#allocation4], 48
  %5091 = vst [vmem:[%s5090] sm:$0xff] %v5089
  %v5092 = vsub.f32 %v5088, %v4440
  %v5093 = vmul.f32 %v2108, %v5092
  %v5094 = vadd.f32 %v4440, %v5093
  %v5095 = vsub.f32 %v5086, %v4443
  %v5096 = vmul.f32 %v2108, %v5095
  %v5097 = vadd.f32 %v4443, %v5096
  %s5098 = smul.addr %s1453, 8
  %s5099 = scalar_lea.vmem [#allocation3], %s5098
  %v5100 = vld [vmem:[%s5099] sm:$0xff]
  %v5101 = vld [vmem:[%s5099 + $0x8] sm:$0xff]
  %v5102 = vld [vmem:[%s5099 + $0x10] sm:$0xff]
  %v5103 = vld [vmem:[%s5099 + $0x18] sm:$0xff]
  %v5104 = vpack.c.bf16 %v4767, %v4767
  %v5105 = vld [vmem:[%s7] sm:$0xff]
  %v5106 = vld [vmem:[%s7 + $0x8] sm:$0xff]
  %v5107 = vld [vmem:[%s7 + $0x10] sm:$0xff]
  %v5108 = vld [vmem:[%s7 + $0x18] sm:$0xff]
  %v5109 = vld [vmem:[%s7 + $0x20] sm:$0xff]
  %v5110 = vld [vmem:[%s7 + $0x28] sm:$0xff]
  %v5111 = vld [vmem:[%s7 + $0x30] sm:$0xff]
  %v5112 = vld [vmem:[%s7 + $0x38] sm:$0xff]
  %v5113 = vld [vmem:[%s7 + $0x40] sm:$0xff]
  %v5114 = vld [vmem:[%s7 + $0x48] sm:$0xff]
  %v5115 = vld [vmem:[%s7 + $0x50] sm:$0xff]
  %v5116 = vld [vmem:[%s7 + $0x58] sm:$0xff]
  %v5117 = vld [vmem:[%s7 + $0x60] sm:$0xff]
  %v5118 = vld [vmem:[%s7 + $0x68] sm:$0xff]
  %v5119 = vld [vmem:[%s7 + $0x70] sm:$0xff]
  %v5120 = vld [vmem:[%s7 + $0x78] sm:$0xff]
  %v5121 = vld [vmem:[%s7 + $0x80] sm:$0xff]
  %v5122 = vld [vmem:[%s7 + $0x88] sm:$0xff]
  %v5123 = vld [vmem:[%s7 + $0x90] sm:$0xff]
  %v5124 = vld [vmem:[%s7 + $0x98] sm:$0xff]
  %v5125 = vld [vmem:[%s7 + $0xa0] sm:$0xff]
  %v5126 = vld [vmem:[%s7 + $0xa8] sm:$0xff]
  %v5127 = vld [vmem:[%s7 + $0xb0] sm:$0xff]
  %v5128 = vld [vmem:[%s7 + $0xb8] sm:$0xff]
  %v5129 = vld [vmem:[%s7 + $0xc0] sm:$0xff]
  %v5130 = vld [vmem:[%s7 + $0xc8] sm:$0xff]
  %v5131 = vld [vmem:[%s7 + $0xd0] sm:$0xff]
  %v5132 = vld [vmem:[%s7 + $0xd8] sm:$0xff]
  %v5133 = vld [vmem:[%s7 + $0xe0] sm:$0xff]
  %v5134 = vld [vmem:[%s7 + $0xe8] sm:$0xff]
  %v5135 = vld [vmem:[%s7 + $0xf0] sm:$0xff]
  %v5136 = vld [vmem:[%s7 + $0xf8] sm:$0xff]
  %v5169 = vunpack.c.l.b16 %v5105
  %v5170 = vunpack.c.h.b16 %v5105
  %v5171 = vunpack.c.l.b16 %v5106
  %v5172 = vunpack.c.h.b16 %v5106
  %v5173 = vunpack.c.l.b16 %v5107
  %v5174 = vunpack.c.h.b16 %v5107
  %v5175 = vunpack.c.l.b16 %v5108
  %v5176 = vunpack.c.h.b16 %v5108
  %v5177 = vunpack.c.l.b16 %v5109
  %v5178 = vunpack.c.h.b16 %v5109
  %v5179 = vunpack.c.l.b16 %v5110
  %v5180 = vunpack.c.h.b16 %v5110
  %v5181 = vunpack.c.l.b16 %v5111
  %v5182 = vunpack.c.h.b16 %v5111
  %v5183 = vunpack.c.l.b16 %v5112
  %v5184 = vunpack.c.h.b16 %v5112
  %v5185 = vunpack.c.l.b16 %v5113
  %v5186 = vunpack.c.h.b16 %v5113
  %v5187 = vunpack.c.l.b16 %v5114
  %v5188 = vunpack.c.h.b16 %v5114
  %v5189 = vunpack.c.l.b16 %v5115
  %v5190 = vunpack.c.h.b16 %v5115
  %v5191 = vunpack.c.l.b16 %v5116
  %v5192 = vunpack.c.h.b16 %v5116
  %v5193 = vunpack.c.l.b16 %v5117
  %v5194 = vunpack.c.h.b16 %v5117
  %v5195 = vunpack.c.l.b16 %v5118
  %v5196 = vunpack.c.h.b16 %v5118
  %v5197 = vunpack.c.l.b16 %v5119
  %v5198 = vunpack.c.h.b16 %v5119
  %v5199 = vunpack.c.l.b16 %v5120
  %v5200 = vunpack.c.h.b16 %v5120
  %v5201 = vunpack.c.l.b16 %v5121
  %v5202 = vunpack.c.h.b16 %v5121
  %v5203 = vunpack.c.l.b16 %v5122
  %v5204 = vunpack.c.h.b16 %v5122
  %v5205 = vunpack.c.l.b16 %v5123
  %v5206 = vunpack.c.h.b16 %v5123
  %v5207 = vunpack.c.l.b16 %v5124
  %v5208 = vunpack.c.h.b16 %v5124
  %v5209 = vunpack.c.l.b16 %v5125
  %v5210 = vunpack.c.h.b16 %v5125
  %v5211 = vunpack.c.l.b16 %v5126
  %v5212 = vunpack.c.h.b16 %v5126
  %v5213 = vunpack.c.l.b16 %v5127
  %v5214 = vunpack.c.h.b16 %v5127
  %v5215 = vunpack.c.l.b16 %v5128
  %v5216 = vunpack.c.h.b16 %v5128
  %v5217 = vunpack.c.l.b16 %v5129
  %v5218 = vunpack.c.h.b16 %v5129
  %v5219 = vunpack.c.l.b16 %v5130
  %v5220 = vunpack.c.h.b16 %v5130
  %v5221 = vunpack.c.l.b16 %v5131
  %v5222 = vunpack.c.h.b16 %v5131
  %v5223 = vunpack.c.l.b16 %v5132
  %v5224 = vunpack.c.h.b16 %v5132
  %v5225 = vunpack.c.l.b16 %v5133
  %v5226 = vunpack.c.h.b16 %v5133
  %v5227 = vunpack.c.l.b16 %v5134
  %v5228 = vunpack.c.h.b16 %v5134
  %v5229 = vunpack.c.l.b16 %v5135
  %v5230 = vunpack.c.h.b16 %v5135
  %v5231 = vunpack.c.l.b16 %v5136
  %v5232 = vunpack.c.h.b16 %v5136
  %v5233 = vpack.c.b16 %v5173, %v5169
  %v5234 = vpack.c.b16 %v5174, %v5170
  %v5235 = vpack.c.b16 %v5175, %v5171
  %v5236 = vpack.c.b16 %v5176, %v5172
  %v5237 = vpack.c.b16 %v5181, %v5177
  %v5238 = vpack.c.b16 %v5182, %v5178
  %v5239 = vpack.c.b16 %v5183, %v5179
  %v5240 = vpack.c.b16 %v5184, %v5180
  %v5241 = vpack.c.b16 %v5189, %v5185
  %v5242 = vpack.c.b16 %v5190, %v5186
  %v5243 = vpack.c.b16 %v5191, %v5187
  %v5244 = vpack.c.b16 %v5192, %v5188
  %v5245 = vpack.c.b16 %v5197, %v5193
  %v5246 = vpack.c.b16 %v5198, %v5194
  %v5247 = vpack.c.b16 %v5199, %v5195
  %v5248 = vpack.c.b16 %v5200, %v5196
  %v5249 = vpack.c.b16 %v5205, %v5201
  %v5250 = vpack.c.b16 %v5206, %v5202
  %v5251 = vpack.c.b16 %v5207, %v5203
  %v5252 = vpack.c.b16 %v5208, %v5204
  %v5253 = vpack.c.b16 %v5213, %v5209
  %v5254 = vpack.c.b16 %v5214, %v5210
  %v5255 = vpack.c.b16 %v5215, %v5211
  %v5256 = vpack.c.b16 %v5216, %v5212
  %v5257 = vpack.c.b16 %v5221, %v5217
  %v5258 = vpack.c.b16 %v5222, %v5218
  %v5259 = vpack.c.b16 %v5223, %v5219
  %v5260 = vpack.c.b16 %v5224, %v5220
  %v5261 = vpack.c.b16 %v5229, %v5225
  %v5262 = vpack.c.b16 %v5230, %v5226
  %v5263 = vpack.c.b16 %v5231, %v5227
  %v5264 = vpack.c.b16 %v5232, %v5228
  %5297 = vmatpush.bf16.msra.mxu0 %v5261
  %5298 = vmatpush.bf16.msra.mxu0 %v5257
  %5299 = vmatpush.bf16.msra.mxu0 %v5253
  %5300 = vmatpush.bf16.msra.mxu0 %v5249
  %5301 = vmatpush.bf16.msra.mxu0 %v5245
  %5302 = vmatpush.bf16.msra.mxu0 %v5241
  %5303 = vmatpush.bf16.msra.mxu0 %v5237
  %5304 = vmatpush.bf16.msra.mxu0 %v5233
  %5305 = vmatmul.bf16.gmra.mxu0 %v5104
  %v5306 = vpop.f32.mrf.mxu0
  %v5307 = vadd.f32 0.0, %v5306
  %v5308 = vpop.f32.mrf.mxu0
  %5309 = vdwg.mxu0
  %5310 = vmatpush.bf16.msra.mxu0 %v5262
  %5311 = vmatpush.bf16.msra.mxu0 %v5258
  %5312 = vmatpush.bf16.msra.mxu0 %v5254
  %5313 = vmatpush.bf16.msra.mxu0 %v5250
  %5314 = vmatpush.bf16.msra.mxu0 %v5246
  %5315 = vmatpush.bf16.msra.mxu0 %v5242
  %5316 = vmatpush.bf16.msra.mxu0 %v5238
  %5317 = vmatpush.bf16.msra.mxu0 %v5234
  %5318 = vmatmul.bf16.gmra.mxu0 %v5104
  %v5319 = vpop.f32.mrf.mxu0
  %v5320 = vadd.f32 0.0, %v5319
  %v5321 = vpop.f32.mrf.mxu0
  %5322 = vdwg.mxu0
  %5323 = vmatpush.bf16.msra.mxu0 %v5263
  %5324 = vmatpush.bf16.msra.mxu0 %v5259
  %5325 = vmatpush.bf16.msra.mxu0 %v5255
  %5326 = vmatpush.bf16.msra.mxu0 %v5251
  %5327 = vmatpush.bf16.msra.mxu0 %v5247
  %5328 = vmatpush.bf16.msra.mxu0 %v5243
  %5329 = vmatpush.bf16.msra.mxu0 %v5239
  %5330 = vmatpush.bf16.msra.mxu0 %v5235
  %5331 = vmatmul.bf16.gmra.mxu0 %v5104
  %v5332 = vpop.f32.mrf.mxu0
  %v5333 = vadd.f32 0.0, %v5332
  %v5334 = vpop.f32.mrf.mxu0
  %5335 = vdwg.mxu0
  %5336 = vmatpush.bf16.msra.mxu0 %v5264
  %5337 = vmatpush.bf16.msra.mxu0 %v5260
  %5338 = vmatpush.bf16.msra.mxu0 %v5256
  %5339 = vmatpush.bf16.msra.mxu0 %v5252
  %5340 = vmatpush.bf16.msra.mxu0 %v5248
  %5341 = vmatpush.bf16.msra.mxu0 %v5244
  %5342 = vmatpush.bf16.msra.mxu0 %v5240
  %5343 = vmatpush.bf16.msra.mxu0 %v5236
  %5344 = vmatmul.bf16.gmra.mxu0 %v5104
  %v5345 = vpop.f32.mrf.mxu0
  %v5346 = vadd.f32 0.0, %v5345
  %v5347 = vpop.f32.mrf.mxu0
  %5348 = vdwg.mxu0
  %v5349 = vadd.f32 %v5100, %v5307
  %v5350 = vadd.f32 %v5101, %v5320
  %v5351 = vadd.f32 %v5102, %v5333
  %v5352 = vadd.f32 %v5103, %v5346
  %v5353 = vxor.u32 %v5349, 2147483648
  %v5354 = vmul.f32 %v5353, 1.442695
  %v5355 = vpow.pop %v5354
  %v5356 = vadd.f32 %v5355, 1.0
  %v5357 = vrcp.pop %v5356
  %v5358 = vmul.f32 %v5356, %v5357
  %v5359 = vsub.f32 1.0, %v5358
  %v5360 = vmul.f32 %v5357, %v5359
  %v5361 = vadd.f32 %v5357, %v5360
  %vm5362 = vweird.f32 %v5356
  %vm5363 = vweird.f32 %v5357
  %vm5364 = vmor %vm5362, %vm5363
  %v5365 = vsel %vm5364, %v5357, %v5361
  %v5366 = vand.u32 2147483647, %v5356
  %vm5367 = vcmp.eq.f32.partialorder %v5366, 8.507059e+37
  %v5368 = vand.u32 %v5356, 2147483648
  %v5369 = vor.u32 1.1754944e-38, %v5368
  %v5370 = vsel %vm5367, %v5369, %v5365
  %v5371 = vmul.f32 1.0, %v5370
  %v5372 = vxor.u32 %v5350, 2147483648
  %v5373 = vmul.f32 %v5372, 1.442695
  %v5374 = vpow.pop %v5373
  %v5375 = vadd.f32 %v5374, 1.0
  %v5376 = vrcp.pop %v5375
  %v5377 = vmul.f32 %v5375, %v5376
  %v5378 = vsub.f32 1.0, %v5377
  %v5379 = vmul.f32 %v5376, %v5378
  %v5380 = vadd.f32 %v5376, %v5379
  %vm5381 = vweird.f32 %v5375
  %vm5382 = vweird.f32 %v5376
  %vm5383 = vmor %vm5381, %vm5382
  %v5384 = vsel %vm5383, %v5376, %v5380
  %v5385 = vand.u32 2147483647, %v5375
  %vm5386 = vcmp.eq.f32.partialorder %v5385, 8.507059e+37
  %v5387 = vand.u32 %v5375, 2147483648
  %v5388 = vor.u32 1.1754944e-38, %v5387
  %v5389 = vsel %vm5386, %v5388, %v5384
  %v5390 = vmul.f32 1.0, %v5389
  %v5391 = vtanh.pop %v5351
  %v5392 = vxor.u32 %v5352, 2147483648
  %v5393 = vmul.f32 %v5392, 1.442695
  %v5394 = vpow.pop %v5393
  %v5395 = vadd.f32 %v5394, 1.0
  %v5396 = vrcp.pop %v5395
  %v5397 = vmul.f32 %v5395, %v5396
  %v5398 = vsub.f32 1.0, %v5397
  %v5399 = vmul.f32 %v5396, %v5398
  %v5400 = vadd.f32 %v5396, %v5399
  %vm5401 = vweird.f32 %v5395
  %vm5402 = vweird.f32 %v5396
  %vm5403 = vmor %vm5401, %vm5402
  %v5404 = vsel %vm5403, %v5396, %v5400
  %v5405 = vand.u32 2147483647, %v5395
  %vm5406 = vcmp.eq.f32.partialorder %v5405, 8.507059e+37
  %v5407 = vand.u32 %v5395, 2147483648
  %v5408 = vor.u32 1.1754944e-38, %v5407
  %v5409 = vsel %vm5406, %v5408, %v5404
  %v5410 = vmul.f32 1.0, %v5409
  %v5411 = vmul.f32 %v5390, %v4770
  %v5412 = vmul.f32 %v5371, %v5391
  %v5413 = vadd.f32 %v5411, %v5412
  %v5414 = vtanh.pop %v5413
  %v5415 = vmul.f32 %v5410, %v5414
  %v5416 = vmul.f32 %v1775, %v5415
  %s5417 = scalar_lea.vmem [#allocation5], 8
  %5418 = vst [vmem:[%s5417] sm:$0xff] %v5416
  %v5419 = vsub.f32 %v5415, %v4767
  %v5420 = vmul.f32 %v1775, %v5419
  %v5421 = vadd.f32 %v4767, %v5420
  %v5422 = vsub.f32 %v5413, %v4770
  %v5423 = vmul.f32 %v1775, %v5422
  %v5424 = vadd.f32 %v4770, %v5423
  %s5425 = smul.addr %s1118, 8
  %s5426 = scalar_lea.vmem [#allocation2], %s5425
  %v5427 = vld [vmem:[%s5426] sm:$0xff]
  %v5428 = vld [vmem:[%s5426 + $0x8] sm:$0xff]
  %v5429 = vld [vmem:[%s5426 + $0x10] sm:$0xff]
  %v5430 = vld [vmem:[%s5426 + $0x18] sm:$0xff]
  %v5431 = vpack.c.bf16 %v5094, %v5094
  %v5432 = vld [vmem:[%s6] sm:$0xff]
  %v5433 = vld [vmem:[%s6 + $0x8] sm:$0xff]
  %v5434 = vld [vmem:[%s6 + $0x10] sm:$0xff]
  %v5435 = vld [vmem:[%s6 + $0x18] sm:$0xff]
  %v5436 = vld [vmem:[%s6 + $0x20] sm:$0xff]
  %v5437 = vld [vmem:[%s6 + $0x28] sm:$0xff]
  %v5438 = vld [vmem:[%s6 + $0x30] sm:$0xff]
  %v5439 = vld [vmem:[%s6 + $0x38] sm:$0xff]
  %v5440 = vld [vmem:[%s6 + $0x40] sm:$0xff]
  %v5441 = vld [vmem:[%s6 + $0x48] sm:$0xff]
  %v5442 = vld [vmem:[%s6 + $0x50] sm:$0xff]
  %v5443 = vld [vmem:[%s6 + $0x58] sm:$0xff]
  %v5444 = vld [vmem:[%s6 + $0x60] sm:$0xff]
  %v5445 = vld [vmem:[%s6 + $0x68] sm:$0xff]
  %v5446 = vld [vmem:[%s6 + $0x70] sm:$0xff]
  %v5447 = vld [vmem:[%s6 + $0x78] sm:$0xff]
  %v5448 = vld [vmem:[%s6 + $0x80] sm:$0xff]
  %v5449 = vld [vmem:[%s6 + $0x88] sm:$0xff]
  %v5450 = vld [vmem:[%s6 + $0x90] sm:$0xff]
  %v5451 = vld [vmem:[%s6 + $0x98] sm:$0xff]
  %v5452 = vld [vmem:[%s6 + $0xa0] sm:$0xff]
  %v5453 = vld [vmem:[%s6 + $0xa8] sm:$0xff]
  %v5454 = vld [vmem:[%s6 + $0xb0] sm:$0xff]
  %v5455 = vld [vmem:[%s6 + $0xb8] sm:$0xff]
  %v5456 = vld [vmem:[%s6 + $0xc0] sm:$0xff]
  %v5457 = vld [vmem:[%s6 + $0xc8] sm:$0xff]
  %v5458 = vld [vmem:[%s6 + $0xd0] sm:$0xff]
  %v5459 = vld [vmem:[%s6 + $0xd8] sm:$0xff]
  %v5460 = vld [vmem:[%s6 + $0xe0] sm:$0xff]
  %v5461 = vld [vmem:[%s6 + $0xe8] sm:$0xff]
  %v5462 = vld [vmem:[%s6 + $0xf0] sm:$0xff]
  %v5463 = vld [vmem:[%s6 + $0xf8] sm:$0xff]
  %v5496 = vunpack.c.l.b16 %v5432
  %v5497 = vunpack.c.h.b16 %v5432
  %v5498 = vunpack.c.l.b16 %v5433
  %v5499 = vunpack.c.h.b16 %v5433
  %v5500 = vunpack.c.l.b16 %v5434
  %v5501 = vunpack.c.h.b16 %v5434
  %v5502 = vunpack.c.l.b16 %v5435
  %v5503 = vunpack.c.h.b16 %v5435
  %v5504 = vunpack.c.l.b16 %v5436
  %v5505 = vunpack.c.h.b16 %v5436
  %v5506 = vunpack.c.l.b16 %v5437
  %v5507 = vunpack.c.h.b16 %v5437
  %v5508 = vunpack.c.l.b16 %v5438
  %v5509 = vunpack.c.h.b16 %v5438
  %v5510 = vunpack.c.l.b16 %v5439
  %v5511 = vunpack.c.h.b16 %v5439
  %v5512 = vunpack.c.l.b16 %v5440
  %v5513 = vunpack.c.h.b16 %v5440
  %v5514 = vunpack.c.l.b16 %v5441
  %v5515 = vunpack.c.h.b16 %v5441
  %v5516 = vunpack.c.l.b16 %v5442
  %v5517 = vunpack.c.h.b16 %v5442
  %v5518 = vunpack.c.l.b16 %v5443
  %v5519 = vunpack.c.h.b16 %v5443
  %v5520 = vunpack.c.l.b16 %v5444
  %v5521 = vunpack.c.h.b16 %v5444
  %v5522 = vunpack.c.l.b16 %v5445
  %v5523 = vunpack.c.h.b16 %v5445
  %v5524 = vunpack.c.l.b16 %v5446
  %v5525 = vunpack.c.h.b16 %v5446
  %v5526 = vunpack.c.l.b16 %v5447
  %v5527 = vunpack.c.h.b16 %v5447
  %v5528 = vunpack.c.l.b16 %v5448
  %v5529 = vunpack.c.h.b16 %v5448
  %v5530 = vunpack.c.l.b16 %v5449
  %v5531 = vunpack.c.h.b16 %v5449
  %v5532 = vunpack.c.l.b16 %v5450
  %v5533 = vunpack.c.h.b16 %v5450
  %v5534 = vunpack.c.l.b16 %v5451
  %v5535 = vunpack.c.h.b16 %v5451
  %v5536 = vunpack.c.l.b16 %v5452
  %v5537 = vunpack.c.h.b16 %v5452
  %v5538 = vunpack.c.l.b16 %v5453
  %v5539 = vunpack.c.h.b16 %v5453
  %v5540 = vunpack.c.l.b16 %v5454
  %v5541 = vunpack.c.h.b16 %v5454
  %v5542 = vunpack.c.l.b16 %v5455
  %v5543 = vunpack.c.h.b16 %v5455
  %v5544 = vunpack.c.l.b16 %v5456
  %v5545 = vunpack.c.h.b16 %v5456
  %v5546 = vunpack.c.l.b16 %v5457
  %v5547 = vunpack.c.h.b16 %v5457
  %v5548 = vunpack.c.l.b16 %v5458
  %v5549 = vunpack.c.h.b16 %v5458
  %v5550 = vunpack.c.l.b16 %v5459
  %v5551 = vunpack.c.h.b16 %v5459
  %v5552 = vunpack.c.l.b16 %v5460
  %v5553 = vunpack.c.h.b16 %v5460
  %v5554 = vunpack.c.l.b16 %v5461
  %v5555 = vunpack.c.h.b16 %v5461
  %v5556 = vunpack.c.l.b16 %v5462
  %v5557 = vunpack.c.h.b16 %v5462
  %v5558 = vunpack.c.l.b16 %v5463
  %v5559 = vunpack.c.h.b16 %v5463
  %v5560 = vpack.c.b16 %v5500, %v5496
  %v5561 = vpack.c.b16 %v5501, %v5497
  %v5562 = vpack.c.b16 %v5502, %v5498
  %v5563 = vpack.c.b16 %v5503, %v5499
  %v5564 = vpack.c.b16 %v5508, %v5504
  %v5565 = vpack.c.b16 %v5509, %v5505
  %v5566 = vpack.c.b16 %v5510, %v5506
  %v5567 = vpack.c.b16 %v5511, %v5507
  %v5568 = vpack.c.b16 %v5516, %v5512
  %v5569 = vpack.c.b16 %v5517, %v5513
  %v5570 = vpack.c.b16 %v5518, %v5514
  %v5571 = vpack.c.b16 %v5519, %v5515
  %v5572 = vpack.c.b16 %v5524, %v5520
  %v5573 = vpack.c.b16 %v5525, %v5521
  %v5574 = vpack.c.b16 %v5526, %v5522
  %v5575 = vpack.c.b16 %v5527, %v5523
  %v5576 = vpack.c.b16 %v5532, %v5528
  %v5577 = vpack.c.b16 %v5533, %v5529
  %v5578 = vpack.c.b16 %v5534, %v5530
  %v5579 = vpack.c.b16 %v5535, %v5531
  %v5580 = vpack.c.b16 %v5540, %v5536
  %v5581 = vpack.c.b16 %v5541, %v5537
  %v5582 = vpack.c.b16 %v5542, %v5538
  %v5583 = vpack.c.b16 %v5543, %v5539
  %v5584 = vpack.c.b16 %v5548, %v5544
  %v5585 = vpack.c.b16 %v5549, %v5545
  %v5586 = vpack.c.b16 %v5550, %v5546
  %v5587 = vpack.c.b16 %v5551, %v5547
  %v5588 = vpack.c.b16 %v5556, %v5552
  %v5589 = vpack.c.b16 %v5557, %v5553
  %v5590 = vpack.c.b16 %v5558, %v5554
  %v5591 = vpack.c.b16 %v5559, %v5555
  %5624 = vmatpush.bf16.msra.mxu0 %v5588
  %5625 = vmatpush.bf16.msra.mxu0 %v5584
  %5626 = vmatpush.bf16.msra.mxu0 %v5580
  %5627 = vmatpush.bf16.msra.mxu0 %v5576
  %5628 = vmatpush.bf16.msra.mxu0 %v5572
  %5629 = vmatpush.bf16.msra.mxu0 %v5568
  %5630 = vmatpush.bf16.msra.mxu0 %v5564
  %5631 = vmatpush.bf16.msra.mxu0 %v5560
  %5632 = vmatmul.bf16.gmra.mxu0 %v5431
  %v5633 = vpop.f32.mrf.mxu0
  %v5634 = vadd.f32 0.0, %v5633
  %v5635 = vpop.f32.mrf.mxu0
  %5636 = vdwg.mxu0
  %5637 = vmatpush.bf16.msra.mxu0 %v5589
  %5638 = vmatpush.bf16.msra.mxu0 %v5585
  %5639 = vmatpush.bf16.msra.mxu0 %v5581
  %5640 = vmatpush.bf16.msra.mxu0 %v5577
  %5641 = vmatpush.bf16.msra.mxu0 %v5573
  %5642 = vmatpush.bf16.msra.mxu0 %v5569
  %5643 = vmatpush.bf16.msra.mxu0 %v5565
  %5644 = vmatpush.bf16.msra.mxu0 %v5561
  %5645 = vmatmul.bf16.gmra.mxu0 %v5431
  %v5646 = vpop.f32.mrf.mxu0
  %v5647 = vadd.f32 0.0, %v5646
  %v5648 = vpop.f32.mrf.mxu0
  %5649 = vdwg.mxu0
  %5650 = vmatpush.bf16.msra.mxu0 %v5590
  %5651 = vmatpush.bf16.msra.mxu0 %v5586
  %5652 = vmatpush.bf16.msra.mxu0 %v5582
  %5653 = vmatpush.bf16.msra.mxu0 %v5578
  %5654 = vmatpush.bf16.msra.mxu0 %v5574
  %5655 = vmatpush.bf16.msra.mxu0 %v5570
  %5656 = vmatpush.bf16.msra.mxu0 %v5566
  %5657 = vmatpush.bf16.msra.mxu0 %v5562
  %5658 = vmatmul.bf16.gmra.mxu0 %v5431
  %v5659 = vpop.f32.mrf.mxu0
  %v5660 = vadd.f32 0.0, %v5659
  %v5661 = vpop.f32.mrf.mxu0
  %5662 = vdwg.mxu0
  %5663 = vmatpush.bf16.msra.mxu0 %v5591
  %5664 = vmatpush.bf16.msra.mxu0 %v5587
  %5665 = vmatpush.bf16.msra.mxu0 %v5583
  %5666 = vmatpush.bf16.msra.mxu0 %v5579
  %5667 = vmatpush.bf16.msra.mxu0 %v5575
  %5668 = vmatpush.bf16.msra.mxu0 %v5571
  %5669 = vmatpush.bf16.msra.mxu0 %v5567
  %5670 = vmatpush.bf16.msra.mxu0 %v5563
  %5671 = vmatmul.bf16.gmra.mxu0 %v5431
  %v5672 = vpop.f32.mrf.mxu0
  %v5673 = vadd.f32 0.0, %v5672
  %v5674 = vpop.f32.mrf.mxu0
  %5675 = vdwg.mxu0
  %v5676 = vadd.f32 %v5427, %v5634
  %v5677 = vadd.f32 %v5428, %v5647
  %v5678 = vadd.f32 %v5429, %v5660
  %v5679 = vadd.f32 %v5430, %v5673
  %v5680 = vxor.u32 %v5676, 2147483648
  %v5681 = vmul.f32 %v5680, 1.442695
  %v5682 = vpow.pop %v5681
  %v5683 = vadd.f32 %v5682, 1.0
  %v5684 = vrcp.pop %v5683
  %v5685 = vmul.f32 %v5683, %v5684
  %v5686 = vsub.f32 1.0, %v5685
  %v5687 = vmul.f32 %v5684, %v5686
  %v5688 = vadd.f32 %v5684, %v5687
  %vm5689 = vweird.f32 %v5683
  %vm5690 = vweird.f32 %v5684
  %vm5691 = vmor %vm5689, %vm5690
  %v5692 = vsel %vm5691, %v5684, %v5688
  %v5693 = vand.u32 2147483647, %v5683
  %vm5694 = vcmp.eq.f32.partialorder %v5693, 8.507059e+37
  %v5695 = vand.u32 %v5683, 2147483648
  %v5696 = vor.u32 1.1754944e-38, %v5695
  %v5697 = vsel %vm5694, %v5696, %v5692
  %v5698 = vmul.f32 1.0, %v5697
  %v5699 = vxor.u32 %v5677, 2147483648
  %v5700 = vmul.f32 %v5699, 1.442695
  %v5701 = vpow.pop %v5700
  %v5702 = vadd.f32 %v5701, 1.0
  %v5703 = vrcp.pop %v5702
  %v5704 = vmul.f32 %v5702, %v5703
  %v5705 = vsub.f32 1.0, %v5704
  %v5706 = vmul.f32 %v5703, %v5705
  %v5707 = vadd.f32 %v5703, %v5706
  %vm5708 = vweird.f32 %v5702
  %vm5709 = vweird.f32 %v5703
  %vm5710 = vmor %vm5708, %vm5709
  %v5711 = vsel %vm5710, %v5703, %v5707
  %v5712 = vand.u32 2147483647, %v5702
  %vm5713 = vcmp.eq.f32.partialorder %v5712, 8.507059e+37
  %v5714 = vand.u32 %v5702, 2147483648
  %v5715 = vor.u32 1.1754944e-38, %v5714
  %v5716 = vsel %vm5713, %v5715, %v5711
  %v5717 = vmul.f32 1.0, %v5716
  %v5718 = vtanh.pop %v5678
  %v5719 = vxor.u32 %v5679, 2147483648
  %v5720 = vmul.f32 %v5719, 1.442695
  %v5721 = vpow.pop %v5720
  %v5722 = vadd.f32 %v5721, 1.0
  %v5723 = vrcp.pop %v5722
  %v5724 = vmul.f32 %v5722, %v5723
  %v5725 = vsub.f32 1.0, %v5724
  %v5726 = vmul.f32 %v5723, %v5725
  %v5727 = vadd.f32 %v5723, %v5726
  %vm5728 = vweird.f32 %v5722
  %vm5729 = vweird.f32 %v5723
  %vm5730 = vmor %vm5728, %vm5729
  %v5731 = vsel %vm5730, %v5723, %v5727
  %v5732 = vand.u32 2147483647, %v5722
  %vm5733 = vcmp.eq.f32.partialorder %v5732, 8.507059e+37
  %v5734 = vand.u32 %v5722, 2147483648
  %v5735 = vor.u32 1.1754944e-38, %v5734
  %v5736 = vsel %vm5733, %v5735, %v5731
  %v5737 = vmul.f32 1.0, %v5736
  %v5738 = vmul.f32 %v5717, %v5097
  %v5739 = vmul.f32 %v5698, %v5718
  %v5740 = vadd.f32 %v5738, %v5739
  %v5741 = vtanh.pop %v5740
  %v5742 = vmul.f32 %v5737, %v5741
  %v5743 = vmul.f32 %v1439, %v5742
  %s5744 = scalar_lea.vmem [#allocation4], 56
  %5745 = vst [vmem:[%s5744] sm:$0xff] %v5743
  %v5746 = vsub.f32 %v5742, %v5094
  %v5747 = vmul.f32 %v1439, %v5746
  %v5748 = vadd.f32 %v5094, %v5747
  %v5749 = vsub.f32 %v5740, %v5097
  %v5750 = vmul.f32 %v1439, %v5749
  %v5751 = vadd.f32 %v5097, %v5750
  %s5752 = smul.addr %s790, 8
  %s5753 = scalar_lea.vmem [#allocation3], %s5752
  %v5754 = vld [vmem:[%s5753] sm:$0xff]
  %v5755 = vld [vmem:[%s5753 + $0x8] sm:$0xff]
  %v5756 = vld [vmem:[%s5753 + $0x10] sm:$0xff]
  %v5757 = vld [vmem:[%s5753 + $0x18] sm:$0xff]
  %v5758 = vpack.c.bf16 %v5421, %v5421
  %v5759 = vld [vmem:[%s7] sm:$0xff]
  %v5760 = vld [vmem:[%s7 + $0x8] sm:$0xff]
  %v5761 = vld [vmem:[%s7 + $0x10] sm:$0xff]
  %v5762 = vld [vmem:[%s7 + $0x18] sm:$0xff]
  %v5763 = vld [vmem:[%s7 + $0x20] sm:$0xff]
  %v5764 = vld [vmem:[%s7 + $0x28] sm:$0xff]
  %v5765 = vld [vmem:[%s7 + $0x30] sm:$0xff]
  %v5766 = vld [vmem:[%s7 + $0x38] sm:$0xff]
  %v5767 = vld [vmem:[%s7 + $0x40] sm:$0xff]
  %v5768 = vld [vmem:[%s7 + $0x48] sm:$0xff]
  %v5769 = vld [vmem:[%s7 + $0x50] sm:$0xff]
  %v5770 = vld [vmem:[%s7 + $0x58] sm:$0xff]
  %v5771 = vld [vmem:[%s7 + $0x60] sm:$0xff]
  %v5772 = vld [vmem:[%s7 + $0x68] sm:$0xff]
  %v5773 = vld [vmem:[%s7 + $0x70] sm:$0xff]
  %v5774 = vld [vmem:[%s7 + $0x78] sm:$0xff]
  %v5775 = vld [vmem:[%s7 + $0x80] sm:$0xff]
  %v5776 = vld [vmem:[%s7 + $0x88] sm:$0xff]
  %v5777 = vld [vmem:[%s7 + $0x90] sm:$0xff]
  %v5778 = vld [vmem:[%s7 + $0x98] sm:$0xff]
  %v5779 = vld [vmem:[%s7 + $0xa0] sm:$0xff]
  %v5780 = vld [vmem:[%s7 + $0xa8] sm:$0xff]
  %v5781 = vld [vmem:[%s7 + $0xb0] sm:$0xff]
  %v5782 = vld [vmem:[%s7 + $0xb8] sm:$0xff]
  %v5783 = vld [vmem:[%s7 + $0xc0] sm:$0xff]
  %v5784 = vld [vmem:[%s7 + $0xc8] sm:$0xff]
  %v5785 = vld [vmem:[%s7 + $0xd0] sm:$0xff]
  %v5786 = vld [vmem:[%s7 + $0xd8] sm:$0xff]
  %v5787 = vld [vmem:[%s7 + $0xe0] sm:$0xff]
  %v5788 = vld [vmem:[%s7 + $0xe8] sm:$0xff]
  %v5789 = vld [vmem:[%s7 + $0xf0] sm:$0xff]
  %v5790 = vld [vmem:[%s7 + $0xf8] sm:$0xff]
  %v5823 = vunpack.c.l.b16 %v5759
  %v5824 = vunpack.c.h.b16 %v5759
  %v5825 = vunpack.c.l.b16 %v5760
  %v5826 = vunpack.c.h.b16 %v5760
  %v5827 = vunpack.c.l.b16 %v5761
  %v5828 = vunpack.c.h.b16 %v5761
  %v5829 = vunpack.c.l.b16 %v5762
  %v5830 = vunpack.c.h.b16 %v5762
  %v5831 = vunpack.c.l.b16 %v5763
  %v5832 = vunpack.c.h.b16 %v5763
  %v5833 = vunpack.c.l.b16 %v5764
  %v5834 = vunpack.c.h.b16 %v5764
  %v5835 = vunpack.c.l.b16 %v5765
  %v5836 = vunpack.c.h.b16 %v5765
  %v5837 = vunpack.c.l.b16 %v5766
  %v5838 = vunpack.c.h.b16 %v5766
  %v5839 = vunpack.c.l.b16 %v5767
  %v5840 = vunpack.c.h.b16 %v5767
  %v5841 = vunpack.c.l.b16 %v5768
  %v5842 = vunpack.c.h.b16 %v5768
  %v5843 = vunpack.c.l.b16 %v5769
  %v5844 = vunpack.c.h.b16 %v5769
  %v5845 = vunpack.c.l.b16 %v5770
  %v5846 = vunpack.c.h.b16 %v5770
  %v5847 = vunpack.c.l.b16 %v5771
  %v5848 = vunpack.c.h.b16 %v5771
  %v5849 = vunpack.c.l.b16 %v5772
  %v5850 = vunpack.c.h.b16 %v5772
  %v5851 = vunpack.c.l.b16 %v5773
  %v5852 = vunpack.c.h.b16 %v5773
  %v5853 = vunpack.c.l.b16 %v5774
  %v5854 = vunpack.c.h.b16 %v5774
  %v5855 = vunpack.c.l.b16 %v5775
  %v5856 = vunpack.c.h.b16 %v5775
  %v5857 = vunpack.c.l.b16 %v5776
  %v5858 = vunpack.c.h.b16 %v5776
  %v5859 = vunpack.c.l.b16 %v5777
  %v5860 = vunpack.c.h.b16 %v5777
  %v5861 = vunpack.c.l.b16 %v5778
  %v5862 = vunpack.c.h.b16 %v5778
  %v5863 = vunpack.c.l.b16 %v5779
  %v5864 = vunpack.c.h.b16 %v5779
  %v5865 = vunpack.c.l.b16 %v5780
  %v5866 = vunpack.c.h.b16 %v5780
  %v5867 = vunpack.c.l.b16 %v5781
  %v5868 = vunpack.c.h.b16 %v5781
  %v5869 = vunpack.c.l.b16 %v5782
  %v5870 = vunpack.c.h.b16 %v5782
  %v5871 = vunpack.c.l.b16 %v5783
  %v5872 = vunpack.c.h.b16 %v5783
  %v5873 = vunpack.c.l.b16 %v5784
  %v5874 = vunpack.c.h.b16 %v5784
  %v5875 = vunpack.c.l.b16 %v5785
  %v5876 = vunpack.c.h.b16 %v5785
  %v5877 = vunpack.c.l.b16 %v5786
  %v5878 = vunpack.c.h.b16 %v5786
  %v5879 = vunpack.c.l.b16 %v5787
  %v5880 = vunpack.c.h.b16 %v5787
  %v5881 = vunpack.c.l.b16 %v5788
  %v5882 = vunpack.c.h.b16 %v5788
  %v5883 = vunpack.c.l.b16 %v5789
  %v5884 = vunpack.c.h.b16 %v5789
  %v5885 = vunpack.c.l.b16 %v5790
  %v5886 = vunpack.c.h.b16 %v5790
  %v5887 = vpack.c.b16 %v5827, %v5823
  %v5888 = vpack.c.b16 %v5828, %v5824
  %v5889 = vpack.c.b16 %v5829, %v5825
  %v5890 = vpack.c.b16 %v5830, %v5826
  %v5891 = vpack.c.b16 %v5835, %v5831
  %v5892 = vpack.c.b16 %v5836, %v5832
  %v5893 = vpack.c.b16 %v5837, %v5833
  %v5894 = vpack.c.b16 %v5838, %v5834
  %v5895 = vpack.c.b16 %v5843, %v5839
  %v5896 = vpack.c.b16 %v5844, %v5840
  %v5897 = vpack.c.b16 %v5845, %v5841
  %v5898 = vpack.c.b16 %v5846, %v5842
  %v5899 = vpack.c.b16 %v5851, %v5847
  %v5900 = vpack.c.b16 %v5852, %v5848
  %v5901 = vpack.c.b16 %v5853, %v5849
  %v5902 = vpack.c.b16 %v5854, %v5850
  %v5903 = vpack.c.b16 %v5859, %v5855
  %v5904 = vpack.c.b16 %v5860, %v5856
  %v5905 = vpack.c.b16 %v5861, %v5857
  %v5906 = vpack.c.b16 %v5862, %v5858
  %v5907 = vpack.c.b16 %v5867, %v5863
  %v5908 = vpack.c.b16 %v5868, %v5864
  %v5909 = vpack.c.b16 %v5869, %v5865
  %v5910 = vpack.c.b16 %v5870, %v5866
  %v5911 = vpack.c.b16 %v5875, %v5871
  %v5912 = vpack.c.b16 %v5876, %v5872
  %v5913 = vpack.c.b16 %v5877, %v5873
  %v5914 = vpack.c.b16 %v5878, %v5874
  %v5915 = vpack.c.b16 %v5883, %v5879
  %v5916 = vpack.c.b16 %v5884, %v5880
  %v5917 = vpack.c.b16 %v5885, %v5881
  %v5918 = vpack.c.b16 %v5886, %v5882
  %5951 = vmatpush.bf16.msra.mxu0 %v5915
  %5952 = vmatpush.bf16.msra.mxu0 %v5911
  %5953 = vmatpush.bf16.msra.mxu0 %v5907
  %5954 = vmatpush.bf16.msra.mxu0 %v5903
  %5955 = vmatpush.bf16.msra.mxu0 %v5899
  %5956 = vmatpush.bf16.msra.mxu0 %v5895
  %5957 = vmatpush.bf16.msra.mxu0 %v5891
  %5958 = vmatpush.bf16.msra.mxu0 %v5887
  %5959 = vmatmul.bf16.gmra.mxu0 %v5758
  %v5960 = vpop.f32.mrf.mxu0
  %v5961 = vadd.f32 0.0, %v5960
  %v5962 = vpop.f32.mrf.mxu0
  %5963 = vdwg.mxu0
  %5964 = vmatpush.bf16.msra.mxu0 %v5916
  %5965 = vmatpush.bf16.msra.mxu0 %v5912
  %5966 = vmatpush.bf16.msra.mxu0 %v5908
  %5967 = vmatpush.bf16.msra.mxu0 %v5904
  %5968 = vmatpush.bf16.msra.mxu0 %v5900
  %5969 = vmatpush.bf16.msra.mxu0 %v5896
  %5970 = vmatpush.bf16.msra.mxu0 %v5892
  %5971 = vmatpush.bf16.msra.mxu0 %v5888
  %5972 = vmatmul.bf16.gmra.mxu0 %v5758
  %v5973 = vpop.f32.mrf.mxu0
  %v5974 = vadd.f32 0.0, %v5973
  %v5975 = vpop.f32.mrf.mxu0
  %5976 = vdwg.mxu0
  %5977 = vmatpush.bf16.msra.mxu0 %v5917
  %5978 = vmatpush.bf16.msra.mxu0 %v5913
  %5979 = vmatpush.bf16.msra.mxu0 %v5909
  %5980 = vmatpush.bf16.msra.mxu0 %v5905
  %5981 = vmatpush.bf16.msra.mxu0 %v5901
  %5982 = vmatpush.bf16.msra.mxu0 %v5897
  %5983 = vmatpush.bf16.msra.mxu0 %v5893
  %5984 = vmatpush.bf16.msra.mxu0 %v5889
  %5985 = vmatmul.bf16.gmra.mxu0 %v5758
  %v5986 = vpop.f32.mrf.mxu0
  %v5987 = vadd.f32 0.0, %v5986
  %v5988 = vpop.f32.mrf.mxu0
  %5989 = vdwg.mxu0
  %5990 = vmatpush.bf16.msra.mxu0 %v5918
  %5991 = vmatpush.bf16.msra.mxu0 %v5914
  %5992 = vmatpush.bf16.msra.mxu0 %v5910
  %5993 = vmatpush.bf16.msra.mxu0 %v5906
  %5994 = vmatpush.bf16.msra.mxu0 %v5902
  %5995 = vmatpush.bf16.msra.mxu0 %v5898
  %5996 = vmatpush.bf16.msra.mxu0 %v5894
  %5997 = vmatpush.bf16.msra.mxu0 %v5890
  %5998 = vmatmul.bf16.gmra.mxu0 %v5758
  %v5999 = vpop.f32.mrf.mxu0
  %v6000 = vadd.f32 0.0, %v5999
  %v6001 = vpop.f32.mrf.mxu0
  %6002 = vdwg.mxu0
  %v6003 = vadd.f32 %v5754, %v5961
  %v6004 = vadd.f32 %v5755, %v5974
  %v6005 = vadd.f32 %v5756, %v5987
  %v6006 = vadd.f32 %v5757, %v6000
  %v6007 = vxor.u32 %v6003, 2147483648
  %v6008 = vmul.f32 %v6007, 1.442695
  %v6009 = vpow.pop %v6008
  %v6010 = vadd.f32 %v6009, 1.0
  %v6011 = vrcp.pop %v6010
  %v6012 = vmul.f32 %v6010, %v6011
  %v6013 = vsub.f32 1.0, %v6012
  %v6014 = vmul.f32 %v6011, %v6013
  %v6015 = vadd.f32 %v6011, %v6014
  %vm6016 = vweird.f32 %v6010
  %vm6017 = vweird.f32 %v6011
  %vm6018 = vmor %vm6016, %vm6017
  %v6019 = vsel %vm6018, %v6011, %v6015
  %v6020 = vand.u32 2147483647, %v6010
  %vm6021 = vcmp.eq.f32.partialorder %v6020, 8.507059e+37
  %v6022 = vand.u32 %v6010, 2147483648
  %v6023 = vor.u32 1.1754944e-38, %v6022
  %v6024 = vsel %vm6021, %v6023, %v6019
  %v6025 = vmul.f32 1.0, %v6024
  %v6026 = vxor.u32 %v6004, 2147483648
  %v6027 = vmul.f32 %v6026, 1.442695
  %v6028 = vpow.pop %v6027
  %v6029 = vadd.f32 %v6028, 1.0
  %v6030 = vrcp.pop %v6029
  %v6031 = vmul.f32 %v6029, %v6030
  %v6032 = vsub.f32 1.0, %v6031
  %v6033 = vmul.f32 %v6030, %v6032
  %v6034 = vadd.f32 %v6030, %v6033
  %vm6035 = vweird.f32 %v6029
  %vm6036 = vweird.f32 %v6030
  %vm6037 = vmor %vm6035, %vm6036
  %v6038 = vsel %vm6037, %v6030, %v6034
  %v6039 = vand.u32 2147483647, %v6029
  %vm6040 = vcmp.eq.f32.partialorder %v6039, 8.507059e+37
  %v6041 = vand.u32 %v6029, 2147483648
  %v6042 = vor.u32 1.1754944e-38, %v6041
  %v6043 = vsel %vm6040, %v6042, %v6038
  %v6044 = vmul.f32 1.0, %v6043
  %v6045 = vtanh.pop %v6005
  %v6046 = vxor.u32 %v6006, 2147483648
  %v6047 = vmul.f32 %v6046, 1.442695
  %v6048 = vpow.pop %v6047
  %v6049 = vadd.f32 %v6048, 1.0
  %v6050 = vrcp.pop %v6049
  %v6051 = vmul.f32 %v6049, %v6050
  %v6052 = vsub.f32 1.0, %v6051
  %v6053 = vmul.f32 %v6050, %v6052
  %v6054 = vadd.f32 %v6050, %v6053
  %vm6055 = vweird.f32 %v6049
  %vm6056 = vweird.f32 %v6050
  %vm6057 = vmor %vm6055, %vm6056
  %v6058 = vsel %vm6057, %v6050, %v6054
  %v6059 = vand.u32 2147483647, %v6049
  %vm6060 = vcmp.eq.f32.partialorder %v6059, 8.507059e+37
  %v6061 = vand.u32 %v6049, 2147483648
  %v6062 = vor.u32 1.1754944e-38, %v6061
  %v6063 = vsel %vm6060, %v6062, %v6058
  %v6064 = vmul.f32 1.0, %v6063
  %v6065 = vmul.f32 %v6044, %v5424
  %v6066 = vmul.f32 %v6025, %v6045
  %v6067 = vadd.f32 %v6065, %v6066
  %v6068 = vtanh.pop %v6067
  %v6069 = vmul.f32 %v6064, %v6068
  %v6070 = vmul.f32 %v1111, %v6069
  %6071 = vst [vmem:[#allocation5] sm:$0xff] %v6070
  %v6072 = vsub.f32 %v6069, %v5421
  %v6073 = vmul.f32 %v1111, %v6072
  %v6074 = vadd.f32 %v5421, %v6073
  %v6075 = vsub.f32 %v6067, %v5424
  %v6076 = vmul.f32 %v1111, %v6075
  %v6077 = vadd.f32 %v5424, %v6076
  %v6078 = vld [vmem:[#allocation4] sm:$0xff]
  %v6079 = vld [vmem:[#allocation4 + $0x8] sm:$0xff]
  %v6080 = vld [vmem:[#allocation4 + $0x10] sm:$0xff]
  %v6081 = vld [vmem:[#allocation4 + $0x18] sm:$0xff]
  %v6082 = vld [vmem:[#allocation4 + $0x20] sm:$0xff]
  %v6083 = vld [vmem:[#allocation4 + $0x28] sm:$0xff]
  %v6084 = vld [vmem:[#allocation4 + $0x30] sm:$0xff]
  %v6085 = vld [vmem:[#allocation4 + $0x38] sm:$0xff]
  %v6086 = vpack.c.bf16 %v6079, %v6078
  %v6087 = vpack.c.bf16 %v6081, %v6080
  %v6088 = vpack.c.bf16 %v6083, %v6082
  %v6089 = vpack.c.bf16 %v6085, %v6084
  %v6090 = vld [vmem:[%s8] sm:$0xf]
  %v6091 = vld [vmem:[%s8 + $0x4] sm:$0xf]
  %v6092 = vld [vmem:[%s8 + $0x8] sm:$0xf]
  %v6093 = vld [vmem:[%s8 + $0xc] sm:$0xf]
  %v6094 = vld [vmem:[%s8 + $0x10] sm:$0xf]
  %v6095 = vld [vmem:[%s8 + $0x14] sm:$0xf]
  %v6096 = vld [vmem:[%s8 + $0x18] sm:$0xf]
  %v6097 = vld [vmem:[%s8 + $0x1c] sm:$0xf]
  %v6098 = vld [vmem:[%s8 + $0x20] sm:$0xf]
  %v6099 = vld [vmem:[%s8 + $0x24] sm:$0xf]
  %v6100 = vld [vmem:[%s8 + $0x28] sm:$0xf]
  %v6101 = vld [vmem:[%s8 + $0x2c] sm:$0xf]
  %v6102 = vld [vmem:[%s8 + $0x30] sm:$0xf]
  %v6103 = vld [vmem:[%s8 + $0x34] sm:$0xf]
  %v6104 = vld [vmem:[%s8 + $0x38] sm:$0xf]
  %v6105 = vld [vmem:[%s8 + $0x3c] sm:$0xf]
  %v6106 = vld [vmem:[#allocation5] sm:$0xff]
  %v6107 = vld [vmem:[#allocation5 + $0x8] sm:$0xff]
  %v6108 = vld [vmem:[#allocation5 + $0x10] sm:$0xff]
  %v6109 = vld [vmem:[#allocation5 + $0x18] sm:$0xff]
  %v6110 = vld [vmem:[#allocation5 + $0x20] sm:$0xff]
  %v6111 = vld [vmem:[#allocation5 + $0x28] sm:$0xff]
  %v6112 = vld [vmem:[#allocation5 + $0x30] sm:$0xff]
  %v6113 = vld [vmem:[#allocation5 + $0x38] sm:$0xff]
  %v6114 = vpack.c.bf16 %v6107, %v6106
  %v6115 = vpack.c.bf16 %v6109, %v6108
  %v6116 = vpack.c.bf16 %v6111, %v6110
  %v6117 = vpack.c.bf16 %v6113, %v6112
  %v6118 = vld [vmem:[%s9] sm:$0xf]
  %v6119 = vld [vmem:[%s9 + $0x4] sm:$0xf]
  %v6120 = vld [vmem:[%s9 + $0x8] sm:$0xf]
  %v6121 = vld [vmem:[%s9 + $0xc] sm:$0xf]
  %v6122 = vld [vmem:[%s9 + $0x10] sm:$0xf]
  %v6123 = vld [vmem:[%s9 + $0x14] sm:$0xf]
  %v6124 = vld [vmem:[%s9 + $0x18] sm:$0xf]
  %v6125 = vld [vmem:[%s9 + $0x1c] sm:$0xf]
  %v6126 = vld [vmem:[%s9 + $0x20] sm:$0xf]
  %v6127 = vld [vmem:[%s9 + $0x24] sm:$0xf]
  %v6128 = vld [vmem:[%s9 + $0x28] sm:$0xf]
  %v6129 = vld [vmem:[%s9 + $0x2c] sm:$0xf]
  %v6130 = vld [vmem:[%s9 + $0x30] sm:$0xf]
  %v6131 = vld [vmem:[%s9 + $0x34] sm:$0xf]
  %v6132 = vld [vmem:[%s9 + $0x38] sm:$0xf]
  %v6133 = vld [vmem:[%s9 + $0x3c] sm:$0xf]
  %v6150 = vunpack.c.l.b16 %v6118
  %v6151 = vunpack.c.l.b16 %v6119
  %v6152 = vunpack.c.l.b16 %v6120
  %v6153 = vunpack.c.l.b16 %v6121
  %v6154 = vunpack.c.l.b16 %v6122
  %v6155 = vunpack.c.l.b16 %v6123
  %v6156 = vunpack.c.l.b16 %v6124
  %v6157 = vunpack.c.l.b16 %v6125
  %v6158 = vunpack.c.l.b16 %v6126
  %v6159 = vunpack.c.l.b16 %v6127
  %v6160 = vunpack.c.l.b16 %v6128
  %v6161 = vunpack.c.l.b16 %v6129
  %v6162 = vunpack.c.l.b16 %v6130
  %v6163 = vunpack.c.l.b16 %v6131
  %v6164 = vunpack.c.l.b16 %v6132
  %v6165 = vunpack.c.l.b16 %v6133
  %v6166 = vpack.c.b16 %v6151, %v6150
  %v6167 = vpack.c.b16 %v6153, %v6152
  %v6168 = vpack.c.b16 %v6155, %v6154
  %v6169 = vpack.c.b16 %v6157, %v6156
  %v6170 = vpack.c.b16 %v6159, %v6158
  %v6171 = vpack.c.b16 %v6161, %v6160
  %v6172 = vpack.c.b16 %v6163, %v6162
  %v6173 = vpack.c.b16 %v6165, %v6164
  %6182 = vmatpush.bf16.msra.mxu0 %v6173
  %6183 = vmatpush.bf16.msra.mxu0 %v6172
  %6184 = vmatpush.bf16.msra.mxu0 %v6171
  %6185 = vmatpush.bf16.msra.mxu0 %v6170
  %6186 = vmatpush.bf16.msra.mxu0 %v6169
  %6187 = vmatpush.bf16.msra.mxu0 %v6168
  %6188 = vmatpush.bf16.msra.mxu0 %v6167
  %6189 = vmatpush.bf16.msra.mxu0 %v6166
  %6190 = vmatmul.bf16.gmra.mxu0 %v6114
  %v6191 = vpop.f32.mrf.mxu0
  %v6192 = vadd.f32 0.0, %v6191
  %v6193 = vpop.f32.mrf.mxu0
  %v6194 = vadd.f32 0.0, %v6193
  %6195 = vmatmul.bf16.gmra.mxu0 %v6115
  %v6196 = vpop.f32.mrf.mxu0
  %v6197 = vadd.f32 0.0, %v6196
  %v6198 = vpop.f32.mrf.mxu0
  %v6199 = vadd.f32 0.0, %v6198
  %6200 = vmatmul.bf16.gmra.mxu0 %v6116
  %v6201 = vpop.f32.mrf.mxu0
  %v6202 = vadd.f32 0.0, %v6201
  %v6203 = vpop.f32.mrf.mxu0
  %v6204 = vadd.f32 0.0, %v6203
  %6205 = vmatmul.bf16.gmra.mxu0 %v6117
  %v6206 = vpop.f32.mrf.mxu0
  %v6207 = vadd.f32 0.0, %v6206
  %v6208 = vpop.f32.mrf.mxu0
  %v6209 = vadd.f32 0.0, %v6208
  %6210 = vdwg.mxu0
  %v6227 = vunpack.c.l.b16 %v6090
  %v6228 = vunpack.c.l.b16 %v6091
  %v6229 = vunpack.c.l.b16 %v6092
  %v6230 = vunpack.c.l.b16 %v6093
  %v6231 = vunpack.c.l.b16 %v6094
  %v6232 = vunpack.c.l.b16 %v6095
  %v6233 = vunpack.c.l.b16 %v6096
  %v6234 = vunpack.c.l.b16 %v6097
  %v6235 = vunpack.c.l.b16 %v6098
  %v6236 = vunpack.c.l.b16 %v6099
  %v6237 = vunpack.c.l.b16 %v6100
  %v6238 = vunpack.c.l.b16 %v6101
  %v6239 = vunpack.c.l.b16 %v6102
  %v6240 = vunpack.c.l.b16 %v6103
  %v6241 = vunpack.c.l.b16 %v6104
  %v6242 = vunpack.c.l.b16 %v6105
  %v6243 = vpack.c.b16 %v6228, %v6227
  %v6244 = vpack.c.b16 %v6230, %v6229
  %v6245 = vpack.c.b16 %v6232, %v6231
  %v6246 = vpack.c.b16 %v6234, %v6233
  %v6247 = vpack.c.b16 %v6236, %v6235
  %v6248 = vpack.c.b16 %v6238, %v6237
  %v6249 = vpack.c.b16 %v6240, %v6239
  %v6250 = vpack.c.b16 %v6242, %v6241
  %6259 = vmatpush.bf16.msra.mxu0 %v6250
  %6260 = vmatpush.bf16.msra.mxu0 %v6249
  %6261 = vmatpush.bf16.msra.mxu0 %v6248
  %6262 = vmatpush.bf16.msra.mxu0 %v6247
  %6263 = vmatpush.bf16.msra.mxu0 %v6246
  %6264 = vmatpush.bf16.msra.mxu0 %v6245
  %6265 = vmatpush.bf16.msra.mxu0 %v6244
  %6266 = vmatpush.bf16.msra.mxu0 %v6243
  %6267 = vmatmul.bf16.gmra.mxu0 %v6086
  %v6268 = vpop.f32.mrf.mxu0
  %v6269 = vadd.f32 %v6192, %v6268
  %v6270 = vpop.f32.mrf.mxu0
  %v6271 = vadd.f32 %v6194, %v6270
  %6272 = vmatmul.bf16.gmra.mxu0 %v6087
  %v6273 = vpop.f32.mrf.mxu0
  %v6274 = vadd.f32 %v6197, %v6273
  %v6275 = vpop.f32.mrf.mxu0
  %v6276 = vadd.f32 %v6199, %v6275
  %6277 = vmatmul.bf16.gmra.mxu0 %v6088
  %v6278 = vpop.f32.mrf.mxu0
  %v6279 = vadd.f32 %v6202, %v6278
  %v6280 = vpop.f32.mrf.mxu0
  %v6281 = vadd.f32 %v6204, %v6280
  %6282 = vmatmul.bf16.gmra.mxu0 %v6089
  %v6283 = vpop.f32.mrf.mxu0
  %v6284 = vadd.f32 %v6207, %v6283
  %v6285 = vpop.f32.mrf.mxu0
  %v6286 = vadd.f32 %v6209, %v6285
  %6287 = vdwg.mxu0
  %6288 = vst [vmem:[%s14] sm:$0xff] %v6269
  %6289 = vst [vmem:[%s14 + $0x8] sm:$0xff] %v6271
  %6290 = vst [vmem:[%s14 + $0x10] sm:$0xff] %v6274
  %6291 = vst [vmem:[%s14 + $0x18] sm:$0xff] %v6276
  %6292 = vst [vmem:[%s14 + $0x20] sm:$0xff] %v6279
  %6293 = vst [vmem:[%s14 + $0x28] sm:$0xff] %v6281
  %6294 = vst [vmem:[%s14 + $0x30] sm:$0xff] %v6284
  %6295 = vst [vmem:[%s14 + $0x38] sm:$0xff] %v6286
  %v6296 = vpack.c.bf16 %v5748, %v5748
  %v6297 = vld [vmem:[%s10] sm:$0xf]
  %v6298 = vld [vmem:[%s10 + $0x4] sm:$0xf]
  %v6299 = vld [vmem:[%s10 + $0x8] sm:$0xf]
  %v6300 = vld [vmem:[%s10 + $0xc] sm:$0xf]
  %v6301 = vld [vmem:[%s10 + $0x10] sm:$0xf]
  %v6302 = vld [vmem:[%s10 + $0x14] sm:$0xf]
  %v6303 = vld [vmem:[%s10 + $0x18] sm:$0xf]
  %v6304 = vld [vmem:[%s10 + $0x1c] sm:$0xf]
  %v6305 = vld [vmem:[%s10 + $0x20] sm:$0xf]
  %v6306 = vld [vmem:[%s10 + $0x24] sm:$0xf]
  %v6307 = vld [vmem:[%s10 + $0x28] sm:$0xf]
  %v6308 = vld [vmem:[%s10 + $0x2c] sm:$0xf]
  %v6309 = vld [vmem:[%s10 + $0x30] sm:$0xf]
  %v6310 = vld [vmem:[%s10 + $0x34] sm:$0xf]
  %v6311 = vld [vmem:[%s10 + $0x38] sm:$0xf]
  %v6312 = vld [vmem:[%s10 + $0x3c] sm:$0xf]
  %v6313 = vpack.c.bf16 %v6074, %v6074
  %v6314 = vld [vmem:[%s11] sm:$0xf]
  %v6315 = vld [vmem:[%s11 + $0x4] sm:$0xf]
  %v6316 = vld [vmem:[%s11 + $0x8] sm:$0xf]
  %v6317 = vld [vmem:[%s11 + $0xc] sm:$0xf]
  %v6318 = vld [vmem:[%s11 + $0x10] sm:$0xf]
  %v6319 = vld [vmem:[%s11 + $0x14] sm:$0xf]
  %v6320 = vld [vmem:[%s11 + $0x18] sm:$0xf]
  %v6321 = vld [vmem:[%s11 + $0x1c] sm:$0xf]
  %v6322 = vld [vmem:[%s11 + $0x20] sm:$0xf]
  %v6323 = vld [vmem:[%s11 + $0x24] sm:$0xf]
  %v6324 = vld [vmem:[%s11 + $0x28] sm:$0xf]
  %v6325 = vld [vmem:[%s11 + $0x2c] sm:$0xf]
  %v6326 = vld [vmem:[%s11 + $0x30] sm:$0xf]
  %v6327 = vld [vmem:[%s11 + $0x34] sm:$0xf]
  %v6328 = vld [vmem:[%s11 + $0x38] sm:$0xf]
  %v6329 = vld [vmem:[%s11 + $0x3c] sm:$0xf]
  %v6346 = vunpack.c.l.b16 %v6314
  %v6347 = vunpack.c.l.b16 %v6315
  %v6348 = vunpack.c.l.b16 %v6316
  %v6349 = vunpack.c.l.b16 %v6317
  %v6350 = vunpack.c.l.b16 %v6318
  %v6351 = vunpack.c.l.b16 %v6319
  %v6352 = vunpack.c.l.b16 %v6320
  %v6353 = vunpack.c.l.b16 %v6321
  %v6354 = vunpack.c.l.b16 %v6322
  %v6355 = vunpack.c.l.b16 %v6323
  %v6356 = vunpack.c.l.b16 %v6324
  %v6357 = vunpack.c.l.b16 %v6325
  %v6358 = vunpack.c.l.b16 %v6326
  %v6359 = vunpack.c.l.b16 %v6327
  %v6360 = vunpack.c.l.b16 %v6328
  %v6361 = vunpack.c.l.b16 %v6329
  %v6362 = vpack.c.b16 %v6347, %v6346
  %v6363 = vpack.c.b16 %v6349, %v6348
  %v6364 = vpack.c.b16 %v6351, %v6350
  %v6365 = vpack.c.b16 %v6353, %v6352
  %v6366 = vpack.c.b16 %v6355, %v6354
  %v6367 = vpack.c.b16 %v6357, %v6356
  %v6368 = vpack.c.b16 %v6359, %v6358
  %v6369 = vpack.c.b16 %v6361, %v6360
  %6378 = vmatpush.bf16.msra.mxu0 %v6369
  %6379 = vmatpush.bf16.msra.mxu0 %v6368
  %6380 = vmatpush.bf16.msra.mxu0 %v6367
  %6381 = vmatpush.bf16.msra.mxu0 %v6366
  %6382 = vmatpush.bf16.msra.mxu0 %v6365
  %6383 = vmatpush.bf16.msra.mxu0 %v6364
  %6384 = vmatpush.bf16.msra.mxu0 %v6363
  %6385 = vmatpush.bf16.msra.mxu0 %v6362
  %6386 = vmatmul.bf16.gmra.mxu0 %v6313
  %v6387 = vpop.f32.mrf.mxu0
  %v6388 = vadd.f32 0.0, %v6387
  %v6389 = vpop.f32.mrf.mxu0
  %6390 = vdwg.mxu0
  %v6407 = vunpack.c.l.b16 %v6297
  %v6408 = vunpack.c.l.b16 %v6298
  %v6409 = vunpack.c.l.b16 %v6299
  %v6410 = vunpack.c.l.b16 %v6300
  %v6411 = vunpack.c.l.b16 %v6301
  %v6412 = vunpack.c.l.b16 %v6302
  %v6413 = vunpack.c.l.b16 %v6303
  %v6414 = vunpack.c.l.b16 %v6304
  %v6415 = vunpack.c.l.b16 %v6305
  %v6416 = vunpack.c.l.b16 %v6306
  %v6417 = vunpack.c.l.b16 %v6307
  %v6418 = vunpack.c.l.b16 %v6308
  %v6419 = vunpack.c.l.b16 %v6309
  %v6420 = vunpack.c.l.b16 %v6310
  %v6421 = vunpack.c.l.b16 %v6311
  %v6422 = vunpack.c.l.b16 %v6312
  %v6423 = vpack.c.b16 %v6408, %v6407
  %v6424 = vpack.c.b16 %v6410, %v6409
  %v6425 = vpack.c.b16 %v6412, %v6411
  %v6426 = vpack.c.b16 %v6414, %v6413
  %v6427 = vpack.c.b16 %v6416, %v6415
  %v6428 = vpack.c.b16 %v6418, %v6417
  %v6429 = vpack.c.b16 %v6420, %v6419
  %v6430 = vpack.c.b16 %v6422, %v6421
  %6439 = vmatpush.bf16.msra.mxu0 %v6430
  %6440 = vmatpush.bf16.msra.mxu0 %v6429
  %6441 = vmatpush.bf16.msra.mxu0 %v6428
  %6442 = vmatpush.bf16.msra.mxu0 %v6427
  %6443 = vmatpush.bf16.msra.mxu0 %v6426
  %6444 = vmatpush.bf16.msra.mxu0 %v6425
  %6445 = vmatpush.bf16.msra.mxu0 %v6424
  %6446 = vmatpush.bf16.msra.mxu0 %v6423
  %6447 = vmatmul.bf16.gmra.mxu0 %v6296
  %v6448 = vpop.f32.mrf.mxu0
  %v6449 = vadd.f32 %v6388, %v6448
  %v6450 = vpop.f32.mrf.mxu0
  %6451 = vdwg.mxu0
  %6452 = vst [vmem:[%s15] sm:$0xff] %v6449
  %v6453 = vpack.c.bf16 %v5751, %v5751
  %v6454 = vld [vmem:[%s12] sm:$0xf]
  %v6455 = vld [vmem:[%s12 + $0x4] sm:$0xf]
  %v6456 = vld [vmem:[%s12 + $0x8] sm:$0xf]
  %v6457 = vld [vmem:[%s12 + $0xc] sm:$0xf]
  %v6458 = vld [vmem:[%s12 + $0x10] sm:$0xf]
  %v6459 = vld [vmem:[%s12 + $0x14] sm:$0xf]
  %v6460 = vld [vmem:[%s12 + $0x18] sm:$0xf]
  %v6461 = vld [vmem:[%s12 + $0x1c] sm:$0xf]
  %v6462 = vld [vmem:[%s12 + $0x20] sm:$0xf]
  %v6463 = vld [vmem:[%s12 + $0x24] sm:$0xf]
  %v6464 = vld [vmem:[%s12 + $0x28] sm:$0xf]
  %v6465 = vld [vmem:[%s12 + $0x2c] sm:$0xf]
  %v6466 = vld [vmem:[%s12 + $0x30] sm:$0xf]
  %v6467 = vld [vmem:[%s12 + $0x34] sm:$0xf]
  %v6468 = vld [vmem:[%s12 + $0x38] sm:$0xf]
  %v6469 = vld [vmem:[%s12 + $0x3c] sm:$0xf]
  %v6470 = vpack.c.bf16 %v6077, %v6077
  %v6471 = vld [vmem:[%s13] sm:$0xf]
  %v6472 = vld [vmem:[%s13 + $0x4] sm:$0xf]
  %v6473 = vld [vmem:[%s13 + $0x8] sm:$0xf]
  %v6474 = vld [vmem:[%s13 + $0xc] sm:$0xf]
  %v6475 = vld [vmem:[%s13 + $0x10] sm:$0xf]
  %v6476 = vld [vmem:[%s13 + $0x14] sm:$0xf]
  %v6477 = vld [vmem:[%s13 + $0x18] sm:$0xf]
  %v6478 = vld [vmem:[%s13 + $0x1c] sm:$0xf]
  %v6479 = vld [vmem:[%s13 + $0x20] sm:$0xf]
  %v6480 = vld [vmem:[%s13 + $0x24] sm:$0xf]
  %v6481 = vld [vmem:[%s13 + $0x28] sm:$0xf]
  %v6482 = vld [vmem:[%s13 + $0x2c] sm:$0xf]
  %v6483 = vld [vmem:[%s13 + $0x30] sm:$0xf]
  %v6484 = vld [vmem:[%s13 + $0x34] sm:$0xf]
  %v6485 = vld [vmem:[%s13 + $0x38] sm:$0xf]
  %v6486 = vld [vmem:[%s13 + $0x3c] sm:$0xf]
  %v6503 = vunpack.c.l.b16 %v6471
  %v6504 = vunpack.c.l.b16 %v6472
  %v6505 = vunpack.c.l.b16 %v6473
  %v6506 = vunpack.c.l.b16 %v6474
  %v6507 = vunpack.c.l.b16 %v6475
  %v6508 = vunpack.c.l.b16 %v6476
  %v6509 = vunpack.c.l.b16 %v6477
  %v6510 = vunpack.c.l.b16 %v6478
  %v6511 = vunpack.c.l.b16 %v6479
  %v6512 = vunpack.c.l.b16 %v6480
  %v6513 = vunpack.c.l.b16 %v6481
  %v6514 = vunpack.c.l.b16 %v6482
  %v6515 = vunpack.c.l.b16 %v6483
  %v6516 = vunpack.c.l.b16 %v6484
  %v6517 = vunpack.c.l.b16 %v6485
  %v6518 = vunpack.c.l.b16 %v6486
  %v6519 = vpack.c.b16 %v6504, %v6503
  %v6520 = vpack.c.b16 %v6506, %v6505
  %v6521 = vpack.c.b16 %v6508, %v6507
  %v6522 = vpack.c.b16 %v6510, %v6509
  %v6523 = vpack.c.b16 %v6512, %v6511
  %v6524 = vpack.c.b16 %v6514, %v6513
  %v6525 = vpack.c.b16 %v6516, %v6515
  %v6526 = vpack.c.b16 %v6518, %v6517
  %6535 = vmatpush.bf16.msra.mxu0 %v6526
  %6536 = vmatpush.bf16.msra.mxu0 %v6525
  %6537 = vmatpush.bf16.msra.mxu0 %v6524
  %6538 = vmatpush.bf16.msra.mxu0 %v6523
  %6539 = vmatpush.bf16.msra.mxu0 %v6522
  %6540 = vmatpush.bf16.msra.mxu0 %v6521
  %6541 = vmatpush.bf16.msra.mxu0 %v6520
  %6542 = vmatpush.bf16.msra.mxu0 %v6519
  %6543 = vmatmul.bf16.gmra.mxu0 %v6470
  %v6544 = vpop.f32.mrf.mxu0
  %v6545 = vadd.f32 0.0, %v6544
  %v6546 = vpop.f32.mrf.mxu0
  %6547 = vdwg.mxu0
  %v6564 = vunpack.c.l.b16 %v6454
  %v6565 = vunpack.c.l.b16 %v6455
  %v6566 = vunpack.c.l.b16 %v6456
  %v6567 = vunpack.c.l.b16 %v6457
  %v6568 = vunpack.c.l.b16 %v6458
  %v6569 = vunpack.c.l.b16 %v6459
  %v6570 = vunpack.c.l.b16 %v6460
  %v6571 = vunpack.c.l.b16 %v6461
  %v6572 = vunpack.c.l.b16 %v6462
  %v6573 = vunpack.c.l.b16 %v6463
  %v6574 = vunpack.c.l.b16 %v6464
  %v6575 = vunpack.c.l.b16 %v6465
  %v6576 = vunpack.c.l.b16 %v6466
  %v6577 = vunpack.c.l.b16 %v6467
  %v6578 = vunpack.c.l.b16 %v6468
  %v6579 = vunpack.c.l.b16 %v6469
  %v6580 = vpack.c.b16 %v6565, %v6564
  %v6581 = vpack.c.b16 %v6567, %v6566
  %v6582 = vpack.c.b16 %v6569, %v6568
  %v6583 = vpack.c.b16 %v6571, %v6570
  %v6584 = vpack.c.b16 %v6573, %v6572
  %v6585 = vpack.c.b16 %v6575, %v6574
  %v6586 = vpack.c.b16 %v6577, %v6576
  %v6587 = vpack.c.b16 %v6579, %v6578
  %6596 = vmatpush.bf16.msra.mxu0 %v6587
  %6597 = vmatpush.bf16.msra.mxu0 %v6586
  %6598 = vmatpush.bf16.msra.mxu0 %v6585
  %6599 = vmatpush.bf16.msra.mxu0 %v6584
  %6600 = vmatpush.bf16.msra.mxu0 %v6583
  %6601 = vmatpush.bf16.msra.mxu0 %v6582
  %6602 = vmatpush.bf16.msra.mxu0 %v6581
  %6603 = vmatpush.bf16.msra.mxu0 %v6580
  %6604 = vmatmul.bf16.gmra.mxu0 %v6453
  %v6605 = vpop.f32.mrf.mxu0
  %v6606 = vadd.f32 %v6545, %v6605
  %v6607 = vpop.f32.mrf.mxu0
  %6608 = vdwg.mxu0
  %6609 = vst [vmem:[%s16] sm:$0xff] %v6606
  // Predicated region
  $region58: #{encoder_forward.1} parent=0 // pred_check
    _
  $region59: #{encoder_forward.1} parent=0 // pred_check_branch
    %6611 = sbr.rel (0) target = $region61
  $region60: #{encoder_forward.1} parent=0 // pred_region
    _
  $region61: #{encoder_forward.1} parent=0 // pred_fallthru
    _
  // Predicated region
  $region62: #{encoder_forward.1} parent=0 // pred_check
    _
  $region63: #{encoder_forward.1} parent=0 // pred_check_branch
    %6613 = sbr.rel (0) target = $region65
  $region64: #{encoder_forward.1} parent=0 // pred_region
    _
  $region65: #{encoder_forward.1} parent=0 // pred_fallthru
    _
  // Predicated region
  $region66: #{encoder_forward.1} parent=0 // pred_check
    _
  $region67: #{encoder_forward.1} parent=0 // pred_check_branch
    %6615 = sbr.rel (0) target = $region69
  $region68: #{encoder_forward.1} parent=0 // pred_region
    _
  $region69: #{encoder_forward.1} parent=0 // pred_fallthru
    _
  // Predicated region
  $region70: #{encoder_forward.1} parent=0 // pred_check
    _
  $region71: #{encoder_forward.1} parent=0 // pred_check_branch
    %6617 = sbr.rel (0) target = $region73
  $region72: #{encoder_forward.1} parent=0 // pred_region
    _
  $region73: #{encoder_forward.1} parent=0 // pred_fallthru
    _
  // Predicated region
  $region74: #{encoder_forward.1} parent=0 // pred_check
    _
  $region75: #{encoder_forward.1} parent=0 // pred_check_branch
    %6619 = sbr.rel (0) target = $region77
  $region76: #{encoder_forward.1} parent=0 // pred_region
    _
  $region77: #{encoder_forward.1} parent=0 // pred_fallthru
    _
  // Predicated region
  $region78: #{encoder_forward.1} parent=0 // pred_check
    _
  $region79: #{encoder_forward.1} parent=0 // pred_check_branch
    %6621 = sbr.rel (0) target = $region81
  $region80: #{encoder_forward.1} parent=0 // pred_region
    _
  $region81: #{encoder_forward.1} parent=0 // pred_fallthru
    _

</llo_original>
